<compile_context>
chip_gen: v7x
topology: tpu7x:2x2x1
jax: 0.10.0
libtpu: 0.0.40
codegen_flags: <defaults>
</compile_context>

<pallas_src>
import numpy as np
import jax
import jax.numpy as jnp
from jax.experimental import pallas as pl
from jax.experimental.pallas import tpu as pltpu

_BN_EPS = 1e-5
_VMEM = pl.BlockSpec(memory_space=pltpu.MemorySpace.VMEM)
_SMEM = pl.BlockSpec(memory_space=pltpu.MemorySpace.SMEM)


# ----------------------------------------------------------------------------
# Static tap tables (shared by prepare_params and the kernel bodies)
# ----------------------------------------------------------------------------
def _parity_taps(a):
    # stride-2, k=4, p=1 conv: taps contributed by input pixels of parity `a`:
    # (kernel index d, image shift s), where shifted[p] = phase[p - s].
    return ((1, 0), (3, -1)) if a == 0 else ((2, 0), (0, 1))


_STRIDE2_TERMS = tuple(
    (alpha * 2 + beta, si, sj, di, dj)
    for alpha in (0, 1) for beta in (0, 1)
    for (di, si) in _parity_taps(alpha)
    for (dj, sj) in _parity_taps(beta)
)  # 16 (input-phase, tap) terms

_CONV4_TERMS = tuple((di, dj, 2 - di, 2 - dj) for di in range(5) for dj in range(5))

_CT_SHIFTS = tuple((si, sj) for si in (-1, 0, 1) for sj in (-1, 0, 1))


def _ct_kh(a, s):
    # ConvTranspose(k=4, s=2, p=1): kernel index used by output parity `a` for
    # input shift `s` (shifted[io] = in[io - s]); None if that shift is unused.
    return {(0, 0): 1, (0, 1): 3, (1, 0): 2, (1, -1): 0}.get((a, s))


# ----------------------------------------------------------------------------
# In-kernel helpers (values only: static slices, concats, rolls, matmuls)
# ----------------------------------------------------------------------------
def _roll_lanes(x, shift):
    """roll along the last axis by a static amount (concat of two static slices)."""
    m = x.shape[1]
    s = shift % m
    if s == 0:
        return x
    return jnp.concatenate([x[:, m - s:], x[:, :m - s]], axis=1)


def _bn_rows(y, gamma, beta):
    """training-mode BatchNorm where channels == rows of y (stats over lanes)."""
    mu = jnp.mean(y, axis=1, keepdims=True)
    d = y - mu
    var = jnp.mean(d * d, axis=1, keepdims=True)
    return d * jax.lax.rsqrt(var + _BN_EPS) * gamma + beta


def _bn_group(y, pmat, gamma, beta):
    """training-mode BatchNorm for phase-major rows (pmat averages the 4 phase rows
    of each channel)."""
    row_mu = jnp.mean(y, axis=1, keepdims=True)
    g_mu = jnp.dot(pmat, row_mu, preferred_element_type=jnp.float32)
    d = y - g_mu
    row_ms = jnp.mean(d * d, axis=1, keepdims=True)
    g_var = jnp.dot(pmat, row_ms, preferred_element_type=jnp.float32)
    return d * jax.lax.rsqrt(g_var + _BN_EPS) * gamma + beta


def _stack_stride2(y, masks, block, width):
    """stride-2 k=4 p=1 conv patches: input columns are phase-ordered (4 blocks of
    `block` columns); each (phase, tap) term is a roll+mask of its phase block."""
    parts = []
    for t, (blk, si, sj, _di, _dj) in enumerate(_STRIDE2_TERMS):
        src = y[:, blk * block:(blk + 1) * block]
        parts.append(_roll_lanes(src, si * width + sj) * masks[t:t + 1, :])
    return jnp.concatenate(parts, axis=0)


def _stack_conv4(y, masks, width):
    """k=5 stride-1 conv patches over the full 4x4 field (pad-2 indexing)."""
    parts = []
    for t, (_di, _dj, si, sj) in enumerate(_CONV4_TERMS):
        parts.append(_roll_lanes(y, si * width + sj) * masks[t:t + 1, :])
    return jnp.concatenate(parts, axis=0)


def _stack_ct(y, masks, width):
    """ConvTranspose(k=4,s=2,p=1) sub-pixel decomposition: 9 shifted input images."""
    parts = []
    for r, (si, sj) in enumerate(_CT_SHIFTS):
        parts.append(_roll_lanes(y, si * width + sj) * masks[r:r + 1, :])
    return jnp.concatenate(parts, axis=0)


def _depth_to_space(ph, d_ref, cout):
    """interleave the 4 output phases (phase-major rows) back to (Cout, N*2H*2W)."""
    out = None
    for k in range(4):
        part = jnp.dot(ph[k * cout:(k + 1) * cout, :], d_ref[k],
                       preferred_element_type=jnp.float32)
        out = part if out is None else out + part
    return out


# ----------------------------------------------------------------------------
# Kernels
# ----------------------------------------------------------------------------
def _encoder_kernel(p1_ref, w1_ref, w2s_ref, m2_ref, perm2_ref,
                    w3s_ref, m3_ref, w4s_ref, m4_ref, sel4_ref,
                    whead_ref, bhead_ref, foldn_ref, bn_ref, eps_t_ref,
                    out_ref):
    bn = bn_ref[...]                                   # (16, 8): g1..g4, b1..b4
    # conv1 (k4 s2): patches prebuilt outside (input-side layout only)
    y = jnp.dot(w1_ref[...], p1_ref[...], preferred_element_type=jnp.float32)   # (16,512)
    y = jnp.maximum(_bn_rows(y, bn[:, 0:1], bn[:, 4:5]), 0.0)
    # conv2 (k4 s2): input columns are phase-ordered (4 blocks of 128)
    p = _stack_stride2(y, m2_ref[...], block=128, width=8)                       # (256,128)
    y = jnp.dot(w2s_ref[...], p, preferred_element_type=jnp.float32)            # (16,128)
    y = jnp.maximum(_bn_rows(y, bn[:, 1:2], bn[:, 5:6]), 0.0)
    y = jnp.dot(y, perm2_ref[...], preferred_element_type=jnp.float32)          # phase-order for conv3
    # conv3 (k4 s2)
    p = _stack_stride2(y, m3_ref[...], block=32, width=4)                        # (256,32)
    y = jnp.dot(w3s_ref[...], p, preferred_element_type=jnp.float32)            # (16,32)
    y = jnp.maximum(_bn_rows(y, bn[:, 2:3], bn[:, 6:7]), 0.0)
    # conv4 (k5 s1 p1): full 4x4 field, then select the valid 2x2 outputs
    p = _stack_conv4(y, m4_ref[...], width=4)                                    # (400,32)
    z = jnp.dot(w4s_ref[...], p, preferred_element_type=jnp.float32)            # (16,32)
    z = jnp.dot(z, sel4_ref[...], preferred_element_type=jnp.float32)           # (16,8)
    z = _bn_rows(z, bn[:, 3:4], bn[:, 7:8])            # no ReLU after the last BN
    # x_mean / x_log_stddev heads + reparameterize
    rows = []
    for k in range(4):
        rows.append(jnp.sum(whead_ref[k] * z, axis=0, keepdims=True))           # (1,8)
    s = jnp.concatenate(rows, axis=0)                                            # (4,8)
    heads = jnp.dot(s, foldn_ref[...], preferred_element_type=jnp.float32) + bhead_ref[...]
    mu_t, ls_t = heads[0:2, :], heads[2:4, :]
    samp_t = mu_t + eps_t_ref[...] * jnp.exp(ls_t + 1e-7)
    out_ref[...] = jnp.concatenate(
        [mu_t, ls_t, samp_t, jnp.zeros((2, 2), jnp.float32)], axis=0)            # (8,2)


def _decoder_kernel(h_ref, bt4_ref, apack_ref, dbn1_ref,
                    wt2_ref, ma_ref, d2_ref,
                    wt3_ref, mb_ref, d3_ref,
                    wt4_ref, mc_ref, pmat_ref, dbn23_ref,
                    out_ref):
    pmat = pmat_ref[...]
    dbn23 = dbn23_ref[...]
    # stage 1: Linear(2,64) + Reshape(-1,16,2,2) + ConvT1(16,16,4,2,1) folded exactly
    a0, a1, cm = apack_ref[0], apack_ref[1], apack_ref[2]
    b0 = h_ref[0, 0] * a0 + h_ref[0, 1] * a1 + cm
    b1 = h_ref[1, 0] * a0 + h_ref[1, 1] * a1 + cm
    y = jnp.concatenate([b0, b1], axis=1)                                        # (16,32) 4x4
    y = jnp.maximum(_bn_rows(y, dbn1_ref[:, 0:1], dbn1_ref[:, 1:2]), 0.0)
    # ConvT2: 4x4 -> 8x8
    p = _stack_ct(y, ma_ref[...], width=4)                                       # (144,32)
    ph = jnp.dot(wt2_ref[...], p, preferred_element_type=jnp.float32)            # (64,32)
    ph = jnp.maximum(_bn_group(ph, pmat, dbn23[:, 0:1], dbn23[:, 1:2]), 0.0)
    y = _depth_to_space(ph, d2_ref, 16)                                          # (16,128)
    # ConvT3: 8x8 -> 16x16
    p = _stack_ct(y, mb_ref[...], width=8)                                       # (144,128)
    ph = jnp.dot(wt3_ref[...], p, preferred_element_type=jnp.float32)            # (64,128)
    ph = jnp.maximum(_bn_group(ph, pmat, dbn23[:, 2:3], dbn23[:, 3:4]), 0.0)
    y = _depth_to_space(ph, d3_ref, 16)                                          # (16,512)
    # ConvT4: 16x16 -> 32x32, emitted in phase form (depth-to-space on the output outside)
    p = _stack_ct(y, mc_ref[...], width=16)                                      # (144,512)
    ph = jnp.dot(wt4_ref[...], p, preferred_element_type=jnp.float32)            # (4,512)
    out_ref[...] = ph + bt4_ref[0]


def _encoder_call(prep, p1, eps_t):
    return pl.pallas_call(
        _encoder_kernel,
        out_shape=jax.ShapeDtypeStruct((8, 2), jnp.float32),
        in_specs=[_VMEM] * 15,
        out_specs=_VMEM,
    )(p1, prep["w1"], prep["w2s"], prep["m2"], prep["perm2"],
      prep["w3s"], prep["m3"], prep["w4s"], prep["m4"], prep["sel4"],
      prep["whead"], prep["bhead"], prep["foldn"], prep["enc_bn"], eps_t)


def _decoder_call(prep, h):
    return pl.pallas_call(
        _decoder_kernel,
        out_shape=jax.ShapeDtypeStruct((4, 512), jnp.float32),
        in_specs=[_SMEM, _SMEM] + [_VMEM] * 12,
        out_specs=_VMEM,
    )(h, prep["bt4"], prep["apack"], prep["dbn1"],
      prep["wt2"], prep["mA"], prep["d2"],
      prep["wt3"], prep["mB"], prep["d3"],
      prep["wt4"], prep["mC"], prep["pmat"], prep["dbn23"])


# ----------------------------------------------------------------------------
# Input-side layout prep (XLA, data-dependent, layout only)
# ----------------------------------------------------------------------------
def _conv1_patches(x):
    """conv1 im2col: (16, 512) patch matrix whose columns are ordered
    (oh%2, ow%2, n, oh//2, ow//2) so conv2 inside the fused kernel can slice its
    four input-parity phases as contiguous 128-column blocks."""
    xp = jnp.pad(x[:, 0], ((0, 0), (1, 1), (1, 1)))                 # (2,34,34)
    blocks = []
    for alpha in (0, 1):
        for beta in (0, 1):
            taps = []
            for di in range(4):
                for dj in range(4):
                    a, b = 2 * alpha + di, 2 * beta + dj
                    sl = xp[:, a:a + 29:4, b:b + 29:4]               # (2,8,8)
                    taps.append(sl.reshape(1, 128))
            blocks.append(jnp.concatenate(taps, axis=0))             # (16,128)
    return jnp.concatenate(blocks, axis=1)                           # (16,512)


# ----------------------------------------------------------------------------
# Parameter preparation (hoisted: runs once, outside the jitted forward)
# ----------------------------------------------------------------------------
def _shift_mask_np(n, h, w, si, sj):
    i = np.arange(h).reshape(h, 1)
    j = np.arange(w).reshape(1, w)
    valid = ((i - si >= 0) & (i - si < h) & (j - sj >= 0) & (j - sj < w))
    return np.tile(valid.astype(np.float32).reshape(1, h * w), (1, n))


def _perm2_np():
    pm = np.zeros((128, 128), np.float32)
    for n in range(2):
        for oh in range(8):
            for ow in range(8):
                src = n * 64 + oh * 8 + ow
                dst = ((oh % 2) * 2 + (ow % 2)) * 32 + n * 16 + (oh // 2) * 4 + (ow // 2)
                pm[src, dst] = 1.0
    return pm


def _sel4_np():
    s = np.zeros((32, 8), np.float32)
    for n in range(2):
        for oh in range(2):
            for ow in range(2):
                s[n * 16 + (oh + 1) * 4 + (ow + 1), n * 4 + oh * 2 + ow] = 1.0
    return s


def _foldn_np():
    f = np.zeros((8, 2), np.float32)
    f[0:4, 0] = 1.0
    f[4:8, 1] = 1.0
    return f


def _d2s_np(half):
    m_in, m_out = 2 * half * half, 2 * 4 * half * half
    d = np.zeros((4, m_in, m_out), np.float32)
    for a in (0, 1):
        for b in (0, 1):
            ph = a * 2 + b
            for n in range(2):
                for i in range(half):
                    for j in range(half):
                        src = n * half * half + i * half + j
                        dst = n * 4 * half * half + (2 * i + a) * 2 * half + (2 * j + b)
                        d[ph, src, dst] = 1.0
    return d


def _pmat64_np():
    r = np.arange(64)
    return (r[:, None] % 16 == r[None, :] % 16).astype(np.float32) * 0.25


def prepare_params(p):
    f32 = lambda a: np.asarray(jax.device_get(a), np.float32)
    prep = {}

    # ---- encoder
    prep["w1"] = f32(p["e_c1_w"]).reshape(16, 16)

    def stride2_stack(w):
        return np.concatenate([w[:, :, di, dj] for (_b, _si, _sj, di, dj) in _STRIDE2_TERMS], axis=1)

    def stride2_masks(half):
        return np.concatenate([_shift_mask_np(2, half, half, si, sj)
                               for (_b, si, sj, _di, _dj) in _STRIDE2_TERMS], axis=0)

    prep["w2s"] = stride2_stack(f32(p["e_c2_w"]))
    prep["m2"] = stride2_masks(8)
    prep["perm2"] = _perm2_np()
    prep["w3s"] = stride2_stack(f32(p["e_c3_w"]))
    prep["m3"] = stride2_masks(4)

    w4 = f32(p["e_c4_w"])
    prep["w4s"] = np.concatenate([w4[:, :, di, dj] for (di, dj, _s, _t) in _CONV4_TERMS], axis=1)
    prep["m4"] = np.concatenate([_shift_mask_np(2, 4, 4, si, sj)
                                 for (_di, _dj, si, sj) in _CONV4_TERMS], axis=0)
    prep["sel4"] = _sel4_np()

    whead = np.concatenate([f32(p["e_mean_w"]), f32(p["e_logstd_w"])], axis=0)   # (4,64)
    whead_exp = np.zeros((4, 16, 8), np.float32)
    for k in range(4):
        wk = whead[k].reshape(16, 4)
        whead_exp[k] = np.concatenate([wk, wk], axis=1)
    prep["whead"] = whead_exp
    prep["bhead"] = np.concatenate([f32(p["e_mean_b"]), f32(p["e_logstd_b"])]).reshape(4, 1)
    prep["foldn"] = _foldn_np()
    prep["enc_bn"] = np.stack(
        [f32(p["e_bn1_g"]), f32(p["e_bn2_g"]), f32(p["e_bn3_g"]), f32(p["e_bn4_g"]),
         f32(p["e_bn1_b"]), f32(p["e_bn2_b"]), f32(p["e_bn3_b"]), f32(p["e_bn4_b"])], axis=1)

    # ---- decoder: Linear(2,64) + ConvT1 exact fold
    wlin, blin = f32(p["d_lin_w"]), f32(p["d_lin_b"])
    wt1, bt1 = f32(p["d_t1_w"]), f32(p["d_t1_b"])
    T = np.zeros((64, 16, 16), np.float32)
    for ci in range(16):
        for ih in range(2):
            for iw in range(2):
                fidx = ci * 4 + ih * 2 + iw
                for pp in range(4):
                    for qq in range(4):
                        kh, kw = pp + 1 - 2 * ih, qq + 1 - 2 * iw
                        if 0 <= kh < 4 and 0 <= kw < 4:
                            T[fidx, :, pp * 4 + qq] += wt1[ci, :, kh, kw]
    a0 = np.einsum("f,fcs->cs", wlin[:, 0], T)
    a1 = np.einsum("f,fcs->cs", wlin[:, 1], T)
    cm = np.einsum("f,fcs->cs", blin, T) + bt1[:, None]
    prep["apack"] = np.stack([a0, a1, cm], axis=0)
    prep["dbn1"] = np.stack([f32(p["d_bn1_g"]), f32(p["d_bn1_b"])], axis=1)

    def ct_stack(w, cout):
        big = np.zeros((4 * cout, 9 * 16), np.float32)
        for a in (0, 1):
            for b in (0, 1):
                ph = a * 2 + b
                for r, (si, sj) in enumerate(_CT_SHIFTS):
                    kh, kw = _ct_kh(a, si), _ct_kh(b, sj)
                    if kh is None or kw is None:
                        continue
                    big[ph * cout:(ph + 1) * cout, r * 16:(r + 1) * 16] = w[:, :, kh, kw].T
        return big

    def ct_masks(half):
        return np.concatenate([_shift_mask_np(2, half, half, si, sj) for (si, sj) in _CT_SHIFTS], axis=0)

    prep["wt2"] = ct_stack(f32(p["d_t2_w"]), 16)
    prep["mA"] = ct_masks(4)
    prep["wt3"] = ct_stack(f32(p["d_t3_w"]), 16)
    prep["mB"] = ct_masks(8)
    prep["wt4"] = ct_stack(f32(p["d_t4_w"]), 1)
    prep["mC"] = ct_masks(16)
    prep["d2"] = _d2s_np(4)
    prep["d3"] = _d2s_np(8)
    prep["pmat"] = _pmat64_np()
    rep4 = lambda v: np.tile(f32(v), 4)
    prep["dbn23"] = np.stack([rep4(p["d_bn2_g"]), rep4(p["d_bn2_b"]),
                              rep4(p["d_bn3_g"]), rep4(p["d_bn3_b"])], axis=1)
    prep["bt4"] = f32(p["d_t4_b"]).reshape(1)

    return jax.tree_util.tree_map(jnp.asarray, prep)


# ----------------------------------------------------------------------------
# Parameter initialization (deterministic, PyTorch-like uniform fan-in bounds)
# ----------------------------------------------------------------------------
def _uniform(key, shape, bound):
    return jax.random.uniform(key, shape, jnp.float32, -bound, bound)


def init_params(key):
    keys = iter(jax.random.split(key, 64))
    p = {}

    def conv_p(name, cout, cin, k):
        bound = 1.0 / (cin * k * k) ** 0.5
        p[name + "_w"] = _uniform(next(keys), (cout, cin, k, k), bound)
        p[name + "_b"] = _uniform(next(keys), (cout,), bound)

    def convT_p(name, cin, cout, k):
        bound = 1.0 / (cout * k * k) ** 0.5
        p[name + "_w"] = _uniform(next(keys), (cin, cout, k, k), bound)
        p[name + "_b"] = _uniform(next(keys), (cout,), bound)

    def lin_p(name, fin, fout):
        bound = 1.0 / fin ** 0.5
        p[name + "_w"] = _uniform(next(keys), (fout, fin), bound)   # PyTorch (out,in)
        p[name + "_b"] = _uniform(next(keys), (fout,), bound)

    def bn_p(name, c):
        p[name + "_g"] = jnp.ones((c,), jnp.float32)
        p[name + "_b"] = jnp.zeros((c,), jnp.float32)

    conv_p("e_c1", 16, 1, 4);  bn_p("e_bn1", 16)
    conv_p("e_c2", 16, 16, 4); bn_p("e_bn2", 16)
    conv_p("e_c3", 16, 16, 4); bn_p("e_bn3", 16)
    conv_p("e_c4", 16, 16, 5); bn_p("e_bn4", 16)
    lin_p("e_mean", 64, 2)
    lin_p("e_logstd", 64, 2)
    lin_p("d_lin", 2, 64)
    convT_p("d_t1", 16, 16, 4); bn_p("d_bn1", 16)
    convT_p("d_t2", 16, 16, 4); bn_p("d_bn2", 16)
    convT_p("d_t3", 16, 16, 4); bn_p("d_bn3", 16)
    convT_p("d_t4", 16, 1, 4)
    return p


# ----------------------------------------------------------------------------
# VAE forward (2 pallas_call launches total)
# ----------------------------------------------------------------------------
@jax.jit
def vae_forward(prep, x, eps):
    p1 = _conv1_patches(x)
    enc = _encoder_call(prep, p1, eps.T)
    x_mean = enc[0:2, :].T
    x_log_stddev = enc[2:4, :].T
    x_sample = enc[4:6, :].T
    ph4 = _decoder_call(prep, x_sample)
    # output-side depth-to-space of the ConvT4 phase form: rows (a,b), cols (n,i,j)
    out = ph4.reshape(2, 2, 2, 16, 16).transpose(2, 3, 0, 4, 1).reshape(2, 1, 32, 32)
    return out, x_sample, x_mean, x_log_stddev


# ----------------------------------------------------------------------------
if __name__ == "__main__":
    key = jax.random.PRNGKey(0)
    k_param, k_x, k_eps = jax.random.split(key, 3)

    params = init_params(k_param)
    prep = prepare_params(params)     # hoisted parameter prep (runs once)

    # Architecture implies 32x32 single-channel inputs (32->16->8->4->2, flatten=64).
    x = jax.random.normal(k_x, (2, 1, 32, 32), jnp.float32)
    eps = jax.random.normal(k_eps, (2, 2), jnp.float32)

    out, x_sample, x_mean, x_log_stddev = vae_forward(prep, x, eps)
    jax.block_until_ready((out, x_sample, x_mean, x_log_stddev))

    assert out.shape == (2, 1, 32, 32)
    assert x_sample.shape == (2, 2)
    assert x_mean.shape == (2, 2)
    assert x_log_stddev.shape == (2, 2)
    print("KERNEL_OK")
</pallas_src>

<mosaic_0001>
module attributes {stable_mosaic.version = 11 : i64} {
  func.func @_encoder_kernel(%arg0: memref<16x512xf32, #tpu.memory_space<vmem>>, %arg1: memref<16x16xf32, #tpu.memory_space<vmem>>, %arg2: memref<16x256xf32, #tpu.memory_space<vmem>>, %arg3: memref<16x128xf32, #tpu.memory_space<vmem>>, %arg4: memref<128x128xf32, #tpu.memory_space<vmem>>, %arg5: memref<16x256xf32, #tpu.memory_space<vmem>>, %arg6: memref<16x32xf32, #tpu.memory_space<vmem>>, %arg7: memref<16x400xf32, #tpu.memory_space<vmem>>, %arg8: memref<25x32xf32, #tpu.memory_space<vmem>>, %arg9: memref<32x8xf32, #tpu.memory_space<vmem>>, %arg10: memref<4x16x8xf32, #tpu.memory_space<vmem>>, %arg11: memref<4x1xf32, #tpu.memory_space<vmem>>, %arg12: memref<8x2xf32, #tpu.memory_space<vmem>>, %arg13: memref<16x8xf32, #tpu.memory_space<vmem>>, %arg14: memref<2x2xf32, #tpu.memory_space<vmem>>, %arg15: memref<8x2xf32, #tpu.memory_space<vmem>>) attributes {dimension_semantics = [], scalar_prefetch = 0 : i64, scratch_operands = 0 : i64, tpu.core_type = #tpu.core_type<tc>} {
    %c0 = arith.constant 0 : index
    %c0_0 = arith.constant 0 : index
    %0 = vector.load %arg13[%c0, %c0_0] : memref<16x8xf32, #tpu.memory_space<vmem>>, vector<16x8xf32>
    %c0_1 = arith.constant 0 : index
    %c0_2 = arith.constant 0 : index
    %1 = vector.load %arg1[%c0_1, %c0_2] : memref<16x16xf32, #tpu.memory_space<vmem>>, vector<16x16xf32>
    %c0_3 = arith.constant 0 : index
    %c0_4 = arith.constant 0 : index
    %2 = vector.load %arg0[%c0_3, %c0_4] : memref<16x512xf32, #tpu.memory_space<vmem>>, vector<16x512xf32>
    %cst = arith.constant dense<0.000000e+00> : vector<16x512xf32>
    %3 = tpu.matmul %1, %2, %cst {dimension_numbers = #tpu.dot_dimension_numbers<[1], [0], [0], [1], [0, 0, 1, 1], [], []>} : vector<16x16xf32>, vector<16x512xf32>, vector<16x512xf32> -> vector<16x512xf32>
    %4 = vector.extract_strided_slice %0 {offsets = [0, 0], sizes = [16, 1], strides = [1, 1]} : vector<16x8xf32> to vector<16x1xf32>
    %5 = vector.extract_strided_slice %0 {offsets = [0, 4], sizes = [16, 1], strides = [1, 1]} : vector<16x8xf32> to vector<16x1xf32>
    %cst_5 = arith.constant dense<0.000000e+00> : vector<16xf32>
    %6 = vector.multi_reduction <add>, %3, %cst_5 [1] : vector<16x512xf32> to vector<16xf32>
    %7 = vector.shape_cast %6 : vector<16xf32> to vector<16x1xf32>
    %cst_6 = arith.constant 5.120000e+02 : f32
    %8 = vector.broadcast %cst_6 : f32 to vector<16x1xf32>
    %9 = arith.divf %7, %8 : vector<16x1xf32>
    %10 = vector.broadcast %9 : vector<16x1xf32> to vector<16x512xf32>
    %11 = arith.subf %3, %10 : vector<16x512xf32>
    %12 = arith.mulf %11, %11 : vector<16x512xf32>
    %cst_7 = arith.constant dense<0.000000e+00> : vector<16xf32>
    %13 = vector.multi_reduction <add>, %12, %cst_7 [1] : vector<16x512xf32> to vector<16xf32>
    %14 = vector.shape_cast %13 : vector<16xf32> to vector<16x1xf32>
    %cst_8 = arith.constant 5.120000e+02 : f32
    %15 = vector.broadcast %cst_8 : f32 to vector<16x1xf32>
    %16 = arith.divf %14, %15 : vector<16x1xf32>
    %cst_9 = arith.constant 9.99999974E-6 : f32
    %17 = vector.broadcast %cst_9 : f32 to vector<16x1xf32>
    %18 = arith.addf %16, %17 : vector<16x1xf32>
    %19 = math.rsqrt %18 : vector<16x1xf32>
    %20 = vector.broadcast %19 : vector<16x1xf32> to vector<16x512xf32>
    %21 = arith.mulf %11, %20 : vector<16x512xf32>
    %22 = vector.broadcast %4 : vector<16x1xf32> to vector<16x512xf32>
    %23 = arith.mulf %21, %22 : vector<16x512xf32>
    %24 = vector.broadcast %5 : vector<16x1xf32> to vector<16x512xf32>
    %25 = arith.addf %23, %24 : vector<16x512xf32>
    %cst_10 = arith.constant 0.000000e+00 : f32
    %26 = vector.broadcast %cst_10 : f32 to vector<16x512xf32>
    %27 = arith.maximumf %25, %26 : vector<16x512xf32>
    %c0_11 = arith.constant 0 : index
    %c0_12 = arith.constant 0 : index
    %28 = vector.load %arg3[%c0_11, %c0_12] : memref<16x128xf32, #tpu.memory_space<vmem>>, vector<16x128xf32>
    %29 = vector.extract_strided_slice %27 {offsets = [0, 0], sizes = [16, 128], strides = [1, 1]} : vector<16x512xf32> to vector<16x128xf32>
    %30 = vector.extract_strided_slice %28 {offsets = [0, 0], sizes = [1, 128], strides = [1, 1]} : vector<16x128xf32> to vector<1x128xf32>
    %31 = vector.broadcast %30 : vector<1x128xf32> to vector<16x128xf32>
    %32 = arith.mulf %29, %31 : vector<16x128xf32>
    %33 = vector.extract_strided_slice %27 {offsets = [0, 0], sizes = [16, 128], strides = [1, 1]} : vector<16x512xf32> to vector<16x128xf32>
    %34 = vector.extract_strided_slice %33 {offsets = [0, 1], sizes = [16, 127], strides = [1, 1]} : vector<16x128xf32> to vector<16x127xf32>
    %35 = vector.extract_strided_slice %33 {offsets = [0, 0], sizes = [16, 1], strides = [1, 1]} : vector<16x128xf32> to vector<16x1xf32>
    %36 = tpu.concatenate %34, %35 in 1 : vector<16x127xf32>, vector<16x1xf32> -> vector<16x128xf32>
    %37 = vector.extract_strided_slice %28 {offsets = [1, 0], sizes = [1, 128], strides = [1, 1]} : vector<16x128xf32> to vector<1x128xf32>
    %38 = vector.broadcast %37 : vector<1x128xf32> to vector<16x128xf32>
    %39 = arith.mulf %36, %38 : vector<16x128xf32>
    %40 = vector.extract_strided_slice %27 {offsets = [0, 0], sizes = [16, 128], strides = [1, 1]} : vector<16x512xf32> to vector<16x128xf32>
    %41 = vector.extract_strided_slice %40 {offsets = [0, 8], sizes = [16, 120], strides = [1, 1]} : vector<16x128xf32> to vector<16x120xf32>
    %42 = vector.extract_strided_slice %40 {offsets = [0, 0], sizes = [16, 8], strides = [1, 1]} : vector<16x128xf32> to vector<16x8xf32>
    %43 = tpu.concatenate %41, %42 in 1 : vector<16x120xf32>, vector<16x8xf32> -> vector<16x128xf32>
    %44 = vector.extract_strided_slice %28 {offsets = [2, 0], sizes = [1, 128], strides = [1, 1]} : vector<16x128xf32> to vector<1x128xf32>
    %45 = vector.broadcast %44 : vector<1x128xf32> to vector<16x128xf32>
    %46 = arith.mulf %43, %45 : vector<16x128xf32>
    %47 = vector.extract_strided_slice %27 {offsets = [0, 0], sizes = [16, 128], strides = [1, 1]} : vector<16x512xf32> to vector<16x128xf32>
    %48 = vector.extract_strided_slice %47 {offsets = [0, 9], sizes = [16, 119], strides = [1, 1]} : vector<16x128xf32> to vector<16x119xf32>
    %49 = vector.extract_strided_slice %47 {offsets = [0, 0], sizes = [16, 9], strides = [1, 1]} : vector<16x128xf32> to vector<16x9xf32>
    %50 = tpu.concatenate %48, %49 in 1 : vector<16x119xf32>, vector<16x9xf32> -> vector<16x128xf32>
    %51 = vector.extract_strided_slice %28 {offsets = [3, 0], sizes = [1, 128], strides = [1, 1]} : vector<16x128xf32> to vector<1x128xf32>
    %52 = vector.broadcast %51 : vector<1x128xf32> to vector<16x128xf32>
    %53 = arith.mulf %50, %52 : vector<16x128xf32>
    %54 = vector.extract_strided_slice %27 {offsets = [0, 128], sizes = [16, 128], strides = [1, 1]} : vector<16x512xf32> to vector<16x128xf32>
    %55 = vector.extract_strided_slice %28 {offsets = [4, 0], sizes = [1, 128], strides = [1, 1]} : vector<16x128xf32> to vector<1x128xf32>
    %56 = vector.broadcast %55 : vector<1x128xf32> to vector<16x128xf32>
    %57 = arith.mulf %54, %56 : vector<16x128xf32>
    %58 = vector.extract_strided_slice %27 {offsets = [0, 128], sizes = [16, 128], strides = [1, 1]} : vector<16x512xf32> to vector<16x128xf32>
    %59 = vector.extract_strided_slice %58 {offsets = [0, 127], sizes = [16, 1], strides = [1, 1]} : vector<16x128xf32> to vector<16x1xf32>
    %60 = vector.extract_strided_slice %58 {offsets = [0, 0], sizes = [16, 127], strides = [1, 1]} : vector<16x128xf32> to vector<16x127xf32>
    %61 = tpu.concatenate %59, %60 in 1 : vector<16x1xf32>, vector<16x127xf32> -> vector<16x128xf32>
    %62 = vector.extract_strided_slice %28 {offsets = [5, 0], sizes = [1, 128], strides = [1, 1]} : vector<16x128xf32> to vector<1x128xf32>
    %63 = vector.broadcast %62 : vector<1x128xf32> to vector<16x128xf32>
    %64 = arith.mulf %61, %63 : vector<16x128xf32>
    %65 = vector.extract_strided_slice %27 {offsets = [0, 128], sizes = [16, 128], strides = [1, 1]} : vector<16x512xf32> to vector<16x128xf32>
    %66 = vector.extract_strided_slice %65 {offsets = [0, 8], sizes = [16, 120], strides = [1, 1]} : vector<16x128xf32> to vector<16x120xf32>
    %67 = vector.extract_strided_slice %65 {offsets = [0, 0], sizes = [16, 8], strides = [1, 1]} : vector<16x128xf32> to vector<16x8xf32>
    %68 = tpu.concatenate %66, %67 in 1 : vector<16x120xf32>, vector<16x8xf32> -> vector<16x128xf32>
    %69 = vector.extract_strided_slice %28 {offsets = [6, 0], sizes = [1, 128], strides = [1, 1]} : vector<16x128xf32> to vector<1x128xf32>
    %70 = vector.broadcast %69 : vector<1x128xf32> to vector<16x128xf32>
    %71 = arith.mulf %68, %70 : vector<16x128xf32>
    %72 = vector.extract_strided_slice %27 {offsets = [0, 128], sizes = [16, 128], strides = [1, 1]} : vector<16x512xf32> to vector<16x128xf32>
    %73 = vector.extract_strided_slice %72 {offsets = [0, 7], sizes = [16, 121], strides = [1, 1]} : vector<16x128xf32> to vector<16x121xf32>
    %74 = vector.extract_strided_slice %72 {offsets = [0, 0], sizes = [16, 7], strides = [1, 1]} : vector<16x128xf32> to vector<16x7xf32>
    %75 = tpu.concatenate %73, %74 in 1 : vector<16x121xf32>, vector<16x7xf32> -> vector<16x128xf32>
    %76 = vector.extract_strided_slice %28 {offsets = [7, 0], sizes = [1, 128], strides = [1, 1]} : vector<16x128xf32> to vector<1x128xf32>
    %77 = vector.broadcast %76 : vector<1x128xf32> to vector<16x128xf32>
    %78 = arith.mulf %75, %77 : vector<16x128xf32>
    %79 = vector.extract_strided_slice %27 {offsets = [0, 256], sizes = [16, 128], strides = [1, 1]} : vector<16x512xf32> to vector<16x128xf32>
    %80 = vector.extract_strided_slice %28 {offsets = [8, 0], sizes = [1, 128], strides = [1, 1]} : vector<16x128xf32> to vector<1x128xf32>
    %81 = vector.broadcast %80 : vector<1x128xf32> to vector<16x128xf32>
    %82 = arith.mulf %79, %81 : vector<16x128xf32>
    %83 = vector.extract_strided_slice %27 {offsets = [0, 256], sizes = [16, 128], strides = [1, 1]} : vector<16x512xf32> to vector<16x128xf32>
    %84 = vector.extract_strided_slice %83 {offsets = [0, 1], sizes = [16, 127], strides = [1, 1]} : vector<16x128xf32> to vector<16x127xf32>
    %85 = vector.extract_strided_slice %83 {offsets = [0, 0], sizes = [16, 1], strides = [1, 1]} : vector<16x128xf32> to vector<16x1xf32>
    %86 = tpu.concatenate %84, %85 in 1 : vector<16x127xf32>, vector<16x1xf32> -> vector<16x128xf32>
    %87 = vector.extract_strided_slice %28 {offsets = [9, 0], sizes = [1, 128], strides = [1, 1]} : vector<16x128xf32> to vector<1x128xf32>
    %88 = vector.broadcast %87 : vector<1x128xf32> to vector<16x128xf32>
    %89 = arith.mulf %86, %88 : vector<16x128xf32>
    %90 = vector.extract_strided_slice %27 {offsets = [0, 256], sizes = [16, 128], strides = [1, 1]} : vector<16x512xf32> to vector<16x128xf32>
    %91 = vector.extract_strided_slice %90 {offsets = [0, 120], sizes = [16, 8], strides = [1, 1]} : vector<16x128xf32> to vector<16x8xf32>
    %92 = vector.extract_strided_slice %90 {offsets = [0, 0], sizes = [16, 120], strides = [1, 1]} : vector<16x128xf32> to vector<16x120xf32>
    %93 = tpu.concatenate %91, %92 in 1 : vector<16x8xf32>, vector<16x120xf32> -> vector<16x128xf32>
    %94 = vector.extract_strided_slice %28 {offsets = [10, 0], sizes = [1, 128], strides = [1, 1]} : vector<16x128xf32> to vector<1x128xf32>
    %95 = vector.broadcast %94 : vector<1x128xf32> to vector<16x128xf32>
    %96 = arith.mulf %93, %95 : vector<16x128xf32>
    %97 = vector.extract_strided_slice %27 {offsets = [0, 256], sizes = [16, 128], strides = [1, 1]} : vector<16x512xf32> to vector<16x128xf32>
    %98 = vector.extract_strided_slice %97 {offsets = [0, 121], sizes = [16, 7], strides = [1, 1]} : vector<16x128xf32> to vector<16x7xf32>
    %99 = vector.extract_strided_slice %97 {offsets = [0, 0], sizes = [16, 121], strides = [1, 1]} : vector<16x128xf32> to vector<16x121xf32>
    %100 = tpu.concatenate %98, %99 in 1 : vector<16x7xf32>, vector<16x121xf32> -> vector<16x128xf32>
    %101 = vector.extract_strided_slice %28 {offsets = [11, 0], sizes = [1, 128], strides = [1, 1]} : vector<16x128xf32> to vector<1x128xf32>
    %102 = vector.broadcast %101 : vector<1x128xf32> to vector<16x128xf32>
    %103 = arith.mulf %100, %102 : vector<16x128xf32>
    %104 = vector.extract_strided_slice %27 {offsets = [0, 384], sizes = [16, 128], strides = [1, 1]} : vector<16x512xf32> to vector<16x128xf32>
    %105 = vector.extract_strided_slice %28 {offsets = [12, 0], sizes = [1, 128], strides = [1, 1]} : vector<16x128xf32> to vector<1x128xf32>
    %106 = vector.broadcast %105 : vector<1x128xf32> to vector<16x128xf32>
    %107 = arith.mulf %104, %106 : vector<16x128xf32>
    %108 = vector.extract_strided_slice %27 {offsets = [0, 384], sizes = [16, 128], strides = [1, 1]} : vector<16x512xf32> to vector<16x128xf32>
    %109 = vector.extract_strided_slice %108 {offsets = [0, 127], sizes = [16, 1], strides = [1, 1]} : vector<16x128xf32> to vector<16x1xf32>
    %110 = vector.extract_strided_slice %108 {offsets = [0, 0], sizes = [16, 127], strides = [1, 1]} : vector<16x128xf32> to vector<16x127xf32>
    %111 = tpu.concatenate %109, %110 in 1 : vector<16x1xf32>, vector<16x127xf32> -> vector<16x128xf32>
    %112 = vector.extract_strided_slice %28 {offsets = [13, 0], sizes = [1, 128], strides = [1, 1]} : vector<16x128xf32> to vector<1x128xf32>
    %113 = vector.broadcast %112 : vector<1x128xf32> to vector<16x128xf32>
    %114 = arith.mulf %111, %113 : vector<16x128xf32>
    %115 = vector.extract_strided_slice %27 {offsets = [0, 384], sizes = [16, 128], strides = [1, 1]} : vector<16x512xf32> to vector<16x128xf32>
    %116 = vector.extract_strided_slice %115 {offsets = [0, 120], sizes = [16, 8], strides = [1, 1]} : vector<16x128xf32> to vector<16x8xf32>
    %117 = vector.extract_strided_slice %115 {offsets = [0, 0], sizes = [16, 120], strides = [1, 1]} : vector<16x128xf32> to vector<16x120xf32>
    %118 = tpu.concatenate %116, %117 in 1 : vector<16x8xf32>, vector<16x120xf32> -> vector<16x128xf32>
    %119 = vector.extract_strided_slice %28 {offsets = [14, 0], sizes = [1, 128], strides = [1, 1]} : vector<16x128xf32> to vector<1x128xf32>
    %120 = vector.broadcast %119 : vector<1x128xf32> to vector<16x128xf32>
    %121 = arith.mulf %118, %120 : vector<16x128xf32>
    %122 = vector.extract_strided_slice %27 {offsets = [0, 384], sizes = [16, 128], strides = [1, 1]} : vector<16x512xf32> to vector<16x128xf32>
    %123 = vector.extract_strided_slice %122 {offsets = [0, 119], sizes = [16, 9], strides = [1, 1]} : vector<16x128xf32> to vector<16x9xf32>
    %124 = vector.extract_strided_slice %122 {offsets = [0, 0], sizes = [16, 119], strides = [1, 1]} : vector<16x128xf32> to vector<16x119xf32>
    %125 = tpu.concatenate %123, %124 in 1 : vector<16x9xf32>, vector<16x119xf32> -> vector<16x128xf32>
    %126 = vector.extract_strided_slice %28 {offsets = [15, 0], sizes = [1, 128], strides = [1, 1]} : vector<16x128xf32> to vector<1x128xf32>
    %127 = vector.broadcast %126 : vector<1x128xf32> to vector<16x128xf32>
    %128 = arith.mulf %125, %127 : vector<16x128xf32>
    %129 = tpu.concatenate %32, %39, %46, %53, %57, %64, %71, %78, %82, %89, %96, %103, %107, %114, %121, %128 in 0 : vector<16x128xf32>, vector<16x128xf32>, vector<16x128xf32>, vector<16x128xf32>, vector<16x128xf32>, vector<16x128xf32>, vector<16x128xf32>, vector<16x128xf32>, vector<16x128xf32>, vector<16x128xf32>, vector<16x128xf32>, vector<16x128xf32>, vector<16x128xf32>, vector<16x128xf32>, vector<16x128xf32>, vector<16x128xf32> -> vector<256x128xf32>
    %c0_13 = arith.constant 0 : index
    %c0_14 = arith.constant 0 : index
    %130 = vector.load %arg2[%c0_13, %c0_14] : memref<16x256xf32, #tpu.memory_space<vmem>>, vector<16x256xf32>
    %cst_15 = arith.constant dense<0.000000e+00> : vector<16x128xf32>
    %131 = tpu.matmul %130, %129, %cst_15 {dimension_numbers = #tpu.dot_dimension_numbers<[1], [0], [0], [1], [0, 0, 1, 1], [], []>} : vector<16x256xf32>, vector<256x128xf32>, vector<16x128xf32> -> vector<16x128xf32>
    %132 = vector.extract_strided_slice %0 {offsets = [0, 1], sizes = [16, 1], strides = [1, 1]} : vector<16x8xf32> to vector<16x1xf32>
    %133 = vector.extract_strided_slice %0 {offsets = [0, 5], sizes = [16, 1], strides = [1, 1]} : vector<16x8xf32> to vector<16x1xf32>
    %cst_16 = arith.constant dense<0.000000e+00> : vector<16xf32>
    %134 = vector.multi_reduction <add>, %131, %cst_16 [1] : vector<16x128xf32> to vector<16xf32>
    %135 = vector.shape_cast %134 : vector<16xf32> to vector<16x1xf32>
    %cst_17 = arith.constant 1.280000e+02 : f32
    %136 = vector.broadcast %cst_17 : f32 to vector<16x1xf32>
    %137 = arith.divf %135, %136 : vector<16x1xf32>
    %138 = vector.broadcast %137 : vector<16x1xf32> to vector<16x128xf32>
    %139 = arith.subf %131, %138 : vector<16x128xf32>
    %140 = arith.mulf %139, %139 : vector<16x128xf32>
    %cst_18 = arith.constant dense<0.000000e+00> : vector<16xf32>
    %141 = vector.multi_reduction <add>, %140, %cst_18 [1] : vector<16x128xf32> to vector<16xf32>
    %142 = vector.shape_cast %141 : vector<16xf32> to vector<16x1xf32>
    %cst_19 = arith.constant 1.280000e+02 : f32
    %143 = vector.broadcast %cst_19 : f32 to vector<16x1xf32>
    %144 = arith.divf %142, %143 : vector<16x1xf32>
    %cst_20 = arith.constant 9.99999974E-6 : f32
    %145 = vector.broadcast %cst_20 : f32 to vector<16x1xf32>
    %146 = arith.addf %144, %145 : vector<16x1xf32>
    %147 = math.rsqrt %146 : vector<16x1xf32>
    %148 = vector.broadcast %147 : vector<16x1xf32> to vector<16x128xf32>
    %149 = arith.mulf %139, %148 : vector<16x128xf32>
    %150 = vector.broadcast %132 : vector<16x1xf32> to vector<16x128xf32>
    %151 = arith.mulf %149, %150 : vector<16x128xf32>
    %152 = vector.broadcast %133 : vector<16x1xf32> to vector<16x128xf32>
    %153 = arith.addf %151, %152 : vector<16x128xf32>
    %cst_21 = arith.constant 0.000000e+00 : f32
    %154 = vector.broadcast %cst_21 : f32 to vector<16x128xf32>
    %155 = arith.maximumf %153, %154 : vector<16x128xf32>
    %c0_22 = arith.constant 0 : index
    %c0_23 = arith.constant 0 : index
    %156 = vector.load %arg4[%c0_22, %c0_23] : memref<128x128xf32, #tpu.memory_space<vmem>>, vector<128x128xf32>
    %cst_24 = arith.constant dense<0.000000e+00> : vector<16x128xf32>
    %157 = tpu.matmul %155, %156, %cst_24 {dimension_numbers = #tpu.dot_dimension_numbers<[1], [0], [0], [1], [0, 0, 1, 1], [], []>} : vector<16x128xf32>, vector<128x128xf32>, vector<16x128xf32> -> vector<16x128xf32>
    %c0_25 = arith.constant 0 : index
    %c0_26 = arith.constant 0 : index
    %158 = vector.load %arg6[%c0_25, %c0_26] : memref<16x32xf32, #tpu.memory_space<vmem>>, vector<16x32xf32>
    %159 = vector.extract_strided_slice %157 {offsets = [0, 0], sizes = [16, 32], strides = [1, 1]} : vector<16x128xf32> to vector<16x32xf32>
    %160 = vector.extract_strided_slice %158 {offsets = [0, 0], sizes = [1, 32], strides = [1, 1]} : vector<16x32xf32> to vector<1x32xf32>
    %161 = vector.broadcast %160 : vector<1x32xf32> to vector<16x32xf32>
    %162 = arith.mulf %159, %161 : vector<16x32xf32>
    %163 = vector.extract_strided_slice %157 {offsets = [0, 0], sizes = [16, 32], strides = [1, 1]} : vector<16x128xf32> to vector<16x32xf32>
    %164 = vector.extract_strided_slice %163 {offsets = [0, 1], sizes = [16, 31], strides = [1, 1]} : vector<16x32xf32> to vector<16x31xf32>
    %165 = vector.extract_strided_slice %163 {offsets = [0, 0], sizes = [16, 1], strides = [1, 1]} : vector<16x32xf32> to vector<16x1xf32>
    %166 = tpu.concatenate %164, %165 in 1 : vector<16x31xf32>, vector<16x1xf32> -> vector<16x32xf32>
    %167 = vector.extract_strided_slice %158 {offsets = [1, 0], sizes = [1, 32], strides = [1, 1]} : vector<16x32xf32> to vector<1x32xf32>
    %168 = vector.broadcast %167 : vector<1x32xf32> to vector<16x32xf32>
    %169 = arith.mulf %166, %168 : vector<16x32xf32>
    %170 = vector.extract_strided_slice %157 {offsets = [0, 0], sizes = [16, 32], strides = [1, 1]} : vector<16x128xf32> to vector<16x32xf32>
    %171 = vector.extract_strided_slice %170 {offsets = [0, 4], sizes = [16, 28], strides = [1, 1]} : vector<16x32xf32> to vector<16x28xf32>
    %172 = vector.extract_strided_slice %170 {offsets = [0, 0], sizes = [16, 4], strides = [1, 1]} : vector<16x32xf32> to vector<16x4xf32>
    %173 = tpu.concatenate %171, %172 in 1 : vector<16x28xf32>, vector<16x4xf32> -> vector<16x32xf32>
    %174 = vector.extract_strided_slice %158 {offsets = [2, 0], sizes = [1, 32], strides = [1, 1]} : vector<16x32xf32> to vector<1x32xf32>
    %175 = vector.broadcast %174 : vector<1x32xf32> to vector<16x32xf32>
    %176 = arith.mulf %173, %175 : vector<16x32xf32>
    %177 = vector.extract_strided_slice %157 {offsets = [0, 0], sizes = [16, 32], strides = [1, 1]} : vector<16x128xf32> to vector<16x32xf32>
    %178 = vector.extract_strided_slice %177 {offsets = [0, 5], sizes = [16, 27], strides = [1, 1]} : vector<16x32xf32> to vector<16x27xf32>
    %179 = vector.extract_strided_slice %177 {offsets = [0, 0], sizes = [16, 5], strides = [1, 1]} : vector<16x32xf32> to vector<16x5xf32>
    %180 = tpu.concatenate %178, %179 in 1 : vector<16x27xf32>, vector<16x5xf32> -> vector<16x32xf32>
    %181 = vector.extract_strided_slice %158 {offsets = [3, 0], sizes = [1, 32], strides = [1, 1]} : vector<16x32xf32> to vector<1x32xf32>
    %182 = vector.broadcast %181 : vector<1x32xf32> to vector<16x32xf32>
    %183 = arith.mulf %180, %182 : vector<16x32xf32>
    %184 = vector.extract_strided_slice %157 {offsets = [0, 32], sizes = [16, 32], strides = [1, 1]} : vector<16x128xf32> to vector<16x32xf32>
    %185 = vector.extract_strided_slice %158 {offsets = [4, 0], sizes = [1, 32], strides = [1, 1]} : vector<16x32xf32> to vector<1x32xf32>
    %186 = vector.broadcast %185 : vector<1x32xf32> to vector<16x32xf32>
    %187 = arith.mulf %184, %186 : vector<16x32xf32>
    %188 = vector.extract_strided_slice %157 {offsets = [0, 32], sizes = [16, 32], strides = [1, 1]} : vector<16x128xf32> to vector<16x32xf32>
    %189 = vector.extract_strided_slice %188 {offsets = [0, 31], sizes = [16, 1], strides = [1, 1]} : vector<16x32xf32> to vector<16x1xf32>
    %190 = vector.extract_strided_slice %188 {offsets = [0, 0], sizes = [16, 31], strides = [1, 1]} : vector<16x32xf32> to vector<16x31xf32>
    %191 = tpu.concatenate %189, %190 in 1 : vector<16x1xf32>, vector<16x31xf32> -> vector<16x32xf32>
    %192 = vector.extract_strided_slice %158 {offsets = [5, 0], sizes = [1, 32], strides = [1, 1]} : vector<16x32xf32> to vector<1x32xf32>
    %193 = vector.broadcast %192 : vector<1x32xf32> to vector<16x32xf32>
    %194 = arith.mulf %191, %193 : vector<16x32xf32>
    %195 = vector.extract_strided_slice %157 {offsets = [0, 32], sizes = [16, 32], strides = [1, 1]} : vector<16x128xf32> to vector<16x32xf32>
    %196 = vector.extract_strided_slice %195 {offsets = [0, 4], sizes = [16, 28], strides = [1, 1]} : vector<16x32xf32> to vector<16x28xf32>
    %197 = vector.extract_strided_slice %195 {offsets = [0, 0], sizes = [16, 4], strides = [1, 1]} : vector<16x32xf32> to vector<16x4xf32>
    %198 = tpu.concatenate %196, %197 in 1 : vector<16x28xf32>, vector<16x4xf32> -> vector<16x32xf32>
    %199 = vector.extract_strided_slice %158 {offsets = [6, 0], sizes = [1, 32], strides = [1, 1]} : vector<16x32xf32> to vector<1x32xf32>
    %200 = vector.broadcast %199 : vector<1x32xf32> to vector<16x32xf32>
    %201 = arith.mulf %198, %200 : vector<16x32xf32>
    %202 = vector.extract_strided_slice %157 {offsets = [0, 32], sizes = [16, 32], strides = [1, 1]} : vector<16x128xf32> to vector<16x32xf32>
    %203 = vector.extract_strided_slice %202 {offsets = [0, 3], sizes = [16, 29], strides = [1, 1]} : vector<16x32xf32> to vector<16x29xf32>
    %204 = vector.extract_strided_slice %202 {offsets = [0, 0], sizes = [16, 3], strides = [1, 1]} : vector<16x32xf32> to vector<16x3xf32>
    %205 = tpu.concatenate %203, %204 in 1 : vector<16x29xf32>, vector<16x3xf32> -> vector<16x32xf32>
    %206 = vector.extract_strided_slice %158 {offsets = [7, 0], sizes = [1, 32], strides = [1, 1]} : vector<16x32xf32> to vector<1x32xf32>
    %207 = vector.broadcast %206 : vector<1x32xf32> to vector<16x32xf32>
    %208 = arith.mulf %205, %207 : vector<16x32xf32>
    %209 = vector.extract_strided_slice %157 {offsets = [0, 64], sizes = [16, 32], strides = [1, 1]} : vector<16x128xf32> to vector<16x32xf32>
    %210 = vector.extract_strided_slice %158 {offsets = [8, 0], sizes = [1, 32], strides = [1, 1]} : vector<16x32xf32> to vector<1x32xf32>
    %211 = vector.broadcast %210 : vector<1x32xf32> to vector<16x32xf32>
    %212 = arith.mulf %209, %211 : vector<16x32xf32>
    %213 = vector.extract_strided_slice %157 {offsets = [0, 64], sizes = [16, 32], strides = [1, 1]} : vector<16x128xf32> to vector<16x32xf32>
    %214 = vector.extract_strided_slice %213 {offsets = [0, 1], sizes = [16, 31], strides = [1, 1]} : vector<16x32xf32> to vector<16x31xf32>
    %215 = vector.extract_strided_slice %213 {offsets = [0, 0], sizes = [16, 1], strides = [1, 1]} : vector<16x32xf32> to vector<16x1xf32>
    %216 = tpu.concatenate %214, %215 in 1 : vector<16x31xf32>, vector<16x1xf32> -> vector<16x32xf32>
    %217 = vector.extract_strided_slice %158 {offsets = [9, 0], sizes = [1, 32], strides = [1, 1]} : vector<16x32xf32> to vector<1x32xf32>
    %218 = vector.broadcast %217 : vector<1x32xf32> to vector<16x32xf32>
    %219 = arith.mulf %216, %218 : vector<16x32xf32>
    %220 = vector.extract_strided_slice %157 {offsets = [0, 64], sizes = [16, 32], strides = [1, 1]} : vector<16x128xf32> to vector<16x32xf32>
    %221 = vector.extract_strided_slice %220 {offsets = [0, 28], sizes = [16, 4], strides = [1, 1]} : vector<16x32xf32> to vector<16x4xf32>
    %222 = vector.extract_strided_slice %220 {offsets = [0, 0], sizes = [16, 28], strides = [1, 1]} : vector<16x32xf32> to vector<16x28xf32>
    %223 = tpu.concatenate %221, %222 in 1 : vector<16x4xf32>, vector<16x28xf32> -> vector<16x32xf32>
    %224 = vector.extract_strided_slice %158 {offsets = [10, 0], sizes = [1, 32], strides = [1, 1]} : vector<16x32xf32> to vector<1x32xf32>
    %225 = vector.broadcast %224 : vector<1x32xf32> to vector<16x32xf32>
    %226 = arith.mulf %223, %225 : vector<16x32xf32>
    %227 = vector.extract_strided_slice %157 {offsets = [0, 64], sizes = [16, 32], strides = [1, 1]} : vector<16x128xf32> to vector<16x32xf32>
    %228 = vector.extract_strided_slice %227 {offsets = [0, 29], sizes = [16, 3], strides = [1, 1]} : vector<16x32xf32> to vector<16x3xf32>
    %229 = vector.extract_strided_slice %227 {offsets = [0, 0], sizes = [16, 29], strides = [1, 1]} : vector<16x32xf32> to vector<16x29xf32>
    %230 = tpu.concatenate %228, %229 in 1 : vector<16x3xf32>, vector<16x29xf32> -> vector<16x32xf32>
    %231 = vector.extract_strided_slice %158 {offsets = [11, 0], sizes = [1, 32], strides = [1, 1]} : vector<16x32xf32> to vector<1x32xf32>
    %232 = vector.broadcast %231 : vector<1x32xf32> to vector<16x32xf32>
    %233 = arith.mulf %230, %232 : vector<16x32xf32>
    %234 = vector.extract_strided_slice %157 {offsets = [0, 96], sizes = [16, 32], strides = [1, 1]} : vector<16x128xf32> to vector<16x32xf32>
    %235 = vector.extract_strided_slice %158 {offsets = [12, 0], sizes = [1, 32], strides = [1, 1]} : vector<16x32xf32> to vector<1x32xf32>
    %236 = vector.broadcast %235 : vector<1x32xf32> to vector<16x32xf32>
    %237 = arith.mulf %234, %236 : vector<16x32xf32>
    %238 = vector.extract_strided_slice %157 {offsets = [0, 96], sizes = [16, 32], strides = [1, 1]} : vector<16x128xf32> to vector<16x32xf32>
    %239 = vector.extract_strided_slice %238 {offsets = [0, 31], sizes = [16, 1], strides = [1, 1]} : vector<16x32xf32> to vector<16x1xf32>
    %240 = vector.extract_strided_slice %238 {offsets = [0, 0], sizes = [16, 31], strides = [1, 1]} : vector<16x32xf32> to vector<16x31xf32>
    %241 = tpu.concatenate %239, %240 in 1 : vector<16x1xf32>, vector<16x31xf32> -> vector<16x32xf32>
    %242 = vector.extract_strided_slice %158 {offsets = [13, 0], sizes = [1, 32], strides = [1, 1]} : vector<16x32xf32> to vector<1x32xf32>
    %243 = vector.broadcast %242 : vector<1x32xf32> to vector<16x32xf32>
    %244 = arith.mulf %241, %243 : vector<16x32xf32>
    %245 = vector.extract_strided_slice %157 {offsets = [0, 96], sizes = [16, 32], strides = [1, 1]} : vector<16x128xf32> to vector<16x32xf32>
    %246 = vector.extract_strided_slice %245 {offsets = [0, 28], sizes = [16, 4], strides = [1, 1]} : vector<16x32xf32> to vector<16x4xf32>
    %247 = vector.extract_strided_slice %245 {offsets = [0, 0], sizes = [16, 28], strides = [1, 1]} : vector<16x32xf32> to vector<16x28xf32>
    %248 = tpu.concatenate %246, %247 in 1 : vector<16x4xf32>, vector<16x28xf32> -> vector<16x32xf32>
    %249 = vector.extract_strided_slice %158 {offsets = [14, 0], sizes = [1, 32], strides = [1, 1]} : vector<16x32xf32> to vector<1x32xf32>
    %250 = vector.broadcast %249 : vector<1x32xf32> to vector<16x32xf32>
    %251 = arith.mulf %248, %250 : vector<16x32xf32>
    %252 = vector.extract_strided_slice %157 {offsets = [0, 96], sizes = [16, 32], strides = [1, 1]} : vector<16x128xf32> to vector<16x32xf32>
    %253 = vector.extract_strided_slice %252 {offsets = [0, 27], sizes = [16, 5], strides = [1, 1]} : vector<16x32xf32> to vector<16x5xf32>
    %254 = vector.extract_strided_slice %252 {offsets = [0, 0], sizes = [16, 27], strides = [1, 1]} : vector<16x32xf32> to vector<16x27xf32>
    %255 = tpu.concatenate %253, %254 in 1 : vector<16x5xf32>, vector<16x27xf32> -> vector<16x32xf32>
    %256 = vector.extract_strided_slice %158 {offsets = [15, 0], sizes = [1, 32], strides = [1, 1]} : vector<16x32xf32> to vector<1x32xf32>
    %257 = vector.broadcast %256 : vector<1x32xf32> to vector<16x32xf32>
    %258 = arith.mulf %255, %257 : vector<16x32xf32>
    %259 = tpu.concatenate %162, %169, %176, %183, %187, %194, %201, %208, %212, %219, %226, %233, %237, %244, %251, %258 in 0 : vector<16x32xf32>, vector<16x32xf32>, vector<16x32xf32>, vector<16x32xf32>, vector<16x32xf32>, vector<16x32xf32>, vector<16x32xf32>, vector<16x32xf32>, vector<16x32xf32>, vector<16x32xf32>, vector<16x32xf32>, vector<16x32xf32>, vector<16x32xf32>, vector<16x32xf32>, vector<16x32xf32>, vector<16x32xf32> -> vector<256x32xf32>
    %c0_27 = arith.constant 0 : index
    %c0_28 = arith.constant 0 : index
    %260 = vector.load %arg5[%c0_27, %c0_28] : memref<16x256xf32, #tpu.memory_space<vmem>>, vector<16x256xf32>
    %cst_29 = arith.constant dense<0.000000e+00> : vector<16x32xf32>
    %261 = tpu.matmul %260, %259, %cst_29 {dimension_numbers = #tpu.dot_dimension_numbers<[1], [0], [0], [1], [0, 0, 1, 1], [], []>} : vector<16x256xf32>, vector<256x32xf32>, vector<16x32xf32> -> vector<16x32xf32>
    %262 = vector.extract_strided_slice %0 {offsets = [0, 2], sizes = [16, 1], strides = [1, 1]} : vector<16x8xf32> to vector<16x1xf32>
    %263 = vector.extract_strided_slice %0 {offsets = [0, 6], sizes = [16, 1], strides = [1, 1]} : vector<16x8xf32> to vector<16x1xf32>
    %cst_30 = arith.constant dense<0.000000e+00> : vector<16xf32>
    %264 = vector.multi_reduction <add>, %261, %cst_30 [1] : vector<16x32xf32> to vector<16xf32>
    %265 = vector.shape_cast %264 : vector<16xf32> to vector<16x1xf32>
    %cst_31 = arith.constant 3.200000e+01 : f32
    %266 = vector.broadcast %cst_31 : f32 to vector<16x1xf32>
    %267 = arith.divf %265, %266 : vector<16x1xf32>
    %268 = vector.broadcast %267 : vector<16x1xf32> to vector<16x32xf32>
    %269 = arith.subf %261, %268 : vector<16x32xf32>
    %270 = arith.mulf %269, %269 : vector<16x32xf32>
    %cst_32 = arith.constant dense<0.000000e+00> : vector<16xf32>
    %271 = vector.multi_reduction <add>, %270, %cst_32 [1] : vector<16x32xf32> to vector<16xf32>
    %272 = vector.shape_cast %271 : vector<16xf32> to vector<16x1xf32>
    %cst_33 = arith.constant 3.200000e+01 : f32
    %273 = vector.broadcast %cst_33 : f32 to vector<16x1xf32>
    %274 = arith.divf %272, %273 : vector<16x1xf32>
    %cst_34 = arith.constant 9.99999974E-6 : f32
    %275 = vector.broadcast %cst_34 : f32 to vector<16x1xf32>
    %276 = arith.addf %274, %275 : vector<16x1xf32>
    %277 = math.rsqrt %276 : vector<16x1xf32>
    %278 = vector.broadcast %277 : vector<16x1xf32> to vector<16x32xf32>
    %279 = arith.mulf %269, %278 : vector<16x32xf32>
    %280 = vector.broadcast %262 : vector<16x1xf32> to vector<16x32xf32>
    %281 = arith.mulf %279, %280 : vector<16x32xf32>
    %282 = vector.broadcast %263 : vector<16x1xf32> to vector<16x32xf32>
    %283 = arith.addf %281, %282 : vector<16x32xf32>
    %cst_35 = arith.constant 0.000000e+00 : f32
    %284 = vector.broadcast %cst_35 : f32 to vector<16x32xf32>
    %285 = arith.maximumf %283, %284 : vector<16x32xf32>
    %c0_36 = arith.constant 0 : index
    %c0_37 = arith.constant 0 : index
    %286 = vector.load %arg8[%c0_36, %c0_37] : memref<25x32xf32, #tpu.memory_space<vmem>>, vector<25x32xf32>
    %287 = vector.extract_strided_slice %285 {offsets = [0, 22], sizes = [16, 10], strides = [1, 1]} : vector<16x32xf32> to vector<16x10xf32>
    %288 = vector.extract_strided_slice %285 {offsets = [0, 0], sizes = [16, 22], strides = [1, 1]} : vector<16x32xf32> to vector<16x22xf32>
    %289 = tpu.concatenate %287, %288 in 1 : vector<16x10xf32>, vector<16x22xf32> -> vector<16x32xf32>
    %290 = vector.extract_strided_slice %286 {offsets = [0, 0], sizes = [1, 32], strides = [1, 1]} : vector<25x32xf32> to vector<1x32xf32>
    %291 = vector.broadcast %290 : vector<1x32xf32> to vector<16x32xf32>
    %292 = arith.mulf %289, %291 : vector<16x32xf32>
    %293 = vector.extract_strided_slice %285 {offsets = [0, 23], sizes = [16, 9], strides = [1, 1]} : vector<16x32xf32> to vector<16x9xf32>
    %294 = vector.extract_strided_slice %285 {offsets = [0, 0], sizes = [16, 23], strides = [1, 1]} : vector<16x32xf32> to vector<16x23xf32>
    %295 = tpu.concatenate %293, %294 in 1 : vector<16x9xf32>, vector<16x23xf32> -> vector<16x32xf32>
    %296 = vector.extract_strided_slice %286 {offsets = [1, 0], sizes = [1, 32], strides = [1, 1]} : vector<25x32xf32> to vector<1x32xf32>
    %297 = vector.broadcast %296 : vector<1x32xf32> to vector<16x32xf32>
    %298 = arith.mulf %295, %297 : vector<16x32xf32>
    %299 = vector.extract_strided_slice %285 {offsets = [0, 24], sizes = [16, 8], strides = [1, 1]} : vector<16x32xf32> to vector<16x8xf32>
    %300 = vector.extract_strided_slice %285 {offsets = [0, 0], sizes = [16, 24], strides = [1, 1]} : vector<16x32xf32> to vector<16x24xf32>
    %301 = tpu.concatenate %299, %300 in 1 : vector<16x8xf32>, vector<16x24xf32> -> vector<16x32xf32>
    %302 = vector.extract_strided_slice %286 {offsets = [2, 0], sizes = [1, 32], strides = [1, 1]} : vector<25x32xf32> to vector<1x32xf32>
    %303 = vector.broadcast %302 : vector<1x32xf32> to vector<16x32xf32>
    %304 = arith.mulf %301, %303 : vector<16x32xf32>
    %305 = vector.extract_strided_slice %285 {offsets = [0, 25], sizes = [16, 7], strides = [1, 1]} : vector<16x32xf32> to vector<16x7xf32>
    %306 = vector.extract_strided_slice %285 {offsets = [0, 0], sizes = [16, 25], strides = [1, 1]} : vector<16x32xf32> to vector<16x25xf32>
    %307 = tpu.concatenate %305, %306 in 1 : vector<16x7xf32>, vector<16x25xf32> -> vector<16x32xf32>
    %308 = vector.extract_strided_slice %286 {offsets = [3, 0], sizes = [1, 32], strides = [1, 1]} : vector<25x32xf32> to vector<1x32xf32>
    %309 = vector.broadcast %308 : vector<1x32xf32> to vector<16x32xf32>
    %310 = arith.mulf %307, %309 : vector<16x32xf32>
    %311 = vector.extract_strided_slice %285 {offsets = [0, 26], sizes = [16, 6], strides = [1, 1]} : vector<16x32xf32> to vector<16x6xf32>
    %312 = vector.extract_strided_slice %285 {offsets = [0, 0], sizes = [16, 26], strides = [1, 1]} : vector<16x32xf32> to vector<16x26xf32>
    %313 = tpu.concatenate %311, %312 in 1 : vector<16x6xf32>, vector<16x26xf32> -> vector<16x32xf32>
    %314 = vector.extract_strided_slice %286 {offsets = [4, 0], sizes = [1, 32], strides = [1, 1]} : vector<25x32xf32> to vector<1x32xf32>
    %315 = vector.broadcast %314 : vector<1x32xf32> to vector<16x32xf32>
    %316 = arith.mulf %313, %315 : vector<16x32xf32>
    %317 = vector.extract_strided_slice %285 {offsets = [0, 26], sizes = [16, 6], strides = [1, 1]} : vector<16x32xf32> to vector<16x6xf32>
    %318 = vector.extract_strided_slice %285 {offsets = [0, 0], sizes = [16, 26], strides = [1, 1]} : vector<16x32xf32> to vector<16x26xf32>
    %319 = tpu.concatenate %317, %318 in 1 : vector<16x6xf32>, vector<16x26xf32> -> vector<16x32xf32>
    %320 = vector.extract_strided_slice %286 {offsets = [5, 0], sizes = [1, 32], strides = [1, 1]} : vector<25x32xf32> to vector<1x32xf32>
    %321 = vector.broadcast %320 : vector<1x32xf32> to vector<16x32xf32>
    %322 = arith.mulf %319, %321 : vector<16x32xf32>
    %323 = vector.extract_strided_slice %285 {offsets = [0, 27], sizes = [16, 5], strides = [1, 1]} : vector<16x32xf32> to vector<16x5xf32>
    %324 = vector.extract_strided_slice %285 {offsets = [0, 0], sizes = [16, 27], strides = [1, 1]} : vector<16x32xf32> to vector<16x27xf32>
    %325 = tpu.concatenate %323, %324 in 1 : vector<16x5xf32>, vector<16x27xf32> -> vector<16x32xf32>
    %326 = vector.extract_strided_slice %286 {offsets = [6, 0], sizes = [1, 32], strides = [1, 1]} : vector<25x32xf32> to vector<1x32xf32>
    %327 = vector.broadcast %326 : vector<1x32xf32> to vector<16x32xf32>
    %328 = arith.mulf %325, %327 : vector<16x32xf32>
    %329 = vector.extract_strided_slice %285 {offsets = [0, 28], sizes = [16, 4], strides = [1, 1]} : vector<16x32xf32> to vector<16x4xf32>
    %330 = vector.extract_strided_slice %285 {offsets = [0, 0], sizes = [16, 28], strides = [1, 1]} : vector<16x32xf32> to vector<16x28xf32>
    %331 = tpu.concatenate %329, %330 in 1 : vector<16x4xf32>, vector<16x28xf32> -> vector<16x32xf32>
    %332 = vector.extract_strided_slice %286 {offsets = [7, 0], sizes = [1, 32], strides = [1, 1]} : vector<25x32xf32> to vector<1x32xf32>
    %333 = vector.broadcast %332 : vector<1x32xf32> to vector<16x32xf32>
    %334 = arith.mulf %331, %333 : vector<16x32xf32>
    %335 = vector.extract_strided_slice %285 {offsets = [0, 29], sizes = [16, 3], strides = [1, 1]} : vector<16x32xf32> to vector<16x3xf32>
    %336 = vector.extract_strided_slice %285 {offsets = [0, 0], sizes = [16, 29], strides = [1, 1]} : vector<16x32xf32> to vector<16x29xf32>
    %337 = tpu.concatenate %335, %336 in 1 : vector<16x3xf32>, vector<16x29xf32> -> vector<16x32xf32>
    %338 = vector.extract_strided_slice %286 {offsets = [8, 0], sizes = [1, 32], strides = [1, 1]} : vector<25x32xf32> to vector<1x32xf32>
    %339 = vector.broadcast %338 : vector<1x32xf32> to vector<16x32xf32>
    %340 = arith.mulf %337, %339 : vector<16x32xf32>
    %341 = vector.extract_strided_slice %285 {offsets = [0, 30], sizes = [16, 2], strides = [1, 1]} : vector<16x32xf32> to vector<16x2xf32>
    %342 = vector.extract_strided_slice %285 {offsets = [0, 0], sizes = [16, 30], strides = [1, 1]} : vector<16x32xf32> to vector<16x30xf32>
    %343 = tpu.concatenate %341, %342 in 1 : vector<16x2xf32>, vector<16x30xf32> -> vector<16x32xf32>
    %344 = vector.extract_strided_slice %286 {offsets = [9, 0], sizes = [1, 32], strides = [1, 1]} : vector<25x32xf32> to vector<1x32xf32>
    %345 = vector.broadcast %344 : vector<1x32xf32> to vector<16x32xf32>
    %346 = arith.mulf %343, %345 : vector<16x32xf32>
    %347 = vector.extract_strided_slice %285 {offsets = [0, 30], sizes = [16, 2], strides = [1, 1]} : vector<16x32xf32> to vector<16x2xf32>
    %348 = vector.extract_strided_slice %285 {offsets = [0, 0], sizes = [16, 30], strides = [1, 1]} : vector<16x32xf32> to vector<16x30xf32>
    %349 = tpu.concatenate %347, %348 in 1 : vector<16x2xf32>, vector<16x30xf32> -> vector<16x32xf32>
    %350 = vector.extract_strided_slice %286 {offsets = [10, 0], sizes = [1, 32], strides = [1, 1]} : vector<25x32xf32> to vector<1x32xf32>
    %351 = vector.broadcast %350 : vector<1x32xf32> to vector<16x32xf32>
    %352 = arith.mulf %349, %351 : vector<16x32xf32>
    %353 = vector.extract_strided_slice %285 {offsets = [0, 31], sizes = [16, 1], strides = [1, 1]} : vector<16x32xf32> to vector<16x1xf32>
    %354 = vector.extract_strided_slice %285 {offsets = [0, 0], sizes = [16, 31], strides = [1, 1]} : vector<16x32xf32> to vector<16x31xf32>
    %355 = tpu.concatenate %353, %354 in 1 : vector<16x1xf32>, vector<16x31xf32> -> vector<16x32xf32>
    %356 = vector.extract_strided_slice %286 {offsets = [11, 0], sizes = [1, 32], strides = [1, 1]} : vector<25x32xf32> to vector<1x32xf32>
    %357 = vector.broadcast %356 : vector<1x32xf32> to vector<16x32xf32>
    %358 = arith.mulf %355, %357 : vector<16x32xf32>
    %359 = vector.extract_strided_slice %286 {offsets = [12, 0], sizes = [1, 32], strides = [1, 1]} : vector<25x32xf32> to vector<1x32xf32>
    %360 = vector.broadcast %359 : vector<1x32xf32> to vector<16x32xf32>
    %361 = arith.mulf %285, %360 : vector<16x32xf32>
    %362 = vector.extract_strided_slice %285 {offsets = [0, 1], sizes = [16, 31], strides = [1, 1]} : vector<16x32xf32> to vector<16x31xf32>
    %363 = vector.extract_strided_slice %285 {offsets = [0, 0], sizes = [16, 1], strides = [1, 1]} : vector<16x32xf32> to vector<16x1xf32>
    %364 = tpu.concatenate %362, %363 in 1 : vector<16x31xf32>, vector<16x1xf32> -> vector<16x32xf32>
    %365 = vector.extract_strided_slice %286 {offsets = [13, 0], sizes = [1, 32], strides = [1, 1]} : vector<25x32xf32> to vector<1x32xf32>
    %366 = vector.broadcast %365 : vector<1x32xf32> to vector<16x32xf32>
    %367 = arith.mulf %364, %366 : vector<16x32xf32>
    %368 = vector.extract_strided_slice %285 {offsets = [0, 2], sizes = [16, 30], strides = [1, 1]} : vector<16x32xf32> to vector<16x30xf32>
    %369 = vector.extract_strided_slice %285 {offsets = [0, 0], sizes = [16, 2], strides = [1, 1]} : vector<16x32xf32> to vector<16x2xf32>
    %370 = tpu.concatenate %368, %369 in 1 : vector<16x30xf32>, vector<16x2xf32> -> vector<16x32xf32>
    %371 = vector.extract_strided_slice %286 {offsets = [14, 0], sizes = [1, 32], strides = [1, 1]} : vector<25x32xf32> to vector<1x32xf32>
    %372 = vector.broadcast %371 : vector<1x32xf32> to vector<16x32xf32>
    %373 = arith.mulf %370, %372 : vector<16x32xf32>
    %374 = vector.extract_strided_slice %285 {offsets = [0, 2], sizes = [16, 30], strides = [1, 1]} : vector<16x32xf32> to vector<16x30xf32>
    %375 = vector.extract_strided_slice %285 {offsets = [0, 0], sizes = [16, 2], strides = [1, 1]} : vector<16x32xf32> to vector<16x2xf32>
    %376 = tpu.concatenate %374, %375 in 1 : vector<16x30xf32>, vector<16x2xf32> -> vector<16x32xf32>
    %377 = vector.extract_strided_slice %286 {offsets = [15, 0], sizes = [1, 32], strides = [1, 1]} : vector<25x32xf32> to vector<1x32xf32>
    %378 = vector.broadcast %377 : vector<1x32xf32> to vector<16x32xf32>
    %379 = arith.mulf %376, %378 : vector<16x32xf32>
    %380 = vector.extract_strided_slice %285 {offsets = [0, 3], sizes = [16, 29], strides = [1, 1]} : vector<16x32xf32> to vector<16x29xf32>
    %381 = vector.extract_strided_slice %285 {offsets = [0, 0], sizes = [16, 3], strides = [1, 1]} : vector<16x32xf32> to vector<16x3xf32>
    %382 = tpu.concatenate %380, %381 in 1 : vector<16x29xf32>, vector<16x3xf32> -> vector<16x32xf32>
    %383 = vector.extract_strided_slice %286 {offsets = [16, 0], sizes = [1, 32], strides = [1, 1]} : vector<25x32xf32> to vector<1x32xf32>
    %384 = vector.broadcast %383 : vector<1x32xf32> to vector<16x32xf32>
    %385 = arith.mulf %382, %384 : vector<16x32xf32>
    %386 = vector.extract_strided_slice %285 {offsets = [0, 4], sizes = [16, 28], strides = [1, 1]} : vector<16x32xf32> to vector<16x28xf32>
    %387 = vector.extract_strided_slice %285 {offsets = [0, 0], sizes = [16, 4], strides = [1, 1]} : vector<16x32xf32> to vector<16x4xf32>
    %388 = tpu.concatenate %386, %387 in 1 : vector<16x28xf32>, vector<16x4xf32> -> vector<16x32xf32>
    %389 = vector.extract_strided_slice %286 {offsets = [17, 0], sizes = [1, 32], strides = [1, 1]} : vector<25x32xf32> to vector<1x32xf32>
    %390 = vector.broadcast %389 : vector<1x32xf32> to vector<16x32xf32>
    %391 = arith.mulf %388, %390 : vector<16x32xf32>
    %392 = vector.extract_strided_slice %285 {offsets = [0, 5], sizes = [16, 27], strides = [1, 1]} : vector<16x32xf32> to vector<16x27xf32>
    %393 = vector.extract_strided_slice %285 {offsets = [0, 0], sizes = [16, 5], strides = [1, 1]} : vector<16x32xf32> to vector<16x5xf32>
    %394 = tpu.concatenate %392, %393 in 1 : vector<16x27xf32>, vector<16x5xf32> -> vector<16x32xf32>
    %395 = vector.extract_strided_slice %286 {offsets = [18, 0], sizes = [1, 32], strides = [1, 1]} : vector<25x32xf32> to vector<1x32xf32>
    %396 = vector.broadcast %395 : vector<1x32xf32> to vector<16x32xf32>
    %397 = arith.mulf %394, %396 : vector<16x32xf32>
    %398 = vector.extract_strided_slice %285 {offsets = [0, 6], sizes = [16, 26], strides = [1, 1]} : vector<16x32xf32> to vector<16x26xf32>
    %399 = vector.extract_strided_slice %285 {offsets = [0, 0], sizes = [16, 6], strides = [1, 1]} : vector<16x32xf32> to vector<16x6xf32>
    %400 = tpu.concatenate %398, %399 in 1 : vector<16x26xf32>, vector<16x6xf32> -> vector<16x32xf32>
    %401 = vector.extract_strided_slice %286 {offsets = [19, 0], sizes = [1, 32], strides = [1, 1]} : vector<25x32xf32> to vector<1x32xf32>
    %402 = vector.broadcast %401 : vector<1x32xf32> to vector<16x32xf32>
    %403 = arith.mulf %400, %402 : vector<16x32xf32>
    %404 = vector.extract_strided_slice %285 {offsets = [0, 6], sizes = [16, 26], strides = [1, 1]} : vector<16x32xf32> to vector<16x26xf32>
    %405 = vector.extract_strided_slice %285 {offsets = [0, 0], sizes = [16, 6], strides = [1, 1]} : vector<16x32xf32> to vector<16x6xf32>
    %406 = tpu.concatenate %404, %405 in 1 : vector<16x26xf32>, vector<16x6xf32> -> vector<16x32xf32>
    %407 = vector.extract_strided_slice %286 {offsets = [20, 0], sizes = [1, 32], strides = [1, 1]} : vector<25x32xf32> to vector<1x32xf32>
    %408 = vector.broadcast %407 : vector<1x32xf32> to vector<16x32xf32>
    %409 = arith.mulf %406, %408 : vector<16x32xf32>
    %410 = vector.extract_strided_slice %285 {offsets = [0, 7], sizes = [16, 25], strides = [1, 1]} : vector<16x32xf32> to vector<16x25xf32>
    %411 = vector.extract_strided_slice %285 {offsets = [0, 0], sizes = [16, 7], strides = [1, 1]} : vector<16x32xf32> to vector<16x7xf32>
    %412 = tpu.concatenate %410, %411 in 1 : vector<16x25xf32>, vector<16x7xf32> -> vector<16x32xf32>
    %413 = vector.extract_strided_slice %286 {offsets = [21, 0], sizes = [1, 32], strides = [1, 1]} : vector<25x32xf32> to vector<1x32xf32>
    %414 = vector.broadcast %413 : vector<1x32xf32> to vector<16x32xf32>
    %415 = arith.mulf %412, %414 : vector<16x32xf32>
    %416 = vector.extract_strided_slice %285 {offsets = [0, 8], sizes = [16, 24], strides = [1, 1]} : vector<16x32xf32> to vector<16x24xf32>
    %417 = vector.extract_strided_slice %285 {offsets = [0, 0], sizes = [16, 8], strides = [1, 1]} : vector<16x32xf32> to vector<16x8xf32>
    %418 = tpu.concatenate %416, %417 in 1 : vector<16x24xf32>, vector<16x8xf32> -> vector<16x32xf32>
    %419 = vector.extract_strided_slice %286 {offsets = [22, 0], sizes = [1, 32], strides = [1, 1]} : vector<25x32xf32> to vector<1x32xf32>
    %420 = vector.broadcast %419 : vector<1x32xf32> to vector<16x32xf32>
    %421 = arith.mulf %418, %420 : vector<16x32xf32>
    %422 = vector.extract_strided_slice %285 {offsets = [0, 9], sizes = [16, 23], strides = [1, 1]} : vector<16x32xf32> to vector<16x23xf32>
    %423 = vector.extract_strided_slice %285 {offsets = [0, 0], sizes = [16, 9], strides = [1, 1]} : vector<16x32xf32> to vector<16x9xf32>
    %424 = tpu.concatenate %422, %423 in 1 : vector<16x23xf32>, vector<16x9xf32> -> vector<16x32xf32>
    %425 = vector.extract_strided_slice %286 {offsets = [23, 0], sizes = [1, 32], strides = [1, 1]} : vector<25x32xf32> to vector<1x32xf32>
    %426 = vector.broadcast %425 : vector<1x32xf32> to vector<16x32xf32>
    %427 = arith.mulf %424, %426 : vector<16x32xf32>
    %428 = vector.extract_strided_slice %285 {offsets = [0, 10], sizes = [16, 22], strides = [1, 1]} : vector<16x32xf32> to vector<16x22xf32>
    %429 = vector.extract_strided_slice %285 {offsets = [0, 0], sizes = [16, 10], strides = [1, 1]} : vector<16x32xf32> to vector<16x10xf32>
    %430 = tpu.concatenate %428, %429 in 1 : vector<16x22xf32>, vector<16x10xf32> -> vector<16x32xf32>
    %431 = vector.extract_strided_slice %286 {offsets = [24, 0], sizes = [1, 32], strides = [1, 1]} : vector<25x32xf32> to vector<1x32xf32>
    %432 = vector.broadcast %431 : vector<1x32xf32> to vector<16x32xf32>
    %433 = arith.mulf %430, %432 : vector<16x32xf32>
    %434 = tpu.concatenate %292, %298, %304, %310, %316, %322, %328, %334, %340, %346, %352, %358, %361, %367, %373, %379 in 0 : vector<16x32xf32>, vector<16x32xf32>, vector<16x32xf32>, vector<16x32xf32>, vector<16x32xf32>, vector<16x32xf32>, vector<16x32xf32>, vector<16x32xf32>, vector<16x32xf32>, vector<16x32xf32>, vector<16x32xf32>, vector<16x32xf32>, vector<16x32xf32>, vector<16x32xf32>, vector<16x32xf32>, vector<16x32xf32> -> vector<256x32xf32>
    %435 = tpu.concatenate %385, %391, %397, %403, %409, %415, %421, %427, %433 in 0 : vector<16x32xf32>, vector<16x32xf32>, vector<16x32xf32>, vector<16x32xf32>, vector<16x32xf32>, vector<16x32xf32>, vector<16x32xf32>, vector<16x32xf32>, vector<16x32xf32> -> vector<144x32xf32>
    %436 = tpu.concatenate %434, %435 in 0 : vector<256x32xf32>, vector<144x32xf32> -> vector<400x32xf32>
    %c0_38 = arith.constant 0 : index
    %c0_39 = arith.constant 0 : index
    %437 = vector.load %arg7[%c0_38, %c0_39] : memref<16x400xf32, #tpu.memory_space<vmem>>, vector<16x400xf32>
    %cst_40 = arith.constant dense<0.000000e+00> : vector<16x32xf32>
    %438 = tpu.matmul %437, %436, %cst_40 {dimension_numbers = #tpu.dot_dimension_numbers<[1], [0], [0], [1], [0, 0, 1, 1], [], []>} : vector<16x400xf32>, vector<400x32xf32>, vector<16x32xf32> -> vector<16x32xf32>
    %c0_41 = arith.constant 0 : index
    %c0_42 = arith.constant 0 : index
    %439 = vector.load %arg9[%c0_41, %c0_42] : memref<32x8xf32, #tpu.memory_space<vmem>>, vector<32x8xf32>
    %cst_43 = arith.constant dense<0.000000e+00> : vector<16x8xf32>
    %440 = tpu.matmul %438, %439, %cst_43 {dimension_numbers = #tpu.dot_dimension_numbers<[1], [0], [0], [1], [0, 0, 1, 1], [], []>} : vector<16x32xf32>, vector<32x8xf32>, vector<16x8xf32> -> vector<16x8xf32>
    %441 = vector.extract_strided_slice %0 {offsets = [0, 3], sizes = [16, 1], strides = [1, 1]} : vector<16x8xf32> to vector<16x1xf32>
    %442 = vector.extract_strided_slice %0 {offsets = [0, 7], sizes = [16, 1], strides = [1, 1]} : vector<16x8xf32> to vector<16x1xf32>
    %cst_44 = arith.constant dense<0.000000e+00> : vector<16xf32>
    %443 = vector.multi_reduction <add>, %440, %cst_44 [1] : vector<16x8xf32> to vector<16xf32>
    %444 = vector.shape_cast %443 : vector<16xf32> to vector<16x1xf32>
    %cst_45 = arith.constant 8.000000e+00 : f32
    %445 = vector.broadcast %cst_45 : f32 to vector<16x1xf32>
    %446 = arith.divf %444, %445 : vector<16x1xf32>
    %447 = vector.broadcast %446 : vector<16x1xf32> to vector<16x8xf32>
    %448 = arith.subf %440, %447 : vector<16x8xf32>
    %449 = arith.mulf %448, %448 : vector<16x8xf32>
    %cst_46 = arith.constant dense<0.000000e+00> : vector<16xf32>
    %450 = vector.multi_reduction <add>, %449, %cst_46 [1] : vector<16x8xf32> to vector<16xf32>
    %451 = vector.shape_cast %450 : vector<16xf32> to vector<16x1xf32>
    %cst_47 = arith.constant 8.000000e+00 : f32
    %452 = vector.broadcast %cst_47 : f32 to vector<16x1xf32>
    %453 = arith.divf %451, %452 : vector<16x1xf32>
    %cst_48 = arith.constant 9.99999974E-6 : f32
    %454 = vector.broadcast %cst_48 : f32 to vector<16x1xf32>
    %455 = arith.addf %453, %454 : vector<16x1xf32>
    %456 = math.rsqrt %455 : vector<16x1xf32>
    %457 = vector.broadcast %456 : vector<16x1xf32> to vector<16x8xf32>
    %458 = arith.mulf %448, %457 : vector<16x8xf32>
    %459 = vector.broadcast %441 : vector<16x1xf32> to vector<16x8xf32>
    %460 = arith.mulf %458, %459 : vector<16x8xf32>
    %461 = vector.broadcast %442 : vector<16x1xf32> to vector<16x8xf32>
    %462 = arith.addf %460, %461 : vector<16x8xf32>
    %c0_49 = arith.constant 0 : index
    %c0_50 = arith.constant 0 : index
    %c0_51 = arith.constant 0 : index
    %463 = vector.load %arg10[%c0_49, %c0_50, %c0_51] : memref<4x16x8xf32, #tpu.memory_space<vmem>>, vector<1x16x8xf32>
    %464 = vector.shape_cast %463 : vector<1x16x8xf32> to vector<16x8xf32>
    %465 = arith.mulf %464, %462 : vector<16x8xf32>
    %cst_52 = arith.constant dense<0.000000e+00> : vector<8xf32>
    %466 = vector.multi_reduction <add>, %465, %cst_52 [0] : vector<16x8xf32> to vector<8xf32>
    %467 = vector.shape_cast %466 : vector<8xf32> to vector<1x8xf32>
    %c1 = arith.constant 1 : index
    %c0_53 = arith.constant 0 : index
    %c0_54 = arith.constant 0 : index
    %468 = vector.load %arg10[%c1, %c0_53, %c0_54] : memref<4x16x8xf32, #tpu.memory_space<vmem>>, vector<1x16x8xf32>
    %469 = vector.shape_cast %468 : vector<1x16x8xf32> to vector<16x8xf32>
    %470 = arith.mulf %469, %462 : vector<16x8xf32>
    %cst_55 = arith.constant dense<0.000000e+00> : vector<8xf32>
    %471 = vector.multi_reduction <add>, %470, %cst_55 [0] : vector<16x8xf32> to vector<8xf32>
    %472 = vector.shape_cast %471 : vector<8xf32> to vector<1x8xf32>
    %c2 = arith.constant 2 : index
    %c0_56 = arith.constant 0 : index
    %c0_57 = arith.constant 0 : index
    %473 = vector.load %arg10[%c2, %c0_56, %c0_57] : memref<4x16x8xf32, #tpu.memory_space<vmem>>, vector<1x16x8xf32>
    %474 = vector.shape_cast %473 : vector<1x16x8xf32> to vector<16x8xf32>
    %475 = arith.mulf %474, %462 : vector<16x8xf32>
    %cst_58 = arith.constant dense<0.000000e+00> : vector<8xf32>
    %476 = vector.multi_reduction <add>, %475, %cst_58 [0] : vector<16x8xf32> to vector<8xf32>
    %477 = vector.shape_cast %476 : vector<8xf32> to vector<1x8xf32>
    %c3 = arith.constant 3 : index
    %c0_59 = arith.constant 0 : index
    %c0_60 = arith.constant 0 : index
    %478 = vector.load %arg10[%c3, %c0_59, %c0_60] : memref<4x16x8xf32, #tpu.memory_space<vmem>>, vector<1x16x8xf32>
    %479 = vector.shape_cast %478 : vector<1x16x8xf32> to vector<16x8xf32>
    %480 = arith.mulf %479, %462 : vector<16x8xf32>
    %cst_61 = arith.constant dense<0.000000e+00> : vector<8xf32>
    %481 = vector.multi_reduction <add>, %480, %cst_61 [0] : vector<16x8xf32> to vector<8xf32>
    %482 = vector.shape_cast %481 : vector<8xf32> to vector<1x8xf32>
    %483 = tpu.concatenate %467, %472, %477, %482 in 0 : vector<1x8xf32>, vector<1x8xf32>, vector<1x8xf32>, vector<1x8xf32> -> vector<4x8xf32>
    %c0_62 = arith.constant 0 : index
    %c0_63 = arith.constant 0 : index
    %484 = vector.load %arg12[%c0_62, %c0_63] : memref<8x2xf32, #tpu.memory_space<vmem>>, vector<8x2xf32>
    %cst_64 = arith.constant dense<0.000000e+00> : vector<4x2xf32>
    %485 = tpu.matmul %483, %484, %cst_64 {dimension_numbers = #tpu.dot_dimension_numbers<[1], [0], [0], [1], [0, 0, 1, 1], [], []>} : vector<4x8xf32>, vector<8x2xf32>, vector<4x2xf32> -> vector<4x2xf32>
    %c0_65 = arith.constant 0 : index
    %c0_66 = arith.constant 0 : index
    %486 = vector.load %arg11[%c0_65, %c0_66] : memref<4x1xf32, #tpu.memory_space<vmem>>, vector<4x1xf32>
    %487 = vector.broadcast %486 : vector<4x1xf32> to vector<4x2xf32>
    %488 = arith.addf %485, %487 : vector<4x2xf32>
    %489 = vector.extract_strided_slice %488 {offsets = [0, 0], sizes = [2, 2], strides = [1, 1]} : vector<4x2xf32> to vector<2x2xf32>
    %490 = vector.extract_strided_slice %488 {offsets = [2, 0], sizes = [2, 2], strides = [1, 1]} : vector<4x2xf32> to vector<2x2xf32>
    %c0_67 = arith.constant 0 : index
    %c0_68 = arith.constant 0 : index
    %491 = vector.load %arg14[%c0_67, %c0_68] : memref<2x2xf32, #tpu.memory_space<vmem>>, vector<2x2xf32>
    %cst_69 = arith.constant 1.000000e-07 : f32
    %492 = vector.broadcast %cst_69 : f32 to vector<2x2xf32>
    %493 = arith.addf %490, %492 : vector<2x2xf32>
    %494 = math.exp %493 : vector<2x2xf32>
    %495 = arith.mulf %491, %494 : vector<2x2xf32>
    %496 = arith.addf %489, %495 : vector<2x2xf32>
    %cst_70 = arith.constant 0.000000e+00 : f32
    %497 = vector.broadcast %cst_70 : f32 to vector<2x2xf32>
    %498 = tpu.concatenate %489, %490, %496, %497 in 0 : vector<2x2xf32>, vector<2x2xf32>, vector<2x2xf32>, vector<2x2xf32> -> vector<8x2xf32>
    %c0_71 = arith.constant 0 : index
    %c0_72 = arith.constant 0 : index
    %499 = vector.load %arg15[%c0_71, %c0_72] : memref<8x2xf32, #tpu.memory_space<vmem>>, vector<8x2xf32>
    tpu.vector_store %arg15[%c0_71, %c0_72], %498 {strides = array<i32>} : memref<8x2xf32, #tpu.memory_space<vmem>>, vector<8x2xf32>,
    return
  }
}

module attributes {stable_mosaic.version = 11 : i64} {
  func.func @_decoder_kernel(%arg0: memref<2x2xf32, #tpu.memory_space<smem>>, %arg1: memref<1xf32, #tpu.memory_space<smem>>, %arg2: memref<3x16x16xf32, #tpu.memory_space<vmem>>, %arg3: memref<16x2xf32, #tpu.memory_space<vmem>>, %arg4: memref<64x144xf32, #tpu.memory_space<vmem>>, %arg5: memref<9x32xf32, #tpu.memory_space<vmem>>, %arg6: memref<4x32x128xf32, #tpu.memory_space<vmem>>, %arg7: memref<64x144xf32, #tpu.memory_space<vmem>>, %arg8: memref<9x128xf32, #tpu.memory_space<vmem>>, %arg9: memref<4x128x512xf32, #tpu.memory_space<vmem>>, %arg10: memref<4x144xf32, #tpu.memory_space<vmem>>, %arg11: memref<9x512xf32, #tpu.memory_space<vmem>>, %arg12: memref<64x64xf32, #tpu.memory_space<vmem>>, %arg13: memref<64x4xf32, #tpu.memory_space<vmem>>, %arg14: memref<4x512xf32, #tpu.memory_space<vmem>>) attributes {dimension_semantics = [], scalar_prefetch = 0 : i64, scratch_operands = 0 : i64, tpu.core_type = #tpu.core_type<tc>} {
    %c0 = arith.constant 0 : index
    %c0_0 = arith.constant 0 : index
    %0 = vector.load %arg12[%c0, %c0_0] : memref<64x64xf32, #tpu.memory_space<vmem>>, vector<64x64xf32>
    %c0_1 = arith.constant 0 : index
    %c0_2 = arith.constant 0 : index
    %1 = vector.load %arg13[%c0_1, %c0_2] : memref<64x4xf32, #tpu.memory_space<vmem>>, vector<64x4xf32>
    %c0_3 = arith.constant 0 : index
    %c0_4 = arith.constant 0 : index
    %c0_5 = arith.constant 0 : index
    %2 = vector.load %arg2[%c0_3, %c0_4, %c0_5] : memref<3x16x16xf32, #tpu.memory_space<vmem>>, vector<1x16x16xf32>
    %3 = vector.shape_cast %2 : vector<1x16x16xf32> to vector<16x16xf32>
    %c1 = arith.constant 1 : index
    %c0_6 = arith.constant 0 : index
    %c0_7 = arith.constant 0 : index
    %4 = vector.load %arg2[%c1, %c0_6, %c0_7] : memref<3x16x16xf32, #tpu.memory_space<vmem>>, vector<1x16x16xf32>
    %5 = vector.shape_cast %4 : vector<1x16x16xf32> to vector<16x16xf32>
    %c2 = arith.constant 2 : index
    %c0_8 = arith.constant 0 : index
    %c0_9 = arith.constant 0 : index
    %6 = vector.load %arg2[%c2, %c0_8, %c0_9] : memref<3x16x16xf32, #tpu.memory_space<vmem>>, vector<1x16x16xf32>
    %7 = vector.shape_cast %6 : vector<1x16x16xf32> to vector<16x16xf32>
    %c0_10 = arith.constant 0 : index
    %c0_11 = arith.constant 0 : index
    %8 = memref.load %arg0[%c0_10, %c0_11] : memref<2x2xf32, #tpu.memory_space<smem>>
    %9 = vector.broadcast %8 : f32 to vector<16x16xf32>
    %10 = arith.mulf %9, %3 : vector<16x16xf32>
    %c0_12 = arith.constant 0 : index
    %c1_13 = arith.constant 1 : index
    %11 = memref.load %arg0[%c0_12, %c1_13] : memref<2x2xf32, #tpu.memory_space<smem>>
    %12 = vector.broadcast %11 : f32 to vector<16x16xf32>
    %13 = arith.mulf %12, %5 : vector<16x16xf32>
    %14 = arith.addf %10, %13 : vector<16x16xf32>
    %15 = arith.addf %14, %7 : vector<16x16xf32>
    %c1_14 = arith.constant 1 : index
    %c0_15 = arith.constant 0 : index
    %16 = memref.load %arg0[%c1_14, %c0_15] : memref<2x2xf32, #tpu.memory_space<smem>>
    %17 = vector.broadcast %16 : f32 to vector<16x16xf32>
    %18 = arith.mulf %17, %3 : vector<16x16xf32>
    %c1_16 = arith.constant 1 : index
    %c1_17 = arith.constant 1 : index
    %19 = memref.load %arg0[%c1_16, %c1_17] : memref<2x2xf32, #tpu.memory_space<smem>>
    %20 = vector.broadcast %19 : f32 to vector<16x16xf32>
    %21 = arith.mulf %20, %5 : vector<16x16xf32>
    %22 = arith.addf %18, %21 : vector<16x16xf32>
    %23 = arith.addf %22, %7 : vector<16x16xf32>
    %24 = tpu.concatenate %15, %23 in 1 : vector<16x16xf32>, vector<16x16xf32> -> vector<16x32xf32>
    %c0_18 = arith.constant 0 : index
    %c0_19 = arith.constant 0 : index
    %25 = vector.load %arg3[%c0_18, %c0_19] : memref<16x2xf32, #tpu.memory_space<vmem>>, vector<16x1xf32>
    %c0_20 = arith.constant 0 : index
    %c1_21 = arith.constant 1 : index
    %26 = vector.load %arg3[%c0_20, %c1_21] : memref<16x2xf32, #tpu.memory_space<vmem>>, vector<16x1xf32>
    %cst = arith.constant dense<0.000000e+00> : vector<16xf32>
    %27 = vector.multi_reduction <add>, %24, %cst [1] : vector<16x32xf32> to vector<16xf32>
    %28 = vector.shape_cast %27 : vector<16xf32> to vector<16x1xf32>
    %cst_22 = arith.constant 3.200000e+01 : f32
    %29 = vector.broadcast %cst_22 : f32 to vector<16x1xf32>
    %30 = arith.divf %28, %29 : vector<16x1xf32>
    %31 = vector.broadcast %30 : vector<16x1xf32> to vector<16x32xf32>
    %32 = arith.subf %24, %31 : vector<16x32xf32>
    %33 = arith.mulf %32, %32 : vector<16x32xf32>
    %cst_23 = arith.constant dense<0.000000e+00> : vector<16xf32>
    %34 = vector.multi_reduction <add>, %33, %cst_23 [1] : vector<16x32xf32> to vector<16xf32>
    %35 = vector.shape_cast %34 : vector<16xf32> to vector<16x1xf32>
    %cst_24 = arith.constant 3.200000e+01 : f32
    %36 = vector.broadcast %cst_24 : f32 to vector<16x1xf32>
    %37 = arith.divf %35, %36 : vector<16x1xf32>
    %cst_25 = arith.constant 9.99999974E-6 : f32
    %38 = vector.broadcast %cst_25 : f32 to vector<16x1xf32>
    %39 = arith.addf %37, %38 : vector<16x1xf32>
    %40 = math.rsqrt %39 : vector<16x1xf32>
    %41 = vector.broadcast %40 : vector<16x1xf32> to vector<16x32xf32>
    %42 = arith.mulf %32, %41 : vector<16x32xf32>
    %43 = vector.broadcast %25 : vector<16x1xf32> to vector<16x32xf32>
    %44 = arith.mulf %42, %43 : vector<16x32xf32>
    %45 = vector.broadcast %26 : vector<16x1xf32> to vector<16x32xf32>
    %46 = arith.addf %44, %45 : vector<16x32xf32>
    %cst_26 = arith.constant 0.000000e+00 : f32
    %47 = vector.broadcast %cst_26 : f32 to vector<16x32xf32>
    %48 = arith.maximumf %46, %47 : vector<16x32xf32>
    %c0_27 = arith.constant 0 : index
    %c0_28 = arith.constant 0 : index
    %49 = vector.load %arg5[%c0_27, %c0_28] : memref<9x32xf32, #tpu.memory_space<vmem>>, vector<9x32xf32>
    %50 = vector.extract_strided_slice %48 {offsets = [0, 5], sizes = [16, 27], strides = [1, 1]} : vector<16x32xf32> to vector<16x27xf32>
    %51 = vector.extract_strided_slice %48 {offsets = [0, 0], sizes = [16, 5], strides = [1, 1]} : vector<16x32xf32> to vector<16x5xf32>
    %52 = tpu.concatenate %50, %51 in 1 : vector<16x27xf32>, vector<16x5xf32> -> vector<16x32xf32>
    %53 = vector.extract_strided_slice %49 {offsets = [0, 0], sizes = [1, 32], strides = [1, 1]} : vector<9x32xf32> to vector<1x32xf32>
    %54 = vector.broadcast %53 : vector<1x32xf32> to vector<16x32xf32>
    %55 = arith.mulf %52, %54 : vector<16x32xf32>
    %56 = vector.extract_strided_slice %48 {offsets = [0, 4], sizes = [16, 28], strides = [1, 1]} : vector<16x32xf32> to vector<16x28xf32>
    %57 = vector.extract_strided_slice %48 {offsets = [0, 0], sizes = [16, 4], strides = [1, 1]} : vector<16x32xf32> to vector<16x4xf32>
    %58 = tpu.concatenate %56, %57 in 1 : vector<16x28xf32>, vector<16x4xf32> -> vector<16x32xf32>
    %59 = vector.extract_strided_slice %49 {offsets = [1, 0], sizes = [1, 32], strides = [1, 1]} : vector<9x32xf32> to vector<1x32xf32>
    %60 = vector.broadcast %59 : vector<1x32xf32> to vector<16x32xf32>
    %61 = arith.mulf %58, %60 : vector<16x32xf32>
    %62 = vector.extract_strided_slice %48 {offsets = [0, 3], sizes = [16, 29], strides = [1, 1]} : vector<16x32xf32> to vector<16x29xf32>
    %63 = vector.extract_strided_slice %48 {offsets = [0, 0], sizes = [16, 3], strides = [1, 1]} : vector<16x32xf32> to vector<16x3xf32>
    %64 = tpu.concatenate %62, %63 in 1 : vector<16x29xf32>, vector<16x3xf32> -> vector<16x32xf32>
    %65 = vector.extract_strided_slice %49 {offsets = [2, 0], sizes = [1, 32], strides = [1, 1]} : vector<9x32xf32> to vector<1x32xf32>
    %66 = vector.broadcast %65 : vector<1x32xf32> to vector<16x32xf32>
    %67 = arith.mulf %64, %66 : vector<16x32xf32>
    %68 = vector.extract_strided_slice %48 {offsets = [0, 1], sizes = [16, 31], strides = [1, 1]} : vector<16x32xf32> to vector<16x31xf32>
    %69 = vector.extract_strided_slice %48 {offsets = [0, 0], sizes = [16, 1], strides = [1, 1]} : vector<16x32xf32> to vector<16x1xf32>
    %70 = tpu.concatenate %68, %69 in 1 : vector<16x31xf32>, vector<16x1xf32> -> vector<16x32xf32>
    %71 = vector.extract_strided_slice %49 {offsets = [3, 0], sizes = [1, 32], strides = [1, 1]} : vector<9x32xf32> to vector<1x32xf32>
    %72 = vector.broadcast %71 : vector<1x32xf32> to vector<16x32xf32>
    %73 = arith.mulf %70, %72 : vector<16x32xf32>
    %74 = vector.extract_strided_slice %49 {offsets = [4, 0], sizes = [1, 32], strides = [1, 1]} : vector<9x32xf32> to vector<1x32xf32>
    %75 = vector.broadcast %74 : vector<1x32xf32> to vector<16x32xf32>
    %76 = arith.mulf %48, %75 : vector<16x32xf32>
    %77 = vector.extract_strided_slice %48 {offsets = [0, 31], sizes = [16, 1], strides = [1, 1]} : vector<16x32xf32> to vector<16x1xf32>
    %78 = vector.extract_strided_slice %48 {offsets = [0, 0], sizes = [16, 31], strides = [1, 1]} : vector<16x32xf32> to vector<16x31xf32>
    %79 = tpu.concatenate %77, %78 in 1 : vector<16x1xf32>, vector<16x31xf32> -> vector<16x32xf32>
    %80 = vector.extract_strided_slice %49 {offsets = [5, 0], sizes = [1, 32], strides = [1, 1]} : vector<9x32xf32> to vector<1x32xf32>
    %81 = vector.broadcast %80 : vector<1x32xf32> to vector<16x32xf32>
    %82 = arith.mulf %79, %81 : vector<16x32xf32>
    %83 = vector.extract_strided_slice %48 {offsets = [0, 29], sizes = [16, 3], strides = [1, 1]} : vector<16x32xf32> to vector<16x3xf32>
    %84 = vector.extract_strided_slice %48 {offsets = [0, 0], sizes = [16, 29], strides = [1, 1]} : vector<16x32xf32> to vector<16x29xf32>
    %85 = tpu.concatenate %83, %84 in 1 : vector<16x3xf32>, vector<16x29xf32> -> vector<16x32xf32>
    %86 = vector.extract_strided_slice %49 {offsets = [6, 0], sizes = [1, 32], strides = [1, 1]} : vector<9x32xf32> to vector<1x32xf32>
    %87 = vector.broadcast %86 : vector<1x32xf32> to vector<16x32xf32>
    %88 = arith.mulf %85, %87 : vector<16x32xf32>
    %89 = vector.extract_strided_slice %48 {offsets = [0, 28], sizes = [16, 4], strides = [1, 1]} : vector<16x32xf32> to vector<16x4xf32>
    %90 = vector.extract_strided_slice %48 {offsets = [0, 0], sizes = [16, 28], strides = [1, 1]} : vector<16x32xf32> to vector<16x28xf32>
    %91 = tpu.concatenate %89, %90 in 1 : vector<16x4xf32>, vector<16x28xf32> -> vector<16x32xf32>
    %92 = vector.extract_strided_slice %49 {offsets = [7, 0], sizes = [1, 32], strides = [1, 1]} : vector<9x32xf32> to vector<1x32xf32>
    %93 = vector.broadcast %92 : vector<1x32xf32> to vector<16x32xf32>
    %94 = arith.mulf %91, %93 : vector<16x32xf32>
    %95 = vector.extract_strided_slice %48 {offsets = [0, 27], sizes = [16, 5], strides = [1, 1]} : vector<16x32xf32> to vector<16x5xf32>
    %96 = vector.extract_strided_slice %48 {offsets = [0, 0], sizes = [16, 27], strides = [1, 1]} : vector<16x32xf32> to vector<16x27xf32>
    %97 = tpu.concatenate %95, %96 in 1 : vector<16x5xf32>, vector<16x27xf32> -> vector<16x32xf32>
    %98 = vector.extract_strided_slice %49 {offsets = [8, 0], sizes = [1, 32], strides = [1, 1]} : vector<9x32xf32> to vector<1x32xf32>
    %99 = vector.broadcast %98 : vector<1x32xf32> to vector<16x32xf32>
    %100 = arith.mulf %97, %99 : vector<16x32xf32>
    %101 = tpu.concatenate %55, %61, %67, %73, %76, %82, %88, %94, %100 in 0 : vector<16x32xf32>, vector<16x32xf32>, vector<16x32xf32>, vector<16x32xf32>, vector<16x32xf32>, vector<16x32xf32>, vector<16x32xf32>, vector<16x32xf32>, vector<16x32xf32> -> vector<144x32xf32>
    %c0_29 = arith.constant 0 : index
    %c0_30 = arith.constant 0 : index
    %102 = vector.load %arg4[%c0_29, %c0_30] : memref<64x144xf32, #tpu.memory_space<vmem>>, vector<64x144xf32>
    %cst_31 = arith.constant dense<0.000000e+00> : vector<64x32xf32>
    %103 = tpu.matmul %102, %101, %cst_31 {dimension_numbers = #tpu.dot_dimension_numbers<[1], [0], [0], [1], [0, 0, 1, 1], [], []>} : vector<64x144xf32>, vector<144x32xf32>, vector<64x32xf32> -> vector<64x32xf32>
    %104 = vector.extract_strided_slice %1 {offsets = [0, 0], sizes = [64, 1], strides = [1, 1]} : vector<64x4xf32> to vector<64x1xf32>
    %105 = vector.extract_strided_slice %1 {offsets = [0, 1], sizes = [64, 1], strides = [1, 1]} : vector<64x4xf32> to vector<64x1xf32>
    %cst_32 = arith.constant dense<0.000000e+00> : vector<64xf32>
    %106 = vector.multi_reduction <add>, %103, %cst_32 [1] : vector<64x32xf32> to vector<64xf32>
    %107 = vector.shape_cast %106 : vector<64xf32> to vector<64x1xf32>
    %cst_33 = arith.constant 3.200000e+01 : f32
    %108 = vector.broadcast %cst_33 : f32 to vector<64x1xf32>
    %109 = arith.divf %107, %108 : vector<64x1xf32>
    %cst_34 = arith.constant dense<0.000000e+00> : vector<64x1xf32>
    %110 = tpu.matmul %0, %109, %cst_34 {dimension_numbers = #tpu.dot_dimension_numbers<[1], [0], [0], [1], [0, 0, 1, 1], [], []>} : vector<64x64xf32>, vector<64x1xf32>, vector<64x1xf32> -> vector<64x1xf32>
    %111 = vector.broadcast %110 : vector<64x1xf32> to vector<64x32xf32>
    %112 = arith.subf %103, %111 : vector<64x32xf32>
    %113 = arith.mulf %112, %112 : vector<64x32xf32>
    %cst_35 = arith.constant dense<0.000000e+00> : vector<64xf32>
    %114 = vector.multi_reduction <add>, %113, %cst_35 [1] : vector<64x32xf32> to vector<64xf32>
    %115 = vector.shape_cast %114 : vector<64xf32> to vector<64x1xf32>
    %cst_36 = arith.constant 3.200000e+01 : f32
    %116 = vector.broadcast %cst_36 : f32 to vector<64x1xf32>
    %117 = arith.divf %115, %116 : vector<64x1xf32>
    %cst_37 = arith.constant dense<0.000000e+00> : vector<64x1xf32>
    %118 = tpu.matmul %0, %117, %cst_37 {dimension_numbers = #tpu.dot_dimension_numbers<[1], [0], [0], [1], [0, 0, 1, 1], [], []>} : vector<64x64xf32>, vector<64x1xf32>, vector<64x1xf32> -> vector<64x1xf32>
    %cst_38 = arith.constant 9.99999974E-6 : f32
    %119 = vector.broadcast %cst_38 : f32 to vector<64x1xf32>
    %120 = arith.addf %118, %119 : vector<64x1xf32>
    %121 = math.rsqrt %120 : vector<64x1xf32>
    %122 = vector.broadcast %121 : vector<64x1xf32> to vector<64x32xf32>
    %123 = arith.mulf %112, %122 : vector<64x32xf32>
    %124 = vector.broadcast %104 : vector<64x1xf32> to vector<64x32xf32>
    %125 = arith.mulf %123, %124 : vector<64x32xf32>
    %126 = vector.broadcast %105 : vector<64x1xf32> to vector<64x32xf32>
    %127 = arith.addf %125, %126 : vector<64x32xf32>
    %cst_39 = arith.constant 0.000000e+00 : f32
    %128 = vector.broadcast %cst_39 : f32 to vector<64x32xf32>
    %129 = arith.maximumf %127, %128 : vector<64x32xf32>
    %130 = vector.extract_strided_slice %129 {offsets = [0, 0], sizes = [16, 32], strides = [1, 1]} : vector<64x32xf32> to vector<16x32xf32>
    %c0_40 = arith.constant 0 : index
    %c0_41 = arith.constant 0 : index
    %c0_42 = arith.constant 0 : index
    %131 = vector.load %arg6[%c0_40, %c0_41, %c0_42] : memref<4x32x128xf32, #tpu.memory_space<vmem>>, vector<1x32x128xf32>
    %132 = vector.shape_cast %131 : vector<1x32x128xf32> to vector<32x128xf32>
    %cst_43 = arith.constant dense<0.000000e+00> : vector<16x128xf32>
    %133 = tpu.matmul %130, %132, %cst_43 {dimension_numbers = #tpu.dot_dimension_numbers<[1], [0], [0], [1], [0, 0, 1, 1], [], []>} : vector<16x32xf32>, vector<32x128xf32>, vector<16x128xf32> -> vector<16x128xf32>
    %134 = vector.extract_strided_slice %129 {offsets = [16, 0], sizes = [16, 32], strides = [1, 1]} : vector<64x32xf32> to vector<16x32xf32>
    %c1_44 = arith.constant 1 : index
    %c0_45 = arith.constant 0 : index
    %c0_46 = arith.constant 0 : index
    %135 = vector.load %arg6[%c1_44, %c0_45, %c0_46] : memref<4x32x128xf32, #tpu.memory_space<vmem>>, vector<1x32x128xf32>
    %136 = vector.shape_cast %135 : vector<1x32x128xf32> to vector<32x128xf32>
    %cst_47 = arith.constant dense<0.000000e+00> : vector<16x128xf32>
    %137 = tpu.matmul %134, %136, %cst_47 {dimension_numbers = #tpu.dot_dimension_numbers<[1], [0], [0], [1], [0, 0, 1, 1], [], []>} : vector<16x32xf32>, vector<32x128xf32>, vector<16x128xf32> -> vector<16x128xf32>
    %138 = arith.addf %133, %137 : vector<16x128xf32>
    %139 = vector.extract_strided_slice %129 {offsets = [32, 0], sizes = [16, 32], strides = [1, 1]} : vector<64x32xf32> to vector<16x32xf32>
    %c2_48 = arith.constant 2 : index
    %c0_49 = arith.constant 0 : index
    %c0_50 = arith.constant 0 : index
    %140 = vector.load %arg6[%c2_48, %c0_49, %c0_50] : memref<4x32x128xf32, #tpu.memory_space<vmem>>, vector<1x32x128xf32>
    %141 = vector.shape_cast %140 : vector<1x32x128xf32> to vector<32x128xf32>
    %cst_51 = arith.constant dense<0.000000e+00> : vector<16x128xf32>
    %142 = tpu.matmul %139, %141, %cst_51 {dimension_numbers = #tpu.dot_dimension_numbers<[1], [0], [0], [1], [0, 0, 1, 1], [], []>} : vector<16x32xf32>, vector<32x128xf32>, vector<16x128xf32> -> vector<16x128xf32>
    %143 = arith.addf %138, %142 : vector<16x128xf32>
    %144 = vector.extract_strided_slice %129 {offsets = [48, 0], sizes = [16, 32], strides = [1, 1]} : vector<64x32xf32> to vector<16x32xf32>
    %c3 = arith.constant 3 : index
    %c0_52 = arith.constant 0 : index
    %c0_53 = arith.constant 0 : index
    %145 = vector.load %arg6[%c3, %c0_52, %c0_53] : memref<4x32x128xf32, #tpu.memory_space<vmem>>, vector<1x32x128xf32>
    %146 = vector.shape_cast %145 : vector<1x32x128xf32> to vector<32x128xf32>
    %cst_54 = arith.constant dense<0.000000e+00> : vector<16x128xf32>
    %147 = tpu.matmul %144, %146, %cst_54 {dimension_numbers = #tpu.dot_dimension_numbers<[1], [0], [0], [1], [0, 0, 1, 1], [], []>} : vector<16x32xf32>, vector<32x128xf32>, vector<16x128xf32> -> vector<16x128xf32>
    %148 = arith.addf %143, %147 : vector<16x128xf32>
    %c0_55 = arith.constant 0 : index
    %c0_56 = arith.constant 0 : index
    %149 = vector.load %arg8[%c0_55, %c0_56] : memref<9x128xf32, #tpu.memory_space<vmem>>, vector<9x128xf32>
    %150 = vector.extract_strided_slice %148 {offsets = [0, 9], sizes = [16, 119], strides = [1, 1]} : vector<16x128xf32> to vector<16x119xf32>
    %151 = vector.extract_strided_slice %148 {offsets = [0, 0], sizes = [16, 9], strides = [1, 1]} : vector<16x128xf32> to vector<16x9xf32>
    %152 = tpu.concatenate %150, %151 in 1 : vector<16x119xf32>, vector<16x9xf32> -> vector<16x128xf32>
    %153 = vector.extract_strided_slice %149 {offsets = [0, 0], sizes = [1, 128], strides = [1, 1]} : vector<9x128xf32> to vector<1x128xf32>
    %154 = vector.broadcast %153 : vector<1x128xf32> to vector<16x128xf32>
    %155 = arith.mulf %152, %154 : vector<16x128xf32>
    %156 = vector.extract_strided_slice %148 {offsets = [0, 8], sizes = [16, 120], strides = [1, 1]} : vector<16x128xf32> to vector<16x120xf32>
    %157 = vector.extract_strided_slice %148 {offsets = [0, 0], sizes = [16, 8], strides = [1, 1]} : vector<16x128xf32> to vector<16x8xf32>
    %158 = tpu.concatenate %156, %157 in 1 : vector<16x120xf32>, vector<16x8xf32> -> vector<16x128xf32>
    %159 = vector.extract_strided_slice %149 {offsets = [1, 0], sizes = [1, 128], strides = [1, 1]} : vector<9x128xf32> to vector<1x128xf32>
    %160 = vector.broadcast %159 : vector<1x128xf32> to vector<16x128xf32>
    %161 = arith.mulf %158, %160 : vector<16x128xf32>
    %162 = vector.extract_strided_slice %148 {offsets = [0, 7], sizes = [16, 121], strides = [1, 1]} : vector<16x128xf32> to vector<16x121xf32>
    %163 = vector.extract_strided_slice %148 {offsets = [0, 0], sizes = [16, 7], strides = [1, 1]} : vector<16x128xf32> to vector<16x7xf32>
    %164 = tpu.concatenate %162, %163 in 1 : vector<16x121xf32>, vector<16x7xf32> -> vector<16x128xf32>
    %165 = vector.extract_strided_slice %149 {offsets = [2, 0], sizes = [1, 128], strides = [1, 1]} : vector<9x128xf32> to vector<1x128xf32>
    %166 = vector.broadcast %165 : vector<1x128xf32> to vector<16x128xf32>
    %167 = arith.mulf %164, %166 : vector<16x128xf32>
    %168 = vector.extract_strided_slice %148 {offsets = [0, 1], sizes = [16, 127], strides = [1, 1]} : vector<16x128xf32> to vector<16x127xf32>
    %169 = vector.extract_strided_slice %148 {offsets = [0, 0], sizes = [16, 1], strides = [1, 1]} : vector<16x128xf32> to vector<16x1xf32>
    %170 = tpu.concatenate %168, %169 in 1 : vector<16x127xf32>, vector<16x1xf32> -> vector<16x128xf32>
    %171 = vector.extract_strided_slice %149 {offsets = [3, 0], sizes = [1, 128], strides = [1, 1]} : vector<9x128xf32> to vector<1x128xf32>
    %172 = vector.broadcast %171 : vector<1x128xf32> to vector<16x128xf32>
    %173 = arith.mulf %170, %172 : vector<16x128xf32>
    %174 = vector.extract_strided_slice %149 {offsets = [4, 0], sizes = [1, 128], strides = [1, 1]} : vector<9x128xf32> to vector<1x128xf32>
    %175 = vector.broadcast %174 : vector<1x128xf32> to vector<16x128xf32>
    %176 = arith.mulf %148, %175 : vector<16x128xf32>
    %177 = vector.extract_strided_slice %148 {offsets = [0, 127], sizes = [16, 1], strides = [1, 1]} : vector<16x128xf32> to vector<16x1xf32>
    %178 = vector.extract_strided_slice %148 {offsets = [0, 0], sizes = [16, 127], strides = [1, 1]} : vector<16x128xf32> to vector<16x127xf32>
    %179 = tpu.concatenate %177, %178 in 1 : vector<16x1xf32>, vector<16x127xf32> -> vector<16x128xf32>
    %180 = vector.extract_strided_slice %149 {offsets = [5, 0], sizes = [1, 128], strides = [1, 1]} : vector<9x128xf32> to vector<1x128xf32>
    %181 = vector.broadcast %180 : vector<1x128xf32> to vector<16x128xf32>
    %182 = arith.mulf %179, %181 : vector<16x128xf32>
    %183 = vector.extract_strided_slice %148 {offsets = [0, 121], sizes = [16, 7], strides = [1, 1]} : vector<16x128xf32> to vector<16x7xf32>
    %184 = vector.extract_strided_slice %148 {offsets = [0, 0], sizes = [16, 121], strides = [1, 1]} : vector<16x128xf32> to vector<16x121xf32>
    %185 = tpu.concatenate %183, %184 in 1 : vector<16x7xf32>, vector<16x121xf32> -> vector<16x128xf32>
    %186 = vector.extract_strided_slice %149 {offsets = [6, 0], sizes = [1, 128], strides = [1, 1]} : vector<9x128xf32> to vector<1x128xf32>
    %187 = vector.broadcast %186 : vector<1x128xf32> to vector<16x128xf32>
    %188 = arith.mulf %185, %187 : vector<16x128xf32>
    %189 = vector.extract_strided_slice %148 {offsets = [0, 120], sizes = [16, 8], strides = [1, 1]} : vector<16x128xf32> to vector<16x8xf32>
    %190 = vector.extract_strided_slice %148 {offsets = [0, 0], sizes = [16, 120], strides = [1, 1]} : vector<16x128xf32> to vector<16x120xf32>
    %191 = tpu.concatenate %189, %190 in 1 : vector<16x8xf32>, vector<16x120xf32> -> vector<16x128xf32>
    %192 = vector.extract_strided_slice %149 {offsets = [7, 0], sizes = [1, 128], strides = [1, 1]} : vector<9x128xf32> to vector<1x128xf32>
    %193 = vector.broadcast %192 : vector<1x128xf32> to vector<16x128xf32>
    %194 = arith.mulf %191, %193 : vector<16x128xf32>
    %195 = vector.extract_strided_slice %148 {offsets = [0, 119], sizes = [16, 9], strides = [1, 1]} : vector<16x128xf32> to vector<16x9xf32>
    %196 = vector.extract_strided_slice %148 {offsets = [0, 0], sizes = [16, 119], strides = [1, 1]} : vector<16x128xf32> to vector<16x119xf32>
    %197 = tpu.concatenate %195, %196 in 1 : vector<16x9xf32>, vector<16x119xf32> -> vector<16x128xf32>
    %198 = vector.extract_strided_slice %149 {offsets = [8, 0], sizes = [1, 128], strides = [1, 1]} : vector<9x128xf32> to vector<1x128xf32>
    %199 = vector.broadcast %198 : vector<1x128xf32> to vector<16x128xf32>
    %200 = arith.mulf %197, %199 : vector<16x128xf32>
    %201 = tpu.concatenate %155, %161, %167, %173, %176, %182, %188, %194, %200 in 0 : vector<16x128xf32>, vector<16x128xf32>, vector<16x128xf32>, vector<16x128xf32>, vector<16x128xf32>, vector<16x128xf32>, vector<16x128xf32>, vector<16x128xf32>, vector<16x128xf32> -> vector<144x128xf32>
    %c0_57 = arith.constant 0 : index
    %c0_58 = arith.constant 0 : index
    %202 = vector.load %arg7[%c0_57, %c0_58] : memref<64x144xf32, #tpu.memory_space<vmem>>, vector<64x144xf32>
    %cst_59 = arith.constant dense<0.000000e+00> : vector<64x128xf32>
    %203 = tpu.matmul %202, %201, %cst_59 {dimension_numbers = #tpu.dot_dimension_numbers<[1], [0], [0], [1], [0, 0, 1, 1], [], []>} : vector<64x144xf32>, vector<144x128xf32>, vector<64x128xf32> -> vector<64x128xf32>
    %204 = vector.extract_strided_slice %1 {offsets = [0, 2], sizes = [64, 1], strides = [1, 1]} : vector<64x4xf32> to vector<64x1xf32>
    %205 = vector.extract_strided_slice %1 {offsets = [0, 3], sizes = [64, 1], strides = [1, 1]} : vector<64x4xf32> to vector<64x1xf32>
    %cst_60 = arith.constant dense<0.000000e+00> : vector<64xf32>
    %206 = vector.multi_reduction <add>, %203, %cst_60 [1] : vector<64x128xf32> to vector<64xf32>
    %207 = vector.shape_cast %206 : vector<64xf32> to vector<64x1xf32>
    %cst_61 = arith.constant 1.280000e+02 : f32
    %208 = vector.broadcast %cst_61 : f32 to vector<64x1xf32>
    %209 = arith.divf %207, %208 : vector<64x1xf32>
    %cst_62 = arith.constant dense<0.000000e+00> : vector<64x1xf32>
    %210 = tpu.matmul %0, %209, %cst_62 {dimension_numbers = #tpu.dot_dimension_numbers<[1], [0], [0], [1], [0, 0, 1, 1], [], []>} : vector<64x64xf32>, vector<64x1xf32>, vector<64x1xf32> -> vector<64x1xf32>
    %211 = vector.broadcast %210 : vector<64x1xf32> to vector<64x128xf32>
    %212 = arith.subf %203, %211 : vector<64x128xf32>
    %213 = arith.mulf %212, %212 : vector<64x128xf32>
    %cst_63 = arith.constant dense<0.000000e+00> : vector<64xf32>
    %214 = vector.multi_reduction <add>, %213, %cst_63 [1] : vector<64x128xf32> to vector<64xf32>
    %215 = vector.shape_cast %214 : vector<64xf32> to vector<64x1xf32>
    %cst_64 = arith.constant 1.280000e+02 : f32
    %216 = vector.broadcast %cst_64 : f32 to vector<64x1xf32>
    %217 = arith.divf %215, %216 : vector<64x1xf32>
    %cst_65 = arith.constant dense<0.000000e+00> : vector<64x1xf32>
    %218 = tpu.matmul %0, %217, %cst_65 {dimension_numbers = #tpu.dot_dimension_numbers<[1], [0], [0], [1], [0, 0, 1, 1], [], []>} : vector<64x64xf32>, vector<64x1xf32>, vector<64x1xf32> -> vector<64x1xf32>
    %cst_66 = arith.constant 9.99999974E-6 : f32
    %219 = vector.broadcast %cst_66 : f32 to vector<64x1xf32>
    %220 = arith.addf %218, %219 : vector<64x1xf32>
    %221 = math.rsqrt %220 : vector<64x1xf32>
    %222 = vector.broadcast %221 : vector<64x1xf32> to vector<64x128xf32>
    %223 = arith.mulf %212, %222 : vector<64x128xf32>
    %224 = vector.broadcast %204 : vector<64x1xf32> to vector<64x128xf32>
    %225 = arith.mulf %223, %224 : vector<64x128xf32>
    %226 = vector.broadcast %205 : vector<64x1xf32> to vector<64x128xf32>
    %227 = arith.addf %225, %226 : vector<64x128xf32>
    %cst_67 = arith.constant 0.000000e+00 : f32
    %228 = vector.broadcast %cst_67 : f32 to vector<64x128xf32>
    %229 = arith.maximumf %227, %228 : vector<64x128xf32>
    %230 = vector.extract_strided_slice %229 {offsets = [0, 0], sizes = [16, 128], strides = [1, 1]} : vector<64x128xf32> to vector<16x128xf32>
    %c0_68 = arith.constant 0 : index
    %c0_69 = arith.constant 0 : index
    %c0_70 = arith.constant 0 : index
    %231 = vector.load %arg9[%c0_68, %c0_69, %c0_70] : memref<4x128x512xf32, #tpu.memory_space<vmem>>, vector<1x128x512xf32>
    %232 = vector.shape_cast %231 : vector<1x128x512xf32> to vector<128x512xf32>
    %cst_71 = arith.constant dense<0.000000e+00> : vector<16x512xf32>
    %233 = tpu.matmul %230, %232, %cst_71 {dimension_numbers = #tpu.dot_dimension_numbers<[1], [0], [0], [1], [0, 0, 1, 1], [], []>} : vector<16x128xf32>, vector<128x512xf32>, vector<16x512xf32> -> vector<16x512xf32>
    %234 = vector.extract_strided_slice %229 {offsets = [16, 0], sizes = [16, 128], strides = [1, 1]} : vector<64x128xf32> to vector<16x128xf32>
    %c1_72 = arith.constant 1 : index
    %c0_73 = arith.constant 0 : index
    %c0_74 = arith.constant 0 : index
    %235 = vector.load %arg9[%c1_72, %c0_73, %c0_74] : memref<4x128x512xf32, #tpu.memory_space<vmem>>, vector<1x128x512xf32>
    %236 = vector.shape_cast %235 : vector<1x128x512xf32> to vector<128x512xf32>
    %cst_75 = arith.constant dense<0.000000e+00> : vector<16x512xf32>
    %237 = tpu.matmul %234, %236, %cst_75 {dimension_numbers = #tpu.dot_dimension_numbers<[1], [0], [0], [1], [0, 0, 1, 1], [], []>} : vector<16x128xf32>, vector<128x512xf32>, vector<16x512xf32> -> vector<16x512xf32>
    %238 = arith.addf %233, %237 : vector<16x512xf32>
    %239 = vector.extract_strided_slice %229 {offsets = [32, 0], sizes = [16, 128], strides = [1, 1]} : vector<64x128xf32> to vector<16x128xf32>
    %c2_76 = arith.constant 2 : index
    %c0_77 = arith.constant 0 : index
    %c0_78 = arith.constant 0 : index
    %240 = vector.load %arg9[%c2_76, %c0_77, %c0_78] : memref<4x128x512xf32, #tpu.memory_space<vmem>>, vector<1x128x512xf32>
    %241 = vector.shape_cast %240 : vector<1x128x512xf32> to vector<128x512xf32>
    %cst_79 = arith.constant dense<0.000000e+00> : vector<16x512xf32>
    %242 = tpu.matmul %239, %241, %cst_79 {dimension_numbers = #tpu.dot_dimension_numbers<[1], [0], [0], [1], [0, 0, 1, 1], [], []>} : vector<16x128xf32>, vector<128x512xf32>, vector<16x512xf32> -> vector<16x512xf32>
    %243 = arith.addf %238, %242 : vector<16x512xf32>
    %244 = vector.extract_strided_slice %229 {offsets = [48, 0], sizes = [16, 128], strides = [1, 1]} : vector<64x128xf32> to vector<16x128xf32>
    %c3_80 = arith.constant 3 : index
    %c0_81 = arith.constant 0 : index
    %c0_82 = arith.constant 0 : index
    %245 = vector.load %arg9[%c3_80, %c0_81, %c0_82] : memref<4x128x512xf32, #tpu.memory_space<vmem>>, vector<1x128x512xf32>
    %246 = vector.shape_cast %245 : vector<1x128x512xf32> to vector<128x512xf32>
    %cst_83 = arith.constant dense<0.000000e+00> : vector<16x512xf32>
    %247 = tpu.matmul %244, %246, %cst_83 {dimension_numbers = #tpu.dot_dimension_numbers<[1], [0], [0], [1], [0, 0, 1, 1], [], []>} : vector<16x128xf32>, vector<128x512xf32>, vector<16x512xf32> -> vector<16x512xf32>
    %248 = arith.addf %243, %247 : vector<16x512xf32>
    %c0_84 = arith.constant 0 : index
    %c0_85 = arith.constant 0 : index
    %249 = vector.load %arg11[%c0_84, %c0_85] : memref<9x512xf32, #tpu.memory_space<vmem>>, vector<9x512xf32>
    %250 = vector.extract_strided_slice %248 {offsets = [0, 17], sizes = [16, 495], strides = [1, 1]} : vector<16x512xf32> to vector<16x495xf32>
    %251 = vector.extract_strided_slice %248 {offsets = [0, 0], sizes = [16, 17], strides = [1, 1]} : vector<16x512xf32> to vector<16x17xf32>
    %252 = tpu.concatenate %250, %251 in 1 : vector<16x495xf32>, vector<16x17xf32> -> vector<16x512xf32>
    %253 = vector.extract_strided_slice %249 {offsets = [0, 0], sizes = [1, 512], strides = [1, 1]} : vector<9x512xf32> to vector<1x512xf32>
    %254 = vector.broadcast %253 : vector<1x512xf32> to vector<16x512xf32>
    %255 = arith.mulf %252, %254 : vector<16x512xf32>
    %256 = vector.extract_strided_slice %248 {offsets = [0, 16], sizes = [16, 496], strides = [1, 1]} : vector<16x512xf32> to vector<16x496xf32>
    %257 = vector.extract_strided_slice %248 {offsets = [0, 0], sizes = [16, 16], strides = [1, 1]} : vector<16x512xf32> to vector<16x16xf32>
    %258 = tpu.concatenate %256, %257 in 1 : vector<16x496xf32>, vector<16x16xf32> -> vector<16x512xf32>
    %259 = vector.extract_strided_slice %249 {offsets = [1, 0], sizes = [1, 512], strides = [1, 1]} : vector<9x512xf32> to vector<1x512xf32>
    %260 = vector.broadcast %259 : vector<1x512xf32> to vector<16x512xf32>
    %261 = arith.mulf %258, %260 : vector<16x512xf32>
    %262 = vector.extract_strided_slice %248 {offsets = [0, 15], sizes = [16, 497], strides = [1, 1]} : vector<16x512xf32> to vector<16x497xf32>
    %263 = vector.extract_strided_slice %248 {offsets = [0, 0], sizes = [16, 15], strides = [1, 1]} : vector<16x512xf32> to vector<16x15xf32>
    %264 = tpu.concatenate %262, %263 in 1 : vector<16x497xf32>, vector<16x15xf32> -> vector<16x512xf32>
    %265 = vector.extract_strided_slice %249 {offsets = [2, 0], sizes = [1, 512], strides = [1, 1]} : vector<9x512xf32> to vector<1x512xf32>
    %266 = vector.broadcast %265 : vector<1x512xf32> to vector<16x512xf32>
    %267 = arith.mulf %264, %266 : vector<16x512xf32>
    %268 = vector.extract_strided_slice %248 {offsets = [0, 1], sizes = [16, 511], strides = [1, 1]} : vector<16x512xf32> to vector<16x511xf32>
    %269 = vector.extract_strided_slice %248 {offsets = [0, 0], sizes = [16, 1], strides = [1, 1]} : vector<16x512xf32> to vector<16x1xf32>
    %270 = tpu.concatenate %268, %269 in 1 : vector<16x511xf32>, vector<16x1xf32> -> vector<16x512xf32>
    %271 = vector.extract_strided_slice %249 {offsets = [3, 0], sizes = [1, 512], strides = [1, 1]} : vector<9x512xf32> to vector<1x512xf32>
    %272 = vector.broadcast %271 : vector<1x512xf32> to vector<16x512xf32>
    %273 = arith.mulf %270, %272 : vector<16x512xf32>
    %274 = vector.extract_strided_slice %249 {offsets = [4, 0], sizes = [1, 512], strides = [1, 1]} : vector<9x512xf32> to vector<1x512xf32>
    %275 = vector.broadcast %274 : vector<1x512xf32> to vector<16x512xf32>
    %276 = arith.mulf %248, %275 : vector<16x512xf32>
    %277 = vector.extract_strided_slice %248 {offsets = [0, 511], sizes = [16, 1], strides = [1, 1]} : vector<16x512xf32> to vector<16x1xf32>
    %278 = vector.extract_strided_slice %248 {offsets = [0, 0], sizes = [16, 511], strides = [1, 1]} : vector<16x512xf32> to vector<16x511xf32>
    %279 = tpu.concatenate %277, %278 in 1 : vector<16x1xf32>, vector<16x511xf32> -> vector<16x512xf32>
    %280 = vector.extract_strided_slice %249 {offsets = [5, 0], sizes = [1, 512], strides = [1, 1]} : vector<9x512xf32> to vector<1x512xf32>
    %281 = vector.broadcast %280 : vector<1x512xf32> to vector<16x512xf32>
    %282 = arith.mulf %279, %281 : vector<16x512xf32>
    %283 = vector.extract_strided_slice %248 {offsets = [0, 497], sizes = [16, 15], strides = [1, 1]} : vector<16x512xf32> to vector<16x15xf32>
    %284 = vector.extract_strided_slice %248 {offsets = [0, 0], sizes = [16, 497], strides = [1, 1]} : vector<16x512xf32> to vector<16x497xf32>
    %285 = tpu.concatenate %283, %284 in 1 : vector<16x15xf32>, vector<16x497xf32> -> vector<16x512xf32>
    %286 = vector.extract_strided_slice %249 {offsets = [6, 0], sizes = [1, 512], strides = [1, 1]} : vector<9x512xf32> to vector<1x512xf32>
    %287 = vector.broadcast %286 : vector<1x512xf32> to vector<16x512xf32>
    %288 = arith.mulf %285, %287 : vector<16x512xf32>
    %289 = vector.extract_strided_slice %248 {offsets = [0, 496], sizes = [16, 16], strides = [1, 1]} : vector<16x512xf32> to vector<16x16xf32>
    %290 = vector.extract_strided_slice %248 {offsets = [0, 0], sizes = [16, 496], strides = [1, 1]} : vector<16x512xf32> to vector<16x496xf32>
    %291 = tpu.concatenate %289, %290 in 1 : vector<16x16xf32>, vector<16x496xf32> -> vector<16x512xf32>
    %292 = vector.extract_strided_slice %249 {offsets = [7, 0], sizes = [1, 512], strides = [1, 1]} : vector<9x512xf32> to vector<1x512xf32>
    %293 = vector.broadcast %292 : vector<1x512xf32> to vector<16x512xf32>
    %294 = arith.mulf %291, %293 : vector<16x512xf32>
    %295 = vector.extract_strided_slice %248 {offsets = [0, 495], sizes = [16, 17], strides = [1, 1]} : vector<16x512xf32> to vector<16x17xf32>
    %296 = vector.extract_strided_slice %248 {offsets = [0, 0], sizes = [16, 495], strides = [1, 1]} : vector<16x512xf32> to vector<16x495xf32>
    %297 = tpu.concatenate %295, %296 in 1 : vector<16x17xf32>, vector<16x495xf32> -> vector<16x512xf32>
    %298 = vector.extract_strided_slice %249 {offsets = [8, 0], sizes = [1, 512], strides = [1, 1]} : vector<9x512xf32> to vector<1x512xf32>
    %299 = vector.broadcast %298 : vector<1x512xf32> to vector<16x512xf32>
    %300 = arith.mulf %297, %299 : vector<16x512xf32>
    %301 = tpu.concatenate %255, %261, %267, %273, %276, %282, %288, %294, %300 in 0 : vector<16x512xf32>, vector<16x512xf32>, vector<16x512xf32>, vector<16x512xf32>, vector<16x512xf32>, vector<16x512xf32>, vector<16x512xf32>, vector<16x512xf32>, vector<16x512xf32> -> vector<144x512xf32>
    %c0_86 = arith.constant 0 : index
    %c0_87 = arith.constant 0 : index
    %302 = vector.load %arg10[%c0_86, %c0_87] : memref<4x144xf32, #tpu.memory_space<vmem>>, vector<4x144xf32>
    %cst_88 = arith.constant dense<0.000000e+00> : vector<4x512xf32>
    %303 = tpu.matmul %302, %301, %cst_88 {dimension_numbers = #tpu.dot_dimension_numbers<[1], [0], [0], [1], [0, 0, 1, 1], [], []>} : vector<4x144xf32>, vector<144x512xf32>, vector<4x512xf32> -> vector<4x512xf32>
    %c0_89 = arith.constant 0 : index
    %304 = memref.load %arg1[%c0_89] : memref<1xf32, #tpu.memory_space<smem>>
    %305 = vector.broadcast %304 : f32 to vector<4x512xf32>
    %306 = arith.addf %303, %305 : vector<4x512xf32>
    %c0_90 = arith.constant 0 : index
    %c0_91 = arith.constant 0 : index
    %307 = vector.load %arg14[%c0_90, %c0_91] : memref<4x512xf32, #tpu.memory_space<vmem>>, vector<4x512xf32>
    tpu.vector_store %arg14[%c0_90, %c0_91], %306 {strides = array<i32>} : memref<4x512xf32, #tpu.memory_space<vmem>>, vector<4x512xf32>,
    return
  }
}

</mosaic_0001>

<llo_original>
// kernel: vae_forward.2
$region0: #{vae_forward.2}
  #allocation0 [shape = 'u32[]', space=smem, size = 0x4, offset = 0x4, fixed_abs, tag = 'smem constant byte address 0x4 - core index']
  #allocation1 [shape = 'u32[144,128]{1,0:T(1,128)}', space=vmem, size = 0x12000, scoped, tag = 'internal scratch']
  %s0 = inlined_call_operand.vmem [shape: f32[16,512], index: 0, kind: input, shape index: {}]
  %s1 = inlined_call_operand.vmem [shape: f32[16,16], index: 1, kind: input, shape index: {}]
  %s2 = inlined_call_operand.vmem [shape: f32[16,256], index: 2, kind: input, shape index: {}]
  %s3 = inlined_call_operand.hbm [shape: f32[16,128], index: 3, kind: input, shape index: {}]
  %s4 = inlined_call_operand.vmem [shape: f32[128,128], index: 4, kind: input, shape index: {}]
  %s5 = inlined_call_operand.vmem [shape: f32[16,256], index: 5, kind: input, shape index: {}]
  %s6 = inlined_call_operand.hbm [shape: f32[16,32], index: 6, kind: input, shape index: {}]
  %s7 = inlined_call_operand.vmem [shape: f32[16,400], index: 7, kind: input, shape index: {}]
  %s8 = inlined_call_operand.vmem [shape: f32[25,32], index: 8, kind: input, shape index: {}]
  %s9 = inlined_call_operand.vmem [shape: f32[32,8], index: 9, kind: input, shape index: {}]
  %s10 = inlined_call_operand.vmem [shape: f32[4,16,8], index: 10, kind: input, shape index: {}]
  %s11 = inlined_call_operand.vmem [shape: f32[4,1], index: 11, kind: input, shape index: {}]
  %s12 = inlined_call_operand.vmem [shape: f32[8,2], index: 12, kind: input, shape index: {}]
  %s13 = inlined_call_operand.vmem [shape: f32[16,8], index: 13, kind: input, shape index: {}]
  %s14 = inlined_call_operand.vmem [shape: f32[2,2], index: 14, kind: input, shape index: {}]
  %s15 = inlined_call_operand.vmem [shape: f32[8,2], index: 15, kind: output, shape index: {}]
  %s16 = sld [smem:[#allocation0]]
  $region78: #{vae_forward.2} parent=0
    _
  %s18 = ssub.s32 1, %s16
  %s19 = scalar_select 0, %s18, %s16
  $region1: #{vae_forward.2} parent=0
    #allocation2 [shape = 'u8[8192]{0}', space=vmem, size = 0x2000, scoped, tag = 'input window, operand 3, single buffered']
    #allocation3 [shape = 's32[1]{0}', space=sflag, size = 0x4, scoped, tag = 'scoped memory for vae_forward.2']
    #allocation4 [shape = 'u8[8192]{0}', space=vmem, size = 0x2000, scoped, tag = 'input window, operand 6, single buffered']
    #allocation5 [shape = 's32[1]{0}', space=sflag, size = 0x4, scoped, tag = 'scoped memory for vae_forward.2']
    %20 = vsyncpa [#allocation3], 0
    %21 = vsyncpa [#allocation5], 0
    // Predicated region
    $region2: #{vae_forward.2} parent=1 // pred_check
      _
    $region3: #{vae_forward.2} parent=1 // pred_check_branch
      %23 = sbr.rel (0) target = $region5
    $region4: #{vae_forward.2} parent=1 // pred_region
      _
    $region5: #{vae_forward.2} parent=1 // pred_fallthru
      _
    // Predicated region
    $region6: #{vae_forward.2} parent=1 // pred_check
      _
    $region7: #{vae_forward.2} parent=1 // pred_check_branch
      %25 = sbr.rel (0) target = $region9
    $region8: #{vae_forward.2} parent=1 // pred_region
      _
    $region9: #{vae_forward.2} parent=1 // pred_fallthru
      _
    // Predicated region
    $region10: #{vae_forward.2} parent=1 // pred_check
      _
    $region11: #{vae_forward.2} parent=1 // pred_check_branch
      %27 = sbr.rel (0) target = $region13
    $region12: #{vae_forward.2} parent=1 // pred_region
      _
    $region13: #{vae_forward.2} parent=1 // pred_fallthru
      _
    // Predicated region
    $region14: #{vae_forward.2} parent=1 // pred_check
      _
    $region15: #{vae_forward.2} parent=1 // pred_check_branch
      %29 = sbr.rel (0) target = $region17
    $region16: #{vae_forward.2} parent=1 // pred_region
      %s31 = ssub.s32 256, 256
      %32 = vsyncadd [#allocation3], %s31
      %s33 = sshll.u32 [#allocation2], 4
      %s34 = int_to_ptr.vmem [resolvable:$true] %s33
      %39 = dma.hbm_to_vmem [thread:$0]  %s3, 256, %s34, [#allocation3], 128, 128, 8
    $region17: #{vae_forward.2} parent=1 // pred_fallthru
      _
    // Predicated region
    $region18: #{vae_forward.2} parent=1 // pred_check
      _
    $region19: #{vae_forward.2} parent=1 // pred_check_branch
      %41 = sbr.rel (0) target = $region21
    $region20: #{vae_forward.2} parent=1 // pred_region
      _
    $region21: #{vae_forward.2} parent=1 // pred_fallthru
      _
    // Predicated region
    $region22: #{vae_forward.2} parent=1 // pred_check
      _
    $region23: #{vae_forward.2} parent=1 // pred_check_branch
      %43 = sbr.rel (0) target = $region25
    $region24: #{vae_forward.2} parent=1 // pred_region
      _
    $region25: #{vae_forward.2} parent=1 // pred_fallthru
      _
    // Predicated region
    $region26: #{vae_forward.2} parent=1 // pred_check
      _
    $region27: #{vae_forward.2} parent=1 // pred_check_branch
      %45 = sbr.rel (0) target = $region29
    $region28: #{vae_forward.2} parent=1 // pred_region
      %s47 = ssub.s32 256, 256
      %48 = vsyncadd [#allocation5], %s47
      %s49 = sshll.u32 [#allocation4], 4
      %s50 = int_to_ptr.vmem [resolvable:$true] %s49
      %55 = dma.hbm_to_vmem [thread:$0]  %s6, 256, %s50, [#allocation5], 128, 128, 8
    $region29: #{vae_forward.2} parent=1 // pred_fallthru
      _
    // Predicated region
    $region30: #{vae_forward.2} parent=1 // pred_check
      _
    $region31: #{vae_forward.2} parent=1 // pred_check_branch
      %57 = sbr.rel (0) target = $region33
    $region32: #{vae_forward.2} parent=1 // pred_region
      _
    $region33: #{vae_forward.2} parent=1 // pred_fallthru
      _
    // Predicated region
    $region34: #{vae_forward.2} parent=1 // pred_check
      _
    $region35: #{vae_forward.2} parent=1 // pred_check_branch
      %59 = sbr.rel (0) target = $region37
    $region36: #{vae_forward.2} parent=1 // pred_region
      _
    $region37: #{vae_forward.2} parent=1 // pred_fallthru
      _
    // Predicated region
    $region38: #{vae_forward.2} parent=1 // pred_check
      _
    $region39: #{vae_forward.2} parent=1 // pred_check_branch
      %61 = sbr.rel (0) target = $region41
    $region40: #{vae_forward.2} parent=1 // pred_region
      _
    $region41: #{vae_forward.2} parent=1 // pred_fallthru
      _
    // Predicated region
    $region42: #{vae_forward.2} parent=1 // pred_check
      _
    $region43: #{vae_forward.2} parent=1 // pred_check_branch
      %63 = sbr.rel (0) target = $region45
    $region44: #{vae_forward.2} parent=1 // pred_region
      _
    $region45: #{vae_forward.2} parent=1 // pred_fallthru
      _
    // Predicated region
    $region46: #{vae_forward.2} parent=1 // pred_check
      _
    $region47: #{vae_forward.2} parent=1 // pred_check_branch
      %65 = sbr.rel (0) target = $region49
    $region48: #{vae_forward.2} parent=1 // pred_region
      _
    $region49: #{vae_forward.2} parent=1 // pred_fallthru
      _
    // Predicated region
    $region50: #{vae_forward.2} parent=1 // pred_check
      _
    $region51: #{vae_forward.2} parent=1 // pred_check_branch
      %67 = sbr.rel (0) target = $region53
    $region52: #{vae_forward.2} parent=1 // pred_region
      _
    $region53: #{vae_forward.2} parent=1 // pred_fallthru
      _
    // Predicated region
    $region54: #{vae_forward.2} parent=1 // pred_check
      _
    $region55: #{vae_forward.2} parent=1 // pred_check_branch
      %69 = sbr.rel (0) target = $region57
    $region56: #{vae_forward.2} parent=1 // pred_region
      _
    $region57: #{vae_forward.2} parent=1 // pred_fallthru
      _
    // Predicated region
    $region58: #{vae_forward.2} parent=1 // pred_check
      _
    $region59: #{vae_forward.2} parent=1 // pred_check_branch
      %71 = sbr.rel (0) target = $region61
    $region60: #{vae_forward.2} parent=1 // pred_region
      _
    $region61: #{vae_forward.2} parent=1 // pred_fallthru
      _
    // Predicated region
    $region62: #{vae_forward.2} parent=1 // pred_check
      _
    $region63: #{vae_forward.2} parent=1 // pred_check_branch
      %73 = sbr.rel (0) target = $region65
    $region64: #{vae_forward.2} parent=1 // pred_region
      %74 = dma.done [#allocation3], 256
    $region65: #{vae_forward.2} parent=1 // pred_fallthru
      _
    // Predicated region
    $region66: #{vae_forward.2} parent=1 // pred_check
      _
    $region67: #{vae_forward.2} parent=1 // pred_check_branch
      %76 = sbr.rel (0) target = $region69
    $region68: #{vae_forward.2} parent=1 // pred_region
      %77 = dma.done [#allocation5], 256
    $region69: #{vae_forward.2} parent=1 // pred_fallthru
      _
    %v78 = vld [vmem:[%s13] sm:$0xff]
    %v79 = vld [vmem:[%s13 + $0x8] sm:$0xff]
    %v80 = vld [vmem:[%s1] sm:$0xff]
    %v81 = vld [vmem:[%s1 + $0x8] sm:$0xff]
    %v82 = vld [vmem:[%s0] sm:$0xff]
    %v83 = vld [vmem:[%s0 + $0x8] sm:$0xff]
    %v84 = vld [vmem:[%s0 + $0x10] sm:$0xff]
    %v85 = vld [vmem:[%s0 + $0x18] sm:$0xff]
    %v86 = vld [vmem:[%s0 + $0x20] sm:$0xff]
    %v87 = vld [vmem:[%s0 + $0x28] sm:$0xff]
    %v88 = vld [vmem:[%s0 + $0x30] sm:$0xff]
    %v89 = vld [vmem:[%s0 + $0x38] sm:$0xff]
    %vm90 = vcmask 130048
    %v92 = vsel %vm90, %v80, 0
    %v95 = vsel %vm90, %v81, 0
    %97 = vmatprep.subr.mxu0 %v83
    %98 = vmatpush1.msra.mxu0 %v82
    %99 = vmatprep.subr.mxu0 %v87
    %100 = vmatpush1.msra.mxu0 %v86
    %101 = vmatprep.subr.mxu0 0.0
    %102 = vmatpush1.msra.mxu0 0.0
    %103 = vmatprep.subr.mxu0 0.0
    %104 = vmatpush1.msra.mxu0 0.0
    %105 = vmatprep.subr.mxu0 0.0
    %106 = vmatpush1.msra.mxu0 0.0
    %107 = vmatprep.subr.mxu0 0.0
    %108 = vmatpush1.msra.mxu0 0.0
    %109 = vmatprep.subr.mxu0 0.0
    %110 = vmatpush1.msra.mxu0 0.0
    %111 = vmatprep.subr.mxu0 0.0
    %112 = vmatpush1.msra.mxu0 0.0
    %113 = vmatprep.subr.mxu0 0.0
    %114 = vmatpush1.msra.mxu0 0.0
    %115 = vmatprep.subr.mxu0 0.0
    %116 = vmatpush1.msra.mxu0 0.0
    %117 = vmatprep.subr.mxu0 0.0
    %118 = vmatpush1.msra.mxu0 0.0
    %119 = vmatprep.subr.mxu0 0.0
    %120 = vmatpush1.msra.mxu0 0.0
    %121 = vmatprep.subr.mxu0 0.0
    %122 = vmatpush1.msra.mxu0 0.0
    %123 = vmatprep.subr.mxu0 0.0
    %124 = vmatpush1.msra.mxu0 0.0
    %125 = vmatprep.subr.mxu0 0.0
    %126 = vmatpush1.msra.mxu0 0.0
    %127 = vmatprep.subr.mxu0 0.0
    %128 = vmatpush1.msra.mxu0 0.0
    %129 = vmatprep.subr.mxu0 0.0
    %130 = vmatpush1.msra.mxu0 0.0
    %131 = vmatprep.subr.mxu0 0.0
    %132 = vmatpush1.msra.mxu0 0.0
    %133 = vmatprep.subr.mxu0 0.0
    %134 = vmatpush1.msra.mxu0 0.0
    %135 = vmatprep.subr.mxu0 0.0
    %136 = vmatpush1.msra.mxu0 0.0
    %137 = vmatprep.subr.mxu0 0.0
    %138 = vmatpush1.msra.mxu0 0.0
    %139 = vmatprep.subr.mxu0 0.0
    %140 = vmatpush1.msra.mxu0 0.0
    %141 = vmatprep.subr.mxu0 0.0
    %142 = vmatpush1.msra.mxu0 0.0
    %143 = vmatprep.subr.mxu0 0.0
    %144 = vmatpush1.msra.mxu0 0.0
    %145 = vmatprep.subr.mxu0 0.0
    %146 = vmatpush1.msra.mxu0 0.0
    %147 = vmatprep.subr.mxu0 0.0
    %148 = vmatpush1.msra.mxu0 0.0
    %149 = vmatprep.subr.mxu0 0.0
    %150 = vmatpush1.msra.mxu0 0.0
    %151 = vmatprep.subr.mxu0 0.0
    %152 = vmatpush1.msra.mxu0 0.0
    %153 = vmatprep.subr.mxu0 0.0
    %154 = vmatpush1.msra.mxu0 0.0
    %155 = vmatprep.subr.mxu0 0.0
    %156 = vmatpush1.msra.mxu0 0.0
    %157 = vmatprep.subr.mxu0 0.0
    %158 = vmatpush1.msra.mxu0 0.0
    %159 = vmatprep.subr.mxu0 0.0
    %160 = vmatpush1.msra.mxu0 0.0
    %161 = vmatprep.mubr.f32.mxu0 0.0
    %162 = vmatmul.mubr.f32.gmra.mrb[0].mxu0 %v92
    %v163 = vpop.f32.mrb[0].mxu0
    %v164 = vadd.f32 0.0, %v163
    %v165 = vpop.f32.mrb[0].mxu0
    %v166 = vadd.f32 0.0, %v165
    %167 = vmatprep.mubr.f32.mxu0 0.0
    %168 = vmatmul.mubr.f32.gmra.mrb[0].mxu0 %v95
    %v169 = vpop.f32.mrb[0].mxu0
    %v170 = vadd.f32 0.0, %v169
    %v171 = vpop.f32.mrb[0].mxu0
    %v172 = vadd.f32 0.0, %v171
    %173 = vdwg.mxu0
    %174 = vmatprep.subr.mxu0 %v85
    %175 = vmatpush1.msra.mxu0 %v84
    %176 = vmatprep.subr.mxu0 %v89
    %177 = vmatpush1.msra.mxu0 %v88
    %178 = vmatprep.subr.mxu0 0.0
    %179 = vmatpush1.msra.mxu0 0.0
    %180 = vmatprep.subr.mxu0 0.0
    %181 = vmatpush1.msra.mxu0 0.0
    %182 = vmatprep.subr.mxu0 0.0
    %183 = vmatpush1.msra.mxu0 0.0
    %184 = vmatprep.subr.mxu0 0.0
    %185 = vmatpush1.msra.mxu0 0.0
    %186 = vmatprep.subr.mxu0 0.0
    %187 = vmatpush1.msra.mxu0 0.0
    %188 = vmatprep.subr.mxu0 0.0
    %189 = vmatpush1.msra.mxu0 0.0
    %190 = vmatprep.subr.mxu0 0.0
    %191 = vmatpush1.msra.mxu0 0.0
    %192 = vmatprep.subr.mxu0 0.0
    %193 = vmatpush1.msra.mxu0 0.0
    %194 = vmatprep.subr.mxu0 0.0
    %195 = vmatpush1.msra.mxu0 0.0
    %196 = vmatprep.subr.mxu0 0.0
    %197 = vmatpush1.msra.mxu0 0.0
    %198 = vmatprep.subr.mxu0 0.0
    %199 = vmatpush1.msra.mxu0 0.0
    %200 = vmatprep.subr.mxu0 0.0
    %201 = vmatpush1.msra.mxu0 0.0
    %202 = vmatprep.subr.mxu0 0.0
    %203 = vmatpush1.msra.mxu0 0.0
    %204 = vmatprep.subr.mxu0 0.0
    %205 = vmatpush1.msra.mxu0 0.0
    %206 = vmatprep.subr.mxu0 0.0
    %207 = vmatpush1.msra.mxu0 0.0
    %208 = vmatprep.subr.mxu0 0.0
    %209 = vmatpush1.msra.mxu0 0.0
    %210 = vmatprep.subr.mxu0 0.0
    %211 = vmatpush1.msra.mxu0 0.0
    %212 = vmatprep.subr.mxu0 0.0
    %213 = vmatpush1.msra.mxu0 0.0
    %214 = vmatprep.subr.mxu0 0.0
    %215 = vmatpush1.msra.mxu0 0.0
    %216 = vmatprep.subr.mxu0 0.0
    %217 = vmatpush1.msra.mxu0 0.0
    %218 = vmatprep.subr.mxu0 0.0
    %219 = vmatpush1.msra.mxu0 0.0
    %220 = vmatprep.subr.mxu0 0.0
    %221 = vmatpush1.msra.mxu0 0.0
    %222 = vmatprep.subr.mxu0 0.0
    %223 = vmatpush1.msra.mxu0 0.0
    %224 = vmatprep.subr.mxu0 0.0
    %225 = vmatpush1.msra.mxu0 0.0
    %226 = vmatprep.subr.mxu0 0.0
    %227 = vmatpush1.msra.mxu0 0.0
    %228 = vmatprep.subr.mxu0 0.0
    %229 = vmatpush1.msra.mxu0 0.0
    %230 = vmatprep.subr.mxu0 0.0
    %231 = vmatpush1.msra.mxu0 0.0
    %232 = vmatprep.subr.mxu0 0.0
    %233 = vmatpush1.msra.mxu0 0.0
    %234 = vmatprep.subr.mxu0 0.0
    %235 = vmatpush1.msra.mxu0 0.0
    %236 = vmatprep.subr.mxu0 0.0
    %237 = vmatpush1.msra.mxu0 0.0
    %238 = vmatprep.mubr.f32.mxu0 0.0
    %239 = vmatmul.mubr.f32.gmra.mrb[0].mxu0 %v92
    %v240 = vpop.f32.mrb[0].mxu0
    %v241 = vadd.f32 0.0, %v240
    %v242 = vpop.f32.mrb[0].mxu0
    %v243 = vadd.f32 0.0, %v242
    %244 = vmatprep.mubr.f32.mxu0 0.0
    %245 = vmatmul.mubr.f32.gmra.mrb[0].mxu0 %v95
    %v246 = vpop.f32.mrb[0].mxu0
    %v247 = vadd.f32 0.0, %v246
    %v248 = vpop.f32.mrb[0].mxu0
    %v249 = vadd.f32 0.0, %v248
    %250 = vdwg.mxu0
    %v251 = vadd.f32 %v164, %v166
    %v252 = vadd.f32 %v251, %v241
    %v253 = vadd.f32 %v252, %v243
    %254 = vadd.xlane.f32.xlu0 %v253
    %v255 = vpop.xlane.xlu0 %254
    %v256 = vadd.f32 %v170, %v172
    %v257 = vadd.f32 %v256, %v247
    %v258 = vadd.f32 %v257, %v249
    %259 = vadd.xlane.f32.xlu0 %v258
    %v260 = vpop.xlane.xlu0 %259
    %v261 = vrcp.pop 512.0
    %v262 = vmul.f32 %v255, %v261
    %v263 = vmul.f32 %v260, %v261
    %v264 = vsub.f32 %v164, %v262
    %v265 = vsub.f32 %v166, %v262
    %v266 = vsub.f32 %v241, %v262
    %v267 = vsub.f32 %v243, %v262
    %v268 = vsub.f32 %v170, %v263
    %v269 = vsub.f32 %v172, %v263
    %v270 = vsub.f32 %v247, %v263
    %v271 = vsub.f32 %v249, %v263
    %v272 = vmul.f32 %v264, %v264
    %v273 = vmul.f32 %v265, %v265
    %v274 = vmul.f32 %v266, %v266
    %v275 = vmul.f32 %v267, %v267
    %v276 = vmul.f32 %v268, %v268
    %v277 = vmul.f32 %v269, %v269
    %v278 = vmul.f32 %v270, %v270
    %v279 = vmul.f32 %v271, %v271
    %v280 = vadd.f32 %v272, %v273
    %v281 = vadd.f32 %v280, %v274
    %v282 = vadd.f32 %v281, %v275
    %283 = vadd.xlane.f32.xlu0 %v282
    %v284 = vpop.xlane.xlu0 %283
    %v285 = vadd.f32 %v276, %v277
    %v286 = vadd.f32 %v285, %v278
    %v287 = vadd.f32 %v286, %v279
    %288 = vadd.xlane.f32.xlu0 %v287
    %v289 = vpop.xlane.xlu0 %288
    %v290 = vmul.f32 %v284, %v261
    %v291 = vmul.f32 %v289, %v261
    %v292 = vadd.f32 %v290, 1e-05
    %v293 = vadd.f32 %v291, 1e-05
    %v294 = vrsqrt.pop %v292
    %v295 = vrsqrt.pop %v293
    %v296 = vmul.f32 %v264, %v294
    %v297 = vmul.f32 %v265, %v294
    %v298 = vmul.f32 %v266, %v294
    %v299 = vmul.f32 %v267, %v294
    %v300 = vmul.f32 %v268, %v295
    %v301 = vmul.f32 %v269, %v295
    %v302 = vmul.f32 %v270, %v295
    %v303 = vmul.f32 %v271, %v295
    %305 = vset.pattern.permute.xlu0 0
    %306 = vperm.xlu0 %305, %v78
    %v307 = vpop.permute.xlu0 %306
    %310 = vset.pattern.permute.xlu0 0
    %311 = vperm.xlu0 %310, %v79
    %v312 = vpop.permute.xlu0 %311
    %v314 = vmul.f32 %v296, %v307
    %v315 = vmul.f32 %v297, %v307
    %v316 = vmul.f32 %v298, %v307
    %v317 = vmul.f32 %v299, %v307
    %v318 = vmul.f32 %v300, %v312
    %v319 = vmul.f32 %v301, %v312
    %v320 = vmul.f32 %v302, %v312
    %v321 = vmul.f32 %v303, %v312
    %322 = vset.pattern.permute.xlu0 4
    %323 = vperm.xlu0 %322, %v78
    %v324 = vpop.permute.xlu0 %323
    %326 = vset.pattern.permute.xlu0 4
    %327 = vperm.xlu0 %326, %v79
    %v328 = vpop.permute.xlu0 %327
    %v330 = vadd.f32 %v314, %v324
    %v331 = vadd.f32 %v315, %v324
    %v332 = vadd.f32 %v316, %v324
    %v333 = vadd.f32 %v317, %v324
    %v334 = vadd.f32 %v318, %v328
    %v335 = vadd.f32 %v319, %v328
    %v336 = vadd.f32 %v320, %v328
    %v337 = vadd.f32 %v321, %v328
    %v338 = vmax.f32 %v330, 0.0
    %v339 = vmax.f32 %v331, 0.0
    %v340 = vmax.f32 %v332, 0.0
    %v341 = vmax.f32 %v333, 0.0
    %v342 = vmax.f32 %v334, 0.0
    %v343 = vmax.f32 %v335, 0.0
    %v344 = vmax.f32 %v336, 0.0
    %v345 = vmax.f32 %v337, 0.0
    %v346 = vld [vmem:[#allocation2] sm:$0xff]
    %v347 = vld [vmem:[#allocation2 + $0x8] sm:$0xff]
    %v348 = vlaneseq
    %v349 = vshrl.u32 %v348, 7
    %v350 = vsub.s32 0, %v349
    %v351 = vrot.slane %v346, %v350
    %v352 = vmul.f32 %v338, %v351
    %v353 = vmul.f32 %v342, %v351
    %356 = vrot.lane.b32.xlu0 %v338, 127
    %v357 = vpop.permute.xlu0 %356
    %358 = vrot.lane.b32.xlu0 %v342, 127
    %v359 = vpop.permute.xlu0 %358
    %v362 = vlaneseq
    %v363 = vshrl.u32 %v362, 7
    %v364 = vsub.s32 1, %v363
    %v365 = vrot.slane %v346, %v364
    %v366 = vmul.f32 %v357, %v365
    %v367 = vmul.f32 %v359, %v365
    %368 = vrot.lane.b32.xlu0 %v338, 120
    %v369 = vpop.permute.xlu0 %368
    %370 = vrot.lane.b32.xlu0 %v342, 120
    %v371 = vpop.permute.xlu0 %370
    %v374 = vlaneseq
    %v375 = vshrl.u32 %v374, 7
    %v376 = vsub.s32 2, %v375
    %v377 = vrot.slane %v346, %v376
    %v378 = vmul.f32 %v369, %v377
    %v379 = vmul.f32 %v371, %v377
    %380 = vrot.lane.b32.xlu0 %v338, 119
    %v381 = vpop.permute.xlu0 %380
    %382 = vrot.lane.b32.xlu0 %v342, 119
    %v383 = vpop.permute.xlu0 %382
    %v386 = vlaneseq
    %v387 = vshrl.u32 %v386, 7
    %v388 = vsub.s32 3, %v387
    %v389 = vrot.slane %v346, %v388
    %v390 = vmul.f32 %v381, %v389
    %v391 = vmul.f32 %v383, %v389
    %v392 = vlaneseq
    %v393 = vshrl.u32 %v392, 7
    %v394 = vsub.s32 4, %v393
    %v395 = vrot.slane %v346, %v394
    %v396 = vmul.f32 %v339, %v395
    %v397 = vmul.f32 %v343, %v395
    %400 = vrot.lane.b32.xlu0 %v339, 1
    %v401 = vpop.permute.xlu0 %400
    %402 = vrot.lane.b32.xlu0 %v343, 1
    %v403 = vpop.permute.xlu0 %402
    %vm406 = vcmask 7168
    %v407 = vlaneseq
    %v408 = vshrl.u32 %v407, 7
    %v409 = vsub.s32 5, %v408
    %v410 = vrot.slane %v346, %v409
    %v411 = vmul.f32 %v401, %v410
    %v412 = vmul.f32 %v403, %v410
    %413 = vrot.lane.b32.xlu0 %v339, 120
    %v414 = vpop.permute.xlu0 %413
    %415 = vrot.lane.b32.xlu0 %v343, 120
    %v416 = vpop.permute.xlu0 %415
    %v419 = vlaneseq
    %v420 = vshrl.u32 %v419, 7
    %v421 = vsub.s32 6, %v420
    %v422 = vrot.slane %v346, %v421
    %v423 = vmul.f32 %v414, %v422
    %v424 = vmul.f32 %v416, %v422
    %425 = vrot.lane.b32.xlu0 %v339, 121
    %v426 = vpop.permute.xlu0 %425
    %427 = vrot.lane.b32.xlu0 %v343, 121
    %v428 = vpop.permute.xlu0 %427
    %v431 = vlaneseq
    %v432 = vshrl.u32 %v431, 7
    %v433 = vsub.s32 7, %v432
    %v434 = vrot.slane %v346, %v433
    %v435 = vmul.f32 %v426, %v434
    %v436 = vmul.f32 %v428, %v434
    %v437 = vlaneseq
    %v438 = vshrl.u32 %v437, 7
    %v439 = vsub.s32 0, %v438
    %v440 = vrot.slane %v347, %v439
    %v441 = vmul.f32 %v340, %v440
    %v442 = vmul.f32 %v344, %v440
    %445 = vrot.lane.b32.xlu0 %v340, 127
    %v446 = vpop.permute.xlu0 %445
    %447 = vrot.lane.b32.xlu0 %v344, 127
    %v448 = vpop.permute.xlu0 %447
    %v451 = vlaneseq
    %v452 = vshrl.u32 %v451, 7
    %v453 = vsub.s32 1, %v452
    %v454 = vrot.slane %v347, %v453
    %v455 = vmul.f32 %v446, %v454
    %v456 = vmul.f32 %v448, %v454
    %457 = vrot.lane.b32.xlu0 %v340, 8
    %v458 = vpop.permute.xlu0 %457
    %459 = vrot.lane.b32.xlu0 %v344, 8
    %v460 = vpop.permute.xlu0 %459
    %vm463 = vcmask 64512
    %v464 = vlaneseq
    %v465 = vshrl.u32 %v464, 7
    %v466 = vsub.s32 2, %v465
    %v467 = vrot.slane %v347, %v466
    %v468 = vmul.f32 %v458, %v467
    %v469 = vmul.f32 %v460, %v467
    %470 = vrot.lane.b32.xlu0 %v340, 7
    %v471 = vpop.permute.xlu0 %470
    %472 = vrot.lane.b32.xlu0 %v344, 7
    %v473 = vpop.permute.xlu0 %472
    %vm476 = vcmask 56320
    %v477 = vlaneseq
    %v478 = vshrl.u32 %v477, 7
    %v479 = vsub.s32 3, %v478
    %v480 = vrot.slane %v347, %v479
    %v481 = vmul.f32 %v471, %v480
    %v482 = vmul.f32 %v473, %v480
    %v483 = vlaneseq
    %v484 = vshrl.u32 %v483, 7
    %v485 = vsub.s32 4, %v484
    %v486 = vrot.slane %v347, %v485
    %v487 = vmul.f32 %v341, %v486
    %v488 = vmul.f32 %v345, %v486
    %491 = vrot.lane.b32.xlu0 %v341, 1
    %v492 = vpop.permute.xlu0 %491
    %493 = vrot.lane.b32.xlu0 %v345, 1
    %v494 = vpop.permute.xlu0 %493
    %v497 = vlaneseq
    %v498 = vshrl.u32 %v497, 7
    %v499 = vsub.s32 5, %v498
    %v500 = vrot.slane %v347, %v499
    %v501 = vmul.f32 %v492, %v500
    %v502 = vmul.f32 %v494, %v500
    %503 = vrot.lane.b32.xlu0 %v341, 8
    %v504 = vpop.permute.xlu0 %503
    %505 = vrot.lane.b32.xlu0 %v345, 8
    %v506 = vpop.permute.xlu0 %505
    %v509 = vlaneseq
    %v510 = vshrl.u32 %v509, 7
    %v511 = vsub.s32 6, %v510
    %v512 = vrot.slane %v347, %v511
    %v513 = vmul.f32 %v504, %v512
    %v514 = vmul.f32 %v506, %v512
    %515 = vrot.lane.b32.xlu0 %v341, 9
    %v516 = vpop.permute.xlu0 %515
    %517 = vrot.lane.b32.xlu0 %v345, 9
    %v518 = vpop.permute.xlu0 %517
    %vm521 = vcmask 72704
    %v522 = vlaneseq
    %v523 = vshrl.u32 %v522, 7
    %v524 = vsub.s32 7, %v523
    %v525 = vrot.slane %v347, %v524
    %v526 = vmul.f32 %v516, %v525
    %v527 = vmul.f32 %v518, %v525
    %v528 = vld [vmem:[%s2] sm:$0xff]
    %v529 = vld [vmem:[%s2 + $0x8] sm:$0xff]
    %v530 = vld [vmem:[%s2 + $0x10] sm:$0xff]
    %v531 = vld [vmem:[%s2 + $0x18] sm:$0xff]
    %532 = vmatprep.subr.mxu0 0.0
    %533 = vmatpush1.msra.mxu0 %v352
    %534 = vmatprep.subr.mxu0 0.0
    %535 = vmatpush1.msra.mxu0 %v353
    %536 = vmatprep.subr.mxu0 0.0
    %537 = vmatpush1.msra.mxu0 %v366
    %538 = vmatprep.subr.mxu0 0.0
    %539 = vmatpush1.msra.mxu0 %v367
    %540 = vmatprep.subr.mxu0 0.0
    %541 = vmatpush1.msra.mxu0 %v378
    %542 = vmatprep.subr.mxu0 0.0
    %543 = vmatpush1.msra.mxu0 %v379
    %544 = vmatprep.subr.mxu0 0.0
    %545 = vmatpush1.msra.mxu0 %v390
    %546 = vmatprep.subr.mxu0 0.0
    %547 = vmatpush1.msra.mxu0 %v391
    %548 = vmatprep.subr.mxu0 0.0
    %549 = vmatpush1.msra.mxu0 %v396
    %550 = vmatprep.subr.mxu0 0.0
    %551 = vmatpush1.msra.mxu0 %v397
    %552 = vmatprep.subr.mxu0 0.0
    %553 = vmatpush1.msra.mxu0 %v411
    %554 = vmatprep.subr.mxu0 0.0
    %555 = vmatpush1.msra.mxu0 %v412
    %556 = vmatprep.subr.mxu0 0.0
    %557 = vmatpush1.msra.mxu0 %v423
    %558 = vmatprep.subr.mxu0 0.0
    %559 = vmatpush1.msra.mxu0 %v424
    %560 = vmatprep.subr.mxu0 0.0
    %561 = vmatpush1.msra.mxu0 %v435
    %562 = vmatprep.subr.mxu0 0.0
    %563 = vmatpush1.msra.mxu0 %v436
    %564 = vmatprep.subr.mxu0 0.0
    %565 = vmatpush1.msra.mxu0 %v441
    %566 = vmatprep.subr.mxu0 0.0
    %567 = vmatpush1.msra.mxu0 %v442
    %568 = vmatprep.subr.mxu0 0.0
    %569 = vmatpush1.msra.mxu0 %v455
    %570 = vmatprep.subr.mxu0 0.0
    %571 = vmatpush1.msra.mxu0 %v456
    %572 = vmatprep.subr.mxu0 0.0
    %573 = vmatpush1.msra.mxu0 %v468
    %574 = vmatprep.subr.mxu0 0.0
    %575 = vmatpush1.msra.mxu0 %v469
    %576 = vmatprep.subr.mxu0 0.0
    %577 = vmatpush1.msra.mxu0 %v481
    %578 = vmatprep.subr.mxu0 0.0
    %579 = vmatpush1.msra.mxu0 %v482
    %580 = vmatprep.subr.mxu0 0.0
    %581 = vmatpush1.msra.mxu0 %v487
    %582 = vmatprep.subr.mxu0 0.0
    %583 = vmatpush1.msra.mxu0 %v488
    %584 = vmatprep.subr.mxu0 0.0
    %585 = vmatpush1.msra.mxu0 %v501
    %586 = vmatprep.subr.mxu0 0.0
    %587 = vmatpush1.msra.mxu0 %v502
    %588 = vmatprep.subr.mxu0 0.0
    %589 = vmatpush1.msra.mxu0 %v513
    %590 = vmatprep.subr.mxu0 0.0
    %591 = vmatpush1.msra.mxu0 %v514
    %592 = vmatprep.subr.mxu0 0.0
    %593 = vmatpush1.msra.mxu0 %v526
    %594 = vmatprep.subr.mxu0 0.0
    %595 = vmatpush1.msra.mxu0 %v527
    %596 = vmatprep.mubr.f32.mxu0 %v529
    %597 = vmatmul.mubr.f32.gmra.mrb[0].mxu0 %v528
    %v598 = vpop.f32.mrb[0].mxu0
    %v599 = vadd.f32 0.0, %v598
    %v600 = vpop.f32.mrb[0].mxu0
    %601 = vmatprep.mubr.f32.mxu0 %v531
    %602 = vmatmul.mubr.f32.gmra.mrb[0].mxu0 %v530
    %v603 = vpop.f32.mrb[0].mxu0
    %v604 = vadd.f32 0.0, %v603
    %v605 = vpop.f32.mrb[0].mxu0
    %606 = vdwg.mxu0
    %607 = vadd.xlane.f32.xlu0 %v599
    %v608 = vpop.xlane.xlu0 %607
    %609 = vadd.xlane.f32.xlu0 %v604
    %v610 = vpop.xlane.xlu0 %609
    %v611 = vrcp.pop 128.0
    %v612 = vmul.f32 %v608, %v611
    %v613 = vmul.f32 %v610, %v611
    %v614 = vsub.f32 %v599, %v612
    %v615 = vsub.f32 %v604, %v613
    %v616 = vmul.f32 %v614, %v614
    %v617 = vmul.f32 %v615, %v615
    %618 = vadd.xlane.f32.xlu0 %v616
    %v619 = vpop.xlane.xlu0 %618
    %620 = vadd.xlane.f32.xlu0 %v617
    %v621 = vpop.xlane.xlu0 %620
    %v622 = vmul.f32 %v619, %v611
    %v623 = vmul.f32 %v621, %v611
    %v624 = vadd.f32 %v622, 1e-05
    %v625 = vadd.f32 %v623, 1e-05
    %v626 = vrsqrt.pop %v624
    %v627 = vrsqrt.pop %v625
    %v628 = vmul.f32 %v614, %v626
    %v629 = vmul.f32 %v615, %v627
    %630 = vset.pattern.permute.xlu0 1
    %631 = vperm.xlu0 %630, %v78
    %v632 = vpop.permute.xlu0 %631
    %634 = vset.pattern.permute.xlu0 1
    %635 = vperm.xlu0 %634, %v79
    %v636 = vpop.permute.xlu0 %635
    %v638 = vmul.f32 %v628, %v632
    %v639 = vmul.f32 %v629, %v636
    %640 = vset.pattern.permute.xlu0 5
    %641 = vperm.xlu0 %640, %v78
    %v642 = vpop.permute.xlu0 %641
    %644 = vset.pattern.permute.xlu0 5
    %645 = vperm.xlu0 %644, %v79
    %v646 = vpop.permute.xlu0 %645
    %v648 = vadd.f32 %v638, %v642
    %v649 = vadd.f32 %v639, %v646
    %v650 = vmax.f32 %v648, 0.0
    %v651 = vmax.f32 %v649, 0.0
    %v652 = vld [vmem:[%s4] sm:$0xff]
    %v653 = vld [vmem:[%s4 + $0x8] sm:$0xff]
    %v654 = vld [vmem:[%s4 + $0x10] sm:$0xff]
    %v655 = vld [vmem:[%s4 + $0x18] sm:$0xff]
    %v656 = vld [vmem:[%s4 + $0x20] sm:$0xff]
    %v657 = vld [vmem:[%s4 + $0x28] sm:$0xff]
    %v658 = vld [vmem:[%s4 + $0x30] sm:$0xff]
    %v659 = vld [vmem:[%s4 + $0x38] sm:$0xff]
    %v660 = vld [vmem:[%s4 + $0x40] sm:$0xff]
    %v661 = vld [vmem:[%s4 + $0x48] sm:$0xff]
    %v662 = vld [vmem:[%s4 + $0x50] sm:$0xff]
    %v663 = vld [vmem:[%s4 + $0x58] sm:$0xff]
    %v664 = vld [vmem:[%s4 + $0x60] sm:$0xff]
    %v665 = vld [vmem:[%s4 + $0x68] sm:$0xff]
    %v666 = vld [vmem:[%s4 + $0x70] sm:$0xff]
    %v667 = vld [vmem:[%s4 + $0x78] sm:$0xff]
    %668 = vmatprep.subr.mxu0 0.0
    %669 = vmatpush1.msra.mxu0 %v652
    %670 = vmatprep.subr.mxu0 0.0
    %671 = vmatpush1.msra.mxu0 %v653
    %672 = vmatprep.subr.mxu0 0.0
    %673 = vmatpush1.msra.mxu0 %v654
    %674 = vmatprep.subr.mxu0 0.0
    %675 = vmatpush1.msra.mxu0 %v655
    %676 = vmatprep.subr.mxu0 0.0
    %677 = vmatpush1.msra.mxu0 %v656
    %678 = vmatprep.subr.mxu0 0.0
    %679 = vmatpush1.msra.mxu0 %v657
    %680 = vmatprep.subr.mxu0 0.0
    %681 = vmatpush1.msra.mxu0 %v658
    %682 = vmatprep.subr.mxu0 0.0
    %683 = vmatpush1.msra.mxu0 %v659
    %684 = vmatprep.subr.mxu0 0.0
    %685 = vmatpush1.msra.mxu0 %v660
    %686 = vmatprep.subr.mxu0 0.0
    %687 = vmatpush1.msra.mxu0 %v661
    %688 = vmatprep.subr.mxu0 0.0
    %689 = vmatpush1.msra.mxu0 %v662
    %690 = vmatprep.subr.mxu0 0.0
    %691 = vmatpush1.msra.mxu0 %v663
    %692 = vmatprep.subr.mxu0 0.0
    %693 = vmatpush1.msra.mxu0 %v664
    %694 = vmatprep.subr.mxu0 0.0
    %695 = vmatpush1.msra.mxu0 %v665
    %696 = vmatprep.subr.mxu0 0.0
    %697 = vmatpush1.msra.mxu0 %v666
    %698 = vmatprep.subr.mxu0 0.0
    %699 = vmatpush1.msra.mxu0 %v667
    %700 = vmatprep.subr.mxu0 0.0
    %701 = vmatpush1.msra.mxu0 0.0
    %702 = vmatprep.subr.mxu0 0.0
    %703 = vmatpush1.msra.mxu0 0.0
    %704 = vmatprep.subr.mxu0 0.0
    %705 = vmatpush1.msra.mxu0 0.0
    %706 = vmatprep.subr.mxu0 0.0
    %707 = vmatpush1.msra.mxu0 0.0
    %708 = vmatprep.subr.mxu0 0.0
    %709 = vmatpush1.msra.mxu0 0.0
    %710 = vmatprep.subr.mxu0 0.0
    %711 = vmatpush1.msra.mxu0 0.0
    %712 = vmatprep.subr.mxu0 0.0
    %713 = vmatpush1.msra.mxu0 0.0
    %714 = vmatprep.subr.mxu0 0.0
    %715 = vmatpush1.msra.mxu0 0.0
    %716 = vmatprep.subr.mxu0 0.0
    %717 = vmatpush1.msra.mxu0 0.0
    %718 = vmatprep.subr.mxu0 0.0
    %719 = vmatpush1.msra.mxu0 0.0
    %720 = vmatprep.subr.mxu0 0.0
    %721 = vmatpush1.msra.mxu0 0.0
    %722 = vmatprep.subr.mxu0 0.0
    %723 = vmatpush1.msra.mxu0 0.0
    %724 = vmatprep.subr.mxu0 0.0
    %725 = vmatpush1.msra.mxu0 0.0
    %726 = vmatprep.subr.mxu0 0.0
    %727 = vmatpush1.msra.mxu0 0.0
    %728 = vmatprep.subr.mxu0 0.0
    %729 = vmatpush1.msra.mxu0 0.0
    %730 = vmatprep.subr.mxu0 0.0
    %731 = vmatpush1.msra.mxu0 0.0
    %732 = vmatprep.mubr.f32.mxu0 0.0
    %733 = vmatmul.mubr.f32.gmra.mrb[0].mxu0 %v650
    %v734 = vpop.f32.mrb[0].mxu0
    %v735 = vadd.f32 0.0, %v734
    %v736 = vpop.f32.mrb[0].mxu0
    %737 = vmatprep.mubr.f32.mxu0 0.0
    %738 = vmatmul.mubr.f32.gmra.mrb[0].mxu0 %v651
    %v739 = vpop.f32.mrb[0].mxu0
    %v740 = vadd.f32 0.0, %v739
    %v741 = vpop.f32.mrb[0].mxu0
    %742 = vdwg.mxu0
    %v743 = vld [vmem:[#allocation4] sm:$0xff]
    %v744 = vld [vmem:[#allocation4 + $0x8] sm:$0xff]
    %v745 = vlaneseq
    %v746 = vshrl.u32 %v745, 7
    %v747 = vsub.s32 0, %v746
    %v748 = vrot.slane %v743, %v747
    %v749 = vmul.f32 %v735, %v748
    %v750 = vmul.f32 %v740, %v748
    %753 = vrot.lane.b32.xlu0 %v735, 127
    %v754 = vpop.permute.xlu0 %753
    %755 = vrot.lane.b32.xlu0 %v740, 127
    %v756 = vpop.permute.xlu0 %755
    %759 = vrot.lane.b32.xlu0 %v735, 31
    %v760 = vpop.permute.xlu0 %759
    %761 = vrot.lane.b32.xlu0 %v740, 31
    %v762 = vpop.permute.xlu0 %761
    %vm765 = vcmask 252928
    %v766 = vsel %vm765, %v754, %v760
    %v767 = vsel %vm765, %v756, %v762
    %v768 = vlaneseq
    %v769 = vshrl.u32 %v768, 7
    %v770 = vsub.s32 1, %v769
    %v771 = vrot.slane %v743, %v770
    %v772 = vmul.f32 %v766, %v771
    %v773 = vmul.f32 %v767, %v771
    %774 = vrot.lane.b32.xlu0 %v735, 124
    %v775 = vpop.permute.xlu0 %774
    %776 = vrot.lane.b32.xlu0 %v740, 124
    %v777 = vpop.permute.xlu0 %776
    %780 = vrot.lane.b32.xlu0 %v735, 28
    %v781 = vpop.permute.xlu0 %780
    %782 = vrot.lane.b32.xlu0 %v740, 28
    %v783 = vpop.permute.xlu0 %782
    %vm786 = vcmask 228352
    %v787 = vsel %vm786, %v775, %v781
    %v788 = vsel %vm786, %v777, %v783
    %v789 = vlaneseq
    %v790 = vshrl.u32 %v789, 7
    %v791 = vsub.s32 2, %v790
    %v792 = vrot.slane %v743, %v791
    %v793 = vmul.f32 %v787, %v792
    %v794 = vmul.f32 %v788, %v792
    %795 = vrot.lane.b32.xlu0 %v735, 123
    %v796 = vpop.permute.xlu0 %795
    %797 = vrot.lane.b32.xlu0 %v740, 123
    %v798 = vpop.permute.xlu0 %797
    %801 = vrot.lane.b32.xlu0 %v735, 27
    %v802 = vpop.permute.xlu0 %801
    %803 = vrot.lane.b32.xlu0 %v740, 27
    %v804 = vpop.permute.xlu0 %803
    %vm807 = vcmask 220160
    %v808 = vsel %vm807, %v796, %v802
    %v809 = vsel %vm807, %v798, %v804
    %v810 = vlaneseq
    %v811 = vshrl.u32 %v810, 7
    %v812 = vsub.s32 3, %v811
    %v813 = vrot.slane %v743, %v812
    %v814 = vmul.f32 %v808, %v813
    %v815 = vmul.f32 %v809, %v813
    %v816 = vlaneseq
    %v817 = vshrl.u32 %v816, 7
    %v818 = vsub.s32 4, %v817
    %v819 = vrot.slane %v743, %v818
    %821 = vrot.lane.b32.xlu0 %v819, 32
    %v822 = vpop.permute.xlu0 %821
    %v824 = vmul.f32 %v735, %v822
    %v825 = vmul.f32 %v740, %v822
    %826 = vrot.lane.b32.xlu0 %v735, 65
    %v827 = vpop.permute.xlu0 %826
    %828 = vrot.lane.b32.xlu0 %v740, 65
    %v829 = vpop.permute.xlu0 %828
    %832 = vrot.lane.b32.xlu0 %v735, 97
    %v833 = vpop.permute.xlu0 %832
    %834 = vrot.lane.b32.xlu0 %v740, 97
    %v835 = vpop.permute.xlu0 %834
    %v838 = vsel %vm406, %v827, %v833
    %v839 = vsel %vm406, %v829, %v835
    %v840 = vlaneseq
    %v841 = vshrl.u32 %v840, 7
    %v842 = vsub.s32 5, %v841
    %v843 = vrot.slane %v743, %v842
    %v844 = vmul.f32 %v838, %v843
    %v845 = vmul.f32 %v839, %v843
    %846 = vrot.lane.b32.xlu0 %v735, 92
    %v847 = vpop.permute.xlu0 %846
    %848 = vrot.lane.b32.xlu0 %v740, 92
    %v849 = vpop.permute.xlu0 %848
    %v852 = vsel %vm786, %v847, %v775
    %v853 = vsel %vm786, %v849, %v777
    %v854 = vlaneseq
    %v855 = vshrl.u32 %v854, 7
    %v856 = vsub.s32 6, %v855
    %v857 = vrot.slane %v743, %v856
    %v858 = vmul.f32 %v852, %v857
    %v859 = vmul.f32 %v853, %v857
    %860 = vrot.lane.b32.xlu0 %v735, 93
    %v861 = vpop.permute.xlu0 %860
    %862 = vrot.lane.b32.xlu0 %v740, 93
    %v863 = vpop.permute.xlu0 %862
    %866 = vrot.lane.b32.xlu0 %v735, 125
    %v867 = vpop.permute.xlu0 %866
    %868 = vrot.lane.b32.xlu0 %v740, 125
    %v869 = vpop.permute.xlu0 %868
    %vm872 = vcmask 236544
    %v873 = vsel %vm872, %v861, %v867
    %v874 = vsel %vm872, %v863, %v869
    %v875 = vlaneseq
    %v876 = vshrl.u32 %v875, 7
    %v877 = vsub.s32 7, %v876
    %v878 = vrot.slane %v743, %v877
    %v879 = vmul.f32 %v873, %v878
    %v880 = vmul.f32 %v874, %v878
    %v881 = vlaneseq
    %v882 = vshrl.u32 %v881, 7
    %v883 = vsub.s32 0, %v882
    %v884 = vrot.slane %v744, %v883
    %886 = vrot.lane.b32.xlu0 %v884, 64
    %v887 = vpop.permute.xlu0 %886
    %v889 = vmul.f32 %v735, %v887
    %v890 = vmul.f32 %v740, %v887
    %891 = vrot.lane.b32.xlu0 %v735, 63
    %v892 = vpop.permute.xlu0 %891
    %893 = vrot.lane.b32.xlu0 %v740, 63
    %v894 = vpop.permute.xlu0 %893
    %897 = vrot.lane.b32.xlu0 %v735, 95
    %v898 = vpop.permute.xlu0 %897
    %899 = vrot.lane.b32.xlu0 %v740, 95
    %v900 = vpop.permute.xlu0 %899
    %v903 = vsel %vm765, %v892, %v898
    %v904 = vsel %vm765, %v894, %v900
    %v905 = vlaneseq
    %v906 = vshrl.u32 %v905, 7
    %v907 = vsub.s32 1, %v906
    %v908 = vrot.slane %v744, %v907
    %v909 = vmul.f32 %v903, %v908
    %v910 = vmul.f32 %v904, %v908
    %911 = vrot.lane.b32.xlu0 %v735, 36
    %v912 = vpop.permute.xlu0 %911
    %913 = vrot.lane.b32.xlu0 %v740, 36
    %v914 = vpop.permute.xlu0 %913
    %917 = vrot.lane.b32.xlu0 %v735, 68
    %v918 = vpop.permute.xlu0 %917
    %919 = vrot.lane.b32.xlu0 %v740, 68
    %v920 = vpop.permute.xlu0 %919
    %vm923 = vcmask 31744
    %v924 = vsel %vm923, %v912, %v918
    %v925 = vsel %vm923, %v914, %v920
    %v926 = vlaneseq
    %v927 = vshrl.u32 %v926, 7
    %v928 = vsub.s32 2, %v927
    %v929 = vrot.slane %v744, %v928
    %v930 = vmul.f32 %v924, %v929
    %v931 = vmul.f32 %v925, %v929
    %932 = vrot.lane.b32.xlu0 %v735, 35
    %v933 = vpop.permute.xlu0 %932
    %934 = vrot.lane.b32.xlu0 %v740, 35
    %v935 = vpop.permute.xlu0 %934
    %938 = vrot.lane.b32.xlu0 %v735, 67
    %v939 = vpop.permute.xlu0 %938
    %940 = vrot.lane.b32.xlu0 %v740, 67
    %v941 = vpop.permute.xlu0 %940
    %vm944 = vcmask 23552
    %v945 = vsel %vm944, %v933, %v939
    %v946 = vsel %vm944, %v935, %v941
    %v947 = vlaneseq
    %v948 = vshrl.u32 %v947, 7
    %v949 = vsub.s32 3, %v948
    %v950 = vrot.slane %v744, %v949
    %v951 = vmul.f32 %v945, %v950
    %v952 = vmul.f32 %v946, %v950
    %v953 = vlaneseq
    %v954 = vshrl.u32 %v953, 7
    %v955 = vsub.s32 4, %v954
    %v956 = vrot.slane %v744, %v955
    %958 = vrot.lane.b32.xlu0 %v956, 96
    %v959 = vpop.permute.xlu0 %958
    %v961 = vmul.f32 %v735, %v959
    %v962 = vmul.f32 %v740, %v959
    %963 = vrot.lane.b32.xlu0 %v735, 1
    %v964 = vpop.permute.xlu0 %963
    %965 = vrot.lane.b32.xlu0 %v740, 1
    %v966 = vpop.permute.xlu0 %965
    %969 = vrot.lane.b32.xlu0 %v735, 33
    %v970 = vpop.permute.xlu0 %969
    %971 = vrot.lane.b32.xlu0 %v740, 33
    %v972 = vpop.permute.xlu0 %971
    %v975 = vsel %vm406, %v964, %v970
    %v976 = vsel %vm406, %v966, %v972
    %v977 = vlaneseq
    %v978 = vshrl.u32 %v977, 7
    %v979 = vsub.s32 5, %v978
    %v980 = vrot.slane %v744, %v979
    %v981 = vmul.f32 %v975, %v980
    %v982 = vmul.f32 %v976, %v980
    %983 = vrot.lane.b32.xlu0 %v735, 4
    %v984 = vpop.permute.xlu0 %983
    %985 = vrot.lane.b32.xlu0 %v740, 4
    %v986 = vpop.permute.xlu0 %985
    %v989 = vsel %vm923, %v984, %v912
    %v990 = vsel %vm923, %v986, %v914
    %v991 = vlaneseq
    %v992 = vshrl.u32 %v991, 7
    %v993 = vsub.s32 6, %v992
    %v994 = vrot.slane %v744, %v993
    %v995 = vmul.f32 %v989, %v994
    %v996 = vmul.f32 %v990, %v994
    %997 = vrot.lane.b32.xlu0 %v735, 5
    %v998 = vpop.permute.xlu0 %997
    %999 = vrot.lane.b32.xlu0 %v740, 5
    %v1000 = vpop.permute.xlu0 %999
    %1003 = vrot.lane.b32.xlu0 %v735, 37
    %v1004 = vpop.permute.xlu0 %1003
    %1005 = vrot.lane.b32.xlu0 %v740, 37
    %v1006 = vpop.permute.xlu0 %1005
    %vm1009 = vcmask 39936
    %v1010 = vsel %vm1009, %v998, %v1004
    %v1011 = vsel %vm1009, %v1000, %v1006
    %v1012 = vlaneseq
    %v1013 = vshrl.u32 %v1012, 7
    %v1014 = vsub.s32 7, %v1013
    %v1015 = vrot.slane %v744, %v1014
    %v1016 = vmul.f32 %v1010, %v1015
    %v1017 = vmul.f32 %v1011, %v1015
    %1020 = vrot.lane.b32.xlu0 %v824, 96
    %v1021 = vpop.permute.xlu0 %1020
    %1022 = vrot.lane.b32.xlu0 %v825, 96
    %v1023 = vpop.permute.xlu0 %1022
    %1028 = vrot.lane.b32.xlu0 %v889, 64
    %v1029 = vpop.permute.xlu0 %1028
    %1030 = vrot.lane.b32.xlu0 %v890, 64
    %v1031 = vpop.permute.xlu0 %1030
    %1036 = vrot.lane.b32.xlu0 %v961, 32
    %v1037 = vpop.permute.xlu0 %1036
    %1038 = vrot.lane.b32.xlu0 %v962, 32
    %v1039 = vpop.permute.xlu0 %1038
    %v1042 = vld [vmem:[%s5] sm:$0xff]
    %v1043 = vld [vmem:[%s5 + $0x8] sm:$0xff]
    %v1044 = vld [vmem:[%s5 + $0x10] sm:$0xff]
    %v1045 = vld [vmem:[%s5 + $0x18] sm:$0xff]
    %1046 = vmatprep.subr.mxu0 0.0
    %1047 = vmatpush1.msra.mxu0 %v749
    %1048 = vmatprep.subr.mxu0 0.0
    %1049 = vmatpush1.msra.mxu0 %v750
    %1050 = vmatprep.subr.mxu0 0.0
    %1051 = vmatpush1.msra.mxu0 %v772
    %1052 = vmatprep.subr.mxu0 0.0
    %1053 = vmatpush1.msra.mxu0 %v773
    %1054 = vmatprep.subr.mxu0 0.0
    %1055 = vmatpush1.msra.mxu0 %v793
    %1056 = vmatprep.subr.mxu0 0.0
    %1057 = vmatpush1.msra.mxu0 %v794
    %1058 = vmatprep.subr.mxu0 0.0
    %1059 = vmatpush1.msra.mxu0 %v814
    %1060 = vmatprep.subr.mxu0 0.0
    %1061 = vmatpush1.msra.mxu0 %v815
    %1062 = vmatprep.subr.mxu0 0.0
    %1063 = vmatpush1.msra.mxu0 %v1021
    %1064 = vmatprep.subr.mxu0 0.0
    %1065 = vmatpush1.msra.mxu0 %v1023
    %1066 = vmatprep.subr.mxu0 0.0
    %1067 = vmatpush1.msra.mxu0 %v844
    %1068 = vmatprep.subr.mxu0 0.0
    %1069 = vmatpush1.msra.mxu0 %v845
    %1070 = vmatprep.subr.mxu0 0.0
    %1071 = vmatpush1.msra.mxu0 %v858
    %1072 = vmatprep.subr.mxu0 0.0
    %1073 = vmatpush1.msra.mxu0 %v859
    %1074 = vmatprep.subr.mxu0 0.0
    %1075 = vmatpush1.msra.mxu0 %v879
    %1076 = vmatprep.subr.mxu0 0.0
    %1077 = vmatpush1.msra.mxu0 %v880
    %1078 = vmatprep.subr.mxu0 0.0
    %1079 = vmatpush1.msra.mxu0 %v1029
    %1080 = vmatprep.subr.mxu0 0.0
    %1081 = vmatpush1.msra.mxu0 %v1031
    %1082 = vmatprep.subr.mxu0 0.0
    %1083 = vmatpush1.msra.mxu0 %v909
    %1084 = vmatprep.subr.mxu0 0.0
    %1085 = vmatpush1.msra.mxu0 %v910
    %1086 = vmatprep.subr.mxu0 0.0
    %1087 = vmatpush1.msra.mxu0 %v930
    %1088 = vmatprep.subr.mxu0 0.0
    %1089 = vmatpush1.msra.mxu0 %v931
    %1090 = vmatprep.subr.mxu0 0.0
    %1091 = vmatpush1.msra.mxu0 %v951
    %1092 = vmatprep.subr.mxu0 0.0
    %1093 = vmatpush1.msra.mxu0 %v952
    %1094 = vmatprep.subr.mxu0 0.0
    %1095 = vmatpush1.msra.mxu0 %v1037
    %1096 = vmatprep.subr.mxu0 0.0
    %1097 = vmatpush1.msra.mxu0 %v1039
    %1098 = vmatprep.subr.mxu0 0.0
    %1099 = vmatpush1.msra.mxu0 %v981
    %1100 = vmatprep.subr.mxu0 0.0
    %1101 = vmatpush1.msra.mxu0 %v982
    %1102 = vmatprep.subr.mxu0 0.0
    %1103 = vmatpush1.msra.mxu0 %v995
    %1104 = vmatprep.subr.mxu0 0.0
    %1105 = vmatpush1.msra.mxu0 %v996
    %1106 = vmatprep.subr.mxu0 0.0
    %1107 = vmatpush1.msra.mxu0 %v1016
    %1108 = vmatprep.subr.mxu0 0.0
    %1109 = vmatpush1.msra.mxu0 %v1017
    %1110 = vmatprep.mubr.f32.mxu0 %v1043
    %1111 = vmatmul.mubr.f32.gmra.mrb[0].mxu0 %v1042
    %v1112 = vpop.f32.mrb[0].mxu0
    %v1113 = vadd.f32 0.0, %v1112
    %v1114 = vpop.f32.mrb[0].mxu0
    %1115 = vmatprep.mubr.f32.mxu0 %v1045
    %1116 = vmatmul.mubr.f32.gmra.mrb[0].mxu0 %v1044
    %v1117 = vpop.f32.mrb[0].mxu0
    %v1118 = vadd.f32 0.0, %v1117
    %v1119 = vpop.f32.mrb[0].mxu0
    %1120 = vdwg.mxu0
    %vm1121 = vcmask 261120
    %v1122 = vsel %vm1121, %v1113, 0.0
    %1123 = vadd.xlane.f32.xlu0 %v1122
    %v1124 = vpop.xlane.xlu0 %1123
    %v1125 = vsel %vm1121, %v1118, 0.0
    %1126 = vadd.xlane.f32.xlu0 %v1125
    %v1127 = vpop.xlane.xlu0 %1126
    %v1128 = vrcp.pop 32.0
    %v1129 = vmul.f32 %v1124, %v1128
    %v1130 = vmul.f32 %v1127, %v1128
    %v1131 = vsub.f32 %v1113, %v1129
    %v1132 = vsub.f32 %v1118, %v1130
    %v1133 = vmul.f32 %v1131, %v1131
    %v1134 = vmul.f32 %v1132, %v1132
    %v1135 = vsel %vm1121, %v1133, 0.0
    %1136 = vadd.xlane.f32.xlu0 %v1135
    %v1137 = vpop.xlane.xlu0 %1136
    %v1138 = vsel %vm1121, %v1134, 0.0
    %1139 = vadd.xlane.f32.xlu0 %v1138
    %v1140 = vpop.xlane.xlu0 %1139
    %v1141 = vmul.f32 %v1137, %v1128
    %v1142 = vmul.f32 %v1140, %v1128
    %v1143 = vadd.f32 %v1141, 1e-05
    %v1144 = vadd.f32 %v1142, 1e-05
    %v1145 = vrsqrt.pop %v1143
    %v1146 = vrsqrt.pop %v1144
    %v1147 = vmul.f32 %v1131, %v1145
    %v1148 = vmul.f32 %v1132, %v1146
    %1149 = vset.pattern.permute.xlu0 2
    %1150 = vperm.xlu0 %1149, %v78
    %v1151 = vpop.permute.xlu0 %1150
    %1153 = vset.pattern.permute.xlu0 2
    %1154 = vperm.xlu0 %1153, %v79
    %v1155 = vpop.permute.xlu0 %1154
    %v1157 = vmul.f32 %v1147, %v1151
    %v1158 = vmul.f32 %v1148, %v1155
    %1159 = vset.pattern.permute.xlu0 6
    %1160 = vperm.xlu0 %1159, %v78
    %v1161 = vpop.permute.xlu0 %1160
    %1163 = vset.pattern.permute.xlu0 6
    %1164 = vperm.xlu0 %1163, %v79
    %v1165 = vpop.permute.xlu0 %1164
    %v1167 = vadd.f32 %v1157, %v1161
    %v1168 = vadd.f32 %v1158, %v1165
    %v1169 = vmax.f32 %v1167, 0.0
    %v1170 = vmax.f32 %v1168, 0.0
    %v1171 = vld [vmem:[%s8] sm:$0xff]
    %v1172 = vld [vmem:[%s8 + $0x8] sm:$0xff]
    %v1173 = vld [vmem:[%s8 + $0x10] sm:$0xff]
    %v1174 = vld [vmem:[%s8 + $0x18] sm:$0x1]
    %1177 = vrot.lane.b32.xlu0 %v1169, 106
    %v1178 = vpop.permute.xlu0 %1177
    %1179 = vrot.lane.b32.xlu0 %v1170, 106
    %v1180 = vpop.permute.xlu0 %1179
    %1183 = vrot.lane.b32.xlu0 %v1169, 10
    %v1184 = vpop.permute.xlu0 %1183
    %1185 = vrot.lane.b32.xlu0 %v1170, 10
    %v1186 = vpop.permute.xlu0 %1185
    %vm1189 = vcmask 80896
    %v1190 = vsel %vm1189, %v1178, %v1184
    %v1191 = vsel %vm1189, %v1180, %v1186
    %v1192 = vlaneseq
    %v1193 = vshrl.u32 %v1192, 7
    %v1194 = vsub.s32 0, %v1193
    %v1195 = vrot.slane %v1171, %v1194
    %v1196 = vmul.f32 %v1190, %v1195
    %v1197 = vmul.f32 %v1191, %v1195
    %1198 = vrot.lane.b32.xlu0 %v1169, 105
    %v1199 = vpop.permute.xlu0 %1198
    %1200 = vrot.lane.b32.xlu0 %v1170, 105
    %v1201 = vpop.permute.xlu0 %1200
    %1204 = vrot.lane.b32.xlu0 %v1169, 9
    %v1205 = vpop.permute.xlu0 %1204
    %1206 = vrot.lane.b32.xlu0 %v1170, 9
    %v1207 = vpop.permute.xlu0 %1206
    %v1210 = vsel %vm521, %v1199, %v1205
    %v1211 = vsel %vm521, %v1201, %v1207
    %v1212 = vlaneseq
    %v1213 = vshrl.u32 %v1212, 7
    %v1214 = vsub.s32 1, %v1213
    %v1215 = vrot.slane %v1171, %v1214
    %v1216 = vmul.f32 %v1210, %v1215
    %v1217 = vmul.f32 %v1211, %v1215
    %1218 = vrot.lane.b32.xlu0 %v1169, 104
    %v1219 = vpop.permute.xlu0 %1218
    %1220 = vrot.lane.b32.xlu0 %v1170, 104
    %v1221 = vpop.permute.xlu0 %1220
    %1224 = vrot.lane.b32.xlu0 %v1169, 8
    %v1225 = vpop.permute.xlu0 %1224
    %1226 = vrot.lane.b32.xlu0 %v1170, 8
    %v1227 = vpop.permute.xlu0 %1226
    %v1230 = vsel %vm463, %v1219, %v1225
    %v1231 = vsel %vm463, %v1221, %v1227
    %v1232 = vlaneseq
    %v1233 = vshrl.u32 %v1232, 7
    %v1234 = vsub.s32 2, %v1233
    %v1235 = vrot.slane %v1171, %v1234
    %v1236 = vmul.f32 %v1230, %v1235
    %v1237 = vmul.f32 %v1231, %v1235
    %1238 = vrot.lane.b32.xlu0 %v1169, 103
    %v1239 = vpop.permute.xlu0 %1238
    %1240 = vrot.lane.b32.xlu0 %v1170, 103
    %v1241 = vpop.permute.xlu0 %1240
    %1244 = vrot.lane.b32.xlu0 %v1169, 7
    %v1245 = vpop.permute.xlu0 %1244
    %1246 = vrot.lane.b32.xlu0 %v1170, 7
    %v1247 = vpop.permute.xlu0 %1246
    %v1250 = vsel %vm476, %v1239, %v1245
    %v1251 = vsel %vm476, %v1241, %v1247
    %v1252 = vlaneseq
    %v1253 = vshrl.u32 %v1252, 7
    %v1254 = vsub.s32 3, %v1253
    %v1255 = vrot.slane %v1171, %v1254
    %v1256 = vmul.f32 %v1250, %v1255
    %v1257 = vmul.f32 %v1251, %v1255
    %1258 = vrot.lane.b32.xlu0 %v1169, 102
    %v1259 = vpop.permute.xlu0 %1258
    %1260 = vrot.lane.b32.xlu0 %v1170, 102
    %v1261 = vpop.permute.xlu0 %1260
    %1264 = vrot.lane.b32.xlu0 %v1169, 6
    %v1265 = vpop.permute.xlu0 %1264
    %1266 = vrot.lane.b32.xlu0 %v1170, 6
    %v1267 = vpop.permute.xlu0 %1266
    %vm1270 = vcmask 48128
    %v1271 = vsel %vm1270, %v1259, %v1265
    %v1272 = vsel %vm1270, %v1261, %v1267
    %v1273 = vlaneseq
    %v1274 = vshrl.u32 %v1273, 7
    %v1275 = vsub.s32 4, %v1274
    %v1276 = vrot.slane %v1171, %v1275
    %v1277 = vmul.f32 %v1271, %v1276
    %v1278 = vmul.f32 %v1272, %v1276
    %v1279 = vlaneseq
    %v1280 = vshrl.u32 %v1279, 7
    %v1281 = vsub.s32 5, %v1280
    %v1282 = vrot.slane %v1171, %v1281
    %v1283 = vmul.f32 %v1271, %v1282
    %v1284 = vmul.f32 %v1272, %v1282
    %1285 = vrot.lane.b32.xlu0 %v1169, 101
    %v1286 = vpop.permute.xlu0 %1285
    %1287 = vrot.lane.b32.xlu0 %v1170, 101
    %v1288 = vpop.permute.xlu0 %1287
    %1291 = vrot.lane.b32.xlu0 %v1169, 5
    %v1292 = vpop.permute.xlu0 %1291
    %1293 = vrot.lane.b32.xlu0 %v1170, 5
    %v1294 = vpop.permute.xlu0 %1293
    %v1297 = vsel %vm1009, %v1286, %v1292
    %v1298 = vsel %vm1009, %v1288, %v1294
    %v1299 = vlaneseq
    %v1300 = vshrl.u32 %v1299, 7
    %v1301 = vsub.s32 6, %v1300
    %v1302 = vrot.slane %v1171, %v1301
    %v1303 = vmul.f32 %v1297, %v1302
    %v1304 = vmul.f32 %v1298, %v1302
    %1305 = vrot.lane.b32.xlu0 %v1169, 100
    %v1306 = vpop.permute.xlu0 %1305
    %1307 = vrot.lane.b32.xlu0 %v1170, 100
    %v1308 = vpop.permute.xlu0 %1307
    %1311 = vrot.lane.b32.xlu0 %v1169, 4
    %v1312 = vpop.permute.xlu0 %1311
    %1313 = vrot.lane.b32.xlu0 %v1170, 4
    %v1314 = vpop.permute.xlu0 %1313
    %v1317 = vsel %vm923, %v1306, %v1312
    %v1318 = vsel %vm923, %v1308, %v1314
    %v1319 = vlaneseq
    %v1320 = vshrl.u32 %v1319, 7
    %v1321 = vsub.s32 7, %v1320
    %v1322 = vrot.slane %v1171, %v1321
    %v1323 = vmul.f32 %v1317, %v1322
    %v1324 = vmul.f32 %v1318, %v1322
    %1325 = vrot.lane.b32.xlu0 %v1169, 99
    %v1326 = vpop.permute.xlu0 %1325
    %1327 = vrot.lane.b32.xlu0 %v1170, 99
    %v1328 = vpop.permute.xlu0 %1327
    %1331 = vrot.lane.b32.xlu0 %v1169, 3
    %v1332 = vpop.permute.xlu0 %1331
    %1333 = vrot.lane.b32.xlu0 %v1170, 3
    %v1334 = vpop.permute.xlu0 %1333
    %v1337 = vsel %vm944, %v1326, %v1332
    %v1338 = vsel %vm944, %v1328, %v1334
    %v1339 = vlaneseq
    %v1340 = vshrl.u32 %v1339, 7
    %v1341 = vsub.s32 0, %v1340
    %v1342 = vrot.slane %v1172, %v1341
    %v1343 = vmul.f32 %v1337, %v1342
    %v1344 = vmul.f32 %v1338, %v1342
    %1345 = vrot.lane.b32.xlu0 %v1169, 98
    %v1346 = vpop.permute.xlu0 %1345
    %1347 = vrot.lane.b32.xlu0 %v1170, 98
    %v1348 = vpop.permute.xlu0 %1347
    %1351 = vrot.lane.b32.xlu0 %v1169, 2
    %v1352 = vpop.permute.xlu0 %1351
    %1353 = vrot.lane.b32.xlu0 %v1170, 2
    %v1354 = vpop.permute.xlu0 %1353
    %vm1357 = vcmask 15360
    %v1358 = vsel %vm1357, %v1346, %v1352
    %v1359 = vsel %vm1357, %v1348, %v1354
    %v1360 = vlaneseq
    %v1361 = vshrl.u32 %v1360, 7
    %v1362 = vsub.s32 1, %v1361
    %v1363 = vrot.slane %v1172, %v1362
    %v1364 = vmul.f32 %v1358, %v1363
    %v1365 = vmul.f32 %v1359, %v1363
    %v1366 = vlaneseq
    %v1367 = vshrl.u32 %v1366, 7
    %v1368 = vsub.s32 2, %v1367
    %v1369 = vrot.slane %v1172, %v1368
    %v1370 = vmul.f32 %v1358, %v1369
    %v1371 = vmul.f32 %v1359, %v1369
    %1372 = vrot.lane.b32.xlu0 %v1169, 97
    %v1373 = vpop.permute.xlu0 %1372
    %1374 = vrot.lane.b32.xlu0 %v1170, 97
    %v1375 = vpop.permute.xlu0 %1374
    %1378 = vrot.lane.b32.xlu0 %v1169, 1
    %v1379 = vpop.permute.xlu0 %1378
    %1380 = vrot.lane.b32.xlu0 %v1170, 1
    %v1381 = vpop.permute.xlu0 %1380
    %v1384 = vsel %vm406, %v1373, %v1379
    %v1385 = vsel %vm406, %v1375, %v1381
    %v1386 = vlaneseq
    %v1387 = vshrl.u32 %v1386, 7
    %v1388 = vsub.s32 3, %v1387
    %v1389 = vrot.slane %v1172, %v1388
    %v1390 = vmul.f32 %v1384, %v1389
    %v1391 = vmul.f32 %v1385, %v1389
    %v1392 = vlaneseq
    %v1393 = vshrl.u32 %v1392, 7
    %v1394 = vsub.s32 4, %v1393
    %v1395 = vrot.slane %v1172, %v1394
    %v1396 = vmul.f32 %v1169, %v1395
    %v1397 = vmul.f32 %v1170, %v1395
    %1398 = vrot.lane.b32.xlu0 %v1169, 127
    %v1399 = vpop.permute.xlu0 %1398
    %1400 = vrot.lane.b32.xlu0 %v1170, 127
    %v1401 = vpop.permute.xlu0 %1400
    %1404 = vrot.lane.b32.xlu0 %v1169, 31
    %v1405 = vpop.permute.xlu0 %1404
    %1406 = vrot.lane.b32.xlu0 %v1170, 31
    %v1407 = vpop.permute.xlu0 %1406
    %v1410 = vsel %vm765, %v1399, %v1405
    %v1411 = vsel %vm765, %v1401, %v1407
    %v1412 = vlaneseq
    %v1413 = vshrl.u32 %v1412, 7
    %v1414 = vsub.s32 5, %v1413
    %v1415 = vrot.slane %v1172, %v1414
    %v1416 = vmul.f32 %v1410, %v1415
    %v1417 = vmul.f32 %v1411, %v1415
    %1418 = vrot.lane.b32.xlu0 %v1169, 126
    %v1419 = vpop.permute.xlu0 %1418
    %1420 = vrot.lane.b32.xlu0 %v1170, 126
    %v1421 = vpop.permute.xlu0 %1420
    %1424 = vrot.lane.b32.xlu0 %v1169, 30
    %v1425 = vpop.permute.xlu0 %1424
    %1426 = vrot.lane.b32.xlu0 %v1170, 30
    %v1427 = vpop.permute.xlu0 %1426
    %vm1430 = vcmask 244736
    %v1431 = vsel %vm1430, %v1419, %v1425
    %v1432 = vsel %vm1430, %v1421, %v1427
    %v1433 = vlaneseq
    %v1434 = vshrl.u32 %v1433, 7
    %v1435 = vsub.s32 6, %v1434
    %v1436 = vrot.slane %v1172, %v1435
    %v1437 = vmul.f32 %v1431, %v1436
    %v1438 = vmul.f32 %v1432, %v1436
    %v1439 = vlaneseq
    %v1440 = vshrl.u32 %v1439, 7
    %v1441 = vsub.s32 7, %v1440
    %v1442 = vrot.slane %v1172, %v1441
    %v1443 = vmul.f32 %v1431, %v1442
    %v1444 = vmul.f32 %v1432, %v1442
    %1445 = vrot.lane.b32.xlu0 %v1169, 125
    %v1446 = vpop.permute.xlu0 %1445
    %1447 = vrot.lane.b32.xlu0 %v1170, 125
    %v1448 = vpop.permute.xlu0 %1447
    %1451 = vrot.lane.b32.xlu0 %v1169, 29
    %v1452 = vpop.permute.xlu0 %1451
    %1453 = vrot.lane.b32.xlu0 %v1170, 29
    %v1454 = vpop.permute.xlu0 %1453
    %v1457 = vsel %vm872, %v1446, %v1452
    %v1458 = vsel %vm872, %v1448, %v1454
    %v1459 = vlaneseq
    %v1460 = vshrl.u32 %v1459, 7
    %v1461 = vsub.s32 0, %v1460
    %v1462 = vrot.slane %v1173, %v1461
    %v1463 = vmul.f32 %v1457, %v1462
    %v1464 = vmul.f32 %v1458, %v1462
    %1465 = vrot.lane.b32.xlu0 %v1169, 124
    %v1466 = vpop.permute.xlu0 %1465
    %1467 = vrot.lane.b32.xlu0 %v1170, 124
    %v1468 = vpop.permute.xlu0 %1467
    %1471 = vrot.lane.b32.xlu0 %v1169, 28
    %v1472 = vpop.permute.xlu0 %1471
    %1473 = vrot.lane.b32.xlu0 %v1170, 28
    %v1474 = vpop.permute.xlu0 %1473
    %v1477 = vsel %vm786, %v1466, %v1472
    %v1478 = vsel %vm786, %v1468, %v1474
    %v1479 = vlaneseq
    %v1480 = vshrl.u32 %v1479, 7
    %v1481 = vsub.s32 1, %v1480
    %v1482 = vrot.slane %v1173, %v1481
    %v1483 = vmul.f32 %v1477, %v1482
    %v1484 = vmul.f32 %v1478, %v1482
    %1485 = vrot.lane.b32.xlu0 %v1169, 123
    %v1486 = vpop.permute.xlu0 %1485
    %1487 = vrot.lane.b32.xlu0 %v1170, 123
    %v1488 = vpop.permute.xlu0 %1487
    %1491 = vrot.lane.b32.xlu0 %v1169, 27
    %v1492 = vpop.permute.xlu0 %1491
    %1493 = vrot.lane.b32.xlu0 %v1170, 27
    %v1494 = vpop.permute.xlu0 %1493
    %v1497 = vsel %vm807, %v1486, %v1492
    %v1498 = vsel %vm807, %v1488, %v1494
    %v1499 = vlaneseq
    %v1500 = vshrl.u32 %v1499, 7
    %v1501 = vsub.s32 2, %v1500
    %v1502 = vrot.slane %v1173, %v1501
    %v1503 = vmul.f32 %v1497, %v1502
    %v1504 = vmul.f32 %v1498, %v1502
    %1505 = vrot.lane.b32.xlu0 %v1169, 122
    %v1506 = vpop.permute.xlu0 %1505
    %1507 = vrot.lane.b32.xlu0 %v1170, 122
    %v1508 = vpop.permute.xlu0 %1507
    %1511 = vrot.lane.b32.xlu0 %v1169, 26
    %v1512 = vpop.permute.xlu0 %1511
    %1513 = vrot.lane.b32.xlu0 %v1170, 26
    %v1514 = vpop.permute.xlu0 %1513
    %vm1517 = vcmask 211968
    %v1518 = vsel %vm1517, %v1506, %v1512
    %v1519 = vsel %vm1517, %v1508, %v1514
    %v1520 = vlaneseq
    %v1521 = vshrl.u32 %v1520, 7
    %v1522 = vsub.s32 3, %v1521
    %v1523 = vrot.slane %v1173, %v1522
    %v1524 = vmul.f32 %v1518, %v1523
    %v1525 = vmul.f32 %v1519, %v1523
    %v1526 = vlaneseq
    %v1527 = vshrl.u32 %v1526, 7
    %v1528 = vsub.s32 4, %v1527
    %v1529 = vrot.slane %v1173, %v1528
    %v1530 = vmul.f32 %v1518, %v1529
    %v1531 = vmul.f32 %v1519, %v1529
    %1532 = vrot.lane.b32.xlu0 %v1169, 121
    %v1533 = vpop.permute.xlu0 %1532
    %1534 = vrot.lane.b32.xlu0 %v1170, 121
    %v1535 = vpop.permute.xlu0 %1534
    %1538 = vrot.lane.b32.xlu0 %v1169, 25
    %v1539 = vpop.permute.xlu0 %1538
    %1540 = vrot.lane.b32.xlu0 %v1170, 25
    %v1541 = vpop.permute.xlu0 %1540
    %vm1544 = vcmask 203776
    %v1545 = vsel %vm1544, %v1533, %v1539
    %v1546 = vsel %vm1544, %v1535, %v1541
    %v1547 = vlaneseq
    %v1548 = vshrl.u32 %v1547, 7
    %v1549 = vsub.s32 5, %v1548
    %v1550 = vrot.slane %v1173, %v1549
    %v1551 = vmul.f32 %v1545, %v1550
    %v1552 = vmul.f32 %v1546, %v1550
    %1553 = vrot.lane.b32.xlu0 %v1169, 120
    %v1554 = vpop.permute.xlu0 %1553
    %1555 = vrot.lane.b32.xlu0 %v1170, 120
    %v1556 = vpop.permute.xlu0 %1555
    %1559 = vrot.lane.b32.xlu0 %v1169, 24
    %v1560 = vpop.permute.xlu0 %1559
    %1561 = vrot.lane.b32.xlu0 %v1170, 24
    %v1562 = vpop.permute.xlu0 %1561
    %vm1565 = vcmask 195584
    %v1566 = vsel %vm1565, %v1554, %v1560
    %v1567 = vsel %vm1565, %v1556, %v1562
    %v1568 = vlaneseq
    %v1569 = vshrl.u32 %v1568, 7
    %v1570 = vsub.s32 6, %v1569
    %v1571 = vrot.slane %v1173, %v1570
    %v1572 = vmul.f32 %v1566, %v1571
    %v1573 = vmul.f32 %v1567, %v1571
    %1574 = vrot.lane.b32.xlu0 %v1169, 119
    %v1575 = vpop.permute.xlu0 %1574
    %1576 = vrot.lane.b32.xlu0 %v1170, 119
    %v1577 = vpop.permute.xlu0 %1576
    %1580 = vrot.lane.b32.xlu0 %v1169, 23
    %v1581 = vpop.permute.xlu0 %1580
    %1582 = vrot.lane.b32.xlu0 %v1170, 23
    %v1583 = vpop.permute.xlu0 %1582
    %vm1586 = vcmask 187392
    %v1587 = vsel %vm1586, %v1575, %v1581
    %v1588 = vsel %vm1586, %v1577, %v1583
    %v1589 = vlaneseq
    %v1590 = vshrl.u32 %v1589, 7
    %v1591 = vsub.s32 7, %v1590
    %v1592 = vrot.slane %v1173, %v1591
    %v1593 = vmul.f32 %v1587, %v1592
    %v1594 = vmul.f32 %v1588, %v1592
    %1595 = vrot.lane.b32.xlu0 %v1169, 118
    %v1596 = vpop.permute.xlu0 %1595
    %1597 = vrot.lane.b32.xlu0 %v1170, 118
    %v1598 = vpop.permute.xlu0 %1597
    %1601 = vrot.lane.b32.xlu0 %v1169, 22
    %v1602 = vpop.permute.xlu0 %1601
    %1603 = vrot.lane.b32.xlu0 %v1170, 22
    %v1604 = vpop.permute.xlu0 %1603
    %vm1607 = vcmask 179200
    %v1608 = vsel %vm1607, %v1596, %v1602
    %v1609 = vsel %vm1607, %v1598, %v1604
    %v1610 = vlaneseq
    %v1611 = vshrl.u32 %v1610, 7
    %v1612 = vsub.s32 0, %v1611
    %v1613 = vrot.slane %v1174, %v1612
    %v1614 = vmul.f32 %v1608, %v1613
    %v1615 = vmul.f32 %v1609, %v1613
    %v1616 = vld [vmem:[%s7] sm:$0xff]
    %v1617 = vld [vmem:[%s7 + $0x8] sm:$0xff]
    %v1618 = vld [vmem:[%s7 + $0x10] sm:$0xff]
    %v1619 = vld [vmem:[%s7 + $0x18] sm:$0xff]
    %v1620 = vld [vmem:[%s7 + $0x20] sm:$0xff]
    %v1621 = vld [vmem:[%s7 + $0x28] sm:$0xff]
    %v1622 = vld [vmem:[%s7 + $0x30] sm:$0xff]
    %v1623 = vld [vmem:[%s7 + $0x38] sm:$0xff]
    %v1625 = vsel %vm90, %v1619, 0
    %v1628 = vsel %vm90, %v1623, 0
    %1630 = vmatprep.subr.mxu0 0.0
    %1631 = vmatpush1.msra.mxu0 %v1196
    %1632 = vmatprep.subr.mxu0 0.0
    %1633 = vmatpush1.msra.mxu0 %v1197
    %1634 = vmatprep.subr.mxu0 0.0
    %1635 = vmatpush1.msra.mxu0 %v1216
    %1636 = vmatprep.subr.mxu0 0.0
    %1637 = vmatpush1.msra.mxu0 %v1217
    %1638 = vmatprep.subr.mxu0 0.0
    %1639 = vmatpush1.msra.mxu0 %v1236
    %1640 = vmatprep.subr.mxu0 0.0
    %1641 = vmatpush1.msra.mxu0 %v1237
    %1642 = vmatprep.subr.mxu0 0.0
    %1643 = vmatpush1.msra.mxu0 %v1256
    %1644 = vmatprep.subr.mxu0 0.0
    %1645 = vmatpush1.msra.mxu0 %v1257
    %1646 = vmatprep.subr.mxu0 0.0
    %1647 = vmatpush1.msra.mxu0 %v1277
    %1648 = vmatprep.subr.mxu0 0.0
    %1649 = vmatpush1.msra.mxu0 %v1278
    %1650 = vmatprep.subr.mxu0 0.0
    %1651 = vmatpush1.msra.mxu0 %v1283
    %1652 = vmatprep.subr.mxu0 0.0
    %1653 = vmatpush1.msra.mxu0 %v1284
    %1654 = vmatprep.subr.mxu0 0.0
    %1655 = vmatpush1.msra.mxu0 %v1303
    %1656 = vmatprep.subr.mxu0 0.0
    %1657 = vmatpush1.msra.mxu0 %v1304
    %1658 = vmatprep.subr.mxu0 0.0
    %1659 = vmatpush1.msra.mxu0 %v1323
    %1660 = vmatprep.subr.mxu0 0.0
    %1661 = vmatpush1.msra.mxu0 %v1324
    %1662 = vmatprep.subr.mxu0 0.0
    %1663 = vmatpush1.msra.mxu0 %v1343
    %1664 = vmatprep.subr.mxu0 0.0
    %1665 = vmatpush1.msra.mxu0 %v1344
    %1666 = vmatprep.subr.mxu0 0.0
    %1667 = vmatpush1.msra.mxu0 %v1364
    %1668 = vmatprep.subr.mxu0 0.0
    %1669 = vmatpush1.msra.mxu0 %v1365
    %1670 = vmatprep.subr.mxu0 0.0
    %1671 = vmatpush1.msra.mxu0 %v1370
    %1672 = vmatprep.subr.mxu0 0.0
    %1673 = vmatpush1.msra.mxu0 %v1371
    %1674 = vmatprep.subr.mxu0 0.0
    %1675 = vmatpush1.msra.mxu0 %v1390
    %1676 = vmatprep.subr.mxu0 0.0
    %1677 = vmatpush1.msra.mxu0 %v1391
    %1678 = vmatprep.subr.mxu0 0.0
    %1679 = vmatpush1.msra.mxu0 %v1396
    %1680 = vmatprep.subr.mxu0 0.0
    %1681 = vmatpush1.msra.mxu0 %v1397
    %1682 = vmatprep.subr.mxu0 0.0
    %1683 = vmatpush1.msra.mxu0 %v1416
    %1684 = vmatprep.subr.mxu0 0.0
    %1685 = vmatpush1.msra.mxu0 %v1417
    %1686 = vmatprep.subr.mxu0 0.0
    %1687 = vmatpush1.msra.mxu0 %v1437
    %1688 = vmatprep.subr.mxu0 0.0
    %1689 = vmatpush1.msra.mxu0 %v1438
    %1690 = vmatprep.subr.mxu0 0.0
    %1691 = vmatpush1.msra.mxu0 %v1443
    %1692 = vmatprep.subr.mxu0 0.0
    %1693 = vmatpush1.msra.mxu0 %v1444
    %1694 = vmatprep.mubr.f32.mxu0 %v1617
    %1695 = vmatmul.mubr.f32.gmra.mrb[0].mxu0 %v1616
    %v1696 = vpop.f32.mrb[0].mxu0
    %v1697 = vadd.f32 0.0, %v1696
    %v1698 = vpop.f32.mrb[0].mxu0
    %1699 = vmatprep.mubr.f32.mxu0 %v1621
    %1700 = vmatmul.mubr.f32.gmra.mrb[0].mxu0 %v1620
    %v1701 = vpop.f32.mrb[0].mxu0
    %v1702 = vadd.f32 0.0, %v1701
    %v1703 = vpop.f32.mrb[0].mxu0
    %1704 = vdwg.mxu0
    %1705 = vmatprep.subr.mxu0 0.0
    %1706 = vmatpush1.msra.mxu0 %v1463
    %1707 = vmatprep.subr.mxu0 0.0
    %1708 = vmatpush1.msra.mxu0 %v1464
    %1709 = vmatprep.subr.mxu0 0.0
    %1710 = vmatpush1.msra.mxu0 %v1483
    %1711 = vmatprep.subr.mxu0 0.0
    %1712 = vmatpush1.msra.mxu0 %v1484
    %1713 = vmatprep.subr.mxu0 0.0
    %1714 = vmatpush1.msra.mxu0 %v1503
    %1715 = vmatprep.subr.mxu0 0.0
    %1716 = vmatpush1.msra.mxu0 %v1504
    %1717 = vmatprep.subr.mxu0 0.0
    %1718 = vmatpush1.msra.mxu0 %v1524
    %1719 = vmatprep.subr.mxu0 0.0
    %1720 = vmatpush1.msra.mxu0 %v1525
    %1721 = vmatprep.subr.mxu0 0.0
    %1722 = vmatpush1.msra.mxu0 %v1530
    %1723 = vmatprep.subr.mxu0 0.0
    %1724 = vmatpush1.msra.mxu0 %v1531
    %1725 = vmatprep.subr.mxu0 0.0
    %1726 = vmatpush1.msra.mxu0 %v1551
    %1727 = vmatprep.subr.mxu0 0.0
    %1728 = vmatpush1.msra.mxu0 %v1552
    %1729 = vmatprep.subr.mxu0 0.0
    %1730 = vmatpush1.msra.mxu0 %v1572
    %1731 = vmatprep.subr.mxu0 0.0
    %1732 = vmatpush1.msra.mxu0 %v1573
    %1733 = vmatprep.subr.mxu0 0.0
    %1734 = vmatpush1.msra.mxu0 %v1593
    %1735 = vmatprep.subr.mxu0 0.0
    %1736 = vmatpush1.msra.mxu0 %v1594
    %1737 = vmatprep.subr.mxu0 0.0
    %1738 = vmatpush1.msra.mxu0 %v1614
    %1739 = vmatprep.subr.mxu0 0.0
    %1740 = vmatpush1.msra.mxu0 %v1615
    %1741 = vmatprep.subr.mxu0 0.0
    %1742 = vmatpush1.msra.mxu0 0.0
    %1743 = vmatprep.subr.mxu0 0.0
    %1744 = vmatpush1.msra.mxu0 0.0
    %1745 = vmatprep.subr.mxu0 0.0
    %1746 = vmatpush1.msra.mxu0 0.0
    %1747 = vmatprep.subr.mxu0 0.0
    %1748 = vmatpush1.msra.mxu0 0.0
    %1749 = vmatprep.subr.mxu0 0.0
    %1750 = vmatpush1.msra.mxu0 0.0
    %1751 = vmatprep.subr.mxu0 0.0
    %1752 = vmatpush1.msra.mxu0 0.0
    %1753 = vmatprep.subr.mxu0 0.0
    %1754 = vmatpush1.msra.mxu0 0.0
    %1755 = vmatprep.subr.mxu0 0.0
    %1756 = vmatpush1.msra.mxu0 0.0
    %1757 = vmatprep.subr.mxu0 0.0
    %1758 = vmatpush1.msra.mxu0 0.0
    %1759 = vmatprep.subr.mxu0 0.0
    %1760 = vmatpush1.msra.mxu0 0.0
    %1761 = vmatprep.subr.mxu0 0.0
    %1762 = vmatpush1.msra.mxu0 0.0
    %1763 = vmatprep.subr.mxu0 0.0
    %1764 = vmatpush1.msra.mxu0 0.0
    %1765 = vmatprep.subr.mxu0 0.0
    %1766 = vmatpush1.msra.mxu0 0.0
    %1767 = vmatprep.subr.mxu0 0.0
    %1768 = vmatpush1.msra.mxu0 0.0
    %1769 = vmatprep.mubr.f32.mxu0 %v1625
    %1770 = vmatmul.mubr.f32.gmra.mrb[0].mxu0 %v1618
    %v1771 = vpop.f32.mrb[0].mxu0
    %v1772 = vadd.f32 %v1697, %v1771
    %v1773 = vpop.f32.mrb[0].mxu0
    %1774 = vmatprep.mubr.f32.mxu0 %v1628
    %1775 = vmatmul.mubr.f32.gmra.mrb[0].mxu0 %v1622
    %v1776 = vpop.f32.mrb[0].mxu0
    %v1777 = vadd.f32 %v1702, %v1776
    %v1778 = vpop.f32.mrb[0].mxu0
    %1779 = vdwg.mxu0
    %v1780 = vld [vmem:[%s9] sm:$0xff]
    %v1781 = vld [vmem:[%s9 + $0x8] sm:$0xff]
    %v1782 = vld [vmem:[%s9 + $0x10] sm:$0xff]
    %v1783 = vld [vmem:[%s9 + $0x18] sm:$0xff]
    %v1785 = vsel %vm1121, %v1772, 0
    %v1788 = vsel %vm1121, %v1777, 0
    %1790 = vmatprep.subr.mxu0 0.0
    %1791 = vmatpush1.msra.mxu0 %v1780
    %1792 = vmatprep.subr.mxu0 0.0
    %1793 = vmatpush1.msra.mxu0 %v1781
    %1794 = vmatprep.subr.mxu0 0.0
    %1795 = vmatpush1.msra.mxu0 %v1782
    %1796 = vmatprep.subr.mxu0 0.0
    %1797 = vmatpush1.msra.mxu0 %v1783
    %1798 = vmatprep.subr.mxu0 0.0
    %1799 = vmatpush1.msra.mxu0 0.0
    %1800 = vmatprep.subr.mxu0 0.0
    %1801 = vmatpush1.msra.mxu0 0.0
    %1802 = vmatprep.subr.mxu0 0.0
    %1803 = vmatpush1.msra.mxu0 0.0
    %1804 = vmatprep.subr.mxu0 0.0
    %1805 = vmatpush1.msra.mxu0 0.0
    %1806 = vmatprep.subr.mxu0 0.0
    %1807 = vmatpush1.msra.mxu0 0.0
    %1808 = vmatprep.subr.mxu0 0.0
    %1809 = vmatpush1.msra.mxu0 0.0
    %1810 = vmatprep.subr.mxu0 0.0
    %1811 = vmatpush1.msra.mxu0 0.0
    %1812 = vmatprep.subr.mxu0 0.0
    %1813 = vmatpush1.msra.mxu0 0.0
    %1814 = vmatprep.subr.mxu0 0.0
    %1815 = vmatpush1.msra.mxu0 0.0
    %1816 = vmatprep.subr.mxu0 0.0
    %1817 = vmatpush1.msra.mxu0 0.0
    %1818 = vmatprep.subr.mxu0 0.0
    %1819 = vmatpush1.msra.mxu0 0.0
    %1820 = vmatprep.subr.mxu0 0.0
    %1821 = vmatpush1.msra.mxu0 0.0
    %1822 = vmatprep.subr.mxu0 0.0
    %1823 = vmatpush1.msra.mxu0 0.0
    %1824 = vmatprep.subr.mxu0 0.0
    %1825 = vmatpush1.msra.mxu0 0.0
    %1826 = vmatprep.subr.mxu0 0.0
    %1827 = vmatpush1.msra.mxu0 0.0
    %1828 = vmatprep.subr.mxu0 0.0
    %1829 = vmatpush1.msra.mxu0 0.0
    %1830 = vmatprep.subr.mxu0 0.0
    %1831 = vmatpush1.msra.mxu0 0.0
    %1832 = vmatprep.subr.mxu0 0.0
    %1833 = vmatpush1.msra.mxu0 0.0
    %1834 = vmatprep.subr.mxu0 0.0
    %1835 = vmatpush1.msra.mxu0 0.0
    %1836 = vmatprep.subr.mxu0 0.0
    %1837 = vmatpush1.msra.mxu0 0.0
    %1838 = vmatprep.subr.mxu0 0.0
    %1839 = vmatpush1.msra.mxu0 0.0
    %1840 = vmatprep.subr.mxu0 0.0
    %1841 = vmatpush1.msra.mxu0 0.0
    %1842 = vmatprep.subr.mxu0 0.0
    %1843 = vmatpush1.msra.mxu0 0.0
    %1844 = vmatprep.subr.mxu0 0.0
    %1845 = vmatpush1.msra.mxu0 0.0
    %1846 = vmatprep.subr.mxu0 0.0
    %1847 = vmatpush1.msra.mxu0 0.0
    %1848 = vmatprep.subr.mxu0 0.0
    %1849 = vmatpush1.msra.mxu0 0.0
    %1850 = vmatprep.subr.mxu0 0.0
    %1851 = vmatpush1.msra.mxu0 0.0
    %1852 = vmatprep.subr.mxu0 0.0
    %1853 = vmatpush1.msra.mxu0 0.0
    %1854 = vmatprep.mubr.f32.mxu0 0.0
    %1855 = vmatmul.mubr.f32.gmra.mrb[0].mxu0 %v1785
    %v1856 = vpop.f32.mrb[0].mxu0
    %v1857 = vadd.f32 0.0, %v1856
    %v1858 = vpop.f32.mrb[0].mxu0
    %1859 = vmatprep.mubr.f32.mxu0 0.0
    %1860 = vmatmul.mubr.f32.gmra.mrb[0].mxu0 %v1788
    %v1861 = vpop.f32.mrb[0].mxu0
    %v1862 = vadd.f32 0.0, %v1861
    %v1863 = vpop.f32.mrb[0].mxu0
    %1864 = vdwg.mxu0
    %v1865 = vsel %vm463, %v1857, 0.0
    %1866 = vadd.xlane.f32.xlu0 %v1865
    %v1867 = vpop.xlane.xlu0 %1866
    %v1868 = vsel %vm463, %v1862, 0.0
    %1869 = vadd.xlane.f32.xlu0 %v1868
    %v1870 = vpop.xlane.xlu0 %1869
    %v1871 = vrcp.pop 8.0
    %v1872 = vmul.f32 %v1867, %v1871
    %v1873 = vmul.f32 %v1870, %v1871
    %v1874 = vsub.f32 %v1857, %v1872
    %v1875 = vsub.f32 %v1862, %v1873
    %v1876 = vmul.f32 %v1874, %v1874
    %v1877 = vmul.f32 %v1875, %v1875
    %v1878 = vsel %vm463, %v1876, 0.0
    %1879 = vadd.xlane.f32.xlu0 %v1878
    %v1880 = vpop.xlane.xlu0 %1879
    %v1881 = vsel %vm463, %v1877, 0.0
    %1882 = vadd.xlane.f32.xlu0 %v1881
    %v1883 = vpop.xlane.xlu0 %1882
    %v1884 = vmul.f32 %v1880, %v1871
    %v1885 = vmul.f32 %v1883, %v1871
    %v1886 = vadd.f32 %v1884, 1e-05
    %v1887 = vadd.f32 %v1885, 1e-05
    %v1888 = vrsqrt.pop %v1886
    %v1889 = vrsqrt.pop %v1887
    %v1890 = vmul.f32 %v1874, %v1888
    %v1891 = vmul.f32 %v1875, %v1889
    %1892 = vset.pattern.permute.xlu0 3
    %1893 = vperm.xlu0 %1892, %v78
    %v1894 = vpop.permute.xlu0 %1893
    %1896 = vset.pattern.permute.xlu0 3
    %1897 = vperm.xlu0 %1896, %v79
    %v1898 = vpop.permute.xlu0 %1897
    %v1900 = vmul.f32 %v1890, %v1894
    %v1901 = vmul.f32 %v1891, %v1898
    %1902 = vset.pattern.permute.xlu0 7
    %1903 = vperm.xlu0 %1902, %v78
    %v1904 = vpop.permute.xlu0 %1903
    %1906 = vset.pattern.permute.xlu0 7
    %1907 = vperm.xlu0 %1906, %v79
    %v1908 = vpop.permute.xlu0 %1907
    %v1910 = vadd.f32 %v1900, %v1904
    %v1911 = vadd.f32 %v1901, %v1908
    %v1912 = vld [vmem:[%s10] sm:$0xff]
    %v1913 = vld [vmem:[%s10 + $0x8] sm:$0xff]
    %v1914 = vmul.f32 %v1912, %v1910
    %v1915 = vmul.f32 %v1913, %v1911
    %v1916 = vsel %vm463, %v1914, 0.0
    %v1917 = vsel %vm463, %v1915, 0.0
    %v1918 = vadd.f32 %v1916, %v1917
    %v1919 = vrot.slane %v1918, 4
    %v1920 = vadd.f32 %v1918, %v1919
    %v1921 = vrot.slane %v1920, 2
    %v1922 = vadd.f32 %v1920, %v1921
    %v1923 = vrot.slane %v1922, 1
    %v1924 = vadd.f32 %v1922, %v1923
    %s1925 = scalar_lea.vmem %s10, 16
    %v1926 = vld [vmem:[%s1925] sm:$0xff]
    %v1927 = vld [vmem:[%s1925 + $0x8] sm:$0xff]
    %v1928 = vmul.f32 %v1926, %v1910
    %v1929 = vmul.f32 %v1927, %v1911
    %v1930 = vsel %vm463, %v1928, 0.0
    %v1931 = vsel %vm463, %v1929, 0.0
    %v1932 = vadd.f32 %v1930, %v1931
    %v1933 = vrot.slane %v1932, 4
    %v1934 = vadd.f32 %v1932, %v1933
    %v1935 = vrot.slane %v1934, 2
    %v1936 = vadd.f32 %v1934, %v1935
    %v1937 = vrot.slane %v1936, 1
    %v1938 = vadd.f32 %v1936, %v1937
    %s1939 = scalar_lea.vmem %s10, 32
    %v1940 = vld [vmem:[%s1939] sm:$0xff]
    %v1941 = vld [vmem:[%s1939 + $0x8] sm:$0xff]
    %v1942 = vmul.f32 %v1940, %v1910
    %v1943 = vmul.f32 %v1941, %v1911
    %v1944 = vsel %vm463, %v1942, 0.0
    %v1945 = vsel %vm463, %v1943, 0.0
    %v1946 = vadd.f32 %v1944, %v1945
    %v1947 = vrot.slane %v1946, 4
    %v1948 = vadd.f32 %v1946, %v1947
    %v1949 = vrot.slane %v1948, 2
    %v1950 = vadd.f32 %v1948, %v1949
    %v1951 = vrot.slane %v1950, 1
    %v1952 = vadd.f32 %v1950, %v1951
    %s1953 = scalar_lea.vmem %s10, 48
    %v1954 = vld [vmem:[%s1953] sm:$0xff]
    %v1955 = vld [vmem:[%s1953 + $0x8] sm:$0xff]
    %v1956 = vmul.f32 %v1954, %v1910
    %v1957 = vmul.f32 %v1955, %v1911
    %v1958 = vsel %vm463, %v1956, 0.0
    %v1959 = vsel %vm463, %v1957, 0.0
    %v1960 = vadd.f32 %v1958, %v1959
    %v1961 = vrot.slane %v1960, 4
    %v1962 = vadd.f32 %v1960, %v1961
    %v1963 = vrot.slane %v1962, 2
    %v1964 = vadd.f32 %v1962, %v1963
    %v1965 = vrot.slane %v1964, 1
    %v1966 = vadd.f32 %v1964, %v1965
    %vm1967 = vcmask 1040384
    %v1968 = vsel %vm1967, %v1924, %v1938
    %vm1969 = vcmask 1041408
    %v1970 = vsel %vm1969, %v1968, %v1952
    %vm1971 = vcmask 1042432
    %v1972 = vsel %vm1971, %v1970, %v1966
    %v1973 = vld [vmem:[%s12] sm:$0xff]
    %v1974 = vld [vmem:[%s11] sm:$0xf]
    %1976 = vset.pattern.permute.xlu0 0
    %1977 = vperm.xlu0 %1976, %v1974
    %v1978 = vpop.permute.xlu0 %1977
    %v1981 = vsel %vm463, %v1972, 0
    %1983 = vmatprep.subr.mxu0 0.0
    %1984 = vmatpush1.msra.mxu0 %v1973
    %1985 = vmatprep.subr.mxu0 0.0
    %1986 = vmatpush1.msra.mxu0 0.0
    %1987 = vmatprep.subr.mxu0 0.0
    %1988 = vmatpush1.msra.mxu0 0.0
    %1989 = vmatprep.subr.mxu0 0.0
    %1990 = vmatpush1.msra.mxu0 0.0
    %1991 = vmatprep.subr.mxu0 0.0
    %1992 = vmatpush1.msra.mxu0 0.0
    %1993 = vmatprep.subr.mxu0 0.0
    %1994 = vmatpush1.msra.mxu0 0.0
    %1995 = vmatprep.subr.mxu0 0.0
    %1996 = vmatpush1.msra.mxu0 0.0
    %1997 = vmatprep.subr.mxu0 0.0
    %1998 = vmatpush1.msra.mxu0 0.0
    %1999 = vmatprep.subr.mxu0 0.0
    %2000 = vmatpush1.msra.mxu0 0.0
    %2001 = vmatprep.subr.mxu0 0.0
    %2002 = vmatpush1.msra.mxu0 0.0
    %2003 = vmatprep.subr.mxu0 0.0
    %2004 = vmatpush1.msra.mxu0 0.0
    %2005 = vmatprep.subr.mxu0 0.0
    %2006 = vmatpush1.msra.mxu0 0.0
    %2007 = vmatprep.subr.mxu0 0.0
    %2008 = vmatpush1.msra.mxu0 0.0
    %2009 = vmatprep.subr.mxu0 0.0
    %2010 = vmatpush1.msra.mxu0 0.0
    %2011 = vmatprep.subr.mxu0 0.0
    %2012 = vmatpush1.msra.mxu0 0.0
    %2013 = vmatprep.subr.mxu0 0.0
    %2014 = vmatpush1.msra.mxu0 0.0
    %2015 = vmatprep.subr.mxu0 0.0
    %2016 = vmatpush1.msra.mxu0 0.0
    %2017 = vmatprep.subr.mxu0 0.0
    %2018 = vmatpush1.msra.mxu0 0.0
    %2019 = vmatprep.subr.mxu0 0.0
    %2020 = vmatpush1.msra.mxu0 0.0
    %2021 = vmatprep.subr.mxu0 0.0
    %2022 = vmatpush1.msra.mxu0 0.0
    %2023 = vmatprep.subr.mxu0 0.0
    %2024 = vmatpush1.msra.mxu0 0.0
    %2025 = vmatprep.subr.mxu0 0.0
    %2026 = vmatpush1.msra.mxu0 0.0
    %2027 = vmatprep.subr.mxu0 0.0
    %2028 = vmatpush1.msra.mxu0 0.0
    %2029 = vmatprep.subr.mxu0 0.0
    %2030 = vmatpush1.msra.mxu0 0.0
    %2031 = vmatprep.subr.mxu0 0.0
    %2032 = vmatpush1.msra.mxu0 0.0
    %2033 = vmatprep.subr.mxu0 0.0
    %2034 = vmatpush1.msra.mxu0 0.0
    %2035 = vmatprep.subr.mxu0 0.0
    %2036 = vmatpush1.msra.mxu0 0.0
    %2037 = vmatprep.subr.mxu0 0.0
    %2038 = vmatpush1.msra.mxu0 0.0
    %2039 = vmatprep.subr.mxu0 0.0
    %2040 = vmatpush1.msra.mxu0 0.0
    %2041 = vmatprep.subr.mxu0 0.0
    %2042 = vmatpush1.msra.mxu0 0.0
    %2043 = vmatprep.subr.mxu0 0.0
    %2044 = vmatpush1.msra.mxu0 0.0
    %2045 = vmatprep.subr.mxu0 0.0
    %2046 = vmatpush1.msra.mxu0 0.0
    %2047 = vmatprep.mubr.f32.mxu0 0.0
    %2048 = vmatmul.mubr.f32.gmra.mrb[0].mxu0 %v1981
    %v2049 = vpop.f32.mrb[0].mxu0
    %v2050 = vadd.f32 %v1978, %v2049
    %v2051 = vpop.f32.mrb[0].mxu0
    %2052 = vdwg.mxu0
    %v2053 = vld [vmem:[%s14] sm:$0x3]
    %v2054 = vadd.f32 %v2050, 1e-07
    %v2055 = vmul.f32 %v2054, 1.442695
    %v2056 = vpow.pop %v2055
    %v2058 = vrot.slane %v2056, 2
    %v2060 = vmul.f32 %v2053, %v2058
    %v2061 = vadd.f32 %v2050, %v2060
    %v2063 = vrot.slane %v2061, 4
    %vm2065 = vcmask 1043456
    %v2066 = vsel %vm2065, %v2050, %v2063
    %vm2067 = vcmask 1045504
    %v2068 = vsel %vm2067, %v2066, 0.0
    %2069 = vst.msk [vmem:[%s15] sm:$0xff] %vm1357, %v2068
    // Predicated region
    $region70: #{vae_forward.2} parent=1 // pred_check
      _
    $region71: #{vae_forward.2} parent=1 // pred_check_branch
      %2071 = sbr.rel (0) target = $region73
    $region72: #{vae_forward.2} parent=1 // pred_region
      _
    $region73: #{vae_forward.2} parent=1 // pred_fallthru
      _
    // Predicated region
    $region74: #{vae_forward.2} parent=1 // pred_check
      _
    $region75: #{vae_forward.2} parent=1 // pred_check_branch
      %2073 = sbr.rel (0) target = $region77
    $region76: #{vae_forward.2} parent=1 // pred_region
      _
    $region77: #{vae_forward.2} parent=1 // pred_fallthru
      _
    %2074 = vsyncpa [#allocation3], 1
    %2075 = vsyncpa [#allocation5], 1

// kernel: vae_forward.3
$region0: #{vae_forward.3}
  #allocation0 [shape = 'u32[]', space=smem, size = 0x4, offset = 0x4, fixed_abs, tag = 'smem constant byte address 0x4 - core index']
  #allocation1 [shape = 'u32[144,128]{1,0:T(1,128)}', space=vmem, size = 0x12000, scoped, tag = 'internal scratch']
  #allocation2 [shape = 'f32[1]{0:T(128)S(6)}', space=smem, size = 0x200, scoped, tag = 'scoped memory for vae_forward.3']
  %s0 = inlined_call_operand.vmem [shape: f32[2,2], index: 0, kind: input, shape index: {}]
  %s1 = inlined_call_operand.<no memory space> [shape: f32[1], index: 1, kind: input, shape index: {}]
  %s2 = inlined_call_operand.vmem [shape: f32[3,16,16], index: 2, kind: input, shape index: {}]
  %s3 = inlined_call_operand.vmem [shape: f32[16,2], index: 3, kind: input, shape index: {}]
  %s4 = inlined_call_operand.vmem [shape: f32[64,144], index: 4, kind: input, shape index: {}]
  %s5 = inlined_call_operand.vmem [shape: f32[9,32], index: 5, kind: input, shape index: {}]
  %s6 = inlined_call_operand.vmem [shape: f32[4,32,128], index: 6, kind: input, shape index: {}]
  %s7 = inlined_call_operand.vmem [shape: f32[64,144], index: 7, kind: input, shape index: {}]
  %s8 = inlined_call_operand.vmem [shape: f32[9,128], index: 8, kind: input, shape index: {}]
  %s9 = inlined_call_operand.vmem [shape: f32[4,128,512], index: 9, kind: input, shape index: {}]
  %s10 = inlined_call_operand.vmem [shape: f32[4,144], index: 10, kind: input, shape index: {}]
  %s11 = inlined_call_operand.vmem [shape: f32[9,512], index: 11, kind: input, shape index: {}]
  %s12 = inlined_call_operand.vmem [shape: f32[64,64], index: 12, kind: input, shape index: {}]
  %s13 = inlined_call_operand.vmem [shape: f32[64,4], index: 13, kind: input, shape index: {}]
  %s14 = inlined_call_operand.vmem [shape: f32[4,512], index: 14, kind: output, shape index: {}]
  %s15 = sld [smem:[#allocation0]]
  $region70: #{vae_forward.3} parent=0
    _
  %s17 = ssub.s32 1, %s15
  %s18 = scalar_select 0, %s17, %s15
  %19 = sst [smem:[#allocation2]] %s1
  $region1: #{vae_forward.3} parent=0
    #allocation3 [shape = 'u8[1024]{0}', space=smem, size = 0x400, scoped, tag = 'input window, operand 0, single buffered']
    #allocation4 [shape = 's32[1]{0}', space=sflag, size = 0x4, scoped, tag = 'scoped memory for vae_forward.3']
    %20 = vsyncpa [#allocation4], 0
    // Predicated region
    $region2: #{vae_forward.3} parent=1 // pred_check
      _
    $region3: #{vae_forward.3} parent=1 // pred_check_branch
      %22 = sbr.rel (0) target = $region5
    $region4: #{vae_forward.3} parent=1 // pred_region
      %s24 = ssub.s32 32, 32
      %25 = vsyncadd [#allocation4], %s24
      %s27 = sshll.u32 %s0, 4
      %s28 = int_to_ptr.vmem [resolvable:$true] %s27
      %30 = dma.vmem_to_smem %s28, 32, [#allocation3], [#allocation4]
    $region5: #{vae_forward.3} parent=1 // pred_fallthru
      _
    // Predicated region
    $region6: #{vae_forward.3} parent=1 // pred_check
      _
    $region7: #{vae_forward.3} parent=1 // pred_check_branch
      %32 = sbr.rel (0) target = $region9
    $region8: #{vae_forward.3} parent=1 // pred_region
      _
    $region9: #{vae_forward.3} parent=1 // pred_fallthru
      _
    // Predicated region
    $region10: #{vae_forward.3} parent=1 // pred_check
      _
    $region11: #{vae_forward.3} parent=1 // pred_check_branch
      %34 = sbr.rel (0) target = $region13
    $region12: #{vae_forward.3} parent=1 // pred_region
      _
    $region13: #{vae_forward.3} parent=1 // pred_fallthru
      _
    // Predicated region
    $region14: #{vae_forward.3} parent=1 // pred_check
      _
    $region15: #{vae_forward.3} parent=1 // pred_check_branch
      %36 = sbr.rel (0) target = $region17
    $region16: #{vae_forward.3} parent=1 // pred_region
      _
    $region17: #{vae_forward.3} parent=1 // pred_fallthru
      _
    // Predicated region
    $region18: #{vae_forward.3} parent=1 // pred_check
      _
    $region19: #{vae_forward.3} parent=1 // pred_check_branch
      %38 = sbr.rel (0) target = $region21
    $region20: #{vae_forward.3} parent=1 // pred_region
      _
    $region21: #{vae_forward.3} parent=1 // pred_fallthru
      _
    // Predicated region
    $region22: #{vae_forward.3} parent=1 // pred_check
      _
    $region23: #{vae_forward.3} parent=1 // pred_check_branch
      %40 = sbr.rel (0) target = $region25
    $region24: #{vae_forward.3} parent=1 // pred_region
      _
    $region25: #{vae_forward.3} parent=1 // pred_fallthru
      _
    // Predicated region
    $region26: #{vae_forward.3} parent=1 // pred_check
      _
    $region27: #{vae_forward.3} parent=1 // pred_check_branch
      %42 = sbr.rel (0) target = $region29
    $region28: #{vae_forward.3} parent=1 // pred_region
      _
    $region29: #{vae_forward.3} parent=1 // pred_fallthru
      _
    // Predicated region
    $region30: #{vae_forward.3} parent=1 // pred_check
      _
    $region31: #{vae_forward.3} parent=1 // pred_check_branch
      %44 = sbr.rel (0) target = $region33
    $region32: #{vae_forward.3} parent=1 // pred_region
      _
    $region33: #{vae_forward.3} parent=1 // pred_fallthru
      _
    // Predicated region
    $region34: #{vae_forward.3} parent=1 // pred_check
      _
    $region35: #{vae_forward.3} parent=1 // pred_check_branch
      %46 = sbr.rel (0) target = $region37
    $region36: #{vae_forward.3} parent=1 // pred_region
      _
    $region37: #{vae_forward.3} parent=1 // pred_fallthru
      _
    // Predicated region
    $region38: #{vae_forward.3} parent=1 // pred_check
      _
    $region39: #{vae_forward.3} parent=1 // pred_check_branch
      %48 = sbr.rel (0) target = $region41
    $region40: #{vae_forward.3} parent=1 // pred_region
      _
    $region41: #{vae_forward.3} parent=1 // pred_fallthru
      _
    // Predicated region
    $region42: #{vae_forward.3} parent=1 // pred_check
      _
    $region43: #{vae_forward.3} parent=1 // pred_check_branch
      %50 = sbr.rel (0) target = $region45
    $region44: #{vae_forward.3} parent=1 // pred_region
      _
    $region45: #{vae_forward.3} parent=1 // pred_fallthru
      _
    // Predicated region
    $region46: #{vae_forward.3} parent=1 // pred_check
      _
    $region47: #{vae_forward.3} parent=1 // pred_check_branch
      %52 = sbr.rel (0) target = $region49
    $region48: #{vae_forward.3} parent=1 // pred_region
      _
    $region49: #{vae_forward.3} parent=1 // pred_fallthru
      _
    // Predicated region
    $region50: #{vae_forward.3} parent=1 // pred_check
      _
    $region51: #{vae_forward.3} parent=1 // pred_check_branch
      %54 = sbr.rel (0) target = $region53
    $region52: #{vae_forward.3} parent=1 // pred_region
      _
    $region53: #{vae_forward.3} parent=1 // pred_fallthru
      _
    // Predicated region
    $region54: #{vae_forward.3} parent=1 // pred_check
      _
    $region55: #{vae_forward.3} parent=1 // pred_check_branch
      %56 = sbr.rel (0) target = $region57
    $region56: #{vae_forward.3} parent=1 // pred_region
      _
    $region57: #{vae_forward.3} parent=1 // pred_fallthru
      _
    // Predicated region
    $region58: #{vae_forward.3} parent=1 // pred_check
      _
    $region59: #{vae_forward.3} parent=1 // pred_check_branch
      %58 = sbr.rel (0) target = $region61
    $region60: #{vae_forward.3} parent=1 // pred_region
      %59 = dma.done [#allocation4], 32
    $region61: #{vae_forward.3} parent=1 // pred_fallthru
      _
    %60 = sfence
    %v61 = vld [vmem:[%s12] sm:$0xff]
    %v62 = vld [vmem:[%s12 + $0x8] sm:$0xff]
    %v63 = vld [vmem:[%s12 + $0x10] sm:$0xff]
    %v64 = vld [vmem:[%s12 + $0x18] sm:$0xff]
    %v65 = vld [vmem:[%s12 + $0x20] sm:$0xff]
    %v66 = vld [vmem:[%s12 + $0x28] sm:$0xff]
    %v67 = vld [vmem:[%s12 + $0x30] sm:$0xff]
    %v68 = vld [vmem:[%s12 + $0x38] sm:$0xff]
    %v69 = vld [vmem:[%s13] sm:$0xff]
    %v70 = vld [vmem:[%s13 + $0x8] sm:$0xff]
    %v71 = vld [vmem:[%s13 + $0x10] sm:$0xff]
    %v72 = vld [vmem:[%s13 + $0x18] sm:$0xff]
    %v73 = vld [vmem:[%s13 + $0x20] sm:$0xff]
    %v74 = vld [vmem:[%s13 + $0x28] sm:$0xff]
    %v75 = vld [vmem:[%s13 + $0x30] sm:$0xff]
    %v76 = vld [vmem:[%s13 + $0x38] sm:$0xff]
    %v77 = vld [vmem:[%s2] sm:$0xff]
    %v78 = vld [vmem:[%s2 + $0x8] sm:$0xff]
    %s79 = scalar_lea.vmem %s2, 16
    %v80 = vld [vmem:[%s79] sm:$0xff]
    %v81 = vld [vmem:[%s79 + $0x8] sm:$0xff]
    %s82 = scalar_lea.vmem %s2, 32
    %v83 = vld [vmem:[%s82] sm:$0xff]
    %v84 = vld [vmem:[%s82 + $0x8] sm:$0xff]
    %s85 = sld [smem:[#allocation3]]
    %v86 = vstv %s85
    %v87 = vmul.f32 %v86, %v77
    %v88 = vmul.f32 %v86, %v78
    %s89 = sld [smem:[#allocation3 + $0x1]]
    %v90 = vstv %s89
    %v91 = vmul.f32 %v90, %v80
    %v92 = vmul.f32 %v90, %v81
    %v93 = vadd.f32 %v87, %v91
    %v94 = vadd.f32 %v88, %v92
    %v95 = vadd.f32 %v93, %v83
    %v96 = vadd.f32 %v94, %v84
    %s97 = sld [smem:[#allocation3 + $0x80]]
    %v98 = vstv %s97
    %v99 = vmul.f32 %v98, %v77
    %v100 = vmul.f32 %v98, %v78
    %s101 = sld [smem:[#allocation3 + $0x81]]
    %v102 = vstv %s101
    %v103 = vmul.f32 %v102, %v80
    %v104 = vmul.f32 %v102, %v81
    %v105 = vadd.f32 %v99, %v103
    %v106 = vadd.f32 %v100, %v104
    %v107 = vadd.f32 %v105, %v83
    %v108 = vadd.f32 %v106, %v84
    %111 = vrot.lane.b32.xlu0 %v107, 16
    %v112 = vpop.permute.xlu0 %111
    %113 = vrot.lane.b32.xlu0 %v108, 16
    %v114 = vpop.permute.xlu0 %113
    %vm117 = vcmask 130048
    %v118 = vsel %vm117, %v95, %v112
    %v119 = vsel %vm117, %v96, %v114
    %v120 = vld [vmem:[%s3] sm:$0xff]
    %v121 = vld [vmem:[%s3 + $0x8] sm:$0xff]
    %vm122 = vcmask 261120
    %v123 = vsel %vm122, %v118, 0.0
    %124 = vadd.xlane.f32.xlu0 %v123
    %v125 = vpop.xlane.xlu0 %124
    %v126 = vsel %vm122, %v119, 0.0
    %127 = vadd.xlane.f32.xlu0 %v126
    %v128 = vpop.xlane.xlu0 %127
    %v129 = vrcp.pop 32.0
    %v130 = vmul.f32 %v125, %v129
    %v131 = vmul.f32 %v128, %v129
    %v132 = vsub.f32 %v118, %v130
    %v133 = vsub.f32 %v119, %v131
    %v134 = vmul.f32 %v132, %v132
    %v135 = vmul.f32 %v133, %v133
    %v136 = vsel %vm122, %v134, 0.0
    %137 = vadd.xlane.f32.xlu0 %v136
    %v138 = vpop.xlane.xlu0 %137
    %v139 = vsel %vm122, %v135, 0.0
    %140 = vadd.xlane.f32.xlu0 %v139
    %v141 = vpop.xlane.xlu0 %140
    %v142 = vmul.f32 %v138, %v129
    %v143 = vmul.f32 %v141, %v129
    %v144 = vadd.f32 %v142, 1e-05
    %v145 = vadd.f32 %v143, 1e-05
    %v146 = vrsqrt.pop %v144
    %v147 = vrsqrt.pop %v145
    %v148 = vmul.f32 %v132, %v146
    %v149 = vmul.f32 %v133, %v147
    %151 = vset.pattern.permute.xlu0 0
    %152 = vperm.xlu0 %151, %v120
    %v153 = vpop.permute.xlu0 %152
    %156 = vset.pattern.permute.xlu0 0
    %157 = vperm.xlu0 %156, %v121
    %v158 = vpop.permute.xlu0 %157
    %v160 = vmul.f32 %v148, %v153
    %v161 = vmul.f32 %v149, %v158
    %162 = vset.pattern.permute.xlu0 1
    %163 = vperm.xlu0 %162, %v120
    %v164 = vpop.permute.xlu0 %163
    %166 = vset.pattern.permute.xlu0 1
    %167 = vperm.xlu0 %166, %v121
    %v168 = vpop.permute.xlu0 %167
    %v170 = vadd.f32 %v160, %v164
    %v171 = vadd.f32 %v161, %v168
    %v172 = vmax.f32 %v170, 0.0
    %v173 = vmax.f32 %v171, 0.0
    %v174 = vld [vmem:[%s5] sm:$0xff]
    %v175 = vld [vmem:[%s5 + $0x8] sm:$0x1]
    %178 = vrot.lane.b32.xlu0 %v172, 123
    %v179 = vpop.permute.xlu0 %178
    %180 = vrot.lane.b32.xlu0 %v173, 123
    %v181 = vpop.permute.xlu0 %180
    %184 = vrot.lane.b32.xlu0 %v172, 27
    %v185 = vpop.permute.xlu0 %184
    %186 = vrot.lane.b32.xlu0 %v173, 27
    %v187 = vpop.permute.xlu0 %186
    %vm190 = vcmask 220160
    %v191 = vsel %vm190, %v179, %v185
    %v192 = vsel %vm190, %v181, %v187
    %v193 = vlaneseq
    %v194 = vshrl.u32 %v193, 7
    %v195 = vsub.s32 0, %v194
    %v196 = vrot.slane %v174, %v195
    %v197 = vmul.f32 %v191, %v196
    %v198 = vmul.f32 %v192, %v196
    %199 = vrot.lane.b32.xlu0 %v172, 124
    %v200 = vpop.permute.xlu0 %199
    %201 = vrot.lane.b32.xlu0 %v173, 124
    %v202 = vpop.permute.xlu0 %201
    %205 = vrot.lane.b32.xlu0 %v172, 28
    %v206 = vpop.permute.xlu0 %205
    %207 = vrot.lane.b32.xlu0 %v173, 28
    %v208 = vpop.permute.xlu0 %207
    %vm211 = vcmask 228352
    %v212 = vsel %vm211, %v200, %v206
    %v213 = vsel %vm211, %v202, %v208
    %v214 = vlaneseq
    %v215 = vshrl.u32 %v214, 7
    %v216 = vsub.s32 1, %v215
    %v217 = vrot.slane %v174, %v216
    %v218 = vmul.f32 %v212, %v217
    %v219 = vmul.f32 %v213, %v217
    %220 = vrot.lane.b32.xlu0 %v172, 125
    %v221 = vpop.permute.xlu0 %220
    %222 = vrot.lane.b32.xlu0 %v173, 125
    %v223 = vpop.permute.xlu0 %222
    %226 = vrot.lane.b32.xlu0 %v172, 29
    %v227 = vpop.permute.xlu0 %226
    %228 = vrot.lane.b32.xlu0 %v173, 29
    %v229 = vpop.permute.xlu0 %228
    %vm232 = vcmask 236544
    %v233 = vsel %vm232, %v221, %v227
    %v234 = vsel %vm232, %v223, %v229
    %v235 = vlaneseq
    %v236 = vshrl.u32 %v235, 7
    %v237 = vsub.s32 2, %v236
    %v238 = vrot.slane %v174, %v237
    %v239 = vmul.f32 %v233, %v238
    %v240 = vmul.f32 %v234, %v238
    %241 = vrot.lane.b32.xlu0 %v172, 127
    %v242 = vpop.permute.xlu0 %241
    %243 = vrot.lane.b32.xlu0 %v173, 127
    %v244 = vpop.permute.xlu0 %243
    %247 = vrot.lane.b32.xlu0 %v172, 31
    %v248 = vpop.permute.xlu0 %247
    %249 = vrot.lane.b32.xlu0 %v173, 31
    %v250 = vpop.permute.xlu0 %249
    %vm253 = vcmask 252928
    %v254 = vsel %vm253, %v242, %v248
    %v255 = vsel %vm253, %v244, %v250
    %v256 = vlaneseq
    %v257 = vshrl.u32 %v256, 7
    %v258 = vsub.s32 3, %v257
    %v259 = vrot.slane %v174, %v258
    %v260 = vmul.f32 %v254, %v259
    %v261 = vmul.f32 %v255, %v259
    %v262 = vlaneseq
    %v263 = vshrl.u32 %v262, 7
    %v264 = vsub.s32 4, %v263
    %v265 = vrot.slane %v174, %v264
    %v266 = vmul.f32 %v172, %v265
    %v267 = vmul.f32 %v173, %v265
    %268 = vrot.lane.b32.xlu0 %v172, 97
    %v269 = vpop.permute.xlu0 %268
    %270 = vrot.lane.b32.xlu0 %v173, 97
    %v271 = vpop.permute.xlu0 %270
    %274 = vrot.lane.b32.xlu0 %v172, 1
    %v275 = vpop.permute.xlu0 %274
    %276 = vrot.lane.b32.xlu0 %v173, 1
    %v277 = vpop.permute.xlu0 %276
    %vm280 = vcmask 7168
    %v281 = vsel %vm280, %v269, %v275
    %v282 = vsel %vm280, %v271, %v277
    %v283 = vlaneseq
    %v284 = vshrl.u32 %v283, 7
    %v285 = vsub.s32 5, %v284
    %v286 = vrot.slane %v174, %v285
    %v287 = vmul.f32 %v281, %v286
    %v288 = vmul.f32 %v282, %v286
    %289 = vrot.lane.b32.xlu0 %v172, 99
    %v290 = vpop.permute.xlu0 %289
    %291 = vrot.lane.b32.xlu0 %v173, 99
    %v292 = vpop.permute.xlu0 %291
    %295 = vrot.lane.b32.xlu0 %v172, 3
    %v296 = vpop.permute.xlu0 %295
    %297 = vrot.lane.b32.xlu0 %v173, 3
    %v298 = vpop.permute.xlu0 %297
    %vm301 = vcmask 23552
    %v302 = vsel %vm301, %v290, %v296
    %v303 = vsel %vm301, %v292, %v298
    %v304 = vlaneseq
    %v305 = vshrl.u32 %v304, 7
    %v306 = vsub.s32 6, %v305
    %v307 = vrot.slane %v174, %v306
    %v308 = vmul.f32 %v302, %v307
    %v309 = vmul.f32 %v303, %v307
    %310 = vrot.lane.b32.xlu0 %v172, 100
    %v311 = vpop.permute.xlu0 %310
    %312 = vrot.lane.b32.xlu0 %v173, 100
    %v313 = vpop.permute.xlu0 %312
    %316 = vrot.lane.b32.xlu0 %v172, 4
    %v317 = vpop.permute.xlu0 %316
    %318 = vrot.lane.b32.xlu0 %v173, 4
    %v319 = vpop.permute.xlu0 %318
    %vm322 = vcmask 31744
    %v323 = vsel %vm322, %v311, %v317
    %v324 = vsel %vm322, %v313, %v319
    %v325 = vlaneseq
    %v326 = vshrl.u32 %v325, 7
    %v327 = vsub.s32 7, %v326
    %v328 = vrot.slane %v174, %v327
    %v329 = vmul.f32 %v323, %v328
    %v330 = vmul.f32 %v324, %v328
    %331 = vrot.lane.b32.xlu0 %v172, 101
    %v332 = vpop.permute.xlu0 %331
    %333 = vrot.lane.b32.xlu0 %v173, 101
    %v334 = vpop.permute.xlu0 %333
    %337 = vrot.lane.b32.xlu0 %v172, 5
    %v338 = vpop.permute.xlu0 %337
    %339 = vrot.lane.b32.xlu0 %v173, 5
    %v340 = vpop.permute.xlu0 %339
    %vm343 = vcmask 39936
    %v344 = vsel %vm343, %v332, %v338
    %v345 = vsel %vm343, %v334, %v340
    %v346 = vlaneseq
    %v347 = vshrl.u32 %v346, 7
    %v348 = vsub.s32 0, %v347
    %v349 = vrot.slane %v175, %v348
    %v350 = vmul.f32 %v344, %v349
    %v351 = vmul.f32 %v345, %v349
    %v352 = vld [vmem:[%s4] sm:$0xff]
    %v353 = vld [vmem:[%s4 + $0x8] sm:$0xff]
    %v354 = vld [vmem:[%s4 + $0x10] sm:$0xff]
    %v355 = vld [vmem:[%s4 + $0x18] sm:$0xff]
    %v356 = vld [vmem:[%s4 + $0x20] sm:$0xff]
    %v357 = vld [vmem:[%s4 + $0x28] sm:$0xff]
    %v358 = vld [vmem:[%s4 + $0x30] sm:$0xff]
    %v359 = vld [vmem:[%s4 + $0x38] sm:$0xff]
    %v360 = vld [vmem:[%s4 + $0x40] sm:$0xff]
    %v361 = vld [vmem:[%s4 + $0x48] sm:$0xff]
    %v362 = vld [vmem:[%s4 + $0x50] sm:$0xff]
    %v363 = vld [vmem:[%s4 + $0x58] sm:$0xff]
    %v364 = vld [vmem:[%s4 + $0x60] sm:$0xff]
    %v365 = vld [vmem:[%s4 + $0x68] sm:$0xff]
    %v366 = vld [vmem:[%s4 + $0x70] sm:$0xff]
    %v367 = vld [vmem:[%s4 + $0x78] sm:$0xff]
    %v369 = vsel %vm117, %v353, 0
    %v372 = vsel %vm117, %v355, 0
    %v375 = vsel %vm117, %v357, 0
    %v378 = vsel %vm117, %v359, 0
    %v381 = vsel %vm117, %v361, 0
    %v384 = vsel %vm117, %v363, 0
    %v387 = vsel %vm117, %v365, 0
    %v390 = vsel %vm117, %v367, 0
    %392 = vmatprep.subr.mxu0 0.0
    %393 = vmatpush1.msra.mxu0 %v197
    %394 = vmatprep.subr.mxu0 0.0
    %395 = vmatpush1.msra.mxu0 %v198
    %396 = vmatprep.subr.mxu0 0.0
    %397 = vmatpush1.msra.mxu0 %v218
    %398 = vmatprep.subr.mxu0 0.0
    %399 = vmatpush1.msra.mxu0 %v219
    %400 = vmatprep.subr.mxu0 0.0
    %401 = vmatpush1.msra.mxu0 %v239
    %402 = vmatprep.subr.mxu0 0.0
    %403 = vmatpush1.msra.mxu0 %v240
    %404 = vmatprep.subr.mxu0 0.0
    %405 = vmatpush1.msra.mxu0 %v260
    %406 = vmatprep.subr.mxu0 0.0
    %407 = vmatpush1.msra.mxu0 %v261
    %408 = vmatprep.subr.mxu0 0.0
    %409 = vmatpush1.msra.mxu0 %v266
    %410 = vmatprep.subr.mxu0 0.0
    %411 = vmatpush1.msra.mxu0 %v267
    %412 = vmatprep.subr.mxu0 0.0
    %413 = vmatpush1.msra.mxu0 %v287
    %414 = vmatprep.subr.mxu0 0.0
    %415 = vmatpush1.msra.mxu0 %v288
    %416 = vmatprep.subr.mxu0 0.0
    %417 = vmatpush1.msra.mxu0 %v308
    %418 = vmatprep.subr.mxu0 0.0
    %419 = vmatpush1.msra.mxu0 %v309
    %420 = vmatprep.subr.mxu0 0.0
    %421 = vmatpush1.msra.mxu0 %v329
    %422 = vmatprep.subr.mxu0 0.0
    %423 = vmatpush1.msra.mxu0 %v330
    %424 = vmatprep.subr.mxu0 0.0
    %425 = vmatpush1.msra.mxu0 %v350
    %426 = vmatprep.subr.mxu0 0.0
    %427 = vmatpush1.msra.mxu0 %v351
    %428 = vmatprep.subr.mxu0 0.0
    %429 = vmatpush1.msra.mxu0 0.0
    %430 = vmatprep.subr.mxu0 0.0
    %431 = vmatpush1.msra.mxu0 0.0
    %432 = vmatprep.subr.mxu0 0.0
    %433 = vmatpush1.msra.mxu0 0.0
    %434 = vmatprep.subr.mxu0 0.0
    %435 = vmatpush1.msra.mxu0 0.0
    %436 = vmatprep.subr.mxu0 0.0
    %437 = vmatpush1.msra.mxu0 0.0
    %438 = vmatprep.subr.mxu0 0.0
    %439 = vmatpush1.msra.mxu0 0.0
    %440 = vmatprep.subr.mxu0 0.0
    %441 = vmatpush1.msra.mxu0 0.0
    %442 = vmatprep.subr.mxu0 0.0
    %443 = vmatpush1.msra.mxu0 0.0
    %444 = vmatprep.subr.mxu0 0.0
    %445 = vmatpush1.msra.mxu0 0.0
    %446 = vmatprep.subr.mxu0 0.0
    %447 = vmatpush1.msra.mxu0 0.0
    %448 = vmatprep.subr.mxu0 0.0
    %449 = vmatpush1.msra.mxu0 0.0
    %450 = vmatprep.subr.mxu0 0.0
    %451 = vmatpush1.msra.mxu0 0.0
    %452 = vmatprep.subr.mxu0 0.0
    %453 = vmatpush1.msra.mxu0 0.0
    %454 = vmatprep.subr.mxu0 0.0
    %455 = vmatpush1.msra.mxu0 0.0
    %456 = vmatprep.mubr.f32.mxu0 %v369
    %457 = vmatmul.mubr.f32.gmra.mrb[0].mxu0 %v352
    %v458 = vpop.f32.mrb[0].mxu0
    %v459 = vadd.f32 0.0, %v458
    %v460 = vpop.f32.mrb[0].mxu0
    %461 = vmatprep.mubr.f32.mxu0 %v372
    %462 = vmatmul.mubr.f32.gmra.mrb[0].mxu0 %v354
    %v463 = vpop.f32.mrb[0].mxu0
    %v464 = vadd.f32 0.0, %v463
    %v465 = vpop.f32.mrb[0].mxu0
    %466 = vmatprep.mubr.f32.mxu0 %v375
    %467 = vmatmul.mubr.f32.gmra.mrb[0].mxu0 %v356
    %v468 = vpop.f32.mrb[0].mxu0
    %v469 = vadd.f32 0.0, %v468
    %v470 = vpop.f32.mrb[0].mxu0
    %471 = vmatprep.mubr.f32.mxu0 %v378
    %472 = vmatmul.mubr.f32.gmra.mrb[0].mxu0 %v358
    %v473 = vpop.f32.mrb[0].mxu0
    %v474 = vadd.f32 0.0, %v473
    %v475 = vpop.f32.mrb[0].mxu0
    %476 = vmatprep.mubr.f32.mxu0 %v381
    %477 = vmatmul.mubr.f32.gmra.mrb[0].mxu0 %v360
    %v478 = vpop.f32.mrb[0].mxu0
    %v479 = vadd.f32 0.0, %v478
    %v480 = vpop.f32.mrb[0].mxu0
    %481 = vmatprep.mubr.f32.mxu0 %v384
    %482 = vmatmul.mubr.f32.gmra.mrb[0].mxu0 %v362
    %v483 = vpop.f32.mrb[0].mxu0
    %v484 = vadd.f32 0.0, %v483
    %v485 = vpop.f32.mrb[0].mxu0
    %486 = vmatprep.mubr.f32.mxu0 %v387
    %487 = vmatmul.mubr.f32.gmra.mrb[0].mxu0 %v364
    %v488 = vpop.f32.mrb[0].mxu0
    %v489 = vadd.f32 0.0, %v488
    %v490 = vpop.f32.mrb[0].mxu0
    %491 = vmatprep.mubr.f32.mxu0 %v390
    %492 = vmatmul.mubr.f32.gmra.mrb[0].mxu0 %v366
    %v493 = vpop.f32.mrb[0].mxu0
    %v494 = vadd.f32 0.0, %v493
    %v495 = vpop.f32.mrb[0].mxu0
    %496 = vdwg.mxu0
    %v497 = vsel %vm122, %v459, 0.0
    %498 = vadd.xlane.f32.xlu0 %v497
    %v499 = vpop.xlane.xlu0 %498
    %v500 = vsel %vm122, %v464, 0.0
    %501 = vadd.xlane.f32.xlu0 %v500
    %v502 = vpop.xlane.xlu0 %501
    %v503 = vsel %vm122, %v469, 0.0
    %504 = vadd.xlane.f32.xlu0 %v503
    %v505 = vpop.xlane.xlu0 %504
    %v506 = vsel %vm122, %v474, 0.0
    %507 = vadd.xlane.f32.xlu0 %v506
    %v508 = vpop.xlane.xlu0 %507
    %v509 = vsel %vm122, %v479, 0.0
    %510 = vadd.xlane.f32.xlu0 %v509
    %v511 = vpop.xlane.xlu0 %510
    %v512 = vsel %vm122, %v484, 0.0
    %513 = vadd.xlane.f32.xlu0 %v512
    %v514 = vpop.xlane.xlu0 %513
    %v515 = vsel %vm122, %v489, 0.0
    %516 = vadd.xlane.f32.xlu0 %v515
    %v517 = vpop.xlane.xlu0 %516
    %v518 = vsel %vm122, %v494, 0.0
    %519 = vadd.xlane.f32.xlu0 %v518
    %v520 = vpop.xlane.xlu0 %519
    %v521 = vmul.f32 %v499, %v129
    %v522 = vmul.f32 %v502, %v129
    %v523 = vmul.f32 %v505, %v129
    %v524 = vmul.f32 %v508, %v129
    %v525 = vmul.f32 %v511, %v129
    %v526 = vmul.f32 %v514, %v129
    %v527 = vmul.f32 %v517, %v129
    %v528 = vmul.f32 %v520, %v129
    %vm529 = vcmask 523264
    %v531 = vsel %vm529, %v61, 0
    %v534 = vsel %vm529, %v62, 0
    %v537 = vsel %vm529, %v63, 0
    %v540 = vsel %vm529, %v64, 0
    %v543 = vsel %vm529, %v65, 0
    %v546 = vsel %vm529, %v66, 0
    %v549 = vsel %vm529, %v67, 0
    %v552 = vsel %vm529, %v68, 0
    %554 = vmatprep.subr.mxu0 0.0
    %555 = vmatpush1.msra.mxu0 %v521
    %556 = vmatprep.subr.mxu0 0.0
    %557 = vmatpush1.msra.mxu0 %v522
    %558 = vmatprep.subr.mxu0 0.0
    %559 = vmatpush1.msra.mxu0 %v523
    %560 = vmatprep.subr.mxu0 0.0
    %561 = vmatpush1.msra.mxu0 %v524
    %562 = vmatprep.subr.mxu0 0.0
    %563 = vmatpush1.msra.mxu0 %v525
    %564 = vmatprep.subr.mxu0 0.0
    %565 = vmatpush1.msra.mxu0 %v526
    %566 = vmatprep.subr.mxu0 0.0
    %567 = vmatpush1.msra.mxu0 %v527
    %568 = vmatprep.subr.mxu0 0.0
    %569 = vmatpush1.msra.mxu0 %v528
    %570 = vmatprep.subr.mxu0 0.0
    %571 = vmatpush1.msra.mxu0 0.0
    %572 = vmatprep.subr.mxu0 0.0
    %573 = vmatpush1.msra.mxu0 0.0
    %574 = vmatprep.subr.mxu0 0.0
    %575 = vmatpush1.msra.mxu0 0.0
    %576 = vmatprep.subr.mxu0 0.0
    %577 = vmatpush1.msra.mxu0 0.0
    %578 = vmatprep.subr.mxu0 0.0
    %579 = vmatpush1.msra.mxu0 0.0
    %580 = vmatprep.subr.mxu0 0.0
    %581 = vmatpush1.msra.mxu0 0.0
    %582 = vmatprep.subr.mxu0 0.0
    %583 = vmatpush1.msra.mxu0 0.0
    %584 = vmatprep.subr.mxu0 0.0
    %585 = vmatpush1.msra.mxu0 0.0
    %586 = vmatprep.subr.mxu0 0.0
    %587 = vmatpush1.msra.mxu0 0.0
    %588 = vmatprep.subr.mxu0 0.0
    %589 = vmatpush1.msra.mxu0 0.0
    %590 = vmatprep.subr.mxu0 0.0
    %591 = vmatpush1.msra.mxu0 0.0
    %592 = vmatprep.subr.mxu0 0.0
    %593 = vmatpush1.msra.mxu0 0.0
    %594 = vmatprep.subr.mxu0 0.0
    %595 = vmatpush1.msra.mxu0 0.0
    %596 = vmatprep.subr.mxu0 0.0
    %597 = vmatpush1.msra.mxu0 0.0
    %598 = vmatprep.subr.mxu0 0.0
    %599 = vmatpush1.msra.mxu0 0.0
    %600 = vmatprep.subr.mxu0 0.0
    %601 = vmatpush1.msra.mxu0 0.0
    %602 = vmatprep.subr.mxu0 0.0
    %603 = vmatpush1.msra.mxu0 0.0
    %604 = vmatprep.subr.mxu0 0.0
    %605 = vmatpush1.msra.mxu0 0.0
    %606 = vmatprep.subr.mxu0 0.0
    %607 = vmatpush1.msra.mxu0 0.0
    %608 = vmatprep.subr.mxu0 0.0
    %609 = vmatpush1.msra.mxu0 0.0
    %610 = vmatprep.subr.mxu0 0.0
    %611 = vmatpush1.msra.mxu0 0.0
    %612 = vmatprep.subr.mxu0 0.0
    %613 = vmatpush1.msra.mxu0 0.0
    %614 = vmatprep.subr.mxu0 0.0
    %615 = vmatpush1.msra.mxu0 0.0
    %616 = vmatprep.subr.mxu0 0.0
    %617 = vmatpush1.msra.mxu0 0.0
    %618 = vmatprep.mubr.f32.mxu0 0.0
    %619 = vmatmul.mubr.f32.gmra.mrb[0].mxu0 %v531
    %v620 = vpop.f32.mrb[0].mxu0
    %v621 = vadd.f32 0.0, %v620
    %v622 = vpop.f32.mrb[0].mxu0
    %623 = vmatprep.mubr.f32.mxu0 0.0
    %624 = vmatmul.mubr.f32.gmra.mrb[0].mxu0 %v534
    %v625 = vpop.f32.mrb[0].mxu0
    %v626 = vadd.f32 0.0, %v625
    %v627 = vpop.f32.mrb[0].mxu0
    %628 = vmatprep.mubr.f32.mxu0 0.0
    %629 = vmatmul.mubr.f32.gmra.mrb[0].mxu0 %v537
    %v630 = vpop.f32.mrb[0].mxu0
    %v631 = vadd.f32 0.0, %v630
    %v632 = vpop.f32.mrb[0].mxu0
    %633 = vmatprep.mubr.f32.mxu0 0.0
    %634 = vmatmul.mubr.f32.gmra.mrb[0].mxu0 %v540
    %v635 = vpop.f32.mrb[0].mxu0
    %v636 = vadd.f32 0.0, %v635
    %v637 = vpop.f32.mrb[0].mxu0
    %638 = vmatprep.mubr.f32.mxu0 0.0
    %639 = vmatmul.mubr.f32.gmra.mrb[0].mxu0 %v543
    %v640 = vpop.f32.mrb[0].mxu0
    %v641 = vadd.f32 0.0, %v640
    %v642 = vpop.f32.mrb[0].mxu0
    %643 = vmatprep.mubr.f32.mxu0 0.0
    %644 = vmatmul.mubr.f32.gmra.mrb[0].mxu0 %v546
    %v645 = vpop.f32.mrb[0].mxu0
    %v646 = vadd.f32 0.0, %v645
    %v647 = vpop.f32.mrb[0].mxu0
    %648 = vmatprep.mubr.f32.mxu0 0.0
    %649 = vmatmul.mubr.f32.gmra.mrb[0].mxu0 %v549
    %v650 = vpop.f32.mrb[0].mxu0
    %v651 = vadd.f32 0.0, %v650
    %v652 = vpop.f32.mrb[0].mxu0
    %653 = vmatprep.mubr.f32.mxu0 0.0
    %654 = vmatmul.mubr.f32.gmra.mrb[0].mxu0 %v552
    %v655 = vpop.f32.mrb[0].mxu0
    %v656 = vadd.f32 0.0, %v655
    %v657 = vpop.f32.mrb[0].mxu0
    %658 = vdwg.mxu0
    %660 = vset.pattern.permute.xlu0 0
    %661 = vperm.xlu0 %660, %v621
    %v662 = vpop.permute.xlu0 %661
    %665 = vset.pattern.permute.xlu0 0
    %666 = vperm.xlu0 %665, %v626
    %v667 = vpop.permute.xlu0 %666
    %670 = vset.pattern.permute.xlu0 0
    %671 = vperm.xlu0 %670, %v631
    %v672 = vpop.permute.xlu0 %671
    %675 = vset.pattern.permute.xlu0 0
    %676 = vperm.xlu0 %675, %v636
    %v677 = vpop.permute.xlu0 %676
    %680 = vset.pattern.permute.xlu0 0
    %681 = vperm.xlu0 %680, %v641
    %v682 = vpop.permute.xlu0 %681
    %685 = vset.pattern.permute.xlu0 0
    %686 = vperm.xlu0 %685, %v646
    %v687 = vpop.permute.xlu0 %686
    %690 = vset.pattern.permute.xlu0 0
    %691 = vperm.xlu0 %690, %v651
    %v692 = vpop.permute.xlu0 %691
    %695 = vset.pattern.permute.xlu0 0
    %696 = vperm.xlu0 %695, %v656
    %v697 = vpop.permute.xlu0 %696
    %v699 = vsub.f32 %v459, %v662
    %v700 = vsub.f32 %v464, %v667
    %v701 = vsub.f32 %v469, %v672
    %v702 = vsub.f32 %v474, %v677
    %v703 = vsub.f32 %v479, %v682
    %v704 = vsub.f32 %v484, %v687
    %v705 = vsub.f32 %v489, %v692
    %v706 = vsub.f32 %v494, %v697
    %v707 = vmul.f32 %v699, %v699
    %v708 = vmul.f32 %v700, %v700
    %v709 = vmul.f32 %v701, %v701
    %v710 = vmul.f32 %v702, %v702
    %v711 = vmul.f32 %v703, %v703
    %v712 = vmul.f32 %v704, %v704
    %v713 = vmul.f32 %v705, %v705
    %v714 = vmul.f32 %v706, %v706
    %v715 = vsel %vm122, %v707, 0.0
    %716 = vadd.xlane.f32.xlu0 %v715
    %v717 = vpop.xlane.xlu0 %716
    %v718 = vsel %vm122, %v708, 0.0
    %719 = vadd.xlane.f32.xlu0 %v718
    %v720 = vpop.xlane.xlu0 %719
    %v721 = vsel %vm122, %v709, 0.0
    %722 = vadd.xlane.f32.xlu0 %v721
    %v723 = vpop.xlane.xlu0 %722
    %v724 = vsel %vm122, %v710, 0.0
    %725 = vadd.xlane.f32.xlu0 %v724
    %v726 = vpop.xlane.xlu0 %725
    %v727 = vsel %vm122, %v711, 0.0
    %728 = vadd.xlane.f32.xlu0 %v727
    %v729 = vpop.xlane.xlu0 %728
    %v730 = vsel %vm122, %v712, 0.0
    %731 = vadd.xlane.f32.xlu0 %v730
    %v732 = vpop.xlane.xlu0 %731
    %v733 = vsel %vm122, %v713, 0.0
    %734 = vadd.xlane.f32.xlu0 %v733
    %v735 = vpop.xlane.xlu0 %734
    %v736 = vsel %vm122, %v714, 0.0
    %737 = vadd.xlane.f32.xlu0 %v736
    %v738 = vpop.xlane.xlu0 %737
    %v739 = vmul.f32 %v717, %v129
    %v740 = vmul.f32 %v720, %v129
    %v741 = vmul.f32 %v723, %v129
    %v742 = vmul.f32 %v726, %v129
    %v743 = vmul.f32 %v729, %v129
    %v744 = vmul.f32 %v732, %v129
    %v745 = vmul.f32 %v735, %v129
    %v746 = vmul.f32 %v738, %v129
    %747 = vmatprep.subr.mxu0 0.0
    %748 = vmatpush1.msra.mxu0 %v739
    %749 = vmatprep.subr.mxu0 0.0
    %750 = vmatpush1.msra.mxu0 %v740
    %751 = vmatprep.subr.mxu0 0.0
    %752 = vmatpush1.msra.mxu0 %v741
    %753 = vmatprep.subr.mxu0 0.0
    %754 = vmatpush1.msra.mxu0 %v742
    %755 = vmatprep.subr.mxu0 0.0
    %756 = vmatpush1.msra.mxu0 %v743
    %757 = vmatprep.subr.mxu0 0.0
    %758 = vmatpush1.msra.mxu0 %v744
    %759 = vmatprep.subr.mxu0 0.0
    %760 = vmatpush1.msra.mxu0 %v745
    %761 = vmatprep.subr.mxu0 0.0
    %762 = vmatpush1.msra.mxu0 %v746
    %763 = vmatprep.subr.mxu0 0.0
    %764 = vmatpush1.msra.mxu0 0.0
    %765 = vmatprep.subr.mxu0 0.0
    %766 = vmatpush1.msra.mxu0 0.0
    %767 = vmatprep.subr.mxu0 0.0
    %768 = vmatpush1.msra.mxu0 0.0
    %769 = vmatprep.subr.mxu0 0.0
    %770 = vmatpush1.msra.mxu0 0.0
    %771 = vmatprep.subr.mxu0 0.0
    %772 = vmatpush1.msra.mxu0 0.0
    %773 = vmatprep.subr.mxu0 0.0
    %774 = vmatpush1.msra.mxu0 0.0
    %775 = vmatprep.subr.mxu0 0.0
    %776 = vmatpush1.msra.mxu0 0.0
    %777 = vmatprep.subr.mxu0 0.0
    %778 = vmatpush1.msra.mxu0 0.0
    %779 = vmatprep.subr.mxu0 0.0
    %780 = vmatpush1.msra.mxu0 0.0
    %781 = vmatprep.subr.mxu0 0.0
    %782 = vmatpush1.msra.mxu0 0.0
    %783 = vmatprep.subr.mxu0 0.0
    %784 = vmatpush1.msra.mxu0 0.0
    %785 = vmatprep.subr.mxu0 0.0
    %786 = vmatpush1.msra.mxu0 0.0
    %787 = vmatprep.subr.mxu0 0.0
    %788 = vmatpush1.msra.mxu0 0.0
    %789 = vmatprep.subr.mxu0 0.0
    %790 = vmatpush1.msra.mxu0 0.0
    %791 = vmatprep.subr.mxu0 0.0
    %792 = vmatpush1.msra.mxu0 0.0
    %793 = vmatprep.subr.mxu0 0.0
    %794 = vmatpush1.msra.mxu0 0.0
    %795 = vmatprep.subr.mxu0 0.0
    %796 = vmatpush1.msra.mxu0 0.0
    %797 = vmatprep.subr.mxu0 0.0
    %798 = vmatpush1.msra.mxu0 0.0
    %799 = vmatprep.subr.mxu0 0.0
    %800 = vmatpush1.msra.mxu0 0.0
    %801 = vmatprep.subr.mxu0 0.0
    %802 = vmatpush1.msra.mxu0 0.0
    %803 = vmatprep.subr.mxu0 0.0
    %804 = vmatpush1.msra.mxu0 0.0
    %805 = vmatprep.subr.mxu0 0.0
    %806 = vmatpush1.msra.mxu0 0.0
    %807 = vmatprep.subr.mxu0 0.0
    %808 = vmatpush1.msra.mxu0 0.0
    %809 = vmatprep.subr.mxu0 0.0
    %810 = vmatpush1.msra.mxu0 0.0
    %811 = vmatprep.mubr.f32.mxu0 0.0
    %812 = vmatmul.mubr.f32.gmra.mrb[0].mxu0 %v531
    %v813 = vpop.f32.mrb[0].mxu0
    %v814 = vadd.f32 1e-05, %v813
    %v815 = vpop.f32.mrb[0].mxu0
    %816 = vmatprep.mubr.f32.mxu0 0.0
    %817 = vmatmul.mubr.f32.gmra.mrb[0].mxu0 %v534
    %v818 = vpop.f32.mrb[0].mxu0
    %v819 = vadd.f32 1e-05, %v818
    %v820 = vpop.f32.mrb[0].mxu0
    %821 = vmatprep.mubr.f32.mxu0 0.0
    %822 = vmatmul.mubr.f32.gmra.mrb[0].mxu0 %v537
    %v823 = vpop.f32.mrb[0].mxu0
    %v824 = vadd.f32 1e-05, %v823
    %v825 = vpop.f32.mrb[0].mxu0
    %826 = vmatprep.mubr.f32.mxu0 0.0
    %827 = vmatmul.mubr.f32.gmra.mrb[0].mxu0 %v540
    %v828 = vpop.f32.mrb[0].mxu0
    %v829 = vadd.f32 1e-05, %v828
    %v830 = vpop.f32.mrb[0].mxu0
    %831 = vmatprep.mubr.f32.mxu0 0.0
    %832 = vmatmul.mubr.f32.gmra.mrb[0].mxu0 %v543
    %v833 = vpop.f32.mrb[0].mxu0
    %v834 = vadd.f32 1e-05, %v833
    %v835 = vpop.f32.mrb[0].mxu0
    %836 = vmatprep.mubr.f32.mxu0 0.0
    %837 = vmatmul.mubr.f32.gmra.mrb[0].mxu0 %v546
    %v838 = vpop.f32.mrb[0].mxu0
    %v839 = vadd.f32 1e-05, %v838
    %v840 = vpop.f32.mrb[0].mxu0
    %841 = vmatprep.mubr.f32.mxu0 0.0
    %842 = vmatmul.mubr.f32.gmra.mrb[0].mxu0 %v549
    %v843 = vpop.f32.mrb[0].mxu0
    %v844 = vadd.f32 1e-05, %v843
    %v845 = vpop.f32.mrb[0].mxu0
    %846 = vmatprep.mubr.f32.mxu0 0.0
    %847 = vmatmul.mubr.f32.gmra.mrb[0].mxu0 %v552
    %v848 = vpop.f32.mrb[0].mxu0
    %v849 = vadd.f32 1e-05, %v848
    %v850 = vpop.f32.mrb[0].mxu0
    %851 = vdwg.mxu0
    %v852 = vrsqrt.pop %v814
    %v853 = vrsqrt.pop %v819
    %v854 = vrsqrt.pop %v824
    %v855 = vrsqrt.pop %v829
    %v856 = vrsqrt.pop %v834
    %v857 = vrsqrt.pop %v839
    %v858 = vrsqrt.pop %v844
    %v859 = vrsqrt.pop %v849
    %861 = vset.pattern.permute.xlu0 0
    %862 = vperm.xlu0 %861, %v852
    %v863 = vpop.permute.xlu0 %862
    %866 = vset.pattern.permute.xlu0 0
    %867 = vperm.xlu0 %866, %v853
    %v868 = vpop.permute.xlu0 %867
    %871 = vset.pattern.permute.xlu0 0
    %872 = vperm.xlu0 %871, %v854
    %v873 = vpop.permute.xlu0 %872
    %876 = vset.pattern.permute.xlu0 0
    %877 = vperm.xlu0 %876, %v855
    %v878 = vpop.permute.xlu0 %877
    %881 = vset.pattern.permute.xlu0 0
    %882 = vperm.xlu0 %881, %v856
    %v883 = vpop.permute.xlu0 %882
    %886 = vset.pattern.permute.xlu0 0
    %887 = vperm.xlu0 %886, %v857
    %v888 = vpop.permute.xlu0 %887
    %891 = vset.pattern.permute.xlu0 0
    %892 = vperm.xlu0 %891, %v858
    %v893 = vpop.permute.xlu0 %892
    %896 = vset.pattern.permute.xlu0 0
    %897 = vperm.xlu0 %896, %v859
    %v898 = vpop.permute.xlu0 %897
    %v900 = vmul.f32 %v699, %v863
    %v901 = vmul.f32 %v700, %v868
    %v902 = vmul.f32 %v701, %v873
    %v903 = vmul.f32 %v702, %v878
    %v904 = vmul.f32 %v703, %v883
    %v905 = vmul.f32 %v704, %v888
    %v906 = vmul.f32 %v705, %v893
    %v907 = vmul.f32 %v706, %v898
    %909 = vset.pattern.permute.xlu0 0
    %910 = vperm.xlu0 %909, %v69
    %v911 = vpop.permute.xlu0 %910
    %914 = vset.pattern.permute.xlu0 0
    %915 = vperm.xlu0 %914, %v70
    %v916 = vpop.permute.xlu0 %915
    %919 = vset.pattern.permute.xlu0 0
    %920 = vperm.xlu0 %919, %v71
    %v921 = vpop.permute.xlu0 %920
    %924 = vset.pattern.permute.xlu0 0
    %925 = vperm.xlu0 %924, %v72
    %v926 = vpop.permute.xlu0 %925
    %929 = vset.pattern.permute.xlu0 0
    %930 = vperm.xlu0 %929, %v73
    %v931 = vpop.permute.xlu0 %930
    %934 = vset.pattern.permute.xlu0 0
    %935 = vperm.xlu0 %934, %v74
    %v936 = vpop.permute.xlu0 %935
    %939 = vset.pattern.permute.xlu0 0
    %940 = vperm.xlu0 %939, %v75
    %v941 = vpop.permute.xlu0 %940
    %944 = vset.pattern.permute.xlu0 0
    %945 = vperm.xlu0 %944, %v76
    %v946 = vpop.permute.xlu0 %945
    %v948 = vmul.f32 %v900, %v911
    %v949 = vmul.f32 %v901, %v916
    %v950 = vmul.f32 %v902, %v921
    %v951 = vmul.f32 %v903, %v926
    %v952 = vmul.f32 %v904, %v931
    %v953 = vmul.f32 %v905, %v936
    %v954 = vmul.f32 %v906, %v941
    %v955 = vmul.f32 %v907, %v946
    %956 = vset.pattern.permute.xlu0 1
    %957 = vperm.xlu0 %956, %v69
    %v958 = vpop.permute.xlu0 %957
    %960 = vset.pattern.permute.xlu0 1
    %961 = vperm.xlu0 %960, %v70
    %v962 = vpop.permute.xlu0 %961
    %964 = vset.pattern.permute.xlu0 1
    %965 = vperm.xlu0 %964, %v71
    %v966 = vpop.permute.xlu0 %965
    %968 = vset.pattern.permute.xlu0 1
    %969 = vperm.xlu0 %968, %v72
    %v970 = vpop.permute.xlu0 %969
    %972 = vset.pattern.permute.xlu0 1
    %973 = vperm.xlu0 %972, %v73
    %v974 = vpop.permute.xlu0 %973
    %976 = vset.pattern.permute.xlu0 1
    %977 = vperm.xlu0 %976, %v74
    %v978 = vpop.permute.xlu0 %977
    %980 = vset.pattern.permute.xlu0 1
    %981 = vperm.xlu0 %980, %v75
    %v982 = vpop.permute.xlu0 %981
    %984 = vset.pattern.permute.xlu0 1
    %985 = vperm.xlu0 %984, %v76
    %v986 = vpop.permute.xlu0 %985
    %v988 = vadd.f32 %v948, %v958
    %v989 = vadd.f32 %v949, %v962
    %v990 = vadd.f32 %v950, %v966
    %v991 = vadd.f32 %v951, %v970
    %v992 = vadd.f32 %v952, %v974
    %v993 = vadd.f32 %v953, %v978
    %v994 = vadd.f32 %v954, %v982
    %v995 = vadd.f32 %v955, %v986
    %v996 = vmax.f32 %v988, 0.0
    %v997 = vmax.f32 %v989, 0.0
    %v998 = vmax.f32 %v990, 0.0
    %v999 = vmax.f32 %v991, 0.0
    %v1000 = vmax.f32 %v992, 0.0
    %v1001 = vmax.f32 %v993, 0.0
    %v1002 = vmax.f32 %v994, 0.0
    %v1003 = vmax.f32 %v995, 0.0
    %v1004 = vld [vmem:[%s6] sm:$0xff]
    %v1005 = vld [vmem:[%s6 + $0x8] sm:$0xff]
    %v1006 = vld [vmem:[%s6 + $0x10] sm:$0xff]
    %v1007 = vld [vmem:[%s6 + $0x18] sm:$0xff]
    %s1008 = scalar_lea.vmem %s6, 32
    %v1009 = vld [vmem:[%s1008] sm:$0xff]
    %v1010 = vld [vmem:[%s1008 + $0x8] sm:$0xff]
    %v1011 = vld [vmem:[%s1008 + $0x10] sm:$0xff]
    %v1012 = vld [vmem:[%s1008 + $0x18] sm:$0xff]
    %v1014 = vsel %vm122, %v998, 0
    %v1017 = vsel %vm122, %v999, 0
    %1019 = vmatprep.subr.mxu0 0.0
    %1020 = vmatpush1.msra.mxu0 %v1009
    %1021 = vmatprep.subr.mxu0 0.0
    %1022 = vmatpush1.msra.mxu0 %v1010
    %1023 = vmatprep.subr.mxu0 0.0
    %1024 = vmatpush1.msra.mxu0 %v1011
    %1025 = vmatprep.subr.mxu0 0.0
    %1026 = vmatpush1.msra.mxu0 %v1012
    %1027 = vmatprep.subr.mxu0 0.0
    %1028 = vmatpush1.msra.mxu0 0.0
    %1029 = vmatprep.subr.mxu0 0.0
    %1030 = vmatpush1.msra.mxu0 0.0
    %1031 = vmatprep.subr.mxu0 0.0
    %1032 = vmatpush1.msra.mxu0 0.0
    %1033 = vmatprep.subr.mxu0 0.0
    %1034 = vmatpush1.msra.mxu0 0.0
    %1035 = vmatprep.subr.mxu0 0.0
    %1036 = vmatpush1.msra.mxu0 0.0
    %1037 = vmatprep.subr.mxu0 0.0
    %1038 = vmatpush1.msra.mxu0 0.0
    %1039 = vmatprep.subr.mxu0 0.0
    %1040 = vmatpush1.msra.mxu0 0.0
    %1041 = vmatprep.subr.mxu0 0.0
    %1042 = vmatpush1.msra.mxu0 0.0
    %1043 = vmatprep.subr.mxu0 0.0
    %1044 = vmatpush1.msra.mxu0 0.0
    %1045 = vmatprep.subr.mxu0 0.0
    %1046 = vmatpush1.msra.mxu0 0.0
    %1047 = vmatprep.subr.mxu0 0.0
    %1048 = vmatpush1.msra.mxu0 0.0
    %1049 = vmatprep.subr.mxu0 0.0
    %1050 = vmatpush1.msra.mxu0 0.0
    %1051 = vmatprep.subr.mxu0 0.0
    %1052 = vmatpush1.msra.mxu0 0.0
    %1053 = vmatprep.subr.mxu0 0.0
    %1054 = vmatpush1.msra.mxu0 0.0
    %1055 = vmatprep.subr.mxu0 0.0
    %1056 = vmatpush1.msra.mxu0 0.0
    %1057 = vmatprep.subr.mxu0 0.0
    %1058 = vmatpush1.msra.mxu0 0.0
    %1059 = vmatprep.subr.mxu0 0.0
    %1060 = vmatpush1.msra.mxu0 0.0
    %1061 = vmatprep.subr.mxu0 0.0
    %1062 = vmatpush1.msra.mxu0 0.0
    %1063 = vmatprep.subr.mxu0 0.0
    %1064 = vmatpush1.msra.mxu0 0.0
    %1065 = vmatprep.subr.mxu0 0.0
    %1066 = vmatpush1.msra.mxu0 0.0
    %1067 = vmatprep.subr.mxu0 0.0
    %1068 = vmatpush1.msra.mxu0 0.0
    %1069 = vmatprep.subr.mxu0 0.0
    %1070 = vmatpush1.msra.mxu0 0.0
    %1071 = vmatprep.subr.mxu0 0.0
    %1072 = vmatpush1.msra.mxu0 0.0
    %1073 = vmatprep.subr.mxu0 0.0
    %1074 = vmatpush1.msra.mxu0 0.0
    %1075 = vmatprep.subr.mxu0 0.0
    %1076 = vmatpush1.msra.mxu0 0.0
    %1077 = vmatprep.subr.mxu0 0.0
    %1078 = vmatpush1.msra.mxu0 0.0
    %1079 = vmatprep.subr.mxu0 0.0
    %1080 = vmatpush1.msra.mxu0 0.0
    %1081 = vmatprep.subr.mxu0 0.0
    %1082 = vmatpush1.msra.mxu0 0.0
    %1083 = vmatprep.mubr.f32.mxu0 0.0
    %1084 = vmatmul.mubr.f32.gmra.mrb[0].mxu0 %v1014
    %v1085 = vpop.f32.mrb[0].mxu0
    %v1086 = vadd.f32 0.0, %v1085
    %v1087 = vpop.f32.mrb[0].mxu0
    %1088 = vmatprep.mubr.f32.mxu0 0.0
    %1089 = vmatmul.mubr.f32.gmra.mrb[0].mxu0 %v1017
    %v1090 = vpop.f32.mrb[0].mxu0
    %v1091 = vadd.f32 0.0, %v1090
    %v1092 = vpop.f32.mrb[0].mxu0
    %1093 = vdwg.mxu0
    %v1095 = vsel %vm122, %v996, 0
    %v1098 = vsel %vm122, %v997, 0
    %1100 = vmatprep.subr.mxu0 0.0
    %1101 = vmatpush1.msra.mxu0 %v1004
    %1102 = vmatprep.subr.mxu0 0.0
    %1103 = vmatpush1.msra.mxu0 %v1005
    %1104 = vmatprep.subr.mxu0 0.0
    %1105 = vmatpush1.msra.mxu0 %v1006
    %1106 = vmatprep.subr.mxu0 0.0
    %1107 = vmatpush1.msra.mxu0 %v1007
    %1108 = vmatprep.subr.mxu0 0.0
    %1109 = vmatpush1.msra.mxu0 0.0
    %1110 = vmatprep.subr.mxu0 0.0
    %1111 = vmatpush1.msra.mxu0 0.0
    %1112 = vmatprep.subr.mxu0 0.0
    %1113 = vmatpush1.msra.mxu0 0.0
    %1114 = vmatprep.subr.mxu0 0.0
    %1115 = vmatpush1.msra.mxu0 0.0
    %1116 = vmatprep.subr.mxu0 0.0
    %1117 = vmatpush1.msra.mxu0 0.0
    %1118 = vmatprep.subr.mxu0 0.0
    %1119 = vmatpush1.msra.mxu0 0.0
    %1120 = vmatprep.subr.mxu0 0.0
    %1121 = vmatpush1.msra.mxu0 0.0
    %1122 = vmatprep.subr.mxu0 0.0
    %1123 = vmatpush1.msra.mxu0 0.0
    %1124 = vmatprep.subr.mxu0 0.0
    %1125 = vmatpush1.msra.mxu0 0.0
    %1126 = vmatprep.subr.mxu0 0.0
    %1127 = vmatpush1.msra.mxu0 0.0
    %1128 = vmatprep.subr.mxu0 0.0
    %1129 = vmatpush1.msra.mxu0 0.0
    %1130 = vmatprep.subr.mxu0 0.0
    %1131 = vmatpush1.msra.mxu0 0.0
    %1132 = vmatprep.subr.mxu0 0.0
    %1133 = vmatpush1.msra.mxu0 0.0
    %1134 = vmatprep.subr.mxu0 0.0
    %1135 = vmatpush1.msra.mxu0 0.0
    %1136 = vmatprep.subr.mxu0 0.0
    %1137 = vmatpush1.msra.mxu0 0.0
    %1138 = vmatprep.subr.mxu0 0.0
    %1139 = vmatpush1.msra.mxu0 0.0
    %1140 = vmatprep.subr.mxu0 0.0
    %1141 = vmatpush1.msra.mxu0 0.0
    %1142 = vmatprep.subr.mxu0 0.0
    %1143 = vmatpush1.msra.mxu0 0.0
    %1144 = vmatprep.subr.mxu0 0.0
    %1145 = vmatpush1.msra.mxu0 0.0
    %1146 = vmatprep.subr.mxu0 0.0
    %1147 = vmatpush1.msra.mxu0 0.0
    %1148 = vmatprep.subr.mxu0 0.0
    %1149 = vmatpush1.msra.mxu0 0.0
    %1150 = vmatprep.subr.mxu0 0.0
    %1151 = vmatpush1.msra.mxu0 0.0
    %1152 = vmatprep.subr.mxu0 0.0
    %1153 = vmatpush1.msra.mxu0 0.0
    %1154 = vmatprep.subr.mxu0 0.0
    %1155 = vmatpush1.msra.mxu0 0.0
    %1156 = vmatprep.subr.mxu0 0.0
    %1157 = vmatpush1.msra.mxu0 0.0
    %1158 = vmatprep.subr.mxu0 0.0
    %1159 = vmatpush1.msra.mxu0 0.0
    %1160 = vmatprep.subr.mxu0 0.0
    %1161 = vmatpush1.msra.mxu0 0.0
    %1162 = vmatprep.subr.mxu0 0.0
    %1163 = vmatpush1.msra.mxu0 0.0
    %1164 = vmatprep.mubr.f32.mxu0 0.0
    %1165 = vmatmul.mubr.f32.gmra.mrb[0].mxu0 %v1095
    %v1166 = vpop.f32.mrb[0].mxu0
    %v1167 = vadd.f32 %v1086, %v1166
    %v1168 = vpop.f32.mrb[0].mxu0
    %1169 = vmatprep.mubr.f32.mxu0 0.0
    %1170 = vmatmul.mubr.f32.gmra.mrb[0].mxu0 %v1098
    %v1171 = vpop.f32.mrb[0].mxu0
    %v1172 = vadd.f32 %v1091, %v1171
    %v1173 = vpop.f32.mrb[0].mxu0
    %1174 = vdwg.mxu0
    %s1175 = scalar_lea.vmem %s6, 64
    %v1176 = vld [vmem:[%s1175] sm:$0xff]
    %v1177 = vld [vmem:[%s1175 + $0x8] sm:$0xff]
    %v1178 = vld [vmem:[%s1175 + $0x10] sm:$0xff]
    %v1179 = vld [vmem:[%s1175 + $0x18] sm:$0xff]
    %v1181 = vsel %vm122, %v1000, 0
    %v1184 = vsel %vm122, %v1001, 0
    %1186 = vmatprep.subr.mxu0 0.0
    %1187 = vmatpush1.msra.mxu0 %v1176
    %1188 = vmatprep.subr.mxu0 0.0
    %1189 = vmatpush1.msra.mxu0 %v1177
    %1190 = vmatprep.subr.mxu0 0.0
    %1191 = vmatpush1.msra.mxu0 %v1178
    %1192 = vmatprep.subr.mxu0 0.0
    %1193 = vmatpush1.msra.mxu0 %v1179
    %1194 = vmatprep.subr.mxu0 0.0
    %1195 = vmatpush1.msra.mxu0 0.0
    %1196 = vmatprep.subr.mxu0 0.0
    %1197 = vmatpush1.msra.mxu0 0.0
    %1198 = vmatprep.subr.mxu0 0.0
    %1199 = vmatpush1.msra.mxu0 0.0
    %1200 = vmatprep.subr.mxu0 0.0
    %1201 = vmatpush1.msra.mxu0 0.0
    %1202 = vmatprep.subr.mxu0 0.0
    %1203 = vmatpush1.msra.mxu0 0.0
    %1204 = vmatprep.subr.mxu0 0.0
    %1205 = vmatpush1.msra.mxu0 0.0
    %1206 = vmatprep.subr.mxu0 0.0
    %1207 = vmatpush1.msra.mxu0 0.0
    %1208 = vmatprep.subr.mxu0 0.0
    %1209 = vmatpush1.msra.mxu0 0.0
    %1210 = vmatprep.subr.mxu0 0.0
    %1211 = vmatpush1.msra.mxu0 0.0
    %1212 = vmatprep.subr.mxu0 0.0
    %1213 = vmatpush1.msra.mxu0 0.0
    %1214 = vmatprep.subr.mxu0 0.0
    %1215 = vmatpush1.msra.mxu0 0.0
    %1216 = vmatprep.subr.mxu0 0.0
    %1217 = vmatpush1.msra.mxu0 0.0
    %1218 = vmatprep.subr.mxu0 0.0
    %1219 = vmatpush1.msra.mxu0 0.0
    %1220 = vmatprep.subr.mxu0 0.0
    %1221 = vmatpush1.msra.mxu0 0.0
    %1222 = vmatprep.subr.mxu0 0.0
    %1223 = vmatpush1.msra.mxu0 0.0
    %1224 = vmatprep.subr.mxu0 0.0
    %1225 = vmatpush1.msra.mxu0 0.0
    %1226 = vmatprep.subr.mxu0 0.0
    %1227 = vmatpush1.msra.mxu0 0.0
    %1228 = vmatprep.subr.mxu0 0.0
    %1229 = vmatpush1.msra.mxu0 0.0
    %1230 = vmatprep.subr.mxu0 0.0
    %1231 = vmatpush1.msra.mxu0 0.0
    %1232 = vmatprep.subr.mxu0 0.0
    %1233 = vmatpush1.msra.mxu0 0.0
    %1234 = vmatprep.subr.mxu0 0.0
    %1235 = vmatpush1.msra.mxu0 0.0
    %1236 = vmatprep.subr.mxu0 0.0
    %1237 = vmatpush1.msra.mxu0 0.0
    %1238 = vmatprep.subr.mxu0 0.0
    %1239 = vmatpush1.msra.mxu0 0.0
    %1240 = vmatprep.subr.mxu0 0.0
    %1241 = vmatpush1.msra.mxu0 0.0
    %1242 = vmatprep.subr.mxu0 0.0
    %1243 = vmatpush1.msra.mxu0 0.0
    %1244 = vmatprep.subr.mxu0 0.0
    %1245 = vmatpush1.msra.mxu0 0.0
    %1246 = vmatprep.subr.mxu0 0.0
    %1247 = vmatpush1.msra.mxu0 0.0
    %1248 = vmatprep.subr.mxu0 0.0
    %1249 = vmatpush1.msra.mxu0 0.0
    %1250 = vmatprep.mubr.f32.mxu0 0.0
    %1251 = vmatmul.mubr.f32.gmra.mrb[0].mxu0 %v1181
    %v1252 = vpop.f32.mrb[0].mxu0
    %v1253 = vadd.f32 0.0, %v1252
    %v1254 = vpop.f32.mrb[0].mxu0
    %1255 = vmatprep.mubr.f32.mxu0 0.0
    %1256 = vmatmul.mubr.f32.gmra.mrb[0].mxu0 %v1184
    %v1257 = vpop.f32.mrb[0].mxu0
    %v1258 = vadd.f32 0.0, %v1257
    %v1259 = vpop.f32.mrb[0].mxu0
    %1260 = vdwg.mxu0
    %v1261 = vadd.f32 %v1167, %v1253
    %v1262 = vadd.f32 %v1172, %v1258
    %s1263 = scalar_lea.vmem %s6, 96
    %v1264 = vld [vmem:[%s1263] sm:$0xff]
    %v1265 = vld [vmem:[%s1263 + $0x8] sm:$0xff]
    %v1266 = vld [vmem:[%s1263 + $0x10] sm:$0xff]
    %v1267 = vld [vmem:[%s1263 + $0x18] sm:$0xff]
    %v1269 = vsel %vm122, %v1002, 0
    %v1272 = vsel %vm122, %v1003, 0
    %1274 = vmatprep.subr.mxu0 0.0
    %1275 = vmatpush1.msra.mxu0 %v1264
    %1276 = vmatprep.subr.mxu0 0.0
    %1277 = vmatpush1.msra.mxu0 %v1265
    %1278 = vmatprep.subr.mxu0 0.0
    %1279 = vmatpush1.msra.mxu0 %v1266
    %1280 = vmatprep.subr.mxu0 0.0
    %1281 = vmatpush1.msra.mxu0 %v1267
    %1282 = vmatprep.subr.mxu0 0.0
    %1283 = vmatpush1.msra.mxu0 0.0
    %1284 = vmatprep.subr.mxu0 0.0
    %1285 = vmatpush1.msra.mxu0 0.0
    %1286 = vmatprep.subr.mxu0 0.0
    %1287 = vmatpush1.msra.mxu0 0.0
    %1288 = vmatprep.subr.mxu0 0.0
    %1289 = vmatpush1.msra.mxu0 0.0
    %1290 = vmatprep.subr.mxu0 0.0
    %1291 = vmatpush1.msra.mxu0 0.0
    %1292 = vmatprep.subr.mxu0 0.0
    %1293 = vmatpush1.msra.mxu0 0.0
    %1294 = vmatprep.subr.mxu0 0.0
    %1295 = vmatpush1.msra.mxu0 0.0
    %1296 = vmatprep.subr.mxu0 0.0
    %1297 = vmatpush1.msra.mxu0 0.0
    %1298 = vmatprep.subr.mxu0 0.0
    %1299 = vmatpush1.msra.mxu0 0.0
    %1300 = vmatprep.subr.mxu0 0.0
    %1301 = vmatpush1.msra.mxu0 0.0
    %1302 = vmatprep.subr.mxu0 0.0
    %1303 = vmatpush1.msra.mxu0 0.0
    %1304 = vmatprep.subr.mxu0 0.0
    %1305 = vmatpush1.msra.mxu0 0.0
    %1306 = vmatprep.subr.mxu0 0.0
    %1307 = vmatpush1.msra.mxu0 0.0
    %1308 = vmatprep.subr.mxu0 0.0
    %1309 = vmatpush1.msra.mxu0 0.0
    %1310 = vmatprep.subr.mxu0 0.0
    %1311 = vmatpush1.msra.mxu0 0.0
    %1312 = vmatprep.subr.mxu0 0.0
    %1313 = vmatpush1.msra.mxu0 0.0
    %1314 = vmatprep.subr.mxu0 0.0
    %1315 = vmatpush1.msra.mxu0 0.0
    %1316 = vmatprep.subr.mxu0 0.0
    %1317 = vmatpush1.msra.mxu0 0.0
    %1318 = vmatprep.subr.mxu0 0.0
    %1319 = vmatpush1.msra.mxu0 0.0
    %1320 = vmatprep.subr.mxu0 0.0
    %1321 = vmatpush1.msra.mxu0 0.0
    %1322 = vmatprep.subr.mxu0 0.0
    %1323 = vmatpush1.msra.mxu0 0.0
    %1324 = vmatprep.subr.mxu0 0.0
    %1325 = vmatpush1.msra.mxu0 0.0
    %1326 = vmatprep.subr.mxu0 0.0
    %1327 = vmatpush1.msra.mxu0 0.0
    %1328 = vmatprep.subr.mxu0 0.0
    %1329 = vmatpush1.msra.mxu0 0.0
    %1330 = vmatprep.subr.mxu0 0.0
    %1331 = vmatpush1.msra.mxu0 0.0
    %1332 = vmatprep.subr.mxu0 0.0
    %1333 = vmatpush1.msra.mxu0 0.0
    %1334 = vmatprep.subr.mxu0 0.0
    %1335 = vmatpush1.msra.mxu0 0.0
    %1336 = vmatprep.subr.mxu0 0.0
    %1337 = vmatpush1.msra.mxu0 0.0
    %1338 = vmatprep.mubr.f32.mxu0 0.0
    %1339 = vmatmul.mubr.f32.gmra.mrb[0].mxu0 %v1269
    %v1340 = vpop.f32.mrb[0].mxu0
    %v1341 = vadd.f32 0.0, %v1340
    %v1342 = vpop.f32.mrb[0].mxu0
    %1343 = vmatprep.mubr.f32.mxu0 0.0
    %1344 = vmatmul.mubr.f32.gmra.mrb[0].mxu0 %v1272
    %v1345 = vpop.f32.mrb[0].mxu0
    %v1346 = vadd.f32 0.0, %v1345
    %v1347 = vpop.f32.mrb[0].mxu0
    %1348 = vdwg.mxu0
    %v1349 = vadd.f32 %v1261, %v1341
    %v1350 = vadd.f32 %v1262, %v1346
    %v1351 = vld [vmem:[%s8] sm:$0xff]
    %v1352 = vld [vmem:[%s8 + $0x8] sm:$0x1]
    %1355 = vrot.lane.b32.xlu0 %v1349, 119
    %v1356 = vpop.permute.xlu0 %1355
    %1357 = vrot.lane.b32.xlu0 %v1350, 119
    %v1358 = vpop.permute.xlu0 %1357
    %v1361 = vlaneseq
    %v1362 = vshrl.u32 %v1361, 7
    %v1363 = vsub.s32 0, %v1362
    %v1364 = vrot.slane %v1351, %v1363
    %v1365 = vmul.f32 %v1356, %v1364
    %v1366 = vmul.f32 %v1358, %v1364
    %1367 = vrot.lane.b32.xlu0 %v1349, 120
    %v1368 = vpop.permute.xlu0 %1367
    %1369 = vrot.lane.b32.xlu0 %v1350, 120
    %v1370 = vpop.permute.xlu0 %1369
    %v1373 = vlaneseq
    %v1374 = vshrl.u32 %v1373, 7
    %v1375 = vsub.s32 1, %v1374
    %v1376 = vrot.slane %v1351, %v1375
    %v1377 = vmul.f32 %v1368, %v1376
    %v1378 = vmul.f32 %v1370, %v1376
    %1379 = vrot.lane.b32.xlu0 %v1349, 121
    %v1380 = vpop.permute.xlu0 %1379
    %1381 = vrot.lane.b32.xlu0 %v1350, 121
    %v1382 = vpop.permute.xlu0 %1381
    %v1385 = vlaneseq
    %v1386 = vshrl.u32 %v1385, 7
    %v1387 = vsub.s32 2, %v1386
    %v1388 = vrot.slane %v1351, %v1387
    %v1389 = vmul.f32 %v1380, %v1388
    %v1390 = vmul.f32 %v1382, %v1388
    %1391 = vrot.lane.b32.xlu0 %v1349, 127
    %v1392 = vpop.permute.xlu0 %1391
    %1393 = vrot.lane.b32.xlu0 %v1350, 127
    %v1394 = vpop.permute.xlu0 %1393
    %vm1397 = vcmask 1039360
    %v1398 = vlaneseq
    %v1399 = vshrl.u32 %v1398, 7
    %v1400 = vsub.s32 3, %v1399
    %v1401 = vrot.slane %v1351, %v1400
    %v1402 = vmul.f32 %v1392, %v1401
    %v1403 = vmul.f32 %v1394, %v1401
    %v1404 = vlaneseq
    %v1405 = vshrl.u32 %v1404, 7
    %v1406 = vsub.s32 4, %v1405
    %v1407 = vrot.slane %v1351, %v1406
    %v1408 = vmul.f32 %v1349, %v1407
    %v1409 = vmul.f32 %v1350, %v1407
    %1410 = vrot.lane.b32.xlu0 %v1349, 1
    %v1411 = vpop.permute.xlu0 %1410
    %1412 = vrot.lane.b32.xlu0 %v1350, 1
    %v1413 = vpop.permute.xlu0 %1412
    %v1416 = vlaneseq
    %v1417 = vshrl.u32 %v1416, 7
    %v1418 = vsub.s32 5, %v1417
    %v1419 = vrot.slane %v1351, %v1418
    %v1420 = vmul.f32 %v1411, %v1419
    %v1421 = vmul.f32 %v1413, %v1419
    %1422 = vrot.lane.b32.xlu0 %v1349, 7
    %v1423 = vpop.permute.xlu0 %1422
    %1424 = vrot.lane.b32.xlu0 %v1350, 7
    %v1425 = vpop.permute.xlu0 %1424
    %v1428 = vlaneseq
    %v1429 = vshrl.u32 %v1428, 7
    %v1430 = vsub.s32 6, %v1429
    %v1431 = vrot.slane %v1351, %v1430
    %v1432 = vmul.f32 %v1423, %v1431
    %v1433 = vmul.f32 %v1425, %v1431
    %1434 = vrot.lane.b32.xlu0 %v1349, 8
    %v1435 = vpop.permute.xlu0 %1434
    %1436 = vrot.lane.b32.xlu0 %v1350, 8
    %v1437 = vpop.permute.xlu0 %1436
    %v1440 = vlaneseq
    %v1441 = vshrl.u32 %v1440, 7
    %v1442 = vsub.s32 7, %v1441
    %v1443 = vrot.slane %v1351, %v1442
    %v1444 = vmul.f32 %v1435, %v1443
    %v1445 = vmul.f32 %v1437, %v1443
    %1446 = vrot.lane.b32.xlu0 %v1349, 9
    %v1447 = vpop.permute.xlu0 %1446
    %1448 = vrot.lane.b32.xlu0 %v1350, 9
    %v1449 = vpop.permute.xlu0 %1448
    %v1452 = vlaneseq
    %v1453 = vshrl.u32 %v1452, 7
    %v1454 = vsub.s32 0, %v1453
    %v1455 = vrot.slane %v1352, %v1454
    %v1456 = vmul.f32 %v1447, %v1455
    %v1457 = vmul.f32 %v1449, %v1455
    %v1458 = vld [vmem:[%s7] sm:$0xff]
    %v1459 = vld [vmem:[%s7 + $0x8] sm:$0xff]
    %v1460 = vld [vmem:[%s7 + $0x10] sm:$0xff]
    %v1461 = vld [vmem:[%s7 + $0x18] sm:$0xff]
    %v1462 = vld [vmem:[%s7 + $0x20] sm:$0xff]
    %v1463 = vld [vmem:[%s7 + $0x28] sm:$0xff]
    %v1464 = vld [vmem:[%s7 + $0x30] sm:$0xff]
    %v1465 = vld [vmem:[%s7 + $0x38] sm:$0xff]
    %v1466 = vld [vmem:[%s7 + $0x40] sm:$0xff]
    %v1467 = vld [vmem:[%s7 + $0x48] sm:$0xff]
    %v1468 = vld [vmem:[%s7 + $0x50] sm:$0xff]
    %v1469 = vld [vmem:[%s7 + $0x58] sm:$0xff]
    %v1470 = vld [vmem:[%s7 + $0x60] sm:$0xff]
    %v1471 = vld [vmem:[%s7 + $0x68] sm:$0xff]
    %v1472 = vld [vmem:[%s7 + $0x70] sm:$0xff]
    %v1473 = vld [vmem:[%s7 + $0x78] sm:$0xff]
    %v1475 = vsel %vm117, %v1459, 0
    %v1478 = vsel %vm117, %v1461, 0
    %v1481 = vsel %vm117, %v1463, 0
    %v1484 = vsel %vm117, %v1465, 0
    %v1487 = vsel %vm117, %v1467, 0
    %v1490 = vsel %vm117, %v1469, 0
    %v1493 = vsel %vm117, %v1471, 0
    %v1496 = vsel %vm117, %v1473, 0
    %1498 = vmatprep.subr.mxu0 0.0
    %1499 = vmatpush1.msra.mxu0 %v1365
    %1500 = vmatprep.subr.mxu0 0.0
    %1501 = vmatpush1.msra.mxu0 %v1366
    %1502 = vmatprep.subr.mxu0 0.0
    %1503 = vmatpush1.msra.mxu0 %v1377
    %1504 = vmatprep.subr.mxu0 0.0
    %1505 = vmatpush1.msra.mxu0 %v1378
    %1506 = vmatprep.subr.mxu0 0.0
    %1507 = vmatpush1.msra.mxu0 %v1389
    %1508 = vmatprep.subr.mxu0 0.0
    %1509 = vmatpush1.msra.mxu0 %v1390
    %1510 = vmatprep.subr.mxu0 0.0
    %1511 = vmatpush1.msra.mxu0 %v1402
    %1512 = vmatprep.subr.mxu0 0.0
    %1513 = vmatpush1.msra.mxu0 %v1403
    %1514 = vmatprep.subr.mxu0 0.0
    %1515 = vmatpush1.msra.mxu0 %v1408
    %1516 = vmatprep.subr.mxu0 0.0
    %1517 = vmatpush1.msra.mxu0 %v1409
    %1518 = vmatprep.subr.mxu0 0.0
    %1519 = vmatpush1.msra.mxu0 %v1420
    %1520 = vmatprep.subr.mxu0 0.0
    %1521 = vmatpush1.msra.mxu0 %v1421
    %1522 = vmatprep.subr.mxu0 0.0
    %1523 = vmatpush1.msra.mxu0 %v1432
    %1524 = vmatprep.subr.mxu0 0.0
    %1525 = vmatpush1.msra.mxu0 %v1433
    %1526 = vmatprep.subr.mxu0 0.0
    %1527 = vmatpush1.msra.mxu0 %v1444
    %1528 = vmatprep.subr.mxu0 0.0
    %1529 = vmatpush1.msra.mxu0 %v1445
    %1530 = vmatprep.subr.mxu0 0.0
    %1531 = vmatpush1.msra.mxu0 %v1456
    %1532 = vmatprep.subr.mxu0 0.0
    %1533 = vmatpush1.msra.mxu0 %v1457
    %1534 = vmatprep.subr.mxu0 0.0
    %1535 = vmatpush1.msra.mxu0 0.0
    %1536 = vmatprep.subr.mxu0 0.0
    %1537 = vmatpush1.msra.mxu0 0.0
    %1538 = vmatprep.subr.mxu0 0.0
    %1539 = vmatpush1.msra.mxu0 0.0
    %1540 = vmatprep.subr.mxu0 0.0
    %1541 = vmatpush1.msra.mxu0 0.0
    %1542 = vmatprep.subr.mxu0 0.0
    %1543 = vmatpush1.msra.mxu0 0.0
    %1544 = vmatprep.subr.mxu0 0.0
    %1545 = vmatpush1.msra.mxu0 0.0
    %1546 = vmatprep.subr.mxu0 0.0
    %1547 = vmatpush1.msra.mxu0 0.0
    %1548 = vmatprep.subr.mxu0 0.0
    %1549 = vmatpush1.msra.mxu0 0.0
    %1550 = vmatprep.subr.mxu0 0.0
    %1551 = vmatpush1.msra.mxu0 0.0
    %1552 = vmatprep.subr.mxu0 0.0
    %1553 = vmatpush1.msra.mxu0 0.0
    %1554 = vmatprep.subr.mxu0 0.0
    %1555 = vmatpush1.msra.mxu0 0.0
    %1556 = vmatprep.subr.mxu0 0.0
    %1557 = vmatpush1.msra.mxu0 0.0
    %1558 = vmatprep.subr.mxu0 0.0
    %1559 = vmatpush1.msra.mxu0 0.0
    %1560 = vmatprep.subr.mxu0 0.0
    %1561 = vmatpush1.msra.mxu0 0.0
    %1562 = vmatprep.mubr.f32.mxu0 %v1475
    %1563 = vmatmul.mubr.f32.gmra.mrb[0].mxu0 %v1458
    %v1564 = vpop.f32.mrb[0].mxu0
    %v1565 = vadd.f32 0.0, %v1564
    %v1566 = vpop.f32.mrb[0].mxu0
    %1567 = vmatprep.mubr.f32.mxu0 %v1478
    %1568 = vmatmul.mubr.f32.gmra.mrb[0].mxu0 %v1460
    %v1569 = vpop.f32.mrb[0].mxu0
    %v1570 = vadd.f32 0.0, %v1569
    %v1571 = vpop.f32.mrb[0].mxu0
    %1572 = vmatprep.mubr.f32.mxu0 %v1481
    %1573 = vmatmul.mubr.f32.gmra.mrb[0].mxu0 %v1462
    %v1574 = vpop.f32.mrb[0].mxu0
    %v1575 = vadd.f32 0.0, %v1574
    %v1576 = vpop.f32.mrb[0].mxu0
    %1577 = vmatprep.mubr.f32.mxu0 %v1484
    %1578 = vmatmul.mubr.f32.gmra.mrb[0].mxu0 %v1464
    %v1579 = vpop.f32.mrb[0].mxu0
    %v1580 = vadd.f32 0.0, %v1579
    %v1581 = vpop.f32.mrb[0].mxu0
    %1582 = vmatprep.mubr.f32.mxu0 %v1487
    %1583 = vmatmul.mubr.f32.gmra.mrb[0].mxu0 %v1466
    %v1584 = vpop.f32.mrb[0].mxu0
    %v1585 = vadd.f32 0.0, %v1584
    %v1586 = vpop.f32.mrb[0].mxu0
    %1587 = vmatprep.mubr.f32.mxu0 %v1490
    %1588 = vmatmul.mubr.f32.gmra.mrb[0].mxu0 %v1468
    %v1589 = vpop.f32.mrb[0].mxu0
    %v1590 = vadd.f32 0.0, %v1589
    %v1591 = vpop.f32.mrb[0].mxu0
    %1592 = vmatprep.mubr.f32.mxu0 %v1493
    %1593 = vmatmul.mubr.f32.gmra.mrb[0].mxu0 %v1470
    %v1594 = vpop.f32.mrb[0].mxu0
    %v1595 = vadd.f32 0.0, %v1594
    %v1596 = vpop.f32.mrb[0].mxu0
    %1597 = vmatprep.mubr.f32.mxu0 %v1496
    %1598 = vmatmul.mubr.f32.gmra.mrb[0].mxu0 %v1472
    %v1599 = vpop.f32.mrb[0].mxu0
    %v1600 = vadd.f32 0.0, %v1599
    %v1601 = vpop.f32.mrb[0].mxu0
    %1602 = vdwg.mxu0
    %1603 = vadd.xlane.f32.xlu0 %v1565
    %v1604 = vpop.xlane.xlu0 %1603
    %1605 = vadd.xlane.f32.xlu0 %v1570
    %v1606 = vpop.xlane.xlu0 %1605
    %1607 = vadd.xlane.f32.xlu0 %v1575
    %v1608 = vpop.xlane.xlu0 %1607
    %1609 = vadd.xlane.f32.xlu0 %v1580
    %v1610 = vpop.xlane.xlu0 %1609
    %1611 = vadd.xlane.f32.xlu0 %v1585
    %v1612 = vpop.xlane.xlu0 %1611
    %1613 = vadd.xlane.f32.xlu0 %v1590
    %v1614 = vpop.xlane.xlu0 %1613
    %1615 = vadd.xlane.f32.xlu0 %v1595
    %v1616 = vpop.xlane.xlu0 %1615
    %1617 = vadd.xlane.f32.xlu0 %v1600
    %v1618 = vpop.xlane.xlu0 %1617
    %v1619 = vrcp.pop 128.0
    %v1620 = vmul.f32 %v1604, %v1619
    %v1621 = vmul.f32 %v1606, %v1619
    %v1622 = vmul.f32 %v1608, %v1619
    %v1623 = vmul.f32 %v1610, %v1619
    %v1624 = vmul.f32 %v1612, %v1619
    %v1625 = vmul.f32 %v1614, %v1619
    %v1626 = vmul.f32 %v1616, %v1619
    %v1627 = vmul.f32 %v1618, %v1619
    %1628 = vmatprep.subr.mxu0 0.0
    %1629 = vmatpush1.msra.mxu0 %v1620
    %1630 = vmatprep.subr.mxu0 0.0
    %1631 = vmatpush1.msra.mxu0 %v1621
    %1632 = vmatprep.subr.mxu0 0.0
    %1633 = vmatpush1.msra.mxu0 %v1622
    %1634 = vmatprep.subr.mxu0 0.0
    %1635 = vmatpush1.msra.mxu0 %v1623
    %1636 = vmatprep.subr.mxu0 0.0
    %1637 = vmatpush1.msra.mxu0 %v1624
    %1638 = vmatprep.subr.mxu0 0.0
    %1639 = vmatpush1.msra.mxu0 %v1625
    %1640 = vmatprep.subr.mxu0 0.0
    %1641 = vmatpush1.msra.mxu0 %v1626
    %1642 = vmatprep.subr.mxu0 0.0
    %1643 = vmatpush1.msra.mxu0 %v1627
    %1644 = vmatprep.subr.mxu0 0.0
    %1645 = vmatpush1.msra.mxu0 0.0
    %1646 = vmatprep.subr.mxu0 0.0
    %1647 = vmatpush1.msra.mxu0 0.0
    %1648 = vmatprep.subr.mxu0 0.0
    %1649 = vmatpush1.msra.mxu0 0.0
    %1650 = vmatprep.subr.mxu0 0.0
    %1651 = vmatpush1.msra.mxu0 0.0
    %1652 = vmatprep.subr.mxu0 0.0
    %1653 = vmatpush1.msra.mxu0 0.0
    %1654 = vmatprep.subr.mxu0 0.0
    %1655 = vmatpush1.msra.mxu0 0.0
    %1656 = vmatprep.subr.mxu0 0.0
    %1657 = vmatpush1.msra.mxu0 0.0
    %1658 = vmatprep.subr.mxu0 0.0
    %1659 = vmatpush1.msra.mxu0 0.0
    %1660 = vmatprep.subr.mxu0 0.0
    %1661 = vmatpush1.msra.mxu0 0.0
    %1662 = vmatprep.subr.mxu0 0.0
    %1663 = vmatpush1.msra.mxu0 0.0
    %1664 = vmatprep.subr.mxu0 0.0
    %1665 = vmatpush1.msra.mxu0 0.0
    %1666 = vmatprep.subr.mxu0 0.0
    %1667 = vmatpush1.msra.mxu0 0.0
    %1668 = vmatprep.subr.mxu0 0.0
    %1669 = vmatpush1.msra.mxu0 0.0
    %1670 = vmatprep.subr.mxu0 0.0
    %1671 = vmatpush1.msra.mxu0 0.0
    %1672 = vmatprep.subr.mxu0 0.0
    %1673 = vmatpush1.msra.mxu0 0.0
    %1674 = vmatprep.subr.mxu0 0.0
    %1675 = vmatpush1.msra.mxu0 0.0
    %1676 = vmatprep.subr.mxu0 0.0
    %1677 = vmatpush1.msra.mxu0 0.0
    %1678 = vmatprep.subr.mxu0 0.0
    %1679 = vmatpush1.msra.mxu0 0.0
    %1680 = vmatprep.subr.mxu0 0.0
    %1681 = vmatpush1.msra.mxu0 0.0
    %1682 = vmatprep.subr.mxu0 0.0
    %1683 = vmatpush1.msra.mxu0 0.0
    %1684 = vmatprep.subr.mxu0 0.0
    %1685 = vmatpush1.msra.mxu0 0.0
    %1686 = vmatprep.subr.mxu0 0.0
    %1687 = vmatpush1.msra.mxu0 0.0
    %1688 = vmatprep.subr.mxu0 0.0
    %1689 = vmatpush1.msra.mxu0 0.0
    %1690 = vmatprep.subr.mxu0 0.0
    %1691 = vmatpush1.msra.mxu0 0.0
    %1692 = vmatprep.mubr.f32.mxu0 0.0
    %1693 = vmatmul.mubr.f32.gmra.mrb[0].mxu0 %v531
    %v1694 = vpop.f32.mrb[0].mxu0
    %v1695 = vadd.f32 0.0, %v1694
    %v1696 = vpop.f32.mrb[0].mxu0
    %1697 = vmatprep.mubr.f32.mxu0 0.0
    %1698 = vmatmul.mubr.f32.gmra.mrb[0].mxu0 %v534
    %v1699 = vpop.f32.mrb[0].mxu0
    %v1700 = vadd.f32 0.0, %v1699
    %v1701 = vpop.f32.mrb[0].mxu0
    %1702 = vmatprep.mubr.f32.mxu0 0.0
    %1703 = vmatmul.mubr.f32.gmra.mrb[0].mxu0 %v537
    %v1704 = vpop.f32.mrb[0].mxu0
    %v1705 = vadd.f32 0.0, %v1704
    %v1706 = vpop.f32.mrb[0].mxu0
    %1707 = vmatprep.mubr.f32.mxu0 0.0
    %1708 = vmatmul.mubr.f32.gmra.mrb[0].mxu0 %v540
    %v1709 = vpop.f32.mrb[0].mxu0
    %v1710 = vadd.f32 0.0, %v1709
    %v1711 = vpop.f32.mrb[0].mxu0
    %1712 = vmatprep.mubr.f32.mxu0 0.0
    %1713 = vmatmul.mubr.f32.gmra.mrb[0].mxu0 %v543
    %v1714 = vpop.f32.mrb[0].mxu0
    %v1715 = vadd.f32 0.0, %v1714
    %v1716 = vpop.f32.mrb[0].mxu0
    %1717 = vmatprep.mubr.f32.mxu0 0.0
    %1718 = vmatmul.mubr.f32.gmra.mrb[0].mxu0 %v546
    %v1719 = vpop.f32.mrb[0].mxu0
    %v1720 = vadd.f32 0.0, %v1719
    %v1721 = vpop.f32.mrb[0].mxu0
    %1722 = vmatprep.mubr.f32.mxu0 0.0
    %1723 = vmatmul.mubr.f32.gmra.mrb[0].mxu0 %v549
    %v1724 = vpop.f32.mrb[0].mxu0
    %v1725 = vadd.f32 0.0, %v1724
    %v1726 = vpop.f32.mrb[0].mxu0
    %1727 = vmatprep.mubr.f32.mxu0 0.0
    %1728 = vmatmul.mubr.f32.gmra.mrb[0].mxu0 %v552
    %v1729 = vpop.f32.mrb[0].mxu0
    %v1730 = vadd.f32 0.0, %v1729
    %v1731 = vpop.f32.mrb[0].mxu0
    %1732 = vdwg.mxu0
    %1734 = vset.pattern.permute.xlu0 0
    %1735 = vperm.xlu0 %1734, %v1695
    %v1736 = vpop.permute.xlu0 %1735
    %1739 = vset.pattern.permute.xlu0 0
    %1740 = vperm.xlu0 %1739, %v1700
    %v1741 = vpop.permute.xlu0 %1740
    %1744 = vset.pattern.permute.xlu0 0
    %1745 = vperm.xlu0 %1744, %v1705
    %v1746 = vpop.permute.xlu0 %1745
    %1749 = vset.pattern.permute.xlu0 0
    %1750 = vperm.xlu0 %1749, %v1710
    %v1751 = vpop.permute.xlu0 %1750
    %1754 = vset.pattern.permute.xlu0 0
    %1755 = vperm.xlu0 %1754, %v1715
    %v1756 = vpop.permute.xlu0 %1755
    %1759 = vset.pattern.permute.xlu0 0
    %1760 = vperm.xlu0 %1759, %v1720
    %v1761 = vpop.permute.xlu0 %1760
    %1764 = vset.pattern.permute.xlu0 0
    %1765 = vperm.xlu0 %1764, %v1725
    %v1766 = vpop.permute.xlu0 %1765
    %1769 = vset.pattern.permute.xlu0 0
    %1770 = vperm.xlu0 %1769, %v1730
    %v1771 = vpop.permute.xlu0 %1770
    %v1773 = vsub.f32 %v1565, %v1736
    %v1774 = vsub.f32 %v1570, %v1741
    %v1775 = vsub.f32 %v1575, %v1746
    %v1776 = vsub.f32 %v1580, %v1751
    %v1777 = vsub.f32 %v1585, %v1756
    %v1778 = vsub.f32 %v1590, %v1761
    %v1779 = vsub.f32 %v1595, %v1766
    %v1780 = vsub.f32 %v1600, %v1771
    %v1781 = vmul.f32 %v1773, %v1773
    %v1782 = vmul.f32 %v1774, %v1774
    %v1783 = vmul.f32 %v1775, %v1775
    %v1784 = vmul.f32 %v1776, %v1776
    %v1785 = vmul.f32 %v1777, %v1777
    %v1786 = vmul.f32 %v1778, %v1778
    %v1787 = vmul.f32 %v1779, %v1779
    %v1788 = vmul.f32 %v1780, %v1780
    %1789 = vadd.xlane.f32.xlu0 %v1781
    %v1790 = vpop.xlane.xlu0 %1789
    %1791 = vadd.xlane.f32.xlu0 %v1782
    %v1792 = vpop.xlane.xlu0 %1791
    %1793 = vadd.xlane.f32.xlu0 %v1783
    %v1794 = vpop.xlane.xlu0 %1793
    %1795 = vadd.xlane.f32.xlu0 %v1784
    %v1796 = vpop.xlane.xlu0 %1795
    %1797 = vadd.xlane.f32.xlu0 %v1785
    %v1798 = vpop.xlane.xlu0 %1797
    %1799 = vadd.xlane.f32.xlu0 %v1786
    %v1800 = vpop.xlane.xlu0 %1799
    %1801 = vadd.xlane.f32.xlu0 %v1787
    %v1802 = vpop.xlane.xlu0 %1801
    %1803 = vadd.xlane.f32.xlu0 %v1788
    %v1804 = vpop.xlane.xlu0 %1803
    %v1805 = vmul.f32 %v1790, %v1619
    %v1806 = vmul.f32 %v1792, %v1619
    %v1807 = vmul.f32 %v1794, %v1619
    %v1808 = vmul.f32 %v1796, %v1619
    %v1809 = vmul.f32 %v1798, %v1619
    %v1810 = vmul.f32 %v1800, %v1619
    %v1811 = vmul.f32 %v1802, %v1619
    %v1812 = vmul.f32 %v1804, %v1619
    %1813 = vmatprep.subr.mxu0 0.0
    %1814 = vmatpush1.msra.mxu0 %v1805
    %1815 = vmatprep.subr.mxu0 0.0
    %1816 = vmatpush1.msra.mxu0 %v1806
    %1817 = vmatprep.subr.mxu0 0.0
    %1818 = vmatpush1.msra.mxu0 %v1807
    %1819 = vmatprep.subr.mxu0 0.0
    %1820 = vmatpush1.msra.mxu0 %v1808
    %1821 = vmatprep.subr.mxu0 0.0
    %1822 = vmatpush1.msra.mxu0 %v1809
    %1823 = vmatprep.subr.mxu0 0.0
    %1824 = vmatpush1.msra.mxu0 %v1810
    %1825 = vmatprep.subr.mxu0 0.0
    %1826 = vmatpush1.msra.mxu0 %v1811
    %1827 = vmatprep.subr.mxu0 0.0
    %1828 = vmatpush1.msra.mxu0 %v1812
    %1829 = vmatprep.subr.mxu0 0.0
    %1830 = vmatpush1.msra.mxu0 0.0
    %1831 = vmatprep.subr.mxu0 0.0
    %1832 = vmatpush1.msra.mxu0 0.0
    %1833 = vmatprep.subr.mxu0 0.0
    %1834 = vmatpush1.msra.mxu0 0.0
    %1835 = vmatprep.subr.mxu0 0.0
    %1836 = vmatpush1.msra.mxu0 0.0
    %1837 = vmatprep.subr.mxu0 0.0
    %1838 = vmatpush1.msra.mxu0 0.0
    %1839 = vmatprep.subr.mxu0 0.0
    %1840 = vmatpush1.msra.mxu0 0.0
    %1841 = vmatprep.subr.mxu0 0.0
    %1842 = vmatpush1.msra.mxu0 0.0
    %1843 = vmatprep.subr.mxu0 0.0
    %1844 = vmatpush1.msra.mxu0 0.0
    %1845 = vmatprep.subr.mxu0 0.0
    %1846 = vmatpush1.msra.mxu0 0.0
    %1847 = vmatprep.subr.mxu0 0.0
    %1848 = vmatpush1.msra.mxu0 0.0
    %1849 = vmatprep.subr.mxu0 0.0
    %1850 = vmatpush1.msra.mxu0 0.0
    %1851 = vmatprep.subr.mxu0 0.0
    %1852 = vmatpush1.msra.mxu0 0.0
    %1853 = vmatprep.subr.mxu0 0.0
    %1854 = vmatpush1.msra.mxu0 0.0
    %1855 = vmatprep.subr.mxu0 0.0
    %1856 = vmatpush1.msra.mxu0 0.0
    %1857 = vmatprep.subr.mxu0 0.0
    %1858 = vmatpush1.msra.mxu0 0.0
    %1859 = vmatprep.subr.mxu0 0.0
    %1860 = vmatpush1.msra.mxu0 0.0
    %1861 = vmatprep.subr.mxu0 0.0
    %1862 = vmatpush1.msra.mxu0 0.0
    %1863 = vmatprep.subr.mxu0 0.0
    %1864 = vmatpush1.msra.mxu0 0.0
    %1865 = vmatprep.subr.mxu0 0.0
    %1866 = vmatpush1.msra.mxu0 0.0
    %1867 = vmatprep.subr.mxu0 0.0
    %1868 = vmatpush1.msra.mxu0 0.0
    %1869 = vmatprep.subr.mxu0 0.0
    %1870 = vmatpush1.msra.mxu0 0.0
    %1871 = vmatprep.subr.mxu0 0.0
    %1872 = vmatpush1.msra.mxu0 0.0
    %1873 = vmatprep.subr.mxu0 0.0
    %1874 = vmatpush1.msra.mxu0 0.0
    %1875 = vmatprep.subr.mxu0 0.0
    %1876 = vmatpush1.msra.mxu0 0.0
    %1877 = vmatprep.mubr.f32.mxu0 0.0
    %1878 = vmatmul.mubr.f32.gmra.mrb[0].mxu0 %v531
    %v1879 = vpop.f32.mrb[0].mxu0
    %v1880 = vadd.f32 1e-05, %v1879
    %v1881 = vpop.f32.mrb[0].mxu0
    %1882 = vmatprep.mubr.f32.mxu0 0.0
    %1883 = vmatmul.mubr.f32.gmra.mrb[0].mxu0 %v534
    %v1884 = vpop.f32.mrb[0].mxu0
    %v1885 = vadd.f32 1e-05, %v1884
    %v1886 = vpop.f32.mrb[0].mxu0
    %1887 = vmatprep.mubr.f32.mxu0 0.0
    %1888 = vmatmul.mubr.f32.gmra.mrb[0].mxu0 %v537
    %v1889 = vpop.f32.mrb[0].mxu0
    %v1890 = vadd.f32 1e-05, %v1889
    %v1891 = vpop.f32.mrb[0].mxu0
    %1892 = vmatprep.mubr.f32.mxu0 0.0
    %1893 = vmatmul.mubr.f32.gmra.mrb[0].mxu0 %v540
    %v1894 = vpop.f32.mrb[0].mxu0
    %v1895 = vadd.f32 1e-05, %v1894
    %v1896 = vpop.f32.mrb[0].mxu0
    %1897 = vmatprep.mubr.f32.mxu0 0.0
    %1898 = vmatmul.mubr.f32.gmra.mrb[0].mxu0 %v543
    %v1899 = vpop.f32.mrb[0].mxu0
    %v1900 = vadd.f32 1e-05, %v1899
    %v1901 = vpop.f32.mrb[0].mxu0
    %1902 = vmatprep.mubr.f32.mxu0 0.0
    %1903 = vmatmul.mubr.f32.gmra.mrb[0].mxu0 %v546
    %v1904 = vpop.f32.mrb[0].mxu0
    %v1905 = vadd.f32 1e-05, %v1904
    %v1906 = vpop.f32.mrb[0].mxu0
    %1907 = vmatprep.mubr.f32.mxu0 0.0
    %1908 = vmatmul.mubr.f32.gmra.mrb[0].mxu0 %v549
    %v1909 = vpop.f32.mrb[0].mxu0
    %v1910 = vadd.f32 1e-05, %v1909
    %v1911 = vpop.f32.mrb[0].mxu0
    %1912 = vmatprep.mubr.f32.mxu0 0.0
    %1913 = vmatmul.mubr.f32.gmra.mrb[0].mxu0 %v552
    %v1914 = vpop.f32.mrb[0].mxu0
    %v1915 = vadd.f32 1e-05, %v1914
    %v1916 = vpop.f32.mrb[0].mxu0
    %1917 = vdwg.mxu0
    %v1918 = vrsqrt.pop %v1880
    %v1919 = vrsqrt.pop %v1885
    %v1920 = vrsqrt.pop %v1890
    %v1921 = vrsqrt.pop %v1895
    %v1922 = vrsqrt.pop %v1900
    %v1923 = vrsqrt.pop %v1905
    %v1924 = vrsqrt.pop %v1910
    %v1925 = vrsqrt.pop %v1915
    %1927 = vset.pattern.permute.xlu0 0
    %1928 = vperm.xlu0 %1927, %v1918
    %v1929 = vpop.permute.xlu0 %1928
    %1932 = vset.pattern.permute.xlu0 0
    %1933 = vperm.xlu0 %1932, %v1919
    %v1934 = vpop.permute.xlu0 %1933
    %1937 = vset.pattern.permute.xlu0 0
    %1938 = vperm.xlu0 %1937, %v1920
    %v1939 = vpop.permute.xlu0 %1938
    %1942 = vset.pattern.permute.xlu0 0
    %1943 = vperm.xlu0 %1942, %v1921
    %v1944 = vpop.permute.xlu0 %1943
    %1947 = vset.pattern.permute.xlu0 0
    %1948 = vperm.xlu0 %1947, %v1922
    %v1949 = vpop.permute.xlu0 %1948
    %1952 = vset.pattern.permute.xlu0 0
    %1953 = vperm.xlu0 %1952, %v1923
    %v1954 = vpop.permute.xlu0 %1953
    %1957 = vset.pattern.permute.xlu0 0
    %1958 = vperm.xlu0 %1957, %v1924
    %v1959 = vpop.permute.xlu0 %1958
    %1962 = vset.pattern.permute.xlu0 0
    %1963 = vperm.xlu0 %1962, %v1925
    %v1964 = vpop.permute.xlu0 %1963
    %v1966 = vmul.f32 %v1773, %v1929
    %v1967 = vmul.f32 %v1774, %v1934
    %v1968 = vmul.f32 %v1775, %v1939
    %v1969 = vmul.f32 %v1776, %v1944
    %v1970 = vmul.f32 %v1777, %v1949
    %v1971 = vmul.f32 %v1778, %v1954
    %v1972 = vmul.f32 %v1779, %v1959
    %v1973 = vmul.f32 %v1780, %v1964
    %1974 = vset.pattern.permute.xlu0 2
    %1975 = vperm.xlu0 %1974, %v69
    %v1976 = vpop.permute.xlu0 %1975
    %1978 = vset.pattern.permute.xlu0 2
    %1979 = vperm.xlu0 %1978, %v70
    %v1980 = vpop.permute.xlu0 %1979
    %1982 = vset.pattern.permute.xlu0 2
    %1983 = vperm.xlu0 %1982, %v71
    %v1984 = vpop.permute.xlu0 %1983
    %1986 = vset.pattern.permute.xlu0 2
    %1987 = vperm.xlu0 %1986, %v72
    %v1988 = vpop.permute.xlu0 %1987
    %1990 = vset.pattern.permute.xlu0 2
    %1991 = vperm.xlu0 %1990, %v73
    %v1992 = vpop.permute.xlu0 %1991
    %1994 = vset.pattern.permute.xlu0 2
    %1995 = vperm.xlu0 %1994, %v74
    %v1996 = vpop.permute.xlu0 %1995
    %1998 = vset.pattern.permute.xlu0 2
    %1999 = vperm.xlu0 %1998, %v75
    %v2000 = vpop.permute.xlu0 %1999
    %2002 = vset.pattern.permute.xlu0 2
    %2003 = vperm.xlu0 %2002, %v76
    %v2004 = vpop.permute.xlu0 %2003
    %v2006 = vmul.f32 %v1966, %v1976
    %v2007 = vmul.f32 %v1967, %v1980
    %v2008 = vmul.f32 %v1968, %v1984
    %v2009 = vmul.f32 %v1969, %v1988
    %v2010 = vmul.f32 %v1970, %v1992
    %v2011 = vmul.f32 %v1971, %v1996
    %v2012 = vmul.f32 %v1972, %v2000
    %v2013 = vmul.f32 %v1973, %v2004
    %2014 = vset.pattern.permute.xlu0 3
    %2015 = vperm.xlu0 %2014, %v69
    %v2016 = vpop.permute.xlu0 %2015
    %2018 = vset.pattern.permute.xlu0 3
    %2019 = vperm.xlu0 %2018, %v70
    %v2020 = vpop.permute.xlu0 %2019
    %2022 = vset.pattern.permute.xlu0 3
    %2023 = vperm.xlu0 %2022, %v71
    %v2024 = vpop.permute.xlu0 %2023
    %2026 = vset.pattern.permute.xlu0 3
    %2027 = vperm.xlu0 %2026, %v72
    %v2028 = vpop.permute.xlu0 %2027
    %2030 = vset.pattern.permute.xlu0 3
    %2031 = vperm.xlu0 %2030, %v73
    %v2032 = vpop.permute.xlu0 %2031
    %2034 = vset.pattern.permute.xlu0 3
    %2035 = vperm.xlu0 %2034, %v74
    %v2036 = vpop.permute.xlu0 %2035
    %2038 = vset.pattern.permute.xlu0 3
    %2039 = vperm.xlu0 %2038, %v75
    %v2040 = vpop.permute.xlu0 %2039
    %2042 = vset.pattern.permute.xlu0 3
    %2043 = vperm.xlu0 %2042, %v76
    %v2044 = vpop.permute.xlu0 %2043
    %v2046 = vadd.f32 %v2006, %v2016
    %v2047 = vadd.f32 %v2007, %v2020
    %v2048 = vadd.f32 %v2008, %v2024
    %v2049 = vadd.f32 %v2009, %v2028
    %v2050 = vadd.f32 %v2010, %v2032
    %v2051 = vadd.f32 %v2011, %v2036
    %v2052 = vadd.f32 %v2012, %v2040
    %v2053 = vadd.f32 %v2013, %v2044
    %v2054 = vmax.f32 %v2046, 0.0
    %v2055 = vmax.f32 %v2047, 0.0
    %v2056 = vmax.f32 %v2048, 0.0
    %v2057 = vmax.f32 %v2049, 0.0
    %v2058 = vmax.f32 %v2050, 0.0
    %v2059 = vmax.f32 %v2051, 0.0
    %v2060 = vmax.f32 %v2052, 0.0
    %v2061 = vmax.f32 %v2053, 0.0
    %v2062 = vld [vmem:[%s9] sm:$0xff]
    %v2063 = vld [vmem:[%s9 + $0x8] sm:$0xff]
    %v2064 = vld [vmem:[%s9 + $0x10] sm:$0xff]
    %v2065 = vld [vmem:[%s9 + $0x18] sm:$0xff]
    %v2066 = vld [vmem:[%s9 + $0x20] sm:$0xff]
    %v2067 = vld [vmem:[%s9 + $0x28] sm:$0xff]
    %v2068 = vld [vmem:[%s9 + $0x30] sm:$0xff]
    %v2069 = vld [vmem:[%s9 + $0x38] sm:$0xff]
    %v2070 = vld [vmem:[%s9 + $0x40] sm:$0xff]
    %v2071 = vld [vmem:[%s9 + $0x48] sm:$0xff]
    %v2072 = vld [vmem:[%s9 + $0x50] sm:$0xff]
    %v2073 = vld [vmem:[%s9 + $0x58] sm:$0xff]
    %v2074 = vld [vmem:[%s9 + $0x60] sm:$0xff]
    %v2075 = vld [vmem:[%s9 + $0x68] sm:$0xff]
    %v2076 = vld [vmem:[%s9 + $0x70] sm:$0xff]
    %v2077 = vld [vmem:[%s9 + $0x78] sm:$0xff]
    %v2078 = vld [vmem:[%s9 + $0x80] sm:$0xff]
    %v2079 = vld [vmem:[%s9 + $0x88] sm:$0xff]
    %v2080 = vld [vmem:[%s9 + $0x90] sm:$0xff]
    %v2081 = vld [vmem:[%s9 + $0x98] sm:$0xff]
    %v2082 = vld [vmem:[%s9 + $0xa0] sm:$0xff]
    %v2083 = vld [vmem:[%s9 + $0xa8] sm:$0xff]
    %v2084 = vld [vmem:[%s9 + $0xb0] sm:$0xff]
    %v2085 = vld [vmem:[%s9 + $0xb8] sm:$0xff]
    %v2086 = vld [vmem:[%s9 + $0xc0] sm:$0xff]
    %v2087 = vld [vmem:[%s9 + $0xc8] sm:$0xff]
    %v2088 = vld [vmem:[%s9 + $0xd0] sm:$0xff]
    %v2089 = vld [vmem:[%s9 + $0xd8] sm:$0xff]
    %v2090 = vld [vmem:[%s9 + $0xe0] sm:$0xff]
    %v2091 = vld [vmem:[%s9 + $0xe8] sm:$0xff]
    %v2092 = vld [vmem:[%s9 + $0xf0] sm:$0xff]
    %v2093 = vld [vmem:[%s9 + $0xf8] sm:$0xff]
    %v2094 = vld [vmem:[%s9 + $0x100] sm:$0xff]
    %v2095 = vld [vmem:[%s9 + $0x108] sm:$0xff]
    %v2096 = vld [vmem:[%s9 + $0x110] sm:$0xff]
    %v2097 = vld [vmem:[%s9 + $0x118] sm:$0xff]
    %v2098 = vld [vmem:[%s9 + $0x120] sm:$0xff]
    %v2099 = vld [vmem:[%s9 + $0x128] sm:$0xff]
    %v2100 = vld [vmem:[%s9 + $0x130] sm:$0xff]
    %v2101 = vld [vmem:[%s9 + $0x138] sm:$0xff]
    %v2102 = vld [vmem:[%s9 + $0x140] sm:$0xff]
    %v2103 = vld [vmem:[%s9 + $0x148] sm:$0xff]
    %v2104 = vld [vmem:[%s9 + $0x150] sm:$0xff]
    %v2105 = vld [vmem:[%s9 + $0x158] sm:$0xff]
    %v2106 = vld [vmem:[%s9 + $0x160] sm:$0xff]
    %v2107 = vld [vmem:[%s9 + $0x168] sm:$0xff]
    %v2108 = vld [vmem:[%s9 + $0x170] sm:$0xff]
    %v2109 = vld [vmem:[%s9 + $0x178] sm:$0xff]
    %v2110 = vld [vmem:[%s9 + $0x180] sm:$0xff]
    %v2111 = vld [vmem:[%s9 + $0x188] sm:$0xff]
    %v2112 = vld [vmem:[%s9 + $0x190] sm:$0xff]
    %v2113 = vld [vmem:[%s9 + $0x198] sm:$0xff]
    %v2114 = vld [vmem:[%s9 + $0x1a0] sm:$0xff]
    %v2115 = vld [vmem:[%s9 + $0x1a8] sm:$0xff]
    %v2116 = vld [vmem:[%s9 + $0x1b0] sm:$0xff]
    %v2117 = vld [vmem:[%s9 + $0x1b8] sm:$0xff]
    %v2118 = vld [vmem:[%s9 + $0x1c0] sm:$0xff]
    %v2119 = vld [vmem:[%s9 + $0x1c8] sm:$0xff]
    %v2120 = vld [vmem:[%s9 + $0x1d0] sm:$0xff]
    %v2121 = vld [vmem:[%s9 + $0x1d8] sm:$0xff]
    %v2122 = vld [vmem:[%s9 + $0x1e0] sm:$0xff]
    %v2123 = vld [vmem:[%s9 + $0x1e8] sm:$0xff]
    %v2124 = vld [vmem:[%s9 + $0x1f0] sm:$0xff]
    %v2125 = vld [vmem:[%s9 + $0x1f8] sm:$0xff]
    %s2126 = scalar_lea.vmem %s9, 512
    %v2127 = vld [vmem:[%s2126] sm:$0xff]
    %v2128 = vld [vmem:[%s2126 + $0x8] sm:$0xff]
    %v2129 = vld [vmem:[%s2126 + $0x10] sm:$0xff]
    %v2130 = vld [vmem:[%s2126 + $0x18] sm:$0xff]
    %v2131 = vld [vmem:[%s2126 + $0x20] sm:$0xff]
    %v2132 = vld [vmem:[%s2126 + $0x28] sm:$0xff]
    %v2133 = vld [vmem:[%s2126 + $0x30] sm:$0xff]
    %v2134 = vld [vmem:[%s2126 + $0x38] sm:$0xff]
    %v2135 = vld [vmem:[%s2126 + $0x40] sm:$0xff]
    %v2136 = vld [vmem:[%s2126 + $0x48] sm:$0xff]
    %v2137 = vld [vmem:[%s2126 + $0x50] sm:$0xff]
    %v2138 = vld [vmem:[%s2126 + $0x58] sm:$0xff]
    %v2139 = vld [vmem:[%s2126 + $0x60] sm:$0xff]
    %v2140 = vld [vmem:[%s2126 + $0x68] sm:$0xff]
    %v2141 = vld [vmem:[%s2126 + $0x70] sm:$0xff]
    %v2142 = vld [vmem:[%s2126 + $0x78] sm:$0xff]
    %v2143 = vld [vmem:[%s2126 + $0x80] sm:$0xff]
    %v2144 = vld [vmem:[%s2126 + $0x88] sm:$0xff]
    %v2145 = vld [vmem:[%s2126 + $0x90] sm:$0xff]
    %v2146 = vld [vmem:[%s2126 + $0x98] sm:$0xff]
    %v2147 = vld [vmem:[%s2126 + $0xa0] sm:$0xff]
    %v2148 = vld [vmem:[%s2126 + $0xa8] sm:$0xff]
    %v2149 = vld [vmem:[%s2126 + $0xb0] sm:$0xff]
    %v2150 = vld [vmem:[%s2126 + $0xb8] sm:$0xff]
    %v2151 = vld [vmem:[%s2126 + $0xc0] sm:$0xff]
    %v2152 = vld [vmem:[%s2126 + $0xc8] sm:$0xff]
    %v2153 = vld [vmem:[%s2126 + $0xd0] sm:$0xff]
    %v2154 = vld [vmem:[%s2126 + $0xd8] sm:$0xff]
    %v2155 = vld [vmem:[%s2126 + $0xe0] sm:$0xff]
    %v2156 = vld [vmem:[%s2126 + $0xe8] sm:$0xff]
    %v2157 = vld [vmem:[%s2126 + $0xf0] sm:$0xff]
    %v2158 = vld [vmem:[%s2126 + $0xf8] sm:$0xff]
    %v2159 = vld [vmem:[%s2126 + $0x100] sm:$0xff]
    %v2160 = vld [vmem:[%s2126 + $0x108] sm:$0xff]
    %v2161 = vld [vmem:[%s2126 + $0x110] sm:$0xff]
    %v2162 = vld [vmem:[%s2126 + $0x118] sm:$0xff]
    %v2163 = vld [vmem:[%s2126 + $0x120] sm:$0xff]
    %v2164 = vld [vmem:[%s2126 + $0x128] sm:$0xff]
    %v2165 = vld [vmem:[%s2126 + $0x130] sm:$0xff]
    %v2166 = vld [vmem:[%s2126 + $0x138] sm:$0xff]
    %v2167 = vld [vmem:[%s2126 + $0x140] sm:$0xff]
    %v2168 = vld [vmem:[%s2126 + $0x148] sm:$0xff]
    %v2169 = vld [vmem:[%s2126 + $0x150] sm:$0xff]
    %v2170 = vld [vmem:[%s2126 + $0x158] sm:$0xff]
    %v2171 = vld [vmem:[%s2126 + $0x160] sm:$0xff]
    %v2172 = vld [vmem:[%s2126 + $0x168] sm:$0xff]
    %v2173 = vld [vmem:[%s2126 + $0x170] sm:$0xff]
    %v2174 = vld [vmem:[%s2126 + $0x178] sm:$0xff]
    %v2175 = vld [vmem:[%s2126 + $0x180] sm:$0xff]
    %v2176 = vld [vmem:[%s2126 + $0x188] sm:$0xff]
    %v2177 = vld [vmem:[%s2126 + $0x190] sm:$0xff]
    %v2178 = vld [vmem:[%s2126 + $0x198] sm:$0xff]
    %v2179 = vld [vmem:[%s2126 + $0x1a0] sm:$0xff]
    %v2180 = vld [vmem:[%s2126 + $0x1a8] sm:$0xff]
    %v2181 = vld [vmem:[%s2126 + $0x1b0] sm:$0xff]
    %v2182 = vld [vmem:[%s2126 + $0x1b8] sm:$0xff]
    %v2183 = vld [vmem:[%s2126 + $0x1c0] sm:$0xff]
    %v2184 = vld [vmem:[%s2126 + $0x1c8] sm:$0xff]
    %v2185 = vld [vmem:[%s2126 + $0x1d0] sm:$0xff]
    %v2186 = vld [vmem:[%s2126 + $0x1d8] sm:$0xff]
    %v2187 = vld [vmem:[%s2126 + $0x1e0] sm:$0xff]
    %v2188 = vld [vmem:[%s2126 + $0x1e8] sm:$0xff]
    %v2189 = vld [vmem:[%s2126 + $0x1f0] sm:$0xff]
    %v2190 = vld [vmem:[%s2126 + $0x1f8] sm:$0xff]
    %2191 = vmatprep.subr.mxu0 %v2128
    %2192 = vmatpush1.msra.mxu0 %v2127
    %2193 = vmatprep.subr.mxu0 %v2132
    %2194 = vmatpush1.msra.mxu0 %v2131
    %2195 = vmatprep.subr.mxu0 %v2136
    %2196 = vmatpush1.msra.mxu0 %v2135
    %2197 = vmatprep.subr.mxu0 %v2140
    %2198 = vmatpush1.msra.mxu0 %v2139
    %2199 = vmatprep.subr.mxu0 %v2144
    %2200 = vmatpush1.msra.mxu0 %v2143
    %2201 = vmatprep.subr.mxu0 %v2148
    %2202 = vmatpush1.msra.mxu0 %v2147
    %2203 = vmatprep.subr.mxu0 %v2152
    %2204 = vmatpush1.msra.mxu0 %v2151
    %2205 = vmatprep.subr.mxu0 %v2156
    %2206 = vmatpush1.msra.mxu0 %v2155
    %2207 = vmatprep.subr.mxu0 %v2160
    %2208 = vmatpush1.msra.mxu0 %v2159
    %2209 = vmatprep.subr.mxu0 %v2164
    %2210 = vmatpush1.msra.mxu0 %v2163
    %2211 = vmatprep.subr.mxu0 %v2168
    %2212 = vmatpush1.msra.mxu0 %v2167
    %2213 = vmatprep.subr.mxu0 %v2172
    %2214 = vmatpush1.msra.mxu0 %v2171
    %2215 = vmatprep.subr.mxu0 %v2176
    %2216 = vmatpush1.msra.mxu0 %v2175
    %2217 = vmatprep.subr.mxu0 %v2180
    %2218 = vmatpush1.msra.mxu0 %v2179
    %2219 = vmatprep.subr.mxu0 %v2184
    %2220 = vmatpush1.msra.mxu0 %v2183
    %2221 = vmatprep.subr.mxu0 %v2188
    %2222 = vmatpush1.msra.mxu0 %v2187
    %2223 = vmatprep.subr.mxu0 0.0
    %2224 = vmatpush1.msra.mxu0 0.0
    %2225 = vmatprep.subr.mxu0 0.0
    %2226 = vmatpush1.msra.mxu0 0.0
    %2227 = vmatprep.subr.mxu0 0.0
    %2228 = vmatpush1.msra.mxu0 0.0
    %2229 = vmatprep.subr.mxu0 0.0
    %2230 = vmatpush1.msra.mxu0 0.0
    %2231 = vmatprep.subr.mxu0 0.0
    %2232 = vmatpush1.msra.mxu0 0.0
    %2233 = vmatprep.subr.mxu0 0.0
    %2234 = vmatpush1.msra.mxu0 0.0
    %2235 = vmatprep.subr.mxu0 0.0
    %2236 = vmatpush1.msra.mxu0 0.0
    %2237 = vmatprep.subr.mxu0 0.0
    %2238 = vmatpush1.msra.mxu0 0.0
    %2239 = vmatprep.subr.mxu0 0.0
    %2240 = vmatpush1.msra.mxu0 0.0
    %2241 = vmatprep.subr.mxu0 0.0
    %2242 = vmatpush1.msra.mxu0 0.0
    %2243 = vmatprep.subr.mxu0 0.0
    %2244 = vmatpush1.msra.mxu0 0.0
    %2245 = vmatprep.subr.mxu0 0.0
    %2246 = vmatpush1.msra.mxu0 0.0
    %2247 = vmatprep.subr.mxu0 0.0
    %2248 = vmatpush1.msra.mxu0 0.0
    %2249 = vmatprep.subr.mxu0 0.0
    %2250 = vmatpush1.msra.mxu0 0.0
    %2251 = vmatprep.subr.mxu0 0.0
    %2252 = vmatpush1.msra.mxu0 0.0
    %2253 = vmatprep.subr.mxu0 0.0
    %2254 = vmatpush1.msra.mxu0 0.0
    %2255 = vmatprep.mubr.f32.mxu0 0.0
    %2256 = vmatmul.mubr.f32.gmra.mrb[0].mxu0 %v2056
    %v2257 = vpop.f32.mrb[0].mxu0
    %v2258 = vadd.f32 0.0, %v2257
    %v2259 = vpop.f32.mrb[0].mxu0
    %v2260 = vadd.f32 0.0, %v2259
    %2261 = vmatprep.mubr.f32.mxu0 0.0
    %2262 = vmatmul.mubr.f32.gmra.mrb[0].mxu0 %v2057
    %v2263 = vpop.f32.mrb[0].mxu0
    %v2264 = vadd.f32 0.0, %v2263
    %v2265 = vpop.f32.mrb[0].mxu0
    %v2266 = vadd.f32 0.0, %v2265
    %2267 = vdwg.mxu0
    %2268 = vmatprep.subr.mxu0 %v2130
    %2269 = vmatpush1.msra.mxu0 %v2129
    %2270 = vmatprep.subr.mxu0 %v2134
    %2271 = vmatpush1.msra.mxu0 %v2133
    %2272 = vmatprep.subr.mxu0 %v2138
    %2273 = vmatpush1.msra.mxu0 %v2137
    %2274 = vmatprep.subr.mxu0 %v2142
    %2275 = vmatpush1.msra.mxu0 %v2141
    %2276 = vmatprep.subr.mxu0 %v2146
    %2277 = vmatpush1.msra.mxu0 %v2145
    %2278 = vmatprep.subr.mxu0 %v2150
    %2279 = vmatpush1.msra.mxu0 %v2149
    %2280 = vmatprep.subr.mxu0 %v2154
    %2281 = vmatpush1.msra.mxu0 %v2153
    %2282 = vmatprep.subr.mxu0 %v2158
    %2283 = vmatpush1.msra.mxu0 %v2157
    %2284 = vmatprep.subr.mxu0 %v2162
    %2285 = vmatpush1.msra.mxu0 %v2161
    %2286 = vmatprep.subr.mxu0 %v2166
    %2287 = vmatpush1.msra.mxu0 %v2165
    %2288 = vmatprep.subr.mxu0 %v2170
    %2289 = vmatpush1.msra.mxu0 %v2169
    %2290 = vmatprep.subr.mxu0 %v2174
    %2291 = vmatpush1.msra.mxu0 %v2173
    %2292 = vmatprep.subr.mxu0 %v2178
    %2293 = vmatpush1.msra.mxu0 %v2177
    %2294 = vmatprep.subr.mxu0 %v2182
    %2295 = vmatpush1.msra.mxu0 %v2181
    %2296 = vmatprep.subr.mxu0 %v2186
    %2297 = vmatpush1.msra.mxu0 %v2185
    %2298 = vmatprep.subr.mxu0 %v2190
    %2299 = vmatpush1.msra.mxu0 %v2189
    %2300 = vmatprep.subr.mxu0 0.0
    %2301 = vmatpush1.msra.mxu0 0.0
    %2302 = vmatprep.subr.mxu0 0.0
    %2303 = vmatpush1.msra.mxu0 0.0
    %2304 = vmatprep.subr.mxu0 0.0
    %2305 = vmatpush1.msra.mxu0 0.0
    %2306 = vmatprep.subr.mxu0 0.0
    %2307 = vmatpush1.msra.mxu0 0.0
    %2308 = vmatprep.subr.mxu0 0.0
    %2309 = vmatpush1.msra.mxu0 0.0
    %2310 = vmatprep.subr.mxu0 0.0
    %2311 = vmatpush1.msra.mxu0 0.0
    %2312 = vmatprep.subr.mxu0 0.0
    %2313 = vmatpush1.msra.mxu0 0.0
    %2314 = vmatprep.subr.mxu0 0.0
    %2315 = vmatpush1.msra.mxu0 0.0
    %2316 = vmatprep.subr.mxu0 0.0
    %2317 = vmatpush1.msra.mxu0 0.0
    %2318 = vmatprep.subr.mxu0 0.0
    %2319 = vmatpush1.msra.mxu0 0.0
    %2320 = vmatprep.subr.mxu0 0.0
    %2321 = vmatpush1.msra.mxu0 0.0
    %2322 = vmatprep.subr.mxu0 0.0
    %2323 = vmatpush1.msra.mxu0 0.0
    %2324 = vmatprep.subr.mxu0 0.0
    %2325 = vmatpush1.msra.mxu0 0.0
    %2326 = vmatprep.subr.mxu0 0.0
    %2327 = vmatpush1.msra.mxu0 0.0
    %2328 = vmatprep.subr.mxu0 0.0
    %2329 = vmatpush1.msra.mxu0 0.0
    %2330 = vmatprep.subr.mxu0 0.0
    %2331 = vmatpush1.msra.mxu0 0.0
    %2332 = vmatprep.mubr.f32.mxu0 0.0
    %2333 = vmatmul.mubr.f32.gmra.mrb[0].mxu0 %v2056
    %v2334 = vpop.f32.mrb[0].mxu0
    %v2335 = vadd.f32 0.0, %v2334
    %v2336 = vpop.f32.mrb[0].mxu0
    %v2337 = vadd.f32 0.0, %v2336
    %2338 = vmatprep.mubr.f32.mxu0 0.0
    %2339 = vmatmul.mubr.f32.gmra.mrb[0].mxu0 %v2057
    %v2340 = vpop.f32.mrb[0].mxu0
    %v2341 = vadd.f32 0.0, %v2340
    %v2342 = vpop.f32.mrb[0].mxu0
    %v2343 = vadd.f32 0.0, %v2342
    %2344 = vdwg.mxu0
    %2345 = vmatprep.subr.mxu0 %v2063
    %2346 = vmatpush1.msra.mxu0 %v2062
    %2347 = vmatprep.subr.mxu0 %v2067
    %2348 = vmatpush1.msra.mxu0 %v2066
    %2349 = vmatprep.subr.mxu0 %v2071
    %2350 = vmatpush1.msra.mxu0 %v2070
    %2351 = vmatprep.subr.mxu0 %v2075
    %2352 = vmatpush1.msra.mxu0 %v2074
    %2353 = vmatprep.subr.mxu0 %v2079
    %2354 = vmatpush1.msra.mxu0 %v2078
    %2355 = vmatprep.subr.mxu0 %v2083
    %2356 = vmatpush1.msra.mxu0 %v2082
    %2357 = vmatprep.subr.mxu0 %v2087
    %2358 = vmatpush1.msra.mxu0 %v2086
    %2359 = vmatprep.subr.mxu0 %v2091
    %2360 = vmatpush1.msra.mxu0 %v2090
    %2361 = vmatprep.subr.mxu0 %v2095
    %2362 = vmatpush1.msra.mxu0 %v2094
    %2363 = vmatprep.subr.mxu0 %v2099
    %2364 = vmatpush1.msra.mxu0 %v2098
    %2365 = vmatprep.subr.mxu0 %v2103
    %2366 = vmatpush1.msra.mxu0 %v2102
    %2367 = vmatprep.subr.mxu0 %v2107
    %2368 = vmatpush1.msra.mxu0 %v2106
    %2369 = vmatprep.subr.mxu0 %v2111
    %2370 = vmatpush1.msra.mxu0 %v2110
    %2371 = vmatprep.subr.mxu0 %v2115
    %2372 = vmatpush1.msra.mxu0 %v2114
    %2373 = vmatprep.subr.mxu0 %v2119
    %2374 = vmatpush1.msra.mxu0 %v2118
    %2375 = vmatprep.subr.mxu0 %v2123
    %2376 = vmatpush1.msra.mxu0 %v2122
    %2377 = vmatprep.subr.mxu0 0.0
    %2378 = vmatpush1.msra.mxu0 0.0
    %2379 = vmatprep.subr.mxu0 0.0
    %2380 = vmatpush1.msra.mxu0 0.0
    %2381 = vmatprep.subr.mxu0 0.0
    %2382 = vmatpush1.msra.mxu0 0.0
    %2383 = vmatprep.subr.mxu0 0.0
    %2384 = vmatpush1.msra.mxu0 0.0
    %2385 = vmatprep.subr.mxu0 0.0
    %2386 = vmatpush1.msra.mxu0 0.0
    %2387 = vmatprep.subr.mxu0 0.0
    %2388 = vmatpush1.msra.mxu0 0.0
    %2389 = vmatprep.subr.mxu0 0.0
    %2390 = vmatpush1.msra.mxu0 0.0
    %2391 = vmatprep.subr.mxu0 0.0
    %2392 = vmatpush1.msra.mxu0 0.0
    %2393 = vmatprep.subr.mxu0 0.0
    %2394 = vmatpush1.msra.mxu0 0.0
    %2395 = vmatprep.subr.mxu0 0.0
    %2396 = vmatpush1.msra.mxu0 0.0
    %2397 = vmatprep.subr.mxu0 0.0
    %2398 = vmatpush1.msra.mxu0 0.0
    %2399 = vmatprep.subr.mxu0 0.0
    %2400 = vmatpush1.msra.mxu0 0.0
    %2401 = vmatprep.subr.mxu0 0.0
    %2402 = vmatpush1.msra.mxu0 0.0
    %2403 = vmatprep.subr.mxu0 0.0
    %2404 = vmatpush1.msra.mxu0 0.0
    %2405 = vmatprep.subr.mxu0 0.0
    %2406 = vmatpush1.msra.mxu0 0.0
    %2407 = vmatprep.subr.mxu0 0.0
    %2408 = vmatpush1.msra.mxu0 0.0
    %2409 = vmatprep.mubr.f32.mxu0 0.0
    %2410 = vmatmul.mubr.f32.gmra.mrb[0].mxu0 %v2054
    %v2411 = vpop.f32.mrb[0].mxu0
    %v2412 = vadd.f32 %v2258, %v2411
    %v2413 = vpop.f32.mrb[0].mxu0
    %v2414 = vadd.f32 %v2260, %v2413
    %2415 = vmatprep.mubr.f32.mxu0 0.0
    %2416 = vmatmul.mubr.f32.gmra.mrb[0].mxu0 %v2055
    %v2417 = vpop.f32.mrb[0].mxu0
    %v2418 = vadd.f32 %v2264, %v2417
    %v2419 = vpop.f32.mrb[0].mxu0
    %v2420 = vadd.f32 %v2266, %v2419
    %2421 = vdwg.mxu0
    %2422 = vmatprep.subr.mxu0 %v2065
    %2423 = vmatpush1.msra.mxu0 %v2064
    %2424 = vmatprep.subr.mxu0 %v2069
    %2425 = vmatpush1.msra.mxu0 %v2068
    %2426 = vmatprep.subr.mxu0 %v2073
    %2427 = vmatpush1.msra.mxu0 %v2072
    %2428 = vmatprep.subr.mxu0 %v2077
    %2429 = vmatpush1.msra.mxu0 %v2076
    %2430 = vmatprep.subr.mxu0 %v2081
    %2431 = vmatpush1.msra.mxu0 %v2080
    %2432 = vmatprep.subr.mxu0 %v2085
    %2433 = vmatpush1.msra.mxu0 %v2084
    %2434 = vmatprep.subr.mxu0 %v2089
    %2435 = vmatpush1.msra.mxu0 %v2088
    %2436 = vmatprep.subr.mxu0 %v2093
    %2437 = vmatpush1.msra.mxu0 %v2092
    %2438 = vmatprep.subr.mxu0 %v2097
    %2439 = vmatpush1.msra.mxu0 %v2096
    %2440 = vmatprep.subr.mxu0 %v2101
    %2441 = vmatpush1.msra.mxu0 %v2100
    %2442 = vmatprep.subr.mxu0 %v2105
    %2443 = vmatpush1.msra.mxu0 %v2104
    %2444 = vmatprep.subr.mxu0 %v2109
    %2445 = vmatpush1.msra.mxu0 %v2108
    %2446 = vmatprep.subr.mxu0 %v2113
    %2447 = vmatpush1.msra.mxu0 %v2112
    %2448 = vmatprep.subr.mxu0 %v2117
    %2449 = vmatpush1.msra.mxu0 %v2116
    %2450 = vmatprep.subr.mxu0 %v2121
    %2451 = vmatpush1.msra.mxu0 %v2120
    %2452 = vmatprep.subr.mxu0 %v2125
    %2453 = vmatpush1.msra.mxu0 %v2124
    %2454 = vmatprep.subr.mxu0 0.0
    %2455 = vmatpush1.msra.mxu0 0.0
    %2456 = vmatprep.subr.mxu0 0.0
    %2457 = vmatpush1.msra.mxu0 0.0
    %2458 = vmatprep.subr.mxu0 0.0
    %2459 = vmatpush1.msra.mxu0 0.0
    %2460 = vmatprep.subr.mxu0 0.0
    %2461 = vmatpush1.msra.mxu0 0.0
    %2462 = vmatprep.subr.mxu0 0.0
    %2463 = vmatpush1.msra.mxu0 0.0
    %2464 = vmatprep.subr.mxu0 0.0
    %2465 = vmatpush1.msra.mxu0 0.0
    %2466 = vmatprep.subr.mxu0 0.0
    %2467 = vmatpush1.msra.mxu0 0.0
    %2468 = vmatprep.subr.mxu0 0.0
    %2469 = vmatpush1.msra.mxu0 0.0
    %2470 = vmatprep.subr.mxu0 0.0
    %2471 = vmatpush1.msra.mxu0 0.0
    %2472 = vmatprep.subr.mxu0 0.0
    %2473 = vmatpush1.msra.mxu0 0.0
    %2474 = vmatprep.subr.mxu0 0.0
    %2475 = vmatpush1.msra.mxu0 0.0
    %2476 = vmatprep.subr.mxu0 0.0
    %2477 = vmatpush1.msra.mxu0 0.0
    %2478 = vmatprep.subr.mxu0 0.0
    %2479 = vmatpush1.msra.mxu0 0.0
    %2480 = vmatprep.subr.mxu0 0.0
    %2481 = vmatpush1.msra.mxu0 0.0
    %2482 = vmatprep.subr.mxu0 0.0
    %2483 = vmatpush1.msra.mxu0 0.0
    %2484 = vmatprep.subr.mxu0 0.0
    %2485 = vmatpush1.msra.mxu0 0.0
    %2486 = vmatprep.mubr.f32.mxu0 0.0
    %2487 = vmatmul.mubr.f32.gmra.mrb[0].mxu0 %v2054
    %v2488 = vpop.f32.mrb[0].mxu0
    %v2489 = vadd.f32 %v2335, %v2488
    %v2490 = vpop.f32.mrb[0].mxu0
    %v2491 = vadd.f32 %v2337, %v2490
    %2492 = vmatprep.mubr.f32.mxu0 0.0
    %2493 = vmatmul.mubr.f32.gmra.mrb[0].mxu0 %v2055
    %v2494 = vpop.f32.mrb[0].mxu0
    %v2495 = vadd.f32 %v2341, %v2494
    %v2496 = vpop.f32.mrb[0].mxu0
    %v2497 = vadd.f32 %v2343, %v2496
    %2498 = vdwg.mxu0
    %s2499 = scalar_lea.vmem %s9, 1024
    %v2500 = vld [vmem:[%s2499] sm:$0xff]
    %v2501 = vld [vmem:[%s2499 + $0x8] sm:$0xff]
    %v2502 = vld [vmem:[%s2499 + $0x10] sm:$0xff]
    %v2503 = vld [vmem:[%s2499 + $0x18] sm:$0xff]
    %v2504 = vld [vmem:[%s2499 + $0x20] sm:$0xff]
    %v2505 = vld [vmem:[%s2499 + $0x28] sm:$0xff]
    %v2506 = vld [vmem:[%s2499 + $0x30] sm:$0xff]
    %v2507 = vld [vmem:[%s2499 + $0x38] sm:$0xff]
    %v2508 = vld [vmem:[%s2499 + $0x40] sm:$0xff]
    %v2509 = vld [vmem:[%s2499 + $0x48] sm:$0xff]
    %v2510 = vld [vmem:[%s2499 + $0x50] sm:$0xff]
    %v2511 = vld [vmem:[%s2499 + $0x58] sm:$0xff]
    %v2512 = vld [vmem:[%s2499 + $0x60] sm:$0xff]
    %v2513 = vld [vmem:[%s2499 + $0x68] sm:$0xff]
    %v2514 = vld [vmem:[%s2499 + $0x70] sm:$0xff]
    %v2515 = vld [vmem:[%s2499 + $0x78] sm:$0xff]
    %v2516 = vld [vmem:[%s2499 + $0x80] sm:$0xff]
    %v2517 = vld [vmem:[%s2499 + $0x88] sm:$0xff]
    %v2518 = vld [vmem:[%s2499 + $0x90] sm:$0xff]
    %v2519 = vld [vmem:[%s2499 + $0x98] sm:$0xff]
    %v2520 = vld [vmem:[%s2499 + $0xa0] sm:$0xff]
    %v2521 = vld [vmem:[%s2499 + $0xa8] sm:$0xff]
    %v2522 = vld [vmem:[%s2499 + $0xb0] sm:$0xff]
    %v2523 = vld [vmem:[%s2499 + $0xb8] sm:$0xff]
    %v2524 = vld [vmem:[%s2499 + $0xc0] sm:$0xff]
    %v2525 = vld [vmem:[%s2499 + $0xc8] sm:$0xff]
    %v2526 = vld [vmem:[%s2499 + $0xd0] sm:$0xff]
    %v2527 = vld [vmem:[%s2499 + $0xd8] sm:$0xff]
    %v2528 = vld [vmem:[%s2499 + $0xe0] sm:$0xff]
    %v2529 = vld [vmem:[%s2499 + $0xe8] sm:$0xff]
    %v2530 = vld [vmem:[%s2499 + $0xf0] sm:$0xff]
    %v2531 = vld [vmem:[%s2499 + $0xf8] sm:$0xff]
    %v2532 = vld [vmem:[%s2499 + $0x100] sm:$0xff]
    %v2533 = vld [vmem:[%s2499 + $0x108] sm:$0xff]
    %v2534 = vld [vmem:[%s2499 + $0x110] sm:$0xff]
    %v2535 = vld [vmem:[%s2499 + $0x118] sm:$0xff]
    %v2536 = vld [vmem:[%s2499 + $0x120] sm:$0xff]
    %v2537 = vld [vmem:[%s2499 + $0x128] sm:$0xff]
    %v2538 = vld [vmem:[%s2499 + $0x130] sm:$0xff]
    %v2539 = vld [vmem:[%s2499 + $0x138] sm:$0xff]
    %v2540 = vld [vmem:[%s2499 + $0x140] sm:$0xff]
    %v2541 = vld [vmem:[%s2499 + $0x148] sm:$0xff]
    %v2542 = vld [vmem:[%s2499 + $0x150] sm:$0xff]
    %v2543 = vld [vmem:[%s2499 + $0x158] sm:$0xff]
    %v2544 = vld [vmem:[%s2499 + $0x160] sm:$0xff]
    %v2545 = vld [vmem:[%s2499 + $0x168] sm:$0xff]
    %v2546 = vld [vmem:[%s2499 + $0x170] sm:$0xff]
    %v2547 = vld [vmem:[%s2499 + $0x178] sm:$0xff]
    %v2548 = vld [vmem:[%s2499 + $0x180] sm:$0xff]
    %v2549 = vld [vmem:[%s2499 + $0x188] sm:$0xff]
    %v2550 = vld [vmem:[%s2499 + $0x190] sm:$0xff]
    %v2551 = vld [vmem:[%s2499 + $0x198] sm:$0xff]
    %v2552 = vld [vmem:[%s2499 + $0x1a0] sm:$0xff]
    %v2553 = vld [vmem:[%s2499 + $0x1a8] sm:$0xff]
    %v2554 = vld [vmem:[%s2499 + $0x1b0] sm:$0xff]
    %v2555 = vld [vmem:[%s2499 + $0x1b8] sm:$0xff]
    %v2556 = vld [vmem:[%s2499 + $0x1c0] sm:$0xff]
    %v2557 = vld [vmem:[%s2499 + $0x1c8] sm:$0xff]
    %v2558 = vld [vmem:[%s2499 + $0x1d0] sm:$0xff]
    %v2559 = vld [vmem:[%s2499 + $0x1d8] sm:$0xff]
    %v2560 = vld [vmem:[%s2499 + $0x1e0] sm:$0xff]
    %v2561 = vld [vmem:[%s2499 + $0x1e8] sm:$0xff]
    %v2562 = vld [vmem:[%s2499 + $0x1f0] sm:$0xff]
    %v2563 = vld [vmem:[%s2499 + $0x1f8] sm:$0xff]
    %2564 = vmatprep.subr.mxu0 %v2501
    %2565 = vmatpush1.msra.mxu0 %v2500
    %2566 = vmatprep.subr.mxu0 %v2505
    %2567 = vmatpush1.msra.mxu0 %v2504
    %2568 = vmatprep.subr.mxu0 %v2509
    %2569 = vmatpush1.msra.mxu0 %v2508
    %2570 = vmatprep.subr.mxu0 %v2513
    %2571 = vmatpush1.msra.mxu0 %v2512
    %2572 = vmatprep.subr.mxu0 %v2517
    %2573 = vmatpush1.msra.mxu0 %v2516
    %2574 = vmatprep.subr.mxu0 %v2521
    %2575 = vmatpush1.msra.mxu0 %v2520
    %2576 = vmatprep.subr.mxu0 %v2525
    %2577 = vmatpush1.msra.mxu0 %v2524
    %2578 = vmatprep.subr.mxu0 %v2529
    %2579 = vmatpush1.msra.mxu0 %v2528
    %2580 = vmatprep.subr.mxu0 %v2533
    %2581 = vmatpush1.msra.mxu0 %v2532
    %2582 = vmatprep.subr.mxu0 %v2537
    %2583 = vmatpush1.msra.mxu0 %v2536
    %2584 = vmatprep.subr.mxu0 %v2541
    %2585 = vmatpush1.msra.mxu0 %v2540
    %2586 = vmatprep.subr.mxu0 %v2545
    %2587 = vmatpush1.msra.mxu0 %v2544
    %2588 = vmatprep.subr.mxu0 %v2549
    %2589 = vmatpush1.msra.mxu0 %v2548
    %2590 = vmatprep.subr.mxu0 %v2553
    %2591 = vmatpush1.msra.mxu0 %v2552
    %2592 = vmatprep.subr.mxu0 %v2557
    %2593 = vmatpush1.msra.mxu0 %v2556
    %2594 = vmatprep.subr.mxu0 %v2561
    %2595 = vmatpush1.msra.mxu0 %v2560
    %2596 = vmatprep.subr.mxu0 0.0
    %2597 = vmatpush1.msra.mxu0 0.0
    %2598 = vmatprep.subr.mxu0 0.0
    %2599 = vmatpush1.msra.mxu0 0.0
    %2600 = vmatprep.subr.mxu0 0.0
    %2601 = vmatpush1.msra.mxu0 0.0
    %2602 = vmatprep.subr.mxu0 0.0
    %2603 = vmatpush1.msra.mxu0 0.0
    %2604 = vmatprep.subr.mxu0 0.0
    %2605 = vmatpush1.msra.mxu0 0.0
    %2606 = vmatprep.subr.mxu0 0.0
    %2607 = vmatpush1.msra.mxu0 0.0
    %2608 = vmatprep.subr.mxu0 0.0
    %2609 = vmatpush1.msra.mxu0 0.0
    %2610 = vmatprep.subr.mxu0 0.0
    %2611 = vmatpush1.msra.mxu0 0.0
    %2612 = vmatprep.subr.mxu0 0.0
    %2613 = vmatpush1.msra.mxu0 0.0
    %2614 = vmatprep.subr.mxu0 0.0
    %2615 = vmatpush1.msra.mxu0 0.0
    %2616 = vmatprep.subr.mxu0 0.0
    %2617 = vmatpush1.msra.mxu0 0.0
    %2618 = vmatprep.subr.mxu0 0.0
    %2619 = vmatpush1.msra.mxu0 0.0
    %2620 = vmatprep.subr.mxu0 0.0
    %2621 = vmatpush1.msra.mxu0 0.0
    %2622 = vmatprep.subr.mxu0 0.0
    %2623 = vmatpush1.msra.mxu0 0.0
    %2624 = vmatprep.subr.mxu0 0.0
    %2625 = vmatpush1.msra.mxu0 0.0
    %2626 = vmatprep.subr.mxu0 0.0
    %2627 = vmatpush1.msra.mxu0 0.0
    %2628 = vmatprep.mubr.f32.mxu0 0.0
    %2629 = vmatmul.mubr.f32.gmra.mrb[0].mxu0 %v2058
    %v2630 = vpop.f32.mrb[0].mxu0
    %v2631 = vadd.f32 0.0, %v2630
    %v2632 = vpop.f32.mrb[0].mxu0
    %v2633 = vadd.f32 0.0, %v2632
    %2634 = vmatprep.mubr.f32.mxu0 0.0
    %2635 = vmatmul.mubr.f32.gmra.mrb[0].mxu0 %v2059
    %v2636 = vpop.f32.mrb[0].mxu0
    %v2637 = vadd.f32 0.0, %v2636
    %v2638 = vpop.f32.mrb[0].mxu0
    %v2639 = vadd.f32 0.0, %v2638
    %2640 = vdwg.mxu0
    %2641 = vmatprep.subr.mxu0 %v2503
    %2642 = vmatpush1.msra.mxu0 %v2502
    %2643 = vmatprep.subr.mxu0 %v2507
    %2644 = vmatpush1.msra.mxu0 %v2506
    %2645 = vmatprep.subr.mxu0 %v2511
    %2646 = vmatpush1.msra.mxu0 %v2510
    %2647 = vmatprep.subr.mxu0 %v2515
    %2648 = vmatpush1.msra.mxu0 %v2514
    %2649 = vmatprep.subr.mxu0 %v2519
    %2650 = vmatpush1.msra.mxu0 %v2518
    %2651 = vmatprep.subr.mxu0 %v2523
    %2652 = vmatpush1.msra.mxu0 %v2522
    %2653 = vmatprep.subr.mxu0 %v2527
    %2654 = vmatpush1.msra.mxu0 %v2526
    %2655 = vmatprep.subr.mxu0 %v2531
    %2656 = vmatpush1.msra.mxu0 %v2530
    %2657 = vmatprep.subr.mxu0 %v2535
    %2658 = vmatpush1.msra.mxu0 %v2534
    %2659 = vmatprep.subr.mxu0 %v2539
    %2660 = vmatpush1.msra.mxu0 %v2538
    %2661 = vmatprep.subr.mxu0 %v2543
    %2662 = vmatpush1.msra.mxu0 %v2542
    %2663 = vmatprep.subr.mxu0 %v2547
    %2664 = vmatpush1.msra.mxu0 %v2546
    %2665 = vmatprep.subr.mxu0 %v2551
    %2666 = vmatpush1.msra.mxu0 %v2550
    %2667 = vmatprep.subr.mxu0 %v2555
    %2668 = vmatpush1.msra.mxu0 %v2554
    %2669 = vmatprep.subr.mxu0 %v2559
    %2670 = vmatpush1.msra.mxu0 %v2558
    %2671 = vmatprep.subr.mxu0 %v2563
    %2672 = vmatpush1.msra.mxu0 %v2562
    %2673 = vmatprep.subr.mxu0 0.0
    %2674 = vmatpush1.msra.mxu0 0.0
    %2675 = vmatprep.subr.mxu0 0.0
    %2676 = vmatpush1.msra.mxu0 0.0
    %2677 = vmatprep.subr.mxu0 0.0
    %2678 = vmatpush1.msra.mxu0 0.0
    %2679 = vmatprep.subr.mxu0 0.0
    %2680 = vmatpush1.msra.mxu0 0.0
    %2681 = vmatprep.subr.mxu0 0.0
    %2682 = vmatpush1.msra.mxu0 0.0
    %2683 = vmatprep.subr.mxu0 0.0
    %2684 = vmatpush1.msra.mxu0 0.0
    %2685 = vmatprep.subr.mxu0 0.0
    %2686 = vmatpush1.msra.mxu0 0.0
    %2687 = vmatprep.subr.mxu0 0.0
    %2688 = vmatpush1.msra.mxu0 0.0
    %2689 = vmatprep.subr.mxu0 0.0
    %2690 = vmatpush1.msra.mxu0 0.0
    %2691 = vmatprep.subr.mxu0 0.0
    %2692 = vmatpush1.msra.mxu0 0.0
    %2693 = vmatprep.subr.mxu0 0.0
    %2694 = vmatpush1.msra.mxu0 0.0
    %2695 = vmatprep.subr.mxu0 0.0
    %2696 = vmatpush1.msra.mxu0 0.0
    %2697 = vmatprep.subr.mxu0 0.0
    %2698 = vmatpush1.msra.mxu0 0.0
    %2699 = vmatprep.subr.mxu0 0.0
    %2700 = vmatpush1.msra.mxu0 0.0
    %2701 = vmatprep.subr.mxu0 0.0
    %2702 = vmatpush1.msra.mxu0 0.0
    %2703 = vmatprep.subr.mxu0 0.0
    %2704 = vmatpush1.msra.mxu0 0.0
    %2705 = vmatprep.mubr.f32.mxu0 0.0
    %2706 = vmatmul.mubr.f32.gmra.mrb[0].mxu0 %v2058
    %v2707 = vpop.f32.mrb[0].mxu0
    %v2708 = vadd.f32 0.0, %v2707
    %v2709 = vpop.f32.mrb[0].mxu0
    %v2710 = vadd.f32 0.0, %v2709
    %2711 = vmatprep.mubr.f32.mxu0 0.0
    %2712 = vmatmul.mubr.f32.gmra.mrb[0].mxu0 %v2059
    %v2713 = vpop.f32.mrb[0].mxu0
    %v2714 = vadd.f32 0.0, %v2713
    %v2715 = vpop.f32.mrb[0].mxu0
    %v2716 = vadd.f32 0.0, %v2715
    %2717 = vdwg.mxu0
    %v2718 = vadd.f32 %v2412, %v2631
    %v2719 = vadd.f32 %v2414, %v2633
    %v2720 = vadd.f32 %v2489, %v2708
    %v2721 = vadd.f32 %v2491, %v2710
    %v2722 = vadd.f32 %v2418, %v2637
    %v2723 = vadd.f32 %v2420, %v2639
    %v2724 = vadd.f32 %v2495, %v2714
    %v2725 = vadd.f32 %v2497, %v2716
    %s2726 = scalar_lea.vmem %s9, 1536
    %v2727 = vld [vmem:[%s2726] sm:$0xff]
    %v2728 = vld [vmem:[%s2726 + $0x8] sm:$0xff]
    %v2729 = vld [vmem:[%s2726 + $0x10] sm:$0xff]
    %v2730 = vld [vmem:[%s2726 + $0x18] sm:$0xff]
    %v2731 = vld [vmem:[%s2726 + $0x20] sm:$0xff]
    %v2732 = vld [vmem:[%s2726 + $0x28] sm:$0xff]
    %v2733 = vld [vmem:[%s2726 + $0x30] sm:$0xff]
    %v2734 = vld [vmem:[%s2726 + $0x38] sm:$0xff]
    %v2735 = vld [vmem:[%s2726 + $0x40] sm:$0xff]
    %v2736 = vld [vmem:[%s2726 + $0x48] sm:$0xff]
    %v2737 = vld [vmem:[%s2726 + $0x50] sm:$0xff]
    %v2738 = vld [vmem:[%s2726 + $0x58] sm:$0xff]
    %v2739 = vld [vmem:[%s2726 + $0x60] sm:$0xff]
    %v2740 = vld [vmem:[%s2726 + $0x68] sm:$0xff]
    %v2741 = vld [vmem:[%s2726 + $0x70] sm:$0xff]
    %v2742 = vld [vmem:[%s2726 + $0x78] sm:$0xff]
    %v2743 = vld [vmem:[%s2726 + $0x80] sm:$0xff]
    %v2744 = vld [vmem:[%s2726 + $0x88] sm:$0xff]
    %v2745 = vld [vmem:[%s2726 + $0x90] sm:$0xff]
    %v2746 = vld [vmem:[%s2726 + $0x98] sm:$0xff]
    %v2747 = vld [vmem:[%s2726 + $0xa0] sm:$0xff]
    %v2748 = vld [vmem:[%s2726 + $0xa8] sm:$0xff]
    %v2749 = vld [vmem:[%s2726 + $0xb0] sm:$0xff]
    %v2750 = vld [vmem:[%s2726 + $0xb8] sm:$0xff]
    %v2751 = vld [vmem:[%s2726 + $0xc0] sm:$0xff]
    %v2752 = vld [vmem:[%s2726 + $0xc8] sm:$0xff]
    %v2753 = vld [vmem:[%s2726 + $0xd0] sm:$0xff]
    %v2754 = vld [vmem:[%s2726 + $0xd8] sm:$0xff]
    %v2755 = vld [vmem:[%s2726 + $0xe0] sm:$0xff]
    %v2756 = vld [vmem:[%s2726 + $0xe8] sm:$0xff]
    %v2757 = vld [vmem:[%s2726 + $0xf0] sm:$0xff]
    %v2758 = vld [vmem:[%s2726 + $0xf8] sm:$0xff]
    %v2759 = vld [vmem:[%s2726 + $0x100] sm:$0xff]
    %v2760 = vld [vmem:[%s2726 + $0x108] sm:$0xff]
    %v2761 = vld [vmem:[%s2726 + $0x110] sm:$0xff]
    %v2762 = vld [vmem:[%s2726 + $0x118] sm:$0xff]
    %v2763 = vld [vmem:[%s2726 + $0x120] sm:$0xff]
    %v2764 = vld [vmem:[%s2726 + $0x128] sm:$0xff]
    %v2765 = vld [vmem:[%s2726 + $0x130] sm:$0xff]
    %v2766 = vld [vmem:[%s2726 + $0x138] sm:$0xff]
    %v2767 = vld [vmem:[%s2726 + $0x140] sm:$0xff]
    %v2768 = vld [vmem:[%s2726 + $0x148] sm:$0xff]
    %v2769 = vld [vmem:[%s2726 + $0x150] sm:$0xff]
    %v2770 = vld [vmem:[%s2726 + $0x158] sm:$0xff]
    %v2771 = vld [vmem:[%s2726 + $0x160] sm:$0xff]
    %v2772 = vld [vmem:[%s2726 + $0x168] sm:$0xff]
    %v2773 = vld [vmem:[%s2726 + $0x170] sm:$0xff]
    %v2774 = vld [vmem:[%s2726 + $0x178] sm:$0xff]
    %v2775 = vld [vmem:[%s2726 + $0x180] sm:$0xff]
    %v2776 = vld [vmem:[%s2726 + $0x188] sm:$0xff]
    %v2777 = vld [vmem:[%s2726 + $0x190] sm:$0xff]
    %v2778 = vld [vmem:[%s2726 + $0x198] sm:$0xff]
    %v2779 = vld [vmem:[%s2726 + $0x1a0] sm:$0xff]
    %v2780 = vld [vmem:[%s2726 + $0x1a8] sm:$0xff]
    %v2781 = vld [vmem:[%s2726 + $0x1b0] sm:$0xff]
    %v2782 = vld [vmem:[%s2726 + $0x1b8] sm:$0xff]
    %v2783 = vld [vmem:[%s2726 + $0x1c0] sm:$0xff]
    %v2784 = vld [vmem:[%s2726 + $0x1c8] sm:$0xff]
    %v2785 = vld [vmem:[%s2726 + $0x1d0] sm:$0xff]
    %v2786 = vld [vmem:[%s2726 + $0x1d8] sm:$0xff]
    %v2787 = vld [vmem:[%s2726 + $0x1e0] sm:$0xff]
    %v2788 = vld [vmem:[%s2726 + $0x1e8] sm:$0xff]
    %v2789 = vld [vmem:[%s2726 + $0x1f0] sm:$0xff]
    %v2790 = vld [vmem:[%s2726 + $0x1f8] sm:$0xff]
    %2791 = vmatprep.subr.mxu0 %v2728
    %2792 = vmatpush1.msra.mxu0 %v2727
    %2793 = vmatprep.subr.mxu0 %v2732
    %2794 = vmatpush1.msra.mxu0 %v2731
    %2795 = vmatprep.subr.mxu0 %v2736
    %2796 = vmatpush1.msra.mxu0 %v2735
    %2797 = vmatprep.subr.mxu0 %v2740
    %2798 = vmatpush1.msra.mxu0 %v2739
    %2799 = vmatprep.subr.mxu0 %v2744
    %2800 = vmatpush1.msra.mxu0 %v2743
    %2801 = vmatprep.subr.mxu0 %v2748
    %2802 = vmatpush1.msra.mxu0 %v2747
    %2803 = vmatprep.subr.mxu0 %v2752
    %2804 = vmatpush1.msra.mxu0 %v2751
    %2805 = vmatprep.subr.mxu0 %v2756
    %2806 = vmatpush1.msra.mxu0 %v2755
    %2807 = vmatprep.subr.mxu0 %v2760
    %2808 = vmatpush1.msra.mxu0 %v2759
    %2809 = vmatprep.subr.mxu0 %v2764
    %2810 = vmatpush1.msra.mxu0 %v2763
    %2811 = vmatprep.subr.mxu0 %v2768
    %2812 = vmatpush1.msra.mxu0 %v2767
    %2813 = vmatprep.subr.mxu0 %v2772
    %2814 = vmatpush1.msra.mxu0 %v2771
    %2815 = vmatprep.subr.mxu0 %v2776
    %2816 = vmatpush1.msra.mxu0 %v2775
    %2817 = vmatprep.subr.mxu0 %v2780
    %2818 = vmatpush1.msra.mxu0 %v2779
    %2819 = vmatprep.subr.mxu0 %v2784
    %2820 = vmatpush1.msra.mxu0 %v2783
    %2821 = vmatprep.subr.mxu0 %v2788
    %2822 = vmatpush1.msra.mxu0 %v2787
    %2823 = vmatprep.subr.mxu0 0.0
    %2824 = vmatpush1.msra.mxu0 0.0
    %2825 = vmatprep.subr.mxu0 0.0
    %2826 = vmatpush1.msra.mxu0 0.0
    %2827 = vmatprep.subr.mxu0 0.0
    %2828 = vmatpush1.msra.mxu0 0.0
    %2829 = vmatprep.subr.mxu0 0.0
    %2830 = vmatpush1.msra.mxu0 0.0
    %2831 = vmatprep.subr.mxu0 0.0
    %2832 = vmatpush1.msra.mxu0 0.0
    %2833 = vmatprep.subr.mxu0 0.0
    %2834 = vmatpush1.msra.mxu0 0.0
    %2835 = vmatprep.subr.mxu0 0.0
    %2836 = vmatpush1.msra.mxu0 0.0
    %2837 = vmatprep.subr.mxu0 0.0
    %2838 = vmatpush1.msra.mxu0 0.0
    %2839 = vmatprep.subr.mxu0 0.0
    %2840 = vmatpush1.msra.mxu0 0.0
    %2841 = vmatprep.subr.mxu0 0.0
    %2842 = vmatpush1.msra.mxu0 0.0
    %2843 = vmatprep.subr.mxu0 0.0
    %2844 = vmatpush1.msra.mxu0 0.0
    %2845 = vmatprep.subr.mxu0 0.0
    %2846 = vmatpush1.msra.mxu0 0.0
    %2847 = vmatprep.subr.mxu0 0.0
    %2848 = vmatpush1.msra.mxu0 0.0
    %2849 = vmatprep.subr.mxu0 0.0
    %2850 = vmatpush1.msra.mxu0 0.0
    %2851 = vmatprep.subr.mxu0 0.0
    %2852 = vmatpush1.msra.mxu0 0.0
    %2853 = vmatprep.subr.mxu0 0.0
    %2854 = vmatpush1.msra.mxu0 0.0
    %2855 = vmatprep.mubr.f32.mxu0 0.0
    %2856 = vmatmul.mubr.f32.gmra.mrb[0].mxu0 %v2060
    %v2857 = vpop.f32.mrb[0].mxu0
    %v2858 = vadd.f32 0.0, %v2857
    %v2859 = vpop.f32.mrb[0].mxu0
    %v2860 = vadd.f32 0.0, %v2859
    %2861 = vmatprep.mubr.f32.mxu0 0.0
    %2862 = vmatmul.mubr.f32.gmra.mrb[0].mxu0 %v2061
    %v2863 = vpop.f32.mrb[0].mxu0
    %v2864 = vadd.f32 0.0, %v2863
    %v2865 = vpop.f32.mrb[0].mxu0
    %v2866 = vadd.f32 0.0, %v2865
    %2867 = vdwg.mxu0
    %2868 = vmatprep.subr.mxu0 %v2730
    %2869 = vmatpush1.msra.mxu0 %v2729
    %2870 = vmatprep.subr.mxu0 %v2734
    %2871 = vmatpush1.msra.mxu0 %v2733
    %2872 = vmatprep.subr.mxu0 %v2738
    %2873 = vmatpush1.msra.mxu0 %v2737
    %2874 = vmatprep.subr.mxu0 %v2742
    %2875 = vmatpush1.msra.mxu0 %v2741
    %2876 = vmatprep.subr.mxu0 %v2746
    %2877 = vmatpush1.msra.mxu0 %v2745
    %2878 = vmatprep.subr.mxu0 %v2750
    %2879 = vmatpush1.msra.mxu0 %v2749
    %2880 = vmatprep.subr.mxu0 %v2754
    %2881 = vmatpush1.msra.mxu0 %v2753
    %2882 = vmatprep.subr.mxu0 %v2758
    %2883 = vmatpush1.msra.mxu0 %v2757
    %2884 = vmatprep.subr.mxu0 %v2762
    %2885 = vmatpush1.msra.mxu0 %v2761
    %2886 = vmatprep.subr.mxu0 %v2766
    %2887 = vmatpush1.msra.mxu0 %v2765
    %2888 = vmatprep.subr.mxu0 %v2770
    %2889 = vmatpush1.msra.mxu0 %v2769
    %2890 = vmatprep.subr.mxu0 %v2774
    %2891 = vmatpush1.msra.mxu0 %v2773
    %2892 = vmatprep.subr.mxu0 %v2778
    %2893 = vmatpush1.msra.mxu0 %v2777
    %2894 = vmatprep.subr.mxu0 %v2782
    %2895 = vmatpush1.msra.mxu0 %v2781
    %2896 = vmatprep.subr.mxu0 %v2786
    %2897 = vmatpush1.msra.mxu0 %v2785
    %2898 = vmatprep.subr.mxu0 %v2790
    %2899 = vmatpush1.msra.mxu0 %v2789
    %2900 = vmatprep.subr.mxu0 0.0
    %2901 = vmatpush1.msra.mxu0 0.0
    %2902 = vmatprep.subr.mxu0 0.0
    %2903 = vmatpush1.msra.mxu0 0.0
    %2904 = vmatprep.subr.mxu0 0.0
    %2905 = vmatpush1.msra.mxu0 0.0
    %2906 = vmatprep.subr.mxu0 0.0
    %2907 = vmatpush1.msra.mxu0 0.0
    %2908 = vmatprep.subr.mxu0 0.0
    %2909 = vmatpush1.msra.mxu0 0.0
    %2910 = vmatprep.subr.mxu0 0.0
    %2911 = vmatpush1.msra.mxu0 0.0
    %2912 = vmatprep.subr.mxu0 0.0
    %2913 = vmatpush1.msra.mxu0 0.0
    %2914 = vmatprep.subr.mxu0 0.0
    %2915 = vmatpush1.msra.mxu0 0.0
    %2916 = vmatprep.subr.mxu0 0.0
    %2917 = vmatpush1.msra.mxu0 0.0
    %2918 = vmatprep.subr.mxu0 0.0
    %2919 = vmatpush1.msra.mxu0 0.0
    %2920 = vmatprep.subr.mxu0 0.0
    %2921 = vmatpush1.msra.mxu0 0.0
    %2922 = vmatprep.subr.mxu0 0.0
    %2923 = vmatpush1.msra.mxu0 0.0
    %2924 = vmatprep.subr.mxu0 0.0
    %2925 = vmatpush1.msra.mxu0 0.0
    %2926 = vmatprep.subr.mxu0 0.0
    %2927 = vmatpush1.msra.mxu0 0.0
    %2928 = vmatprep.subr.mxu0 0.0
    %2929 = vmatpush1.msra.mxu0 0.0
    %2930 = vmatprep.subr.mxu0 0.0
    %2931 = vmatpush1.msra.mxu0 0.0
    %2932 = vmatprep.mubr.f32.mxu0 0.0
    %2933 = vmatmul.mubr.f32.gmra.mrb[0].mxu0 %v2060
    %v2934 = vpop.f32.mrb[0].mxu0
    %v2935 = vadd.f32 0.0, %v2934
    %v2936 = vpop.f32.mrb[0].mxu0
    %v2937 = vadd.f32 0.0, %v2936
    %2938 = vmatprep.mubr.f32.mxu0 0.0
    %2939 = vmatmul.mubr.f32.gmra.mrb[0].mxu0 %v2061
    %v2940 = vpop.f32.mrb[0].mxu0
    %v2941 = vadd.f32 0.0, %v2940
    %v2942 = vpop.f32.mrb[0].mxu0
    %v2943 = vadd.f32 0.0, %v2942
    %2944 = vdwg.mxu0
    %v2945 = vadd.f32 %v2718, %v2858
    %v2946 = vadd.f32 %v2719, %v2860
    %v2947 = vadd.f32 %v2720, %v2935
    %v2948 = vadd.f32 %v2721, %v2937
    %v2949 = vadd.f32 %v2722, %v2864
    %v2950 = vadd.f32 %v2723, %v2866
    %v2951 = vadd.f32 %v2724, %v2941
    %v2952 = vadd.f32 %v2725, %v2943
    %v2953 = vld [vmem:[%s11] sm:$0xff]
    %v2954 = vld [vmem:[%s11 + $0x8] sm:$0xff]
    %v2955 = vld [vmem:[%s11 + $0x10] sm:$0xff]
    %v2956 = vld [vmem:[%s11 + $0x18] sm:$0xff]
    %v2957 = vld [vmem:[%s11 + $0x20] sm:$0x1]
    %v2958 = vld [vmem:[%s11 + $0x28] sm:$0x1]
    %v2959 = vld [vmem:[%s11 + $0x30] sm:$0x1]
    %v2960 = vld [vmem:[%s11 + $0x38] sm:$0x1]
    %2969 = vrot.lane.b32.xlu0 %v2945, 111
    %v2970 = vpop.permute.xlu0 %2969
    %2971 = vrot.lane.b32.xlu0 %v2946, 111
    %v2972 = vpop.permute.xlu0 %2971
    %2973 = vrot.lane.b32.xlu0 %v2947, 111
    %v2974 = vpop.permute.xlu0 %2973
    %2975 = vrot.lane.b32.xlu0 %v2948, 111
    %v2976 = vpop.permute.xlu0 %2975
    %2977 = vrot.lane.b32.xlu0 %v2949, 111
    %v2978 = vpop.permute.xlu0 %2977
    %2979 = vrot.lane.b32.xlu0 %v2950, 111
    %v2980 = vpop.permute.xlu0 %2979
    %2981 = vrot.lane.b32.xlu0 %v2951, 111
    %v2982 = vpop.permute.xlu0 %2981
    %2983 = vrot.lane.b32.xlu0 %v2952, 111
    %v2984 = vpop.permute.xlu0 %2983
    %vm2985 = vcmask 908288
    %v2986 = vsel %vm2985, %v2970, %v2972
    %v2987 = vsel %vm2985, %v2972, %v2974
    %v2988 = vsel %vm2985, %v2974, %v2976
    %v2989 = vsel %vm2985, %v2978, %v2980
    %v2990 = vsel %vm2985, %v2980, %v2982
    %v2991 = vsel %vm2985, %v2982, %v2984
    %v3002 = vsel %vm2985, %v2976, %v2970
    %v3003 = vsel %vm2985, %v2984, %v2978
    %v3004 = vlaneseq
    %v3005 = vshrl.u32 %v3004, 7
    %v3006 = vsub.s32 0, %v3005
    %v3007 = vrot.slane %v2953, %v3006
    %v3008 = vlaneseq
    %v3009 = vshrl.u32 %v3008, 7
    %v3010 = vsub.s32 0, %v3009
    %v3011 = vrot.slane %v2954, %v3010
    %v3012 = vlaneseq
    %v3013 = vshrl.u32 %v3012, 7
    %v3014 = vsub.s32 0, %v3013
    %v3015 = vrot.slane %v2955, %v3014
    %v3016 = vlaneseq
    %v3017 = vshrl.u32 %v3016, 7
    %v3018 = vsub.s32 0, %v3017
    %v3019 = vrot.slane %v2956, %v3018
    %v3020 = vmul.f32 %v2986, %v3007
    %v3021 = vmul.f32 %v2987, %v3011
    %v3022 = vmul.f32 %v2988, %v3015
    %v3023 = vmul.f32 %v3002, %v3019
    %v3024 = vmul.f32 %v2989, %v3007
    %v3025 = vmul.f32 %v2990, %v3011
    %v3026 = vmul.f32 %v2991, %v3015
    %v3027 = vmul.f32 %v3003, %v3019
    %3028 = vrot.lane.b32.xlu0 %v2945, 112
    %v3029 = vpop.permute.xlu0 %3028
    %3030 = vrot.lane.b32.xlu0 %v2946, 112
    %v3031 = vpop.permute.xlu0 %3030
    %3032 = vrot.lane.b32.xlu0 %v2947, 112
    %v3033 = vpop.permute.xlu0 %3032
    %3034 = vrot.lane.b32.xlu0 %v2948, 112
    %v3035 = vpop.permute.xlu0 %3034
    %3036 = vrot.lane.b32.xlu0 %v2949, 112
    %v3037 = vpop.permute.xlu0 %3036
    %3038 = vrot.lane.b32.xlu0 %v2950, 112
    %v3039 = vpop.permute.xlu0 %3038
    %3040 = vrot.lane.b32.xlu0 %v2951, 112
    %v3041 = vpop.permute.xlu0 %3040
    %3042 = vrot.lane.b32.xlu0 %v2952, 112
    %v3043 = vpop.permute.xlu0 %3042
    %vm3044 = vcmask 916480
    %v3045 = vsel %vm3044, %v3029, %v3031
    %v3046 = vsel %vm3044, %v3031, %v3033
    %v3047 = vsel %vm3044, %v3033, %v3035
    %v3048 = vsel %vm3044, %v3037, %v3039
    %v3049 = vsel %vm3044, %v3039, %v3041
    %v3050 = vsel %vm3044, %v3041, %v3043
    %v3061 = vsel %vm3044, %v3035, %v3029
    %v3062 = vsel %vm3044, %v3043, %v3037
    %v3063 = vlaneseq
    %v3064 = vshrl.u32 %v3063, 7
    %v3065 = vsub.s32 1, %v3064
    %v3066 = vrot.slane %v2953, %v3065
    %v3067 = vlaneseq
    %v3068 = vshrl.u32 %v3067, 7
    %v3069 = vsub.s32 1, %v3068
    %v3070 = vrot.slane %v2954, %v3069
    %v3071 = vlaneseq
    %v3072 = vshrl.u32 %v3071, 7
    %v3073 = vsub.s32 1, %v3072
    %v3074 = vrot.slane %v2955, %v3073
    %v3075 = vlaneseq
    %v3076 = vshrl.u32 %v3075, 7
    %v3077 = vsub.s32 1, %v3076
    %v3078 = vrot.slane %v2956, %v3077
    %v3079 = vmul.f32 %v3045, %v3066
    %v3080 = vmul.f32 %v3046, %v3070
    %v3081 = vmul.f32 %v3047, %v3074
    %v3082 = vmul.f32 %v3061, %v3078
    %v3083 = vmul.f32 %v3048, %v3066
    %v3084 = vmul.f32 %v3049, %v3070
    %v3085 = vmul.f32 %v3050, %v3074
    %v3086 = vmul.f32 %v3062, %v3078
    %3087 = vrot.lane.b32.xlu0 %v2945, 113
    %v3088 = vpop.permute.xlu0 %3087
    %3089 = vrot.lane.b32.xlu0 %v2946, 113
    %v3090 = vpop.permute.xlu0 %3089
    %3091 = vrot.lane.b32.xlu0 %v2947, 113
    %v3092 = vpop.permute.xlu0 %3091
    %3093 = vrot.lane.b32.xlu0 %v2948, 113
    %v3094 = vpop.permute.xlu0 %3093
    %3095 = vrot.lane.b32.xlu0 %v2949, 113
    %v3096 = vpop.permute.xlu0 %3095
    %3097 = vrot.lane.b32.xlu0 %v2950, 113
    %v3098 = vpop.permute.xlu0 %3097
    %3099 = vrot.lane.b32.xlu0 %v2951, 113
    %v3100 = vpop.permute.xlu0 %3099
    %3101 = vrot.lane.b32.xlu0 %v2952, 113
    %v3102 = vpop.permute.xlu0 %3101
    %vm3103 = vcmask 924672
    %v3104 = vsel %vm3103, %v3088, %v3090
    %v3105 = vsel %vm3103, %v3090, %v3092
    %v3106 = vsel %vm3103, %v3092, %v3094
    %v3107 = vsel %vm3103, %v3096, %v3098
    %v3108 = vsel %vm3103, %v3098, %v3100
    %v3109 = vsel %vm3103, %v3100, %v3102
    %v3120 = vsel %vm3103, %v3094, %v3088
    %v3121 = vsel %vm3103, %v3102, %v3096
    %v3122 = vlaneseq
    %v3123 = vshrl.u32 %v3122, 7
    %v3124 = vsub.s32 2, %v3123
    %v3125 = vrot.slane %v2953, %v3124
    %v3126 = vlaneseq
    %v3127 = vshrl.u32 %v3126, 7
    %v3128 = vsub.s32 2, %v3127
    %v3129 = vrot.slane %v2954, %v3128
    %v3130 = vlaneseq
    %v3131 = vshrl.u32 %v3130, 7
    %v3132 = vsub.s32 2, %v3131
    %v3133 = vrot.slane %v2955, %v3132
    %v3134 = vlaneseq
    %v3135 = vshrl.u32 %v3134, 7
    %v3136 = vsub.s32 2, %v3135
    %v3137 = vrot.slane %v2956, %v3136
    %v3138 = vmul.f32 %v3104, %v3125
    %v3139 = vmul.f32 %v3105, %v3129
    %v3140 = vmul.f32 %v3106, %v3133
    %v3141 = vmul.f32 %v3120, %v3137
    %v3142 = vmul.f32 %v3107, %v3125
    %v3143 = vmul.f32 %v3108, %v3129
    %v3144 = vmul.f32 %v3109, %v3133
    %v3145 = vmul.f32 %v3121, %v3137
    %3146 = vrot.lane.b32.xlu0 %v2945, 127
    %v3147 = vpop.permute.xlu0 %3146
    %3148 = vrot.lane.b32.xlu0 %v2946, 127
    %v3149 = vpop.permute.xlu0 %3148
    %3150 = vrot.lane.b32.xlu0 %v2947, 127
    %v3151 = vpop.permute.xlu0 %3150
    %3152 = vrot.lane.b32.xlu0 %v2948, 127
    %v3153 = vpop.permute.xlu0 %3152
    %3154 = vrot.lane.b32.xlu0 %v2949, 127
    %v3155 = vpop.permute.xlu0 %3154
    %3156 = vrot.lane.b32.xlu0 %v2950, 127
    %v3157 = vpop.permute.xlu0 %3156
    %3158 = vrot.lane.b32.xlu0 %v2951, 127
    %v3159 = vpop.permute.xlu0 %3158
    %3160 = vrot.lane.b32.xlu0 %v2952, 127
    %v3161 = vpop.permute.xlu0 %3160
    %v3162 = vsel %vm1397, %v3147, %v3149
    %v3163 = vsel %vm1397, %v3149, %v3151
    %v3164 = vsel %vm1397, %v3151, %v3153
    %v3165 = vsel %vm1397, %v3155, %v3157
    %v3166 = vsel %vm1397, %v3157, %v3159
    %v3167 = vsel %vm1397, %v3159, %v3161
    %v3178 = vsel %vm1397, %v3153, %v3147
    %v3179 = vsel %vm1397, %v3161, %v3155
    %v3180 = vlaneseq
    %v3181 = vshrl.u32 %v3180, 7
    %v3182 = vsub.s32 3, %v3181
    %v3183 = vrot.slane %v2953, %v3182
    %v3184 = vlaneseq
    %v3185 = vshrl.u32 %v3184, 7
    %v3186 = vsub.s32 3, %v3185
    %v3187 = vrot.slane %v2954, %v3186
    %v3188 = vlaneseq
    %v3189 = vshrl.u32 %v3188, 7
    %v3190 = vsub.s32 3, %v3189
    %v3191 = vrot.slane %v2955, %v3190
    %v3192 = vlaneseq
    %v3193 = vshrl.u32 %v3192, 7
    %v3194 = vsub.s32 3, %v3193
    %v3195 = vrot.slane %v2956, %v3194
    %v3196 = vmul.f32 %v3162, %v3183
    %v3197 = vmul.f32 %v3163, %v3187
    %v3198 = vmul.f32 %v3164, %v3191
    %v3199 = vmul.f32 %v3178, %v3195
    %v3200 = vmul.f32 %v3165, %v3183
    %v3201 = vmul.f32 %v3166, %v3187
    %v3202 = vmul.f32 %v3167, %v3191
    %v3203 = vmul.f32 %v3179, %v3195
    %v3204 = vlaneseq
    %v3205 = vshrl.u32 %v3204, 7
    %v3206 = vsub.s32 4, %v3205
    %v3207 = vrot.slane %v2953, %v3206
    %v3208 = vlaneseq
    %v3209 = vshrl.u32 %v3208, 7
    %v3210 = vsub.s32 4, %v3209
    %v3211 = vrot.slane %v2954, %v3210
    %v3212 = vlaneseq
    %v3213 = vshrl.u32 %v3212, 7
    %v3214 = vsub.s32 4, %v3213
    %v3215 = vrot.slane %v2955, %v3214
    %v3216 = vlaneseq
    %v3217 = vshrl.u32 %v3216, 7
    %v3218 = vsub.s32 4, %v3217
    %v3219 = vrot.slane %v2956, %v3218
    %v3220 = vmul.f32 %v2945, %v3207
    %v3221 = vmul.f32 %v2946, %v3211
    %v3222 = vmul.f32 %v2947, %v3215
    %v3223 = vmul.f32 %v2948, %v3219
    %v3224 = vmul.f32 %v2949, %v3207
    %v3225 = vmul.f32 %v2950, %v3211
    %v3226 = vmul.f32 %v2951, %v3215
    %v3227 = vmul.f32 %v2952, %v3219
    %3228 = vrot.lane.b32.xlu0 %v2948, 1
    %v3229 = vpop.permute.xlu0 %3228
    %3230 = vrot.lane.b32.xlu0 %v2952, 1
    %v3231 = vpop.permute.xlu0 %3230
    %3234 = vrot.lane.b32.xlu0 %v2945, 1
    %v3235 = vpop.permute.xlu0 %3234
    %3236 = vrot.lane.b32.xlu0 %v2946, 1
    %v3237 = vpop.permute.xlu0 %3236
    %3238 = vrot.lane.b32.xlu0 %v2947, 1
    %v3239 = vpop.permute.xlu0 %3238
    %3240 = vrot.lane.b32.xlu0 %v2949, 1
    %v3241 = vpop.permute.xlu0 %3240
    %3242 = vrot.lane.b32.xlu0 %v2950, 1
    %v3243 = vpop.permute.xlu0 %3242
    %3244 = vrot.lane.b32.xlu0 %v2951, 1
    %v3245 = vpop.permute.xlu0 %3244
    %v3246 = vsel %vm280, %v3235, %v3237
    %v3247 = vsel %vm280, %v3237, %v3239
    %v3248 = vsel %vm280, %v3239, %v3229
    %v3249 = vsel %vm280, %v3241, %v3243
    %v3250 = vsel %vm280, %v3243, %v3245
    %v3251 = vsel %vm280, %v3245, %v3231
    %v3260 = vsel %vm280, %v3229, %v3235
    %v3261 = vsel %vm280, %v3231, %v3241
    %v3262 = vlaneseq
    %v3263 = vshrl.u32 %v3262, 7
    %v3264 = vsub.s32 5, %v3263
    %v3265 = vrot.slane %v2953, %v3264
    %v3266 = vlaneseq
    %v3267 = vshrl.u32 %v3266, 7
    %v3268 = vsub.s32 5, %v3267
    %v3269 = vrot.slane %v2954, %v3268
    %v3270 = vlaneseq
    %v3271 = vshrl.u32 %v3270, 7
    %v3272 = vsub.s32 5, %v3271
    %v3273 = vrot.slane %v2955, %v3272
    %v3274 = vlaneseq
    %v3275 = vshrl.u32 %v3274, 7
    %v3276 = vsub.s32 5, %v3275
    %v3277 = vrot.slane %v2956, %v3276
    %v3278 = vmul.f32 %v3260, %v3265
    %v3279 = vmul.f32 %v3246, %v3269
    %v3280 = vmul.f32 %v3247, %v3273
    %v3281 = vmul.f32 %v3248, %v3277
    %v3282 = vmul.f32 %v3261, %v3265
    %v3283 = vmul.f32 %v3249, %v3269
    %v3284 = vmul.f32 %v3250, %v3273
    %v3285 = vmul.f32 %v3251, %v3277
    %3286 = vrot.lane.b32.xlu0 %v2948, 15
    %v3287 = vpop.permute.xlu0 %3286
    %3288 = vrot.lane.b32.xlu0 %v2952, 15
    %v3289 = vpop.permute.xlu0 %3288
    %3292 = vrot.lane.b32.xlu0 %v2945, 15
    %v3293 = vpop.permute.xlu0 %3292
    %3294 = vrot.lane.b32.xlu0 %v2946, 15
    %v3295 = vpop.permute.xlu0 %3294
    %3296 = vrot.lane.b32.xlu0 %v2947, 15
    %v3297 = vpop.permute.xlu0 %3296
    %3298 = vrot.lane.b32.xlu0 %v2949, 15
    %v3299 = vpop.permute.xlu0 %3298
    %3300 = vrot.lane.b32.xlu0 %v2950, 15
    %v3301 = vpop.permute.xlu0 %3300
    %3302 = vrot.lane.b32.xlu0 %v2951, 15
    %v3303 = vpop.permute.xlu0 %3302
    %vm3304 = vcmask 121856
    %v3305 = vsel %vm3304, %v3293, %v3295
    %v3306 = vsel %vm3304, %v3295, %v3297
    %v3307 = vsel %vm3304, %v3297, %v3287
    %v3308 = vsel %vm3304, %v3299, %v3301
    %v3309 = vsel %vm3304, %v3301, %v3303
    %v3310 = vsel %vm3304, %v3303, %v3289
    %v3319 = vsel %vm3304, %v3287, %v3293
    %v3320 = vsel %vm3304, %v3289, %v3299
    %v3321 = vlaneseq
    %v3322 = vshrl.u32 %v3321, 7
    %v3323 = vsub.s32 6, %v3322
    %v3324 = vrot.slane %v2953, %v3323
    %v3325 = vlaneseq
    %v3326 = vshrl.u32 %v3325, 7
    %v3327 = vsub.s32 6, %v3326
    %v3328 = vrot.slane %v2954, %v3327
    %v3329 = vlaneseq
    %v3330 = vshrl.u32 %v3329, 7
    %v3331 = vsub.s32 6, %v3330
    %v3332 = vrot.slane %v2955, %v3331
    %v3333 = vlaneseq
    %v3334 = vshrl.u32 %v3333, 7
    %v3335 = vsub.s32 6, %v3334
    %v3336 = vrot.slane %v2956, %v3335
    %v3337 = vmul.f32 %v3319, %v3324
    %v3338 = vmul.f32 %v3305, %v3328
    %v3339 = vmul.f32 %v3306, %v3332
    %v3340 = vmul.f32 %v3307, %v3336
    %v3341 = vmul.f32 %v3320, %v3324
    %v3342 = vmul.f32 %v3308, %v3328
    %v3343 = vmul.f32 %v3309, %v3332
    %v3344 = vmul.f32 %v3310, %v3336
    %3345 = vrot.lane.b32.xlu0 %v2948, 16
    %v3346 = vpop.permute.xlu0 %3345
    %3347 = vrot.lane.b32.xlu0 %v2952, 16
    %v3348 = vpop.permute.xlu0 %3347
    %3351 = vrot.lane.b32.xlu0 %v2945, 16
    %v3352 = vpop.permute.xlu0 %3351
    %3353 = vrot.lane.b32.xlu0 %v2946, 16
    %v3354 = vpop.permute.xlu0 %3353
    %3355 = vrot.lane.b32.xlu0 %v2947, 16
    %v3356 = vpop.permute.xlu0 %3355
    %3357 = vrot.lane.b32.xlu0 %v2949, 16
    %v3358 = vpop.permute.xlu0 %3357
    %3359 = vrot.lane.b32.xlu0 %v2950, 16
    %v3360 = vpop.permute.xlu0 %3359
    %3361 = vrot.lane.b32.xlu0 %v2951, 16
    %v3362 = vpop.permute.xlu0 %3361
    %v3363 = vsel %vm117, %v3352, %v3354
    %v3364 = vsel %vm117, %v3354, %v3356
    %v3365 = vsel %vm117, %v3356, %v3346
    %v3366 = vsel %vm117, %v3358, %v3360
    %v3367 = vsel %vm117, %v3360, %v3362
    %v3368 = vsel %vm117, %v3362, %v3348
    %v3377 = vsel %vm117, %v3346, %v3352
    %v3378 = vsel %vm117, %v3348, %v3358
    %v3379 = vlaneseq
    %v3380 = vshrl.u32 %v3379, 7
    %v3381 = vsub.s32 7, %v3380
    %v3382 = vrot.slane %v2953, %v3381
    %v3383 = vlaneseq
    %v3384 = vshrl.u32 %v3383, 7
    %v3385 = vsub.s32 7, %v3384
    %v3386 = vrot.slane %v2954, %v3385
    %v3387 = vlaneseq
    %v3388 = vshrl.u32 %v3387, 7
    %v3389 = vsub.s32 7, %v3388
    %v3390 = vrot.slane %v2955, %v3389
    %v3391 = vlaneseq
    %v3392 = vshrl.u32 %v3391, 7
    %v3393 = vsub.s32 7, %v3392
    %v3394 = vrot.slane %v2956, %v3393
    %v3395 = vmul.f32 %v3377, %v3382
    %v3396 = vmul.f32 %v3363, %v3386
    %v3397 = vmul.f32 %v3364, %v3390
    %v3398 = vmul.f32 %v3365, %v3394
    %v3399 = vmul.f32 %v3378, %v3382
    %v3400 = vmul.f32 %v3366, %v3386
    %v3401 = vmul.f32 %v3367, %v3390
    %v3402 = vmul.f32 %v3368, %v3394
    %3403 = vrot.lane.b32.xlu0 %v2948, 17
    %v3404 = vpop.permute.xlu0 %3403
    %3405 = vrot.lane.b32.xlu0 %v2952, 17
    %v3406 = vpop.permute.xlu0 %3405
    %3409 = vrot.lane.b32.xlu0 %v2945, 17
    %v3410 = vpop.permute.xlu0 %3409
    %3411 = vrot.lane.b32.xlu0 %v2946, 17
    %v3412 = vpop.permute.xlu0 %3411
    %3413 = vrot.lane.b32.xlu0 %v2947, 17
    %v3414 = vpop.permute.xlu0 %3413
    %3415 = vrot.lane.b32.xlu0 %v2949, 17
    %v3416 = vpop.permute.xlu0 %3415
    %3417 = vrot.lane.b32.xlu0 %v2950, 17
    %v3418 = vpop.permute.xlu0 %3417
    %3419 = vrot.lane.b32.xlu0 %v2951, 17
    %v3420 = vpop.permute.xlu0 %3419
    %vm3421 = vcmask 138240
    %v3422 = vsel %vm3421, %v3410, %v3412
    %v3423 = vsel %vm3421, %v3412, %v3414
    %v3424 = vsel %vm3421, %v3414, %v3404
    %v3425 = vsel %vm3421, %v3416, %v3418
    %v3426 = vsel %vm3421, %v3418, %v3420
    %v3427 = vsel %vm3421, %v3420, %v3406
    %v3436 = vsel %vm3421, %v3404, %v3410
    %v3437 = vsel %vm3421, %v3406, %v3416
    %v3438 = vlaneseq
    %v3439 = vshrl.u32 %v3438, 7
    %v3440 = vsub.s32 0, %v3439
    %v3441 = vrot.slane %v2957, %v3440
    %v3442 = vlaneseq
    %v3443 = vshrl.u32 %v3442, 7
    %v3444 = vsub.s32 0, %v3443
    %v3445 = vrot.slane %v2958, %v3444
    %v3446 = vlaneseq
    %v3447 = vshrl.u32 %v3446, 7
    %v3448 = vsub.s32 0, %v3447
    %v3449 = vrot.slane %v2959, %v3448
    %v3450 = vlaneseq
    %v3451 = vshrl.u32 %v3450, 7
    %v3452 = vsub.s32 0, %v3451
    %v3453 = vrot.slane %v2960, %v3452
    %v3454 = vmul.f32 %v3436, %v3441
    %v3455 = vmul.f32 %v3422, %v3445
    %v3456 = vmul.f32 %v3423, %v3449
    %v3457 = vmul.f32 %v3424, %v3453
    %v3458 = vmul.f32 %v3437, %v3441
    %v3459 = vmul.f32 %v3425, %v3445
    %v3460 = vmul.f32 %v3426, %v3449
    %v3461 = vmul.f32 %v3427, %v3453
    %v3462 = vld [vmem:[%s10] sm:$0xff]
    %s3463 = sld [smem:[#allocation2]]
    %v3464 = vstv %s3463
    %v3466 = vcombine.high %v3462, %v3462
    %v3467 = vsel %vm117, %v3466, 0
    %3469 = vmatprep.subr.mxu0 %v3021
    %3470 = vmatpush1.msra.mxu0 %v3020
    %3471 = vmatprep.subr.mxu0 %v3025
    %3472 = vmatpush1.msra.mxu0 %v3024
    %3473 = vmatprep.subr.mxu0 %v3080
    %3474 = vmatpush1.msra.mxu0 %v3079
    %3475 = vmatprep.subr.mxu0 %v3084
    %3476 = vmatpush1.msra.mxu0 %v3083
    %3477 = vmatprep.subr.mxu0 %v3139
    %3478 = vmatpush1.msra.mxu0 %v3138
    %3479 = vmatprep.subr.mxu0 %v3143
    %3480 = vmatpush1.msra.mxu0 %v3142
    %3481 = vmatprep.subr.mxu0 %v3197
    %3482 = vmatpush1.msra.mxu0 %v3196
    %3483 = vmatprep.subr.mxu0 %v3201
    %3484 = vmatpush1.msra.mxu0 %v3200
    %3485 = vmatprep.subr.mxu0 %v3221
    %3486 = vmatpush1.msra.mxu0 %v3220
    %3487 = vmatprep.subr.mxu0 %v3225
    %3488 = vmatpush1.msra.mxu0 %v3224
    %3489 = vmatprep.subr.mxu0 %v3279
    %3490 = vmatpush1.msra.mxu0 %v3278
    %3491 = vmatprep.subr.mxu0 %v3283
    %3492 = vmatpush1.msra.mxu0 %v3282
    %3493 = vmatprep.subr.mxu0 %v3338
    %3494 = vmatpush1.msra.mxu0 %v3337
    %3495 = vmatprep.subr.mxu0 %v3342
    %3496 = vmatpush1.msra.mxu0 %v3341
    %3497 = vmatprep.subr.mxu0 %v3396
    %3498 = vmatpush1.msra.mxu0 %v3395
    %3499 = vmatprep.subr.mxu0 %v3400
    %3500 = vmatpush1.msra.mxu0 %v3399
    %3501 = vmatprep.subr.mxu0 %v3455
    %3502 = vmatpush1.msra.mxu0 %v3454
    %3503 = vmatprep.subr.mxu0 %v3459
    %3504 = vmatpush1.msra.mxu0 %v3458
    %3505 = vmatprep.subr.mxu0 0.0
    %3506 = vmatpush1.msra.mxu0 0.0
    %3507 = vmatprep.subr.mxu0 0.0
    %3508 = vmatpush1.msra.mxu0 0.0
    %3509 = vmatprep.subr.mxu0 0.0
    %3510 = vmatpush1.msra.mxu0 0.0
    %3511 = vmatprep.subr.mxu0 0.0
    %3512 = vmatpush1.msra.mxu0 0.0
    %3513 = vmatprep.subr.mxu0 0.0
    %3514 = vmatpush1.msra.mxu0 0.0
    %3515 = vmatprep.subr.mxu0 0.0
    %3516 = vmatpush1.msra.mxu0 0.0
    %3517 = vmatprep.subr.mxu0 0.0
    %3518 = vmatpush1.msra.mxu0 0.0
    %3519 = vmatprep.subr.mxu0 0.0
    %3520 = vmatpush1.msra.mxu0 0.0
    %3521 = vmatprep.subr.mxu0 0.0
    %3522 = vmatpush1.msra.mxu0 0.0
    %3523 = vmatprep.subr.mxu0 0.0
    %3524 = vmatpush1.msra.mxu0 0.0
    %3525 = vmatprep.subr.mxu0 0.0
    %3526 = vmatpush1.msra.mxu0 0.0
    %3527 = vmatprep.subr.mxu0 0.0
    %3528 = vmatpush1.msra.mxu0 0.0
    %3529 = vmatprep.subr.mxu0 0.0
    %3530 = vmatpush1.msra.mxu0 0.0
    %3531 = vmatprep.subr.mxu0 0.0
    %3532 = vmatpush1.msra.mxu0 0.0
    %3533 = vmatprep.mubr.f32.mxu0 %v3467
    %3534 = vmatmul.mubr.f32.gmra.mrb[0].mxu0 %v3462
    %v3535 = vpop.f32.mrb[0].mxu0
    %v3536 = vadd.f32 %v3464, %v3535
    %v3537 = vpop.f32.mrb[0].mxu0
    %v3538 = vadd.f32 %v3464, %v3537
    %3539 = vdwg.mxu0
    %3540 = vmatprep.subr.mxu0 %v3023
    %3541 = vmatpush1.msra.mxu0 %v3022
    %3542 = vmatprep.subr.mxu0 %v3027
    %3543 = vmatpush1.msra.mxu0 %v3026
    %3544 = vmatprep.subr.mxu0 %v3082
    %3545 = vmatpush1.msra.mxu0 %v3081
    %3546 = vmatprep.subr.mxu0 %v3086
    %3547 = vmatpush1.msra.mxu0 %v3085
    %3548 = vmatprep.subr.mxu0 %v3141
    %3549 = vmatpush1.msra.mxu0 %v3140
    %3550 = vmatprep.subr.mxu0 %v3145
    %3551 = vmatpush1.msra.mxu0 %v3144
    %3552 = vmatprep.subr.mxu0 %v3199
    %3553 = vmatpush1.msra.mxu0 %v3198
    %3554 = vmatprep.subr.mxu0 %v3203
    %3555 = vmatpush1.msra.mxu0 %v3202
    %3556 = vmatprep.subr.mxu0 %v3223
    %3557 = vmatpush1.msra.mxu0 %v3222
    %3558 = vmatprep.subr.mxu0 %v3227
    %3559 = vmatpush1.msra.mxu0 %v3226
    %3560 = vmatprep.subr.mxu0 %v3281
    %3561 = vmatpush1.msra.mxu0 %v3280
    %3562 = vmatprep.subr.mxu0 %v3285
    %3563 = vmatpush1.msra.mxu0 %v3284
    %3564 = vmatprep.subr.mxu0 %v3340
    %3565 = vmatpush1.msra.mxu0 %v3339
    %3566 = vmatprep.subr.mxu0 %v3344
    %3567 = vmatpush1.msra.mxu0 %v3343
    %3568 = vmatprep.subr.mxu0 %v3398
    %3569 = vmatpush1.msra.mxu0 %v3397
    %3570 = vmatprep.subr.mxu0 %v3402
    %3571 = vmatpush1.msra.mxu0 %v3401
    %3572 = vmatprep.subr.mxu0 %v3457
    %3573 = vmatpush1.msra.mxu0 %v3456
    %3574 = vmatprep.subr.mxu0 %v3461
    %3575 = vmatpush1.msra.mxu0 %v3460
    %3576 = vmatprep.subr.mxu0 0.0
    %3577 = vmatpush1.msra.mxu0 0.0
    %3578 = vmatprep.subr.mxu0 0.0
    %3579 = vmatpush1.msra.mxu0 0.0
    %3580 = vmatprep.subr.mxu0 0.0
    %3581 = vmatpush1.msra.mxu0 0.0
    %3582 = vmatprep.subr.mxu0 0.0
    %3583 = vmatpush1.msra.mxu0 0.0
    %3584 = vmatprep.subr.mxu0 0.0
    %3585 = vmatpush1.msra.mxu0 0.0
    %3586 = vmatprep.subr.mxu0 0.0
    %3587 = vmatpush1.msra.mxu0 0.0
    %3588 = vmatprep.subr.mxu0 0.0
    %3589 = vmatpush1.msra.mxu0 0.0
    %3590 = vmatprep.subr.mxu0 0.0
    %3591 = vmatpush1.msra.mxu0 0.0
    %3592 = vmatprep.subr.mxu0 0.0
    %3593 = vmatpush1.msra.mxu0 0.0
    %3594 = vmatprep.subr.mxu0 0.0
    %3595 = vmatpush1.msra.mxu0 0.0
    %3596 = vmatprep.subr.mxu0 0.0
    %3597 = vmatpush1.msra.mxu0 0.0
    %3598 = vmatprep.subr.mxu0 0.0
    %3599 = vmatpush1.msra.mxu0 0.0
    %3600 = vmatprep.subr.mxu0 0.0
    %3601 = vmatpush1.msra.mxu0 0.0
    %3602 = vmatprep.subr.mxu0 0.0
    %3603 = vmatpush1.msra.mxu0 0.0
    %3604 = vmatprep.mubr.f32.mxu0 %v3467
    %3605 = vmatmul.mubr.f32.gmra.mrb[0].mxu0 %v3462
    %v3606 = vpop.f32.mrb[0].mxu0
    %v3607 = vadd.f32 %v3464, %v3606
    %v3608 = vpop.f32.mrb[0].mxu0
    %v3609 = vadd.f32 %v3464, %v3608
    %3610 = vdwg.mxu0
    %v3615 = vcombine.low %v3536, %v3538
    %v3616 = vcombine.low %v3607, %v3609
    %3619 = vst [vmem:[%s14] sm:$0xff] %v3615
    %3620 = vst [vmem:[%s14 + $0x8] sm:$0xff] %v3616
    // Predicated region
    $region62: #{vae_forward.3} parent=1 // pred_check
      _
    $region63: #{vae_forward.3} parent=1 // pred_check_branch
      %3622 = sbr.rel (0) target = $region65
    $region64: #{vae_forward.3} parent=1 // pred_region
      _
    $region65: #{vae_forward.3} parent=1 // pred_fallthru
      _
    // Predicated region
    $region66: #{vae_forward.3} parent=1 // pred_check
      _
    $region67: #{vae_forward.3} parent=1 // pred_check_branch
      %3624 = sbr.rel (0) target = $region69
    $region68: #{vae_forward.3} parent=1 // pred_region
      _
    $region69: #{vae_forward.3} parent=1 // pred_fallthru
      _
    %3625 = vsyncpa [#allocation4], 1

</llo_original>
